<compile_context>
chip_gen: v7x
topology: tpu7x:2x2x1
jax: 0.10.0
libtpu: 0.0.40
codegen_flags: <defaults>
</compile_context>

<pallas_src>
import functools

import numpy as np
import jax
import jax.numpy as jnp
from jax.experimental import pallas as pl
from jax.experimental.pallas import tpu as pltpu

LATENT_CHANNELS = 10
LATENT_DIM = 100
FLAT_DIM = 10 * 6 * 278            # 16680
FLAT_PAD = 16896                   # 132 * 128, lane aligned padded flat dim
FC_TILE = 1408                     # 11 * 128 ; 16896 / 1408 = 12 grid steps

CP = 16                            # channels padded to one full sublane tile
OFF = 4                            # top/left zero margin of the valid region
ZPAD = 4                           # zero rows re-established below the valid region

HS_BIG, W_BIG = 136, 512           # canvas for the big front/back sections
HS_MID, W_MID = 56, 384            # canvas for the 46x318-and-smaller sections

VMEM_LIMIT = 32 * 1024 * 1024      # fits v7x's 64 MiB VMEM with headroom


# ----------------------------------------------------------------------------
# Pallas kernels
# ----------------------------------------------------------------------------
def _conv_canvas_kernel(dims_ref, x_ref, w_ref, b_ref, o_ref, *, K, pad, relu):
    """One stride-1 conv layer over a whole canvas (one batch sample).

    dims_ref : SMEM (2,) int32 = [h_out, w_out]  (valid output extent)
    x_ref    : (HS*CP, WC) bf16   input canvas  (valid data at rows/cols >= OFF)
    w_ref    : (K, CP, K*CP) bf16 stacked weights, [kw, cout, kh*CP + cin]
    b_ref    : (CP, 1) f32
    o_ref    : (HS*CP, WC) bf16   output canvas
    """
    _, WC = o_ref.shape
    h_out = dims_ref[0]
    w_out = dims_ref[1]

    w_list = [w_ref[kw] for kw in range(K)]              # each (CP, K*CP)
    bias = b_ref[...]                                    # (CP, 1) f32
    col = jax.lax.broadcasted_iota(jnp.int32, (CP, WC), 1)
    col_ok = (col >= OFF) & (col < OFF + w_out)

    # re-establish the zero margin: OFF rows above + ZPAD rows below valid data
    o_ref[0:OFF * CP, :] = jnp.zeros((OFF * CP, WC), o_ref.dtype)
    below = pl.multiple_of((OFF + h_out) * CP, CP)
    o_ref[pl.ds(below, ZPAD * CP), :] = jnp.zeros((ZPAD * CP, WC), o_ref.dtype)

    def row_body(i, carry):
        r_out = OFF + i
        r_in = pl.multiple_of((r_out - pad) * CP, CP)
        xs = x_ref[pl.ds(r_in, K * CP), :]               # (K*CP, WC) bf16
        acc = jnp.zeros((CP, WC), jnp.float32)
        for kw in range(K):
            d = jnp.dot(w_list[kw], xs, preferred_element_type=jnp.float32)
            sh = (pad - kw) % WC                         # static lane rotation
            if sh:
                d = pltpu.roll(d, shift=sh, axis=1)
            acc = acc + d
        acc = acc + bias
        if relu:
            acc = jnp.maximum(acc, 0.0)
        acc = jnp.where(col_ok, acc, 0.0)
        o_ref[pl.ds(pl.multiple_of(r_out * CP, CP), CP), :] = acc.astype(o_ref.dtype)
        return carry

    jax.lax.fori_loop(0, h_out, row_body, 0)


def _conv_in_res_kernel(dims_ref, t_ref, x_ref, w_ref, b_ref, g_ref, bt_ref,
                        o_ref, *, K, pad):
    """Fused conv2 -> InstanceNorm2d(affine) -> +residual -> ReLU (one sample).

    t_ref : conv1(+relu) output canvas (conv2 input), bf16
    x_ref : residual-block input canvas (the residual), bf16
    """
    _, WC = o_ref.shape
    h = dims_ref[0]
    w = dims_ref[1]

    w_list = [w_ref[kw] for kw in range(K)]
    bias = b_ref[...]
    col = jax.lax.broadcasted_iota(jnp.int32, (CP, WC), 1)
    col_ok = (col >= OFF) & (col < OFF + w)
    colf = col_ok.astype(jnp.float32)

    o_ref[0:OFF * CP, :] = jnp.zeros((OFF * CP, WC), o_ref.dtype)
    below = pl.multiple_of((OFF + h) * CP, CP)
    o_ref[pl.ds(below, ZPAD * CP), :] = jnp.zeros((ZPAD * CP, WC), o_ref.dtype)

    def pass1(i, carry):                                 # conv2 + stats
        s1, s2 = carry
        r_out = OFF + i
        r_in = pl.multiple_of((r_out - pad) * CP, CP)
        xs = t_ref[pl.ds(r_in, K * CP), :]
        acc = jnp.zeros((CP, WC), jnp.float32)
        for kw in range(K):
            d = jnp.dot(w_list[kw], xs, preferred_element_type=jnp.float32)
            sh = (pad - kw) % WC
            if sh:
                d = pltpu.roll(d, shift=sh, axis=1)
            acc = acc + d
        acc = (acc + bias) * colf                        # masked conv2 output
        s1 = s1 + jnp.sum(acc, axis=1, keepdims=True)
        s2 = s2 + jnp.sum(acc * acc, axis=1, keepdims=True)
        o_ref[pl.ds(pl.multiple_of(r_out * CP, CP), CP), :] = acc.astype(o_ref.dtype)
        return (s1, s2)

    init = (jnp.zeros((CP, 1), jnp.float32), jnp.zeros((CP, 1), jnp.float32))
    s1, s2 = jax.lax.fori_loop(0, h, pass1, init)

    n = (h * w).astype(jnp.float32)                      # biased variance, HxW
    mean = s1 / n
    var = s2 / n - mean * mean
    inv = jax.lax.rsqrt(var + 1e-5)
    scale = g_ref[...] * inv                             # (CP, 1)
    shift = bt_ref[...] - mean * scale

    def pass2(i, carry):                                 # norm + residual + relu
        r = pl.multiple_of((OFF + i) * CP, CP)
        y = o_ref[pl.ds(r, CP), :].astype(jnp.float32)
        res = x_ref[pl.ds(r, CP), :].astype(jnp.float32)
        out = jnp.maximum(y * scale + shift + res, 0.0)
        out = jnp.where(col_ok, out, 0.0)
        o_ref[pl.ds(r, CP), :] = out.astype(o_ref.dtype)
        return carry

    jax.lax.fori_loop(0, h, pass2, 0)


def _fc_acc_kernel(x_ref, w_ref, b_ref, o_ref, acc_ref):
    """K-tiled Linear: grid over the contraction dim so the weight DMA pipelines."""
    k = pl.program_id(0)

    @pl.when(k == 0)
    def _():
        acc_ref[...] = jnp.zeros_like(acc_ref)

    acc_ref[...] += jnp.dot(x_ref[...], w_ref[...],
                            preferred_element_type=jnp.float32)

    @pl.when(k == pl.num_programs(0) - 1)
    def _():
        o_ref[...] = acc_ref[...] + b_ref[...]


def _fc_tile_kernel(x_ref, w_ref, b_ref, o_ref, *, relu):
    """N-tiled Linear: grid over the output dim so the weight DMA pipelines."""
    y = jnp.dot(x_ref[...], w_ref[...],
                preferred_element_type=jnp.float32) + b_ref[...]
    if relu:
        y = jnp.maximum(y, 0.0)
    o_ref[...] = y


def _sample_kernel(mu_ref, lv_ref, eps_ref, z_ref):
    z_ref[...] = mu_ref[...] + eps_ref[...] * jnp.exp(0.5 * lv_ref[...])


# ----------------------------------------------------------------------------
# Pallas wrappers
# ----------------------------------------------------------------------------
def conv_canvas(c, w, b, dims, *, K, pad, relu):
    """c: (B, HS*CP, WC) bf16; w: (K, CP, K*CP) bf16; b: (CP,1) f32; dims: (2,) i32."""
    B, HCP, WC = c.shape
    kern = functools.partial(_conv_canvas_kernel, K=K, pad=pad, relu=relu)
    grid_spec = pltpu.PrefetchScalarGridSpec(
        num_scalar_prefetch=1,
        grid=(B,),
        in_specs=[
            pl.BlockSpec((None, HCP, WC), lambda i, d: (i, 0, 0)),
            pl.BlockSpec((K, CP, K * CP), lambda i, d: (0, 0, 0)),
            pl.BlockSpec((CP, 1), lambda i, d: (0, 0)),
        ],
        out_specs=pl.BlockSpec((None, HCP, WC), lambda i, d: (i, 0, 0)),
    )
    return pl.pallas_call(
        kern,
        grid_spec=grid_spec,
        out_shape=jax.ShapeDtypeStruct((B, HCP, WC), jnp.bfloat16),
        compiler_params=pltpu.CompilerParams(
            dimension_semantics=("parallel",),
            vmem_limit_bytes=VMEM_LIMIT),
    )(dims, c, w, b)


def conv_in_res(t, x, w, b, g, bt, dims):
    """Fused conv2 + InstanceNorm + residual + ReLU for a ResidualBlock."""
    B, HCP, WC = t.shape
    kern = functools.partial(_conv_in_res_kernel, K=3, pad=1)
    grid_spec = pltpu.PrefetchScalarGridSpec(
        num_scalar_prefetch=1,
        grid=(B,),
        in_specs=[
            pl.BlockSpec((None, HCP, WC), lambda i, d: (i, 0, 0)),   # t
            pl.BlockSpec((None, HCP, WC), lambda i, d: (i, 0, 0)),   # residual
            pl.BlockSpec((3, CP, 3 * CP), lambda i, d: (0, 0, 0)),
            pl.BlockSpec((CP, 1), lambda i, d: (0, 0)),
            pl.BlockSpec((CP, 1), lambda i, d: (0, 0)),
            pl.BlockSpec((CP, 1), lambda i, d: (0, 0)),
        ],
        out_specs=pl.BlockSpec((None, HCP, WC), lambda i, d: (i, 0, 0)),
    )
    return pl.pallas_call(
        kern,
        grid_spec=grid_spec,
        out_shape=jax.ShapeDtypeStruct((B, HCP, WC), jnp.bfloat16),
        compiler_params=pltpu.CompilerParams(
            dimension_semantics=("parallel",),
            vmem_limit_bytes=VMEM_LIMIT),
    )(dims, t, x, w, b, g, bt)


def fc_dual(x, w, b):
    """x: (B, FLAT_PAD) f32; w: (FLAT_PAD, 2*LATENT_DIM); b: (1, 2*LATENT_DIM)."""
    B, KP = x.shape
    N = w.shape[1]
    nk = KP // FC_TILE
    return pl.pallas_call(
        _fc_acc_kernel,
        grid=(nk,),
        in_specs=[
            pl.BlockSpec((B, FC_TILE), lambda k: (0, k)),
            pl.BlockSpec((FC_TILE, N), lambda k: (k, 0)),
            pl.BlockSpec((1, N), lambda k: (0, 0)),
        ],
        out_specs=pl.BlockSpec((B, N), lambda k: (0, 0)),
        out_shape=jax.ShapeDtypeStruct((B, N), jnp.float32),
        scratch_shapes=[pltpu.VMEM((B, N), jnp.float32)],
        compiler_params=pltpu.CompilerParams(
            dimension_semantics=("arbitrary",),
            vmem_limit_bytes=VMEM_LIMIT),
    )(x, w, b)


def fc_wide(x, w, b, relu):
    """x: (B, Din) f32; w: (Din, FLAT_PAD); b: (1, FLAT_PAD)."""
    B, Din = x.shape
    NP = w.shape[1]
    nn_ = NP // FC_TILE
    kern = functools.partial(_fc_tile_kernel, relu=relu)
    return pl.pallas_call(
        kern,
        grid=(nn_,),
        in_specs=[
            pl.BlockSpec((B, Din), lambda n: (0, 0)),
            pl.BlockSpec((Din, FC_TILE), lambda n: (0, n)),
            pl.BlockSpec((1, FC_TILE), lambda n: (0, n)),
        ],
        out_specs=pl.BlockSpec((B, FC_TILE), lambda n: (0, n)),
        out_shape=jax.ShapeDtypeStruct((B, NP), jnp.float32),
        compiler_params=pltpu.CompilerParams(
            dimension_semantics=("parallel",),
            vmem_limit_bytes=VMEM_LIMIT),
    )(x, w, b)


def sample_pallas(mu, lv, eps):
    return pl.pallas_call(
        _sample_kernel,
        out_shape=jax.ShapeDtypeStruct(mu.shape, jnp.float32),
    )(mu, lv, eps)


# ----------------------------------------------------------------------------
# Canvas glue (tiny, only at section boundaries)
# ----------------------------------------------------------------------------
def to_canvas(x, HS, WC):
    """x: (B, C, h, w) f32 -> (B, HS*CP, WC) bf16 canvas (valid data at OFF, OFF)."""
    B, C, h, w = x.shape
    xb = jnp.transpose(x, (0, 2, 1, 3))                  # (B, h, C, w)
    xb = jnp.pad(xb, ((0, 0), (OFF, HS - OFF - h), (0, CP - C),
                      (OFF, WC - OFF - w)))
    return xb.reshape(B, HS * CP, WC).astype(jnp.bfloat16)


def from_canvas(c, C, h, w):
    """(B, HS*CP, WC) canvas -> (B, C, h, w) f32 (NCHW)."""
    B, HCP, WC = c.shape
    HS = HCP // CP
    x = c.reshape(B, HS, CP, WC)[:, OFF:OFF + h, :C, OFF:OFF + w]
    return jnp.transpose(x, (0, 2, 1, 3)).astype(jnp.float32)


def resize_canvas(c, HS_to, W_to, h, w):
    """Move the (h, w) valid region into a canvas of a different size."""
    B, HCP, WC = c.shape
    HS = HCP // CP
    x = c.reshape(B, HS, CP, WC)[:, OFF:OFF + h, :, OFF:OFF + w]
    x = jnp.pad(x, ((0, 0), (OFF, HS_to - OFF - h), (0, 0),
                    (OFF, W_to - OFF - w)))
    return x.reshape(B, HS_to * CP, W_to)


# ----------------------------------------------------------------------------
# Layer chains (lax.scan over stacked per-layer parameters)
# ----------------------------------------------------------------------------
def conv_chain(c, Wk, Bb, dims_seq, *, K, pad, relu):
    def body(carry, p):
        w, b, d = p
        return conv_canvas(carry, w, b, d, K=K, pad=pad, relu=relu), None
    out, _ = jax.lax.scan(body, c, (Wk, Bb, dims_seq))
    return out


def resblock_chain(c, W1, B1, W2, B2, G, BT, dims):
    def body(carry, p):
        w1, b1, w2, b2, g, bt = p
        t = conv_canvas(carry, w1, b1, dims, K=3, pad=1, relu=True)
        out = conv_in_res(t, carry, w2, b2, g, bt, dims)
        return out, None
    out, _ = jax.lax.scan(body, c, (W1, B1, W2, B2, G, BT))
    return out


# ----------------------------------------------------------------------------
# AudioVAE forward
# ----------------------------------------------------------------------------
def encoder_forward(params, x):
    B = x.shape[0]
    c = to_canvas(x, HS_BIG, W_BIG)
    c = conv_canvas(c, params['e_conv0_w'], params['e_conv0_b'],
                    params['e_conv0_d'], K=3, pad=0, relu=True)
    c = conv_chain(c, params['e_conv1_w'], params['e_conv1_b'],
                   params['e_conv1_d'], K=5, pad=0, relu=True)
    c = resize_canvas(c, HS_MID, W_MID, 46, 318)
    c = resblock_chain(c, params['e_res_w1'], params['e_res_b1'],
                       params['e_res_w2'], params['e_res_b2'],
                       params['e_res_g'], params['e_res_bt'], params['res_d'])
    c = conv_chain(c, params['e_conv2_w'], params['e_conv2_b'],
                   params['e_conv2_d'], K=3, pad=0, relu=True)
    c = conv_canvas(c, params['e_conv3_w'], params['e_conv3_b'],
                    params['e_conv3_d'], K=3, pad=1, relu=True)
    flat = from_canvas(c, LATENT_CHANNELS, 6, 278).reshape(B, FLAT_DIM)
    flat = jnp.pad(flat, ((0, 0), (0, FLAT_PAD - FLAT_DIM)))
    mulv = fc_dual(flat, params['e_fc_w'], params['e_fc_b'])
    return mulv[:, :LATENT_DIM], mulv[:, LATENT_DIM:]


def decoder_forward(params, z):
    B = z.shape[0]
    h = fc_wide(z, params['d_fc1_w'], params['d_fc1_b'], relu=True)[:, :FLAT_DIM]
    h = h.reshape(B, LATENT_CHANNELS, 6, 278)
    c = to_canvas(h, HS_MID, W_MID)
    c = conv_canvas(c, params['d_conv1_w'], params['d_conv1_b'],
                    params['d_conv1_d'], K=3, pad=1, relu=True)
    c = conv_chain(c, params['d_conv2_w'], params['d_conv2_b'],
                   params['d_conv2_d'], K=3, pad=2, relu=True)
    c = resblock_chain(c, params['d_res_w1'], params['d_res_b1'],
                       params['d_res_w2'], params['d_res_b2'],
                       params['d_res_g'], params['d_res_bt'], params['res_d'])
    c = resize_canvas(c, HS_BIG, W_BIG, 46, 318)
    c = conv_chain(c, params['d_conv3_w'], params['d_conv3_b'],
                   params['d_conv3_d'], K=5, pad=4, relu=True)
    c = conv_canvas(c, params['d_conv0_w'], params['d_conv0_b'],
                    params['d_conv0_d'], K=3, pad=2, relu=False)
    return from_canvas(c, 2, 128, 400)


def audio_vae_forward(params, x, eps):
    mu, log_var = encoder_forward(params, x)
    # TODO(synk): torch.randn_like RNG stream cannot be reproduced; eps is supplied externally.
    z = sample_pallas(mu, log_var, eps)
    recon = decoder_forward(params, z)
    return recon, mu, log_var


# ----------------------------------------------------------------------------
# Parameter init (PyTorch-style) + one-time weight preparation (outside jit)
# ----------------------------------------------------------------------------
def init_params(key):
    """PyTorch-layout parameters with U(-1/sqrt(fan_in), 1/sqrt(fan_in)) init."""
    cnt = [0]

    def u(shape, fan_in):
        cnt[0] += 1
        k = jax.random.fold_in(key, cnt[0])
        bnd = 1.0 / np.sqrt(fan_in)
        return jax.random.uniform(k, shape, jnp.float32, -bnd, bnd)

    LC = LATENT_CHANNELS
    P = {}
    # encoder
    P['e_conv0_w'] = u((LC, 2, 3, 3), 2 * 9);        P['e_conv0_b'] = u((LC,), 2 * 9)
    P['e_conv1_w'] = u((20, LC, LC, 5, 5), LC * 25); P['e_conv1_b'] = u((20, LC), LC * 25)
    P['e_res_w1'] = u((10, LC, LC, 3, 3), LC * 9);   P['e_res_b1'] = u((10, LC), LC * 9)
    P['e_res_w2'] = u((10, LC, LC, 3, 3), LC * 9);   P['e_res_b2'] = u((10, LC), LC * 9)
    P['e_res_g'] = jnp.ones((10, LC), jnp.float32)
    P['e_res_bt'] = jnp.zeros((10, LC), jnp.float32)
    P['e_conv2_w'] = u((20, LC, LC, 3, 3), LC * 9);  P['e_conv2_b'] = u((20, LC), LC * 9)
    P['e_conv3_w'] = u((LC, LC, 3, 3), LC * 9);      P['e_conv3_b'] = u((LC,), LC * 9)
    P['e_fcmu_w'] = u((LATENT_DIM, FLAT_DIM), FLAT_DIM)
    P['e_fcmu_b'] = u((LATENT_DIM,), FLAT_DIM)
    P['e_fclv_w'] = u((LATENT_DIM, FLAT_DIM), FLAT_DIM)
    P['e_fclv_b'] = u((LATENT_DIM,), FLAT_DIM)
    # decoder
    P['d_fc1_w'] = u((FLAT_DIM, LATENT_DIM), LATENT_DIM)
    P['d_fc1_b'] = u((FLAT_DIM,), LATENT_DIM)
    P['d_conv1_w'] = u((LC, LC, 3, 3), LC * 9);      P['d_conv1_b'] = u((LC,), LC * 9)
    P['d_conv2_w'] = u((20, LC, LC, 3, 3), LC * 9);  P['d_conv2_b'] = u((20, LC), LC * 9)
    P['d_res_w1'] = u((10, LC, LC, 3, 3), LC * 9);   P['d_res_b1'] = u((10, LC), LC * 9)
    P['d_res_w2'] = u((10, LC, LC, 3, 3), LC * 9);   P['d_res_b2'] = u((10, LC), LC * 9)
    P['d_res_g'] = jnp.ones((10, LC), jnp.float32)
    P['d_res_bt'] = jnp.zeros((10, LC), jnp.float32)
    P['d_conv3_w'] = u((20, LC, LC, 5, 5), LC * 25); P['d_conv3_b'] = u((20, LC), LC * 25)
    P['d_conv0_w'] = u((LC, 2, 3, 3), LC * 9);       P['d_conv0_b'] = u((2,), LC * 9)
    return P


def _stack_conv_w(w, transpose=False):
    """PyTorch conv weight -> (..., K, CP, K*CP) bf16; layout [kw, cout, kh*CP+cin].

    Conv2d: (..., Cout, Cin, K, K).  ConvTranspose2d (stride 1): (..., Cin, Cout, K, K),
    realised as a full conv with spatially flipped + swapped weights.
    """
    w = jnp.asarray(w, jnp.float32)
    if transpose:
        w = jnp.flip(w, axis=(-2, -1))
        w = jnp.swapaxes(w, -4, -3)
    lead = w.shape[:-4]
    co, ci, K, _ = w.shape[-4:]
    pad = [(0, 0)] * len(lead) + [(0, CP - co), (0, CP - ci), (0, 0), (0, 0)]
    w = jnp.pad(w, pad)                                   # (..., CP, CP, K, K)
    nd = w.ndim
    perm = tuple(range(nd - 4)) + (nd - 1, nd - 4, nd - 2, nd - 3)
    w = jnp.transpose(w, perm)                            # (..., K, CP, K, CP)
    return w.reshape(*lead, K, CP, K * CP).astype(jnp.bfloat16)


def _pad_vec(v, n=CP):
    """(..., C) -> (..., n, 1) f32, zero padded."""
    v = jnp.asarray(v, jnp.float32)
    lead = v.shape[:-1]
    v = jnp.pad(v, [(0, 0)] * len(lead) + [(0, n - v.shape[-1])])
    return v.reshape(*lead, n, 1)


def _chain_dims(h0, w0, delta, steps):
    return jnp.asarray([[h0 + delta * (i + 1), w0 + delta * (i + 1)]
                        for i in range(steps)], jnp.int32)


def prepare_params(P):
    """One-time (outside jit) weight re-layout for the Pallas kernels."""
    Q = {}
    # encoder
    Q['e_conv0_w'] = _stack_conv_w(P['e_conv0_w']); Q['e_conv0_b'] = _pad_vec(P['e_conv0_b'])
    Q['e_conv0_d'] = jnp.asarray([126, 398], jnp.int32)
    Q['e_conv1_w'] = _stack_conv_w(P['e_conv1_w']); Q['e_conv1_b'] = _pad_vec(P['e_conv1_b'])
    Q['e_conv1_d'] = _chain_dims(126, 398, -4, 20)
    Q['e_res_w1'] = _stack_conv_w(P['e_res_w1']);   Q['e_res_b1'] = _pad_vec(P['e_res_b1'])
    Q['e_res_w2'] = _stack_conv_w(P['e_res_w2']);   Q['e_res_b2'] = _pad_vec(P['e_res_b2'])
    Q['e_res_g'] = _pad_vec(P['e_res_g']);          Q['e_res_bt'] = _pad_vec(P['e_res_bt'])
    Q['e_conv2_w'] = _stack_conv_w(P['e_conv2_w']); Q['e_conv2_b'] = _pad_vec(P['e_conv2_b'])
    Q['e_conv2_d'] = _chain_dims(46, 318, -2, 20)
    Q['e_conv3_w'] = _stack_conv_w(P['e_conv3_w']); Q['e_conv3_b'] = _pad_vec(P['e_conv3_b'])
    Q['e_conv3_d'] = jnp.asarray([6, 278], jnp.int32)
    Q['res_d'] = jnp.asarray([46, 318], jnp.int32)
    # merged mu/logvar linear: (FLAT_PAD, 2*LATENT_DIM)
    w_mu = jnp.asarray(P['e_fcmu_w'], jnp.float32).T
    w_lv = jnp.asarray(P['e_fclv_w'], jnp.float32).T
    w = jnp.concatenate([w_mu, w_lv], axis=1)
    Q['e_fc_w'] = jnp.pad(w, ((0, FLAT_PAD - FLAT_DIM), (0, 0)))
    Q['e_fc_b'] = jnp.concatenate([P['e_fcmu_b'], P['e_fclv_b']]
                                  ).reshape(1, -1).astype(jnp.float32)
    # decoder
    w1 = jnp.asarray(P['d_fc1_w'], jnp.float32).T
    Q['d_fc1_w'] = jnp.pad(w1, ((0, 0), (0, FLAT_PAD - FLAT_DIM)))
    Q['d_fc1_b'] = jnp.pad(jnp.asarray(P['d_fc1_b'], jnp.float32),
                           (0, FLAT_PAD - FLAT_DIM)).reshape(1, -1)
    Q['d_conv1_w'] = _stack_conv_w(P['d_conv1_w']); Q['d_conv1_b'] = _pad_vec(P['d_conv1_b'])
    Q['d_conv1_d'] = jnp.asarray([6, 278], jnp.int32)
    Q['d_conv2_w'] = _stack_conv_w(P['d_conv2_w'], transpose=True)
    Q['d_conv2_b'] = _pad_vec(P['d_conv2_b'])
    Q['d_conv2_d'] = _chain_dims(6, 278, 2, 20)
    Q['d_res_w1'] = _stack_conv_w(P['d_res_w1']);   Q['d_res_b1'] = _pad_vec(P['d_res_b1'])
    Q['d_res_w2'] = _stack_conv_w(P['d_res_w2']);   Q['d_res_b2'] = _pad_vec(P['d_res_b2'])
    Q['d_res_g'] = _pad_vec(P['d_res_g']);          Q['d_res_bt'] = _pad_vec(P['d_res_bt'])
    Q['d_conv3_w'] = _stack_conv_w(P['d_conv3_w'], transpose=True)
    Q['d_conv3_b'] = _pad_vec(P['d_conv3_b'])
    Q['d_conv3_d'] = _chain_dims(46, 318, 4, 20)
    Q['d_conv0_w'] = _stack_conv_w(P['d_conv0_w'], transpose=True)
    Q['d_conv0_b'] = _pad_vec(P['d_conv0_b'])
    Q['d_conv0_d'] = jnp.asarray([128, 400], jnp.int32)
    return Q


# ----------------------------------------------------------------------------
if __name__ == "__main__":
    key = jax.random.PRNGKey(0)
    raw = init_params(key)
    params = prepare_params(raw)         # hoisted weight prep, runs once outside jit

    kx, keps = jax.random.split(jax.random.fold_in(key, 12345))
    # Input spatial size is fixed by the module's Linear dims (10*6*278); batch kept small.
    x = jax.random.normal(kx, (1, 2, 128, 400), jnp.float32)
    eps = jax.random.normal(keps, (1, LATENT_DIM), jnp.float32)

    fwd = jax.jit(audio_vae_forward)
    recon, mu, log_var = fwd(params, x, eps)
    jax.block_until_ready((recon, mu, log_var))

    assert recon.shape == (1, 2, 128, 400)
    assert mu.shape == (1, LATENT_DIM) and log_var.shape == (1, LATENT_DIM)
    print("KERNEL_OK")
</pallas_src>

<mosaic_0001>
module attributes {stable_mosaic.version = 11 : i64} {
  func.func @_conv_canvas_kernel(%arg0: i32, %arg1: memref<2xi32, #tpu.memory_space<smem>>, %arg2: memref<1x2176x512xbf16, #tpu.memory_space<vmem>>, %arg3: memref<3x16x48xbf16, #tpu.memory_space<vmem>>, %arg4: memref<16x1xf32, #tpu.memory_space<vmem>>, %arg5: memref<1x2176x512xbf16, #tpu.memory_space<vmem>>) attributes {dimension_semantics = [#tpu.dimension_semantics<parallel>], iteration_bounds = array<i64: 1>, scalar_prefetch = 1 : i64, scratch_operands = 0 : i64, tpu.core_type = #tpu.core_type<tc>, window_params = [{transform_indices = @transform_0, window_bounds = array<i64: 1, 2176, 512>}, {pipeline_mode = #tpu.pipeline_mode<synchronous>, transform_indices = @transform_1, window_bounds = array<i64: 3, 16, 48>}, {pipeline_mode = #tpu.pipeline_mode<synchronous>, transform_indices = @transform_2, window_bounds = array<i64: 16, 1>}, {transform_indices = @transform_3, window_bounds = array<i64: 1, 2176, 512>}]} {
    %c0 = arith.constant 0 : index
    %0 = memref.load %arg1[%c0] : memref<2xi32, #tpu.memory_space<smem>>
    %c1 = arith.constant 1 : index
    %1 = memref.load %arg1[%c1] : memref<2xi32, #tpu.memory_space<smem>>
    %c0_0 = arith.constant 0 : index
    %c0_1 = arith.constant 0 : index
    %c0_2 = arith.constant 0 : index
    %2 = vector.load %arg3[%c0_0, %c0_1, %c0_2] : memref<3x16x48xbf16, #tpu.memory_space<vmem>>, vector<1x16x48xbf16>
    %3 = vector.shape_cast %2 : vector<1x16x48xbf16> to vector<16x48xbf16>
    %c1_3 = arith.constant 1 : index
    %c0_4 = arith.constant 0 : index
    %c0_5 = arith.constant 0 : index
    %4 = vector.load %arg3[%c1_3, %c0_4, %c0_5] : memref<3x16x48xbf16, #tpu.memory_space<vmem>>, vector<1x16x48xbf16>
    %5 = vector.shape_cast %4 : vector<1x16x48xbf16> to vector<16x48xbf16>
    %c2 = arith.constant 2 : index
    %c0_6 = arith.constant 0 : index
    %c0_7 = arith.constant 0 : index
    %6 = vector.load %arg3[%c2, %c0_6, %c0_7] : memref<3x16x48xbf16, #tpu.memory_space<vmem>>, vector<1x16x48xbf16>
    %7 = vector.shape_cast %6 : vector<1x16x48xbf16> to vector<16x48xbf16>
    %c0_8 = arith.constant 0 : index
    %c0_9 = arith.constant 0 : index
    %8 = vector.load %arg4[%c0_8, %c0_9] : memref<16x1xf32, #tpu.memory_space<vmem>>, vector<16x1xf32>
    %9 = tpu.iota {dimensions = array<i32: 1>} : vector<16x512xi32>
    %c4_i32 = arith.constant 4 : i32
    %10 = vector.broadcast %c4_i32 : i32 to vector<16x512xi32>
    %11 = arith.cmpi sge, %9, %10 : vector<16x512xi32>
    %c4_i32_10 = arith.constant 4 : i32
    %12 = arith.addi %c4_i32_10, %1 : i32
    %13 = vector.broadcast %12 : i32 to vector<16x512xi32>
    %14 = arith.cmpi slt, %9, %13 : vector<16x512xi32>
    %15 = arith.andi %11, %14 : vector<16x512xi1>
    %cst = arith.constant 0.000000e+00 : bf16
    %16 = vector.broadcast %cst : bf16 to vector<64x512xbf16>
    %c0_11 = arith.constant 0 : index
    %c0_12 = arith.constant 0 : index
    %c0_13 = arith.constant 0 : index
    %17 = vector.load %arg5[%c0_11, %c0_12, %c0_13] : memref<1x2176x512xbf16, #tpu.memory_space<vmem>>, vector<1x64x512xbf16>
    %18 = vector.shape_cast %17 : vector<1x64x512xbf16> to vector<64x512xbf16>
    %19 = vector.shape_cast %16 : vector<64x512xbf16> to vector<1x64x512xbf16>
    tpu.vector_store %arg5[%c0_11, %c0_12, %c0_13], %19 {strides = array<i32>} : memref<1x2176x512xbf16, #tpu.memory_space<vmem>>, vector<1x64x512xbf16>,
    %c4_i32_14 = arith.constant 4 : i32
    %20 = arith.addi %c4_i32_14, %0 : i32
    %c16_i32 = arith.constant 16 : i32
    %21 = arith.muli %20, %c16_i32 : i32
    %22 = tpu.assume_multiple %21, 16 : i32
    %cst_15 = arith.constant 0.000000e+00 : bf16
    %23 = vector.broadcast %cst_15 : bf16 to vector<64x512xbf16>
    %c0_16 = arith.constant 0 : index
    %24 = arith.index_cast %22 : i32 to index
    %c0_17 = arith.constant 0 : index
    %25 = vector.load %arg5[%c0_16, %24, %c0_17] : memref<1x2176x512xbf16, #tpu.memory_space<vmem>>, vector<1x64x512xbf16>
    %26 = vector.shape_cast %25 : vector<1x64x512xbf16> to vector<64x512xbf16>
    %27 = vector.shape_cast %23 : vector<64x512xbf16> to vector<1x64x512xbf16>
    tpu.vector_store %arg5[%c0_16, %24, %c0_17], %27 {strides = array<i32>} : memref<1x2176x512xbf16, #tpu.memory_space<vmem>>, vector<1x64x512xbf16>,
    %c0_i32 = arith.constant 0 : i32
    %c0_i32_18 = arith.constant 0 : i32
    %28 = arith.subi %0, %c0_i32_18 : i32
    %29 = arith.addi %c0_i32_18, %28 : i32
    %c1_i32 = arith.constant 1 : i32
    scf.for %arg6 = %c0_i32_18 to %29 step %c1_i32  : i32 {
      %c4_i32_19 = arith.constant 4 : i32
      %30 = arith.addi %c4_i32_19, %arg6 : i32
      %c0_i32_20 = arith.constant 0 : i32
      %31 = arith.subi %30, %c0_i32_20 : i32
      %c16_i32_21 = arith.constant 16 : i32
      %32 = arith.muli %31, %c16_i32_21 : i32
      %33 = tpu.assume_multiple %32, 16 : i32
      %c0_22 = arith.constant 0 : index
      %34 = arith.index_cast %33 : i32 to index
      %c0_23 = arith.constant 0 : index
      %35 = vector.load %arg2[%c0_22, %34, %c0_23] : memref<1x2176x512xbf16, #tpu.memory_space<vmem>>, vector<1x48x512xbf16>
      %36 = vector.shape_cast %35 : vector<1x48x512xbf16> to vector<48x512xbf16>
      %cst_24 = arith.constant 0.000000e+00 : f32
      %37 = vector.broadcast %cst_24 : f32 to vector<16x512xf32>
      %cst_25 = arith.constant dense<0.000000e+00> : vector<16x512xf32>
      %38 = tpu.matmul %3, %36, %cst_25 {dimension_numbers = #tpu.dot_dimension_numbers<[1], [0], [0], [1], [0, 0, 1, 1], [], []>} : vector<16x48xbf16>, vector<48x512xbf16>, vector<16x512xf32> -> vector<16x512xf32>
      %39 = arith.addf %37, %38 : vector<16x512xf32>
      %cst_26 = arith.constant dense<0.000000e+00> : vector<16x512xf32>
      %40 = tpu.matmul %5, %36, %cst_26 {dimension_numbers = #tpu.dot_dimension_numbers<[1], [0], [0], [1], [0, 0, 1, 1], [], []>} : vector<16x48xbf16>, vector<48x512xbf16>, vector<16x512xf32> -> vector<16x512xf32>
      %c511_i32 = arith.constant 511 : i32
      %41 = tpu.dynamic_rotate %40 by %c511_i32 dim 1 : vector<16x512xf32>, i32 -> vector<16x512xf32>
      %42 = arith.addf %39, %41 : vector<16x512xf32>
      %cst_27 = arith.constant dense<0.000000e+00> : vector<16x512xf32>
      %43 = tpu.matmul %7, %36, %cst_27 {dimension_numbers = #tpu.dot_dimension_numbers<[1], [0], [0], [1], [0, 0, 1, 1], [], []>} : vector<16x48xbf16>, vector<48x512xbf16>, vector<16x512xf32> -> vector<16x512xf32>
      %c510_i32 = arith.constant 510 : i32
      %44 = tpu.dynamic_rotate %43 by %c510_i32 dim 1 : vector<16x512xf32>, i32 -> vector<16x512xf32>
      %45 = arith.addf %42, %44 : vector<16x512xf32>
      %46 = vector.broadcast %8 : vector<16x1xf32> to vector<16x512xf32>
      %47 = arith.addf %45, %46 : vector<16x512xf32>
      %cst_28 = arith.constant 0.000000e+00 : f32
      %48 = vector.broadcast %cst_28 : f32 to vector<16x512xf32>
      %49 = arith.maximumf %47, %48 : vector<16x512xf32>
      %cst_29 = arith.constant 0.000000e+00 : f32
      %50 = vector.broadcast %cst_29 : f32 to vector<16x512xf32>
      %51 = arith.select %15, %49, %50 : vector<16x512xi1>, vector<16x512xf32>
      %52 = arith.truncf %51 : vector<16x512xf32> to vector<16x512xbf16>
      %c16_i32_30 = arith.constant 16 : i32
      %53 = arith.muli %30, %c16_i32_30 : i32
      %54 = tpu.assume_multiple %53, 16 : i32
      %c0_31 = arith.constant 0 : index
      %55 = arith.index_cast %54 : i32 to index
      %c0_32 = arith.constant 0 : index
      %56 = vector.load %arg5[%c0_31, %55, %c0_32] : memref<1x2176x512xbf16, #tpu.memory_space<vmem>>, vector<1x16x512xbf16>
      %57 = vector.shape_cast %56 : vector<1x16x512xbf16> to vector<16x512xbf16>
      %58 = vector.shape_cast %52 : vector<16x512xbf16> to vector<1x16x512xbf16>
      tpu.vector_store %arg5[%c0_31, %55, %c0_32], %58 {strides = array<i32>} : memref<1x2176x512xbf16, #tpu.memory_space<vmem>>, vector<1x16x512xbf16>,
    }
    return
  }
  func.func @transform_0(%arg0: i32, %arg1: memref<2xi32, #tpu.memory_space<smem>>) -> (i32, i32, i32) {
    %c0_i32 = arith.constant 0 : i32
    %c0_i32_0 = arith.constant 0 : i32
    %c0_i32_1 = arith.constant 0 : i32
    return %arg0, %c0_i32, %c0_i32_0 : i32, i32, i32
  }
  func.func @transform_1(%arg0: i32, %arg1: memref<2xi32, #tpu.memory_space<smem>>) -> (i32, i32, i32) {
    %c0_i32 = arith.constant 0 : i32
    %c0_i32_0 = arith.constant 0 : i32
    %c0_i32_1 = arith.constant 0 : i32
    %c0_i32_2 = arith.constant 0 : i32
    return %c0_i32, %c0_i32_0, %c0_i32_1 : i32, i32, i32
  }
  func.func @transform_2(%arg0: i32, %arg1: memref<2xi32, #tpu.memory_space<smem>>) -> (i32, i32) {
    %c0_i32 = arith.constant 0 : i32
    %c0_i32_0 = arith.constant 0 : i32
    %c0_i32_1 = arith.constant 0 : i32
    return %c0_i32, %c0_i32_0 : i32, i32
  }
  func.func @transform_3(%arg0: i32, %arg1: memref<2xi32, #tpu.memory_space<smem>>) -> (i32, i32, i32) {
    %c0_i32 = arith.constant 0 : i32
    %c0_i32_0 = arith.constant 0 : i32
    %c0_i32_1 = arith.constant 0 : i32
    return %arg0, %c0_i32, %c0_i32_0 : i32, i32, i32
  }
}

module attributes {stable_mosaic.version = 11 : i64} {
  func.func @_conv_canvas_kernel(%arg0: i32, %arg1: memref<2xi32, #tpu.memory_space<smem>>, %arg2: memref<1x2176x512xbf16, #tpu.memory_space<vmem>>, %arg3: memref<5x16x80xbf16, #tpu.memory_space<vmem>>, %arg4: memref<16x1xf32, #tpu.memory_space<vmem>>, %arg5: memref<1x2176x512xbf16, #tpu.memory_space<vmem>>) attributes {dimension_semantics = [#tpu.dimension_semantics<parallel>], iteration_bounds = array<i64: 1>, scalar_prefetch = 1 : i64, scratch_operands = 0 : i64, tpu.core_type = #tpu.core_type<tc>, window_params = [{transform_indices = @transform_0, window_bounds = array<i64: 1, 2176, 512>}, {pipeline_mode = #tpu.pipeline_mode<synchronous>, transform_indices = @transform_1, window_bounds = array<i64: 5, 16, 80>}, {pipeline_mode = #tpu.pipeline_mode<synchronous>, transform_indices = @transform_2, window_bounds = array<i64: 16, 1>}, {transform_indices = @transform_3, window_bounds = array<i64: 1, 2176, 512>}]} {
    %c0 = arith.constant 0 : index
    %0 = memref.load %arg1[%c0] : memref<2xi32, #tpu.memory_space<smem>>
    %c1 = arith.constant 1 : index
    %1 = memref.load %arg1[%c1] : memref<2xi32, #tpu.memory_space<smem>>
    %c0_0 = arith.constant 0 : index
    %c0_1 = arith.constant 0 : index
    %c0_2 = arith.constant 0 : index
    %2 = vector.load %arg3[%c0_0, %c0_1, %c0_2] : memref<5x16x80xbf16, #tpu.memory_space<vmem>>, vector<1x16x80xbf16>
    %3 = vector.shape_cast %2 : vector<1x16x80xbf16> to vector<16x80xbf16>
    %c1_3 = arith.constant 1 : index
    %c0_4 = arith.constant 0 : index
    %c0_5 = arith.constant 0 : index
    %4 = vector.load %arg3[%c1_3, %c0_4, %c0_5] : memref<5x16x80xbf16, #tpu.memory_space<vmem>>, vector<1x16x80xbf16>
    %5 = vector.shape_cast %4 : vector<1x16x80xbf16> to vector<16x80xbf16>
    %c2 = arith.constant 2 : index
    %c0_6 = arith.constant 0 : index
    %c0_7 = arith.constant 0 : index
    %6 = vector.load %arg3[%c2, %c0_6, %c0_7] : memref<5x16x80xbf16, #tpu.memory_space<vmem>>, vector<1x16x80xbf16>
    %7 = vector.shape_cast %6 : vector<1x16x80xbf16> to vector<16x80xbf16>
    %c3 = arith.constant 3 : index
    %c0_8 = arith.constant 0 : index
    %c0_9 = arith.constant 0 : index
    %8 = vector.load %arg3[%c3, %c0_8, %c0_9] : memref<5x16x80xbf16, #tpu.memory_space<vmem>>, vector<1x16x80xbf16>
    %9 = vector.shape_cast %8 : vector<1x16x80xbf16> to vector<16x80xbf16>
    %c4 = arith.constant 4 : index
    %c0_10 = arith.constant 0 : index
    %c0_11 = arith.constant 0 : index
    %10 = vector.load %arg3[%c4, %c0_10, %c0_11] : memref<5x16x80xbf16, #tpu.memory_space<vmem>>, vector<1x16x80xbf16>
    %11 = vector.shape_cast %10 : vector<1x16x80xbf16> to vector<16x80xbf16>
    %c0_12 = arith.constant 0 : index
    %c0_13 = arith.constant 0 : index
    %12 = vector.load %arg4[%c0_12, %c0_13] : memref<16x1xf32, #tpu.memory_space<vmem>>, vector<16x1xf32>
    %13 = tpu.iota {dimensions = array<i32: 1>} : vector<16x512xi32>
    %c4_i32 = arith.constant 4 : i32
    %14 = vector.broadcast %c4_i32 : i32 to vector<16x512xi32>
    %15 = arith.cmpi sge, %13, %14 : vector<16x512xi32>
    %c4_i32_14 = arith.constant 4 : i32
    %16 = arith.addi %c4_i32_14, %1 : i32
    %17 = vector.broadcast %16 : i32 to vector<16x512xi32>
    %18 = arith.cmpi slt, %13, %17 : vector<16x512xi32>
    %19 = arith.andi %15, %18 : vector<16x512xi1>
    %cst = arith.constant 0.000000e+00 : bf16
    %20 = vector.broadcast %cst : bf16 to vector<64x512xbf16>
    %c0_15 = arith.constant 0 : index
    %c0_16 = arith.constant 0 : index
    %c0_17 = arith.constant 0 : index
    %21 = vector.load %arg5[%c0_15, %c0_16, %c0_17] : memref<1x2176x512xbf16, #tpu.memory_space<vmem>>, vector<1x64x512xbf16>
    %22 = vector.shape_cast %21 : vector<1x64x512xbf16> to vector<64x512xbf16>
    %23 = vector.shape_cast %20 : vector<64x512xbf16> to vector<1x64x512xbf16>
    tpu.vector_store %arg5[%c0_15, %c0_16, %c0_17], %23 {strides = array<i32>} : memref<1x2176x512xbf16, #tpu.memory_space<vmem>>, vector<1x64x512xbf16>,
    %c4_i32_18 = arith.constant 4 : i32
    %24 = arith.addi %c4_i32_18, %0 : i32
    %c16_i32 = arith.constant 16 : i32
    %25 = arith.muli %24, %c16_i32 : i32
    %26 = tpu.assume_multiple %25, 16 : i32
    %cst_19 = arith.constant 0.000000e+00 : bf16
    %27 = vector.broadcast %cst_19 : bf16 to vector<64x512xbf16>
    %c0_20 = arith.constant 0 : index
    %28 = arith.index_cast %26 : i32 to index
    %c0_21 = arith.constant 0 : index
    %29 = vector.load %arg5[%c0_20, %28, %c0_21] : memref<1x2176x512xbf16, #tpu.memory_space<vmem>>, vector<1x64x512xbf16>
    %30 = vector.shape_cast %29 : vector<1x64x512xbf16> to vector<64x512xbf16>
    %31 = vector.shape_cast %27 : vector<64x512xbf16> to vector<1x64x512xbf16>
    tpu.vector_store %arg5[%c0_20, %28, %c0_21], %31 {strides = array<i32>} : memref<1x2176x512xbf16, #tpu.memory_space<vmem>>, vector<1x64x512xbf16>,
    %c0_i32 = arith.constant 0 : i32
    %c0_i32_22 = arith.constant 0 : i32
    %32 = arith.subi %0, %c0_i32_22 : i32
    %33 = arith.addi %c0_i32_22, %32 : i32
    %c1_i32 = arith.constant 1 : i32
    scf.for %arg6 = %c0_i32_22 to %33 step %c1_i32  : i32 {
      %c4_i32_23 = arith.constant 4 : i32
      %34 = arith.addi %c4_i32_23, %arg6 : i32
      %c0_i32_24 = arith.constant 0 : i32
      %35 = arith.subi %34, %c0_i32_24 : i32
      %c16_i32_25 = arith.constant 16 : i32
      %36 = arith.muli %35, %c16_i32_25 : i32
      %37 = tpu.assume_multiple %36, 16 : i32
      %c0_26 = arith.constant 0 : index
      %38 = arith.index_cast %37 : i32 to index
      %c0_27 = arith.constant 0 : index
      %39 = vector.load %arg2[%c0_26, %38, %c0_27] : memref<1x2176x512xbf16, #tpu.memory_space<vmem>>, vector<1x80x512xbf16>
      %40 = vector.shape_cast %39 : vector<1x80x512xbf16> to vector<80x512xbf16>
      %cst_28 = arith.constant 0.000000e+00 : f32
      %41 = vector.broadcast %cst_28 : f32 to vector<16x512xf32>
      %cst_29 = arith.constant dense<0.000000e+00> : vector<16x512xf32>
      %42 = tpu.matmul %3, %40, %cst_29 {dimension_numbers = #tpu.dot_dimension_numbers<[1], [0], [0], [1], [0, 0, 1, 1], [], []>} : vector<16x80xbf16>, vector<80x512xbf16>, vector<16x512xf32> -> vector<16x512xf32>
      %43 = arith.addf %41, %42 : vector<16x512xf32>
      %cst_30 = arith.constant dense<0.000000e+00> : vector<16x512xf32>
      %44 = tpu.matmul %5, %40, %cst_30 {dimension_numbers = #tpu.dot_dimension_numbers<[1], [0], [0], [1], [0, 0, 1, 1], [], []>} : vector<16x80xbf16>, vector<80x512xbf16>, vector<16x512xf32> -> vector<16x512xf32>
      %c511_i32 = arith.constant 511 : i32
      %45 = tpu.dynamic_rotate %44 by %c511_i32 dim 1 : vector<16x512xf32>, i32 -> vector<16x512xf32>
      %46 = arith.addf %43, %45 : vector<16x512xf32>
      %cst_31 = arith.constant dense<0.000000e+00> : vector<16x512xf32>
      %47 = tpu.matmul %7, %40, %cst_31 {dimension_numbers = #tpu.dot_dimension_numbers<[1], [0], [0], [1], [0, 0, 1, 1], [], []>} : vector<16x80xbf16>, vector<80x512xbf16>, vector<16x512xf32> -> vector<16x512xf32>
      %c510_i32 = arith.constant 510 : i32
      %48 = tpu.dynamic_rotate %47 by %c510_i32 dim 1 : vector<16x512xf32>, i32 -> vector<16x512xf32>
      %49 = arith.addf %46, %48 : vector<16x512xf32>
      %cst_32 = arith.constant dense<0.000000e+00> : vector<16x512xf32>
      %50 = tpu.matmul %9, %40, %cst_32 {dimension_numbers = #tpu.dot_dimension_numbers<[1], [0], [0], [1], [0, 0, 1, 1], [], []>} : vector<16x80xbf16>, vector<80x512xbf16>, vector<16x512xf32> -> vector<16x512xf32>
      %c509_i32 = arith.constant 509 : i32
      %51 = tpu.dynamic_rotate %50 by %c509_i32 dim 1 : vector<16x512xf32>, i32 -> vector<16x512xf32>
      %52 = arith.addf %49, %51 : vector<16x512xf32>
      %cst_33 = arith.constant dense<0.000000e+00> : vector<16x512xf32>
      %53 = tpu.matmul %11, %40, %cst_33 {dimension_numbers = #tpu.dot_dimension_numbers<[1], [0], [0], [1], [0, 0, 1, 1], [], []>} : vector<16x80xbf16>, vector<80x512xbf16>, vector<16x512xf32> -> vector<16x512xf32>
      %c508_i32 = arith.constant 508 : i32
      %54 = tpu.dynamic_rotate %53 by %c508_i32 dim 1 : vector<16x512xf32>, i32 -> vector<16x512xf32>
      %55 = arith.addf %52, %54 : vector<16x512xf32>
      %56 = vector.broadcast %12 : vector<16x1xf32> to vector<16x512xf32>
      %57 = arith.addf %55, %56 : vector<16x512xf32>
      %cst_34 = arith.constant 0.000000e+00 : f32
      %58 = vector.broadcast %cst_34 : f32 to vector<16x512xf32>
      %59 = arith.maximumf %57, %58 : vector<16x512xf32>
      %cst_35 = arith.constant 0.000000e+00 : f32
      %60 = vector.broadcast %cst_35 : f32 to vector<16x512xf32>
      %61 = arith.select %19, %59, %60 : vector<16x512xi1>, vector<16x512xf32>
      %62 = arith.truncf %61 : vector<16x512xf32> to vector<16x512xbf16>
      %c16_i32_36 = arith.constant 16 : i32
      %63 = arith.muli %34, %c16_i32_36 : i32
      %64 = tpu.assume_multiple %63, 16 : i32
      %c0_37 = arith.constant 0 : index
      %65 = arith.index_cast %64 : i32 to index
      %c0_38 = arith.constant 0 : index
      %66 = vector.load %arg5[%c0_37, %65, %c0_38] : memref<1x2176x512xbf16, #tpu.memory_space<vmem>>, vector<1x16x512xbf16>
      %67 = vector.shape_cast %66 : vector<1x16x512xbf16> to vector<16x512xbf16>
      %68 = vector.shape_cast %62 : vector<16x512xbf16> to vector<1x16x512xbf16>
      tpu.vector_store %arg5[%c0_37, %65, %c0_38], %68 {strides = array<i32>} : memref<1x2176x512xbf16, #tpu.memory_space<vmem>>, vector<1x16x512xbf16>,
    }
    return
  }
  func.func @transform_0(%arg0: i32, %arg1: memref<2xi32, #tpu.memory_space<smem>>) -> (i32, i32, i32) {
    %c0_i32 = arith.constant 0 : i32
    %c0_i32_0 = arith.constant 0 : i32
    %c0_i32_1 = arith.constant 0 : i32
    return %arg0, %c0_i32, %c0_i32_0 : i32, i32, i32
  }
  func.func @transform_1(%arg0: i32, %arg1: memref<2xi32, #tpu.memory_space<smem>>) -> (i32, i32, i32) {
    %c0_i32 = arith.constant 0 : i32
    %c0_i32_0 = arith.constant 0 : i32
    %c0_i32_1 = arith.constant 0 : i32
    %c0_i32_2 = arith.constant 0 : i32
    return %c0_i32, %c0_i32_0, %c0_i32_1 : i32, i32, i32
  }
  func.func @transform_2(%arg0: i32, %arg1: memref<2xi32, #tpu.memory_space<smem>>) -> (i32, i32) {
    %c0_i32 = arith.constant 0 : i32
    %c0_i32_0 = arith.constant 0 : i32
    %c0_i32_1 = arith.constant 0 : i32
    return %c0_i32, %c0_i32_0 : i32, i32
  }
  func.func @transform_3(%arg0: i32, %arg1: memref<2xi32, #tpu.memory_space<smem>>) -> (i32, i32, i32) {
    %c0_i32 = arith.constant 0 : i32
    %c0_i32_0 = arith.constant 0 : i32
    %c0_i32_1 = arith.constant 0 : i32
    return %arg0, %c0_i32, %c0_i32_0 : i32, i32, i32
  }
}

module attributes {stable_mosaic.version = 11 : i64} {
  func.func @_conv_canvas_kernel(%arg0: i32, %arg1: memref<2xi32, #tpu.memory_space<smem>>, %arg2: memref<1x896x384xbf16, #tpu.memory_space<vmem>>, %arg3: memref<3x16x48xbf16, #tpu.memory_space<vmem>>, %arg4: memref<16x1xf32, #tpu.memory_space<vmem>>, %arg5: memref<1x896x384xbf16, #tpu.memory_space<vmem>>) attributes {dimension_semantics = [#tpu.dimension_semantics<parallel>], iteration_bounds = array<i64: 1>, scalar_prefetch = 1 : i64, scratch_operands = 0 : i64, tpu.core_type = #tpu.core_type<tc>, window_params = [{transform_indices = @transform_0, window_bounds = array<i64: 1, 896, 384>}, {pipeline_mode = #tpu.pipeline_mode<synchronous>, transform_indices = @transform_1, window_bounds = array<i64: 3, 16, 48>}, {pipeline_mode = #tpu.pipeline_mode<synchronous>, transform_indices = @transform_2, window_bounds = array<i64: 16, 1>}, {transform_indices = @transform_3, window_bounds = array<i64: 1, 896, 384>}]} {
    %c0 = arith.constant 0 : index
    %0 = memref.load %arg1[%c0] : memref<2xi32, #tpu.memory_space<smem>>
    %c1 = arith.constant 1 : index
    %1 = memref.load %arg1[%c1] : memref<2xi32, #tpu.memory_space<smem>>
    %c0_0 = arith.constant 0 : index
    %c0_1 = arith.constant 0 : index
    %c0_2 = arith.constant 0 : index
    %2 = vector.load %arg3[%c0_0, %c0_1, %c0_2] : memref<3x16x48xbf16, #tpu.memory_space<vmem>>, vector<1x16x48xbf16>
    %3 = vector.shape_cast %2 : vector<1x16x48xbf16> to vector<16x48xbf16>
    %c1_3 = arith.constant 1 : index
    %c0_4 = arith.constant 0 : index
    %c0_5 = arith.constant 0 : index
    %4 = vector.load %arg3[%c1_3, %c0_4, %c0_5] : memref<3x16x48xbf16, #tpu.memory_space<vmem>>, vector<1x16x48xbf16>
    %5 = vector.shape_cast %4 : vector<1x16x48xbf16> to vector<16x48xbf16>
    %c2 = arith.constant 2 : index
    %c0_6 = arith.constant 0 : index
    %c0_7 = arith.constant 0 : index
    %6 = vector.load %arg3[%c2, %c0_6, %c0_7] : memref<3x16x48xbf16, #tpu.memory_space<vmem>>, vector<1x16x48xbf16>
    %7 = vector.shape_cast %6 : vector<1x16x48xbf16> to vector<16x48xbf16>
    %c0_8 = arith.constant 0 : index
    %c0_9 = arith.constant 0 : index
    %8 = vector.load %arg4[%c0_8, %c0_9] : memref<16x1xf32, #tpu.memory_space<vmem>>, vector<16x1xf32>
    %9 = tpu.iota {dimensions = array<i32: 1>} : vector<16x384xi32>
    %c4_i32 = arith.constant 4 : i32
    %10 = vector.broadcast %c4_i32 : i32 to vector<16x384xi32>
    %11 = arith.cmpi sge, %9, %10 : vector<16x384xi32>
    %c4_i32_10 = arith.constant 4 : i32
    %12 = arith.addi %c4_i32_10, %1 : i32
    %13 = vector.broadcast %12 : i32 to vector<16x384xi32>
    %14 = arith.cmpi slt, %9, %13 : vector<16x384xi32>
    %15 = arith.andi %11, %14 : vector<16x384xi1>
    %cst = arith.constant 0.000000e+00 : bf16
    %16 = vector.broadcast %cst : bf16 to vector<64x384xbf16>
    %c0_11 = arith.constant 0 : index
    %c0_12 = arith.constant 0 : index
    %c0_13 = arith.constant 0 : index
    %17 = vector.load %arg5[%c0_11, %c0_12, %c0_13] : memref<1x896x384xbf16, #tpu.memory_space<vmem>>, vector<1x64x384xbf16>
    %18 = vector.shape_cast %17 : vector<1x64x384xbf16> to vector<64x384xbf16>
    %19 = vector.shape_cast %16 : vector<64x384xbf16> to vector<1x64x384xbf16>
    tpu.vector_store %arg5[%c0_11, %c0_12, %c0_13], %19 {strides = array<i32>} : memref<1x896x384xbf16, #tpu.memory_space<vmem>>, vector<1x64x384xbf16>,
    %c4_i32_14 = arith.constant 4 : i32
    %20 = arith.addi %c4_i32_14, %0 : i32
    %c16_i32 = arith.constant 16 : i32
    %21 = arith.muli %20, %c16_i32 : i32
    %22 = tpu.assume_multiple %21, 16 : i32
    %cst_15 = arith.constant 0.000000e+00 : bf16
    %23 = vector.broadcast %cst_15 : bf16 to vector<64x384xbf16>
    %c0_16 = arith.constant 0 : index
    %24 = arith.index_cast %22 : i32 to index
    %c0_17 = arith.constant 0 : index
    %25 = vector.load %arg5[%c0_16, %24, %c0_17] : memref<1x896x384xbf16, #tpu.memory_space<vmem>>, vector<1x64x384xbf16>
    %26 = vector.shape_cast %25 : vector<1x64x384xbf16> to vector<64x384xbf16>
    %27 = vector.shape_cast %23 : vector<64x384xbf16> to vector<1x64x384xbf16>
    tpu.vector_store %arg5[%c0_16, %24, %c0_17], %27 {strides = array<i32>} : memref<1x896x384xbf16, #tpu.memory_space<vmem>>, vector<1x64x384xbf16>,
    %c0_i32 = arith.constant 0 : i32
    %c0_i32_18 = arith.constant 0 : i32
    %28 = arith.subi %0, %c0_i32_18 : i32
    %29 = arith.addi %c0_i32_18, %28 : i32
    %c1_i32 = arith.constant 1 : i32
    scf.for %arg6 = %c0_i32_18 to %29 step %c1_i32  : i32 {
      %c4_i32_19 = arith.constant 4 : i32
      %30 = arith.addi %c4_i32_19, %arg6 : i32
      %c1_i32_20 = arith.constant 1 : i32
      %31 = arith.subi %30, %c1_i32_20 : i32
      %c16_i32_21 = arith.constant 16 : i32
      %32 = arith.muli %31, %c16_i32_21 : i32
      %33 = tpu.assume_multiple %32, 16 : i32
      %c0_22 = arith.constant 0 : index
      %34 = arith.index_cast %33 : i32 to index
      %c0_23 = arith.constant 0 : index
      %35 = vector.load %arg2[%c0_22, %34, %c0_23] : memref<1x896x384xbf16, #tpu.memory_space<vmem>>, vector<1x48x384xbf16>
      %36 = vector.shape_cast %35 : vector<1x48x384xbf16> to vector<48x384xbf16>
      %cst_24 = arith.constant 0.000000e+00 : f32
      %37 = vector.broadcast %cst_24 : f32 to vector<16x384xf32>
      %cst_25 = arith.constant dense<0.000000e+00> : vector<16x384xf32>
      %38 = tpu.matmul %3, %36, %cst_25 {dimension_numbers = #tpu.dot_dimension_numbers<[1], [0], [0], [1], [0, 0, 1, 1], [], []>} : vector<16x48xbf16>, vector<48x384xbf16>, vector<16x384xf32> -> vector<16x384xf32>
      %c1_i32_26 = arith.constant 1 : i32
      %39 = tpu.dynamic_rotate %38 by %c1_i32_26 dim 1 : vector<16x384xf32>, i32 -> vector<16x384xf32>
      %40 = arith.addf %37, %39 : vector<16x384xf32>
      %cst_27 = arith.constant dense<0.000000e+00> : vector<16x384xf32>
      %41 = tpu.matmul %5, %36, %cst_27 {dimension_numbers = #tpu.dot_dimension_numbers<[1], [0], [0], [1], [0, 0, 1, 1], [], []>} : vector<16x48xbf16>, vector<48x384xbf16>, vector<16x384xf32> -> vector<16x384xf32>
      %42 = arith.addf %40, %41 : vector<16x384xf32>
      %cst_28 = arith.constant dense<0.000000e+00> : vector<16x384xf32>
      %43 = tpu.matmul %7, %36, %cst_28 {dimension_numbers = #tpu.dot_dimension_numbers<[1], [0], [0], [1], [0, 0, 1, 1], [], []>} : vector<16x48xbf16>, vector<48x384xbf16>, vector<16x384xf32> -> vector<16x384xf32>
      %c383_i32 = arith.constant 383 : i32
      %44 = tpu.dynamic_rotate %43 by %c383_i32 dim 1 : vector<16x384xf32>, i32 -> vector<16x384xf32>
      %45 = arith.addf %42, %44 : vector<16x384xf32>
      %46 = vector.broadcast %8 : vector<16x1xf32> to vector<16x384xf32>
      %47 = arith.addf %45, %46 : vector<16x384xf32>
      %cst_29 = arith.constant 0.000000e+00 : f32
      %48 = vector.broadcast %cst_29 : f32 to vector<16x384xf32>
      %49 = arith.maximumf %47, %48 : vector<16x384xf32>
      %cst_30 = arith.constant 0.000000e+00 : f32
      %50 = vector.broadcast %cst_30 : f32 to vector<16x384xf32>
      %51 = arith.select %15, %49, %50 : vector<16x384xi1>, vector<16x384xf32>
      %52 = arith.truncf %51 : vector<16x384xf32> to vector<16x384xbf16>
      %c16_i32_31 = arith.constant 16 : i32
      %53 = arith.muli %30, %c16_i32_31 : i32
      %54 = tpu.assume_multiple %53, 16 : i32
      %c0_32 = arith.constant 0 : index
      %55 = arith.index_cast %54 : i32 to index
      %c0_33 = arith.constant 0 : index
      %56 = vector.load %arg5[%c0_32, %55, %c0_33] : memref<1x896x384xbf16, #tpu.memory_space<vmem>>, vector<1x16x384xbf16>
      %57 = vector.shape_cast %56 : vector<1x16x384xbf16> to vector<16x384xbf16>
      %58 = vector.shape_cast %52 : vector<16x384xbf16> to vector<1x16x384xbf16>
      tpu.vector_store %arg5[%c0_32, %55, %c0_33], %58 {strides = array<i32>} : memref<1x896x384xbf16, #tpu.memory_space<vmem>>, vector<1x16x384xbf16>,
    }
    return
  }
  func.func @transform_0(%arg0: i32, %arg1: memref<2xi32, #tpu.memory_space<smem>>) -> (i32, i32, i32) {
    %c0_i32 = arith.constant 0 : i32
    %c0_i32_0 = arith.constant 0 : i32
    %c0_i32_1 = arith.constant 0 : i32
    return %arg0, %c0_i32, %c0_i32_0 : i32, i32, i32
  }
  func.func @transform_1(%arg0: i32, %arg1: memref<2xi32, #tpu.memory_space<smem>>) -> (i32, i32, i32) {
    %c0_i32 = arith.constant 0 : i32
    %c0_i32_0 = arith.constant 0 : i32
    %c0_i32_1 = arith.constant 0 : i32
    %c0_i32_2 = arith.constant 0 : i32
    return %c0_i32, %c0_i32_0, %c0_i32_1 : i32, i32, i32
  }
  func.func @transform_2(%arg0: i32, %arg1: memref<2xi32, #tpu.memory_space<smem>>) -> (i32, i32) {
    %c0_i32 = arith.constant 0 : i32
    %c0_i32_0 = arith.constant 0 : i32
    %c0_i32_1 = arith.constant 0 : i32
    return %c0_i32, %c0_i32_0 : i32, i32
  }
  func.func @transform_3(%arg0: i32, %arg1: memref<2xi32, #tpu.memory_space<smem>>) -> (i32, i32, i32) {
    %c0_i32 = arith.constant 0 : i32
    %c0_i32_0 = arith.constant 0 : i32
    %c0_i32_1 = arith.constant 0 : i32
    return %arg0, %c0_i32, %c0_i32_0 : i32, i32, i32
  }
}

module attributes {stable_mosaic.version = 11 : i64} {
  func.func @_conv_in_res_kernel(%arg0: i32, %arg1: memref<2xi32, #tpu.memory_space<smem>>, %arg2: memref<1x896x384xbf16, #tpu.memory_space<vmem>>, %arg3: memref<1x896x384xbf16, #tpu.memory_space<vmem>>, %arg4: memref<3x16x48xbf16, #tpu.memory_space<vmem>>, %arg5: memref<16x1xf32, #tpu.memory_space<vmem>>, %arg6: memref<16x1xf32, #tpu.memory_space<vmem>>, %arg7: memref<16x1xf32, #tpu.memory_space<vmem>>, %arg8: memref<1x896x384xbf16, #tpu.memory_space<vmem>>) attributes {dimension_semantics = [#tpu.dimension_semantics<parallel>], iteration_bounds = array<i64: 1>, scalar_prefetch = 1 : i64, scratch_operands = 0 : i64, tpu.core_type = #tpu.core_type<tc>, window_params = [{transform_indices = @transform_0, window_bounds = array<i64: 1, 896, 384>}, {transform_indices = @transform_1, window_bounds = array<i64: 1, 896, 384>}, {pipeline_mode = #tpu.pipeline_mode<synchronous>, transform_indices = @transform_2, window_bounds = array<i64: 3, 16, 48>}, {pipeline_mode = #tpu.pipeline_mode<synchronous>, transform_indices = @transform_3, window_bounds = array<i64: 16, 1>}, {pipeline_mode = #tpu.pipeline_mode<synchronous>, transform_indices = @transform_4, window_bounds = array<i64: 16, 1>}, {pipeline_mode = #tpu.pipeline_mode<synchronous>, transform_indices = @transform_5, window_bounds = array<i64: 16, 1>}, {transform_indices = @transform_6, window_bounds = array<i64: 1, 896, 384>}]} {
    %c0 = arith.constant 0 : index
    %0 = memref.load %arg1[%c0] : memref<2xi32, #tpu.memory_space<smem>>
    %c1 = arith.constant 1 : index
    %1 = memref.load %arg1[%c1] : memref<2xi32, #tpu.memory_space<smem>>
    %c0_0 = arith.constant 0 : index
    %c0_1 = arith.constant 0 : index
    %c0_2 = arith.constant 0 : index
    %2 = vector.load %arg4[%c0_0, %c0_1, %c0_2] : memref<3x16x48xbf16, #tpu.memory_space<vmem>>, vector<1x16x48xbf16>
    %3 = vector.shape_cast %2 : vector<1x16x48xbf16> to vector<16x48xbf16>
    %c1_3 = arith.constant 1 : index
    %c0_4 = arith.constant 0 : index
    %c0_5 = arith.constant 0 : index
    %4 = vector.load %arg4[%c1_3, %c0_4, %c0_5] : memref<3x16x48xbf16, #tpu.memory_space<vmem>>, vector<1x16x48xbf16>
    %5 = vector.shape_cast %4 : vector<1x16x48xbf16> to vector<16x48xbf16>
    %c2 = arith.constant 2 : index
    %c0_6 = arith.constant 0 : index
    %c0_7 = arith.constant 0 : index
    %6 = vector.load %arg4[%c2, %c0_6, %c0_7] : memref<3x16x48xbf16, #tpu.memory_space<vmem>>, vector<1x16x48xbf16>
    %7 = vector.shape_cast %6 : vector<1x16x48xbf16> to vector<16x48xbf16>
    %c0_8 = arith.constant 0 : index
    %c0_9 = arith.constant 0 : index
    %8 = vector.load %arg5[%c0_8, %c0_9] : memref<16x1xf32, #tpu.memory_space<vmem>>, vector<16x1xf32>
    %9 = tpu.iota {dimensions = array<i32: 1>} : vector<16x384xi32>
    %c4_i32 = arith.constant 4 : i32
    %10 = vector.broadcast %c4_i32 : i32 to vector<16x384xi32>
    %11 = arith.cmpi sge, %9, %10 : vector<16x384xi32>
    %c4_i32_10 = arith.constant 4 : i32
    %12 = arith.addi %c4_i32_10, %1 : i32
    %13 = vector.broadcast %12 : i32 to vector<16x384xi32>
    %14 = arith.cmpi slt, %9, %13 : vector<16x384xi32>
    %15 = arith.andi %11, %14 : vector<16x384xi1>
    %16 = arith.extui %15 : vector<16x384xi1> to vector<16x384xi32>
    %17 = arith.sitofp %16 : vector<16x384xi32> to vector<16x384xf32>
    %cst = arith.constant 0.000000e+00 : bf16
    %18 = vector.broadcast %cst : bf16 to vector<64x384xbf16>
    %c0_11 = arith.constant 0 : index
    %c0_12 = arith.constant 0 : index
    %c0_13 = arith.constant 0 : index
    %19 = vector.load %arg8[%c0_11, %c0_12, %c0_13] : memref<1x896x384xbf16, #tpu.memory_space<vmem>>, vector<1x64x384xbf16>
    %20 = vector.shape_cast %19 : vector<1x64x384xbf16> to vector<64x384xbf16>
    %21 = vector.shape_cast %18 : vector<64x384xbf16> to vector<1x64x384xbf16>
    tpu.vector_store %arg8[%c0_11, %c0_12, %c0_13], %21 {strides = array<i32>} : memref<1x896x384xbf16, #tpu.memory_space<vmem>>, vector<1x64x384xbf16>,
    %c4_i32_14 = arith.constant 4 : i32
    %22 = arith.addi %c4_i32_14, %0 : i32
    %c16_i32 = arith.constant 16 : i32
    %23 = arith.muli %22, %c16_i32 : i32
    %24 = tpu.assume_multiple %23, 16 : i32
    %cst_15 = arith.constant 0.000000e+00 : bf16
    %25 = vector.broadcast %cst_15 : bf16 to vector<64x384xbf16>
    %c0_16 = arith.constant 0 : index
    %26 = arith.index_cast %24 : i32 to index
    %c0_17 = arith.constant 0 : index
    %27 = vector.load %arg8[%c0_16, %26, %c0_17] : memref<1x896x384xbf16, #tpu.memory_space<vmem>>, vector<1x64x384xbf16>
    %28 = vector.shape_cast %27 : vector<1x64x384xbf16> to vector<64x384xbf16>
    %29 = vector.shape_cast %25 : vector<64x384xbf16> to vector<1x64x384xbf16>
    tpu.vector_store %arg8[%c0_16, %26, %c0_17], %29 {strides = array<i32>} : memref<1x896x384xbf16, #tpu.memory_space<vmem>>, vector<1x64x384xbf16>,
    %cst_18 = arith.constant 0.000000e+00 : f32
    %30 = vector.broadcast %cst_18 : f32 to vector<16x1xf32>
    %cst_19 = arith.constant 0.000000e+00 : f32
    %31 = vector.broadcast %cst_19 : f32 to vector<16x1xf32>
    %c0_i32 = arith.constant 0 : i32
    %32 = arith.subi %0, %c0_i32 : i32
    %33 = arith.addi %c0_i32, %32 : i32
    %c1_i32 = arith.constant 1 : i32
    %34:2 = scf.for %arg9 = %c0_i32 to %33 step %c1_i32 iter_args(%arg10 = %30, %arg11 = %31) -> (vector<16x1xf32>, vector<16x1xf32>)  : i32 {
      %c4_i32_28 = arith.constant 4 : i32
      %53 = arith.addi %c4_i32_28, %arg9 : i32
      %c1_i32_29 = arith.constant 1 : i32
      %54 = arith.subi %53, %c1_i32_29 : i32
      %c16_i32_30 = arith.constant 16 : i32
      %55 = arith.muli %54, %c16_i32_30 : i32
      %56 = tpu.assume_multiple %55, 16 : i32
      %c0_31 = arith.constant 0 : index
      %57 = arith.index_cast %56 : i32 to index
      %c0_32 = arith.constant 0 : index
      %58 = vector.load %arg2[%c0_31, %57, %c0_32] : memref<1x896x384xbf16, #tpu.memory_space<vmem>>, vector<1x48x384xbf16>
      %59 = vector.shape_cast %58 : vector<1x48x384xbf16> to vector<48x384xbf16>
      %cst_33 = arith.constant 0.000000e+00 : f32
      %60 = vector.broadcast %cst_33 : f32 to vector<16x384xf32>
      %cst_34 = arith.constant dense<0.000000e+00> : vector<16x384xf32>
      %61 = tpu.matmul %3, %59, %cst_34 {dimension_numbers = #tpu.dot_dimension_numbers<[1], [0], [0], [1], [0, 0, 1, 1], [], []>} : vector<16x48xbf16>, vector<48x384xbf16>, vector<16x384xf32> -> vector<16x384xf32>
      %c1_i32_35 = arith.constant 1 : i32
      %62 = tpu.dynamic_rotate %61 by %c1_i32_35 dim 1 : vector<16x384xf32>, i32 -> vector<16x384xf32>
      %63 = arith.addf %60, %62 : vector<16x384xf32>
      %cst_36 = arith.constant dense<0.000000e+00> : vector<16x384xf32>
      %64 = tpu.matmul %5, %59, %cst_36 {dimension_numbers = #tpu.dot_dimension_numbers<[1], [0], [0], [1], [0, 0, 1, 1], [], []>} : vector<16x48xbf16>, vector<48x384xbf16>, vector<16x384xf32> -> vector<16x384xf32>
      %65 = arith.addf %63, %64 : vector<16x384xf32>
      %cst_37 = arith.constant dense<0.000000e+00> : vector<16x384xf32>
      %66 = tpu.matmul %7, %59, %cst_37 {dimension_numbers = #tpu.dot_dimension_numbers<[1], [0], [0], [1], [0, 0, 1, 1], [], []>} : vector<16x48xbf16>, vector<48x384xbf16>, vector<16x384xf32> -> vector<16x384xf32>
      %c383_i32 = arith.constant 383 : i32
      %67 = tpu.dynamic_rotate %66 by %c383_i32 dim 1 : vector<16x384xf32>, i32 -> vector<16x384xf32>
      %68 = arith.addf %65, %67 : vector<16x384xf32>
      %69 = vector.broadcast %8 : vector<16x1xf32> to vector<16x384xf32>
      %70 = arith.addf %68, %69 : vector<16x384xf32>
      %71 = arith.mulf %70, %17 : vector<16x384xf32>
      %cst_38 = arith.constant dense<0.000000e+00> : vector<16xf32>
      %72 = vector.multi_reduction <add>, %71, %cst_38 [1] : vector<16x384xf32> to vector<16xf32>
      %73 = vector.shape_cast %72 : vector<16xf32> to vector<16x1xf32>
      %74 = arith.addf %arg10, %73 : vector<16x1xf32>
      %75 = arith.mulf %71, %71 : vector<16x384xf32>
      %cst_39 = arith.constant dense<0.000000e+00> : vector<16xf32>
      %76 = vector.multi_reduction <add>, %75, %cst_39 [1] : vector<16x384xf32> to vector<16xf32>
      %77 = vector.shape_cast %76 : vector<16xf32> to vector<16x1xf32>
      %78 = arith.addf %arg11, %77 : vector<16x1xf32>
      %79 = arith.truncf %71 : vector<16x384xf32> to vector<16x384xbf16>
      %c16_i32_40 = arith.constant 16 : i32
      %80 = arith.muli %53, %c16_i32_40 : i32
      %81 = tpu.assume_multiple %80, 16 : i32
      %c0_41 = arith.constant 0 : index
      %82 = arith.index_cast %81 : i32 to index
      %c0_42 = arith.constant 0 : index
      %83 = vector.load %arg8[%c0_41, %82, %c0_42] : memref<1x896x384xbf16, #tpu.memory_space<vmem>>, vector<1x16x384xbf16>
      %84 = vector.shape_cast %83 : vector<1x16x384xbf16> to vector<16x384xbf16>
      %85 = vector.shape_cast %79 : vector<16x384xbf16> to vector<1x16x384xbf16>
      tpu.vector_store %arg8[%c0_41, %82, %c0_42], %85 {strides = array<i32>} : memref<1x896x384xbf16, #tpu.memory_space<vmem>>, vector<1x16x384xbf16>,
      scf.yield %74, %78 : vector<16x1xf32>, vector<16x1xf32>
    }
    %35 = arith.muli %0, %1 : i32
    %36 = arith.sitofp %35 : i32 to f32
    %37 = vector.broadcast %36 : f32 to vector<16x1xf32>
    %38 = arith.divf %34#0, %37 : vector<16x1xf32>
    %39 = vector.broadcast %36 : f32 to vector<16x1xf32>
    %40 = arith.divf %34#1, %39 : vector<16x1xf32>
    %41 = arith.mulf %38, %38 : vector<16x1xf32>
    %42 = arith.subf %40, %41 : vector<16x1xf32>
    %cst_20 = arith.constant 9.99999974E-6 : f32
    %43 = vector.broadcast %cst_20 : f32 to vector<16x1xf32>
    %44 = arith.addf %42, %43 : vector<16x1xf32>
    %45 = math.rsqrt %44 : vector<16x1xf32>
    %c0_21 = arith.constant 0 : index
    %c0_22 = arith.constant 0 : index
    %46 = vector.load %arg6[%c0_21, %c0_22] : memref<16x1xf32, #tpu.memory_space<vmem>>, vector<16x1xf32>
    %47 = arith.mulf %46, %45 : vector<16x1xf32>
    %c0_23 = arith.constant 0 : index
    %c0_24 = arith.constant 0 : index
    %48 = vector.load %arg7[%c0_23, %c0_24] : memref<16x1xf32, #tpu.memory_space<vmem>>, vector<16x1xf32>
    %49 = arith.mulf %38, %47 : vector<16x1xf32>
    %50 = arith.subf %48, %49 : vector<16x1xf32>
    %c0_i32_25 = arith.constant 0 : i32
    %c0_i32_26 = arith.constant 0 : i32
    %51 = arith.subi %0, %c0_i32_26 : i32
    %52 = arith.addi %c0_i32_26, %51 : i32
    %c1_i32_27 = arith.constant 1 : i32
    scf.for %arg9 = %c0_i32_26 to %52 step %c1_i32_27  : i32 {
      %c4_i32_28 = arith.constant 4 : i32
      %53 = arith.addi %c4_i32_28, %arg9 : i32
      %c16_i32_29 = arith.constant 16 : i32
      %54 = arith.muli %53, %c16_i32_29 : i32
      %55 = tpu.assume_multiple %54, 16 : i32
      %c0_30 = arith.constant 0 : index
      %56 = arith.index_cast %55 : i32 to index
      %c0_31 = arith.constant 0 : index
      %57 = vector.load %arg8[%c0_30, %56, %c0_31] : memref<1x896x384xbf16, #tpu.memory_space<vmem>>, vector<1x16x384xbf16>
      %58 = vector.shape_cast %57 : vector<1x16x384xbf16> to vector<16x384xbf16>
      %59 = arith.extf %58 : vector<16x384xbf16> to vector<16x384xf32>
      %c0_32 = arith.constant 0 : index
      %60 = arith.index_cast %55 : i32 to index
      %c0_33 = arith.constant 0 : index
      %61 = vector.load %arg3[%c0_32, %60, %c0_33] : memref<1x896x384xbf16, #tpu.memory_space<vmem>>, vector<1x16x384xbf16>
      %62 = vector.shape_cast %61 : vector<1x16x384xbf16> to vector<16x384xbf16>
      %63 = arith.extf %62 : vector<16x384xbf16> to vector<16x384xf32>
      %64 = vector.broadcast %47 : vector<16x1xf32> to vector<16x384xf32>
      %65 = arith.mulf %59, %64 : vector<16x384xf32>
      %66 = vector.broadcast %50 : vector<16x1xf32> to vector<16x384xf32>
      %67 = arith.addf %65, %66 : vector<16x384xf32>
      %68 = arith.addf %67, %63 : vector<16x384xf32>
      %cst_34 = arith.constant 0.000000e+00 : f32
      %69 = vector.broadcast %cst_34 : f32 to vector<16x384xf32>
      %70 = arith.maximumf %68, %69 : vector<16x384xf32>
      %cst_35 = arith.constant 0.000000e+00 : f32
      %71 = vector.broadcast %cst_35 : f32 to vector<16x384xf32>
      %72 = arith.select %15, %70, %71 : vector<16x384xi1>, vector<16x384xf32>
      %73 = arith.truncf %72 : vector<16x384xf32> to vector<16x384xbf16>
      %c0_36 = arith.constant 0 : index
      %74 = arith.index_cast %55 : i32 to index
      %c0_37 = arith.constant 0 : index
      %75 = vector.load %arg8[%c0_36, %74, %c0_37] : memref<1x896x384xbf16, #tpu.memory_space<vmem>>, vector<1x16x384xbf16>
      %76 = vector.shape_cast %75 : vector<1x16x384xbf16> to vector<16x384xbf16>
      %77 = vector.shape_cast %73 : vector<16x384xbf16> to vector<1x16x384xbf16>
      tpu.vector_store %arg8[%c0_36, %74, %c0_37], %77 {strides = array<i32>} : memref<1x896x384xbf16, #tpu.memory_space<vmem>>, vector<1x16x384xbf16>,
    }
    return
  }
  func.func @transform_0(%arg0: i32, %arg1: memref<2xi32, #tpu.memory_space<smem>>) -> (i32, i32, i32) {
    %c0_i32 = arith.constant 0 : i32
    %c0_i32_0 = arith.constant 0 : i32
    %c0_i32_1 = arith.constant 0 : i32
    return %arg0, %c0_i32, %c0_i32_0 : i32, i32, i32
  }
  func.func @transform_1(%arg0: i32, %arg1: memref<2xi32, #tpu.memory_space<smem>>) -> (i32, i32, i32) {
    %c0_i32 = arith.constant 0 : i32
    %c0_i32_0 = arith.constant 0 : i32
    %c0_i32_1 = arith.constant 0 : i32
    return %arg0, %c0_i32, %c0_i32_0 : i32, i32, i32
  }
  func.func @transform_2(%arg0: i32, %arg1: memref<2xi32, #tpu.memory_space<smem>>) -> (i32, i32, i32) {
    %c0_i32 = arith.constant 0 : i32
    %c0_i32_0 = arith.constant 0 : i32
    %c0_i32_1 = arith.constant 0 : i32
    %c0_i32_2 = arith.constant 0 : i32
    return %c0_i32, %c0_i32_0, %c0_i32_1 : i32, i32, i32
  }
  func.func @transform_3(%arg0: i32, %arg1: memref<2xi32, #tpu.memory_space<smem>>) -> (i32, i32) {
    %c0_i32 = arith.constant 0 : i32
    %c0_i32_0 = arith.constant 0 : i32
    %c0_i32_1 = arith.constant 0 : i32
    return %c0_i32, %c0_i32_0 : i32, i32
  }
  func.func @transform_4(%arg0: i32, %arg1: memref<2xi32, #tpu.memory_space<smem>>) -> (i32, i32) {
    %c0_i32 = arith.constant 0 : i32
    %c0_i32_0 = arith.constant 0 : i32
    %c0_i32_1 = arith.constant 0 : i32
    return %c0_i32, %c0_i32_0 : i32, i32
  }
  func.func @transform_5(%arg0: i32, %arg1: memref<2xi32, #tpu.memory_space<smem>>) -> (i32, i32) {
    %c0_i32 = arith.constant 0 : i32
    %c0_i32_0 = arith.constant 0 : i32
    %c0_i32_1 = arith.constant 0 : i32
    return %c0_i32, %c0_i32_0 : i32, i32
  }
  func.func @transform_6(%arg0: i32, %arg1: memref<2xi32, #tpu.memory_space<smem>>) -> (i32, i32, i32) {
    %c0_i32 = arith.constant 0 : i32
    %c0_i32_0 = arith.constant 0 : i32
    %c0_i32_1 = arith.constant 0 : i32
    return %arg0, %c0_i32, %c0_i32_0 : i32, i32, i32
  }
}

module attributes {stable_mosaic.version = 11 : i64} {
  func.func @_conv_canvas_kernel(%arg0: i32, %arg1: memref<2xi32, #tpu.memory_space<smem>>, %arg2: memref<1x896x384xbf16, #tpu.memory_space<vmem>>, %arg3: memref<3x16x48xbf16, #tpu.memory_space<vmem>>, %arg4: memref<16x1xf32, #tpu.memory_space<vmem>>, %arg5: memref<1x896x384xbf16, #tpu.memory_space<vmem>>) attributes {dimension_semantics = [#tpu.dimension_semantics<parallel>], iteration_bounds = array<i64: 1>, scalar_prefetch = 1 : i64, scratch_operands = 0 : i64, tpu.core_type = #tpu.core_type<tc>, window_params = [{transform_indices = @transform_0, window_bounds = array<i64: 1, 896, 384>}, {pipeline_mode = #tpu.pipeline_mode<synchronous>, transform_indices = @transform_1, window_bounds = array<i64: 3, 16, 48>}, {pipeline_mode = #tpu.pipeline_mode<synchronous>, transform_indices = @transform_2, window_bounds = array<i64: 16, 1>}, {transform_indices = @transform_3, window_bounds = array<i64: 1, 896, 384>}]} {
    %c0 = arith.constant 0 : index
    %0 = memref.load %arg1[%c0] : memref<2xi32, #tpu.memory_space<smem>>
    %c1 = arith.constant 1 : index
    %1 = memref.load %arg1[%c1] : memref<2xi32, #tpu.memory_space<smem>>
    %c0_0 = arith.constant 0 : index
    %c0_1 = arith.constant 0 : index
    %c0_2 = arith.constant 0 : index
    %2 = vector.load %arg3[%c0_0, %c0_1, %c0_2] : memref<3x16x48xbf16, #tpu.memory_space<vmem>>, vector<1x16x48xbf16>
    %3 = vector.shape_cast %2 : vector<1x16x48xbf16> to vector<16x48xbf16>
    %c1_3 = arith.constant 1 : index
    %c0_4 = arith.constant 0 : index
    %c0_5 = arith.constant 0 : index
    %4 = vector.load %arg3[%c1_3, %c0_4, %c0_5] : memref<3x16x48xbf16, #tpu.memory_space<vmem>>, vector<1x16x48xbf16>
    %5 = vector.shape_cast %4 : vector<1x16x48xbf16> to vector<16x48xbf16>
    %c2 = arith.constant 2 : index
    %c0_6 = arith.constant 0 : index
    %c0_7 = arith.constant 0 : index
    %6 = vector.load %arg3[%c2, %c0_6, %c0_7] : memref<3x16x48xbf16, #tpu.memory_space<vmem>>, vector<1x16x48xbf16>
    %7 = vector.shape_cast %6 : vector<1x16x48xbf16> to vector<16x48xbf16>
    %c0_8 = arith.constant 0 : index
    %c0_9 = arith.constant 0 : index
    %8 = vector.load %arg4[%c0_8, %c0_9] : memref<16x1xf32, #tpu.memory_space<vmem>>, vector<16x1xf32>
    %9 = tpu.iota {dimensions = array<i32: 1>} : vector<16x384xi32>
    %c4_i32 = arith.constant 4 : i32
    %10 = vector.broadcast %c4_i32 : i32 to vector<16x384xi32>
    %11 = arith.cmpi sge, %9, %10 : vector<16x384xi32>
    %c4_i32_10 = arith.constant 4 : i32
    %12 = arith.addi %c4_i32_10, %1 : i32
    %13 = vector.broadcast %12 : i32 to vector<16x384xi32>
    %14 = arith.cmpi slt, %9, %13 : vector<16x384xi32>
    %15 = arith.andi %11, %14 : vector<16x384xi1>
    %cst = arith.constant 0.000000e+00 : bf16
    %16 = vector.broadcast %cst : bf16 to vector<64x384xbf16>
    %c0_11 = arith.constant 0 : index
    %c0_12 = arith.constant 0 : index
    %c0_13 = arith.constant 0 : index
    %17 = vector.load %arg5[%c0_11, %c0_12, %c0_13] : memref<1x896x384xbf16, #tpu.memory_space<vmem>>, vector<1x64x384xbf16>
    %18 = vector.shape_cast %17 : vector<1x64x384xbf16> to vector<64x384xbf16>
    %19 = vector.shape_cast %16 : vector<64x384xbf16> to vector<1x64x384xbf16>
    tpu.vector_store %arg5[%c0_11, %c0_12, %c0_13], %19 {strides = array<i32>} : memref<1x896x384xbf16, #tpu.memory_space<vmem>>, vector<1x64x384xbf16>,
    %c4_i32_14 = arith.constant 4 : i32
    %20 = arith.addi %c4_i32_14, %0 : i32
    %c16_i32 = arith.constant 16 : i32
    %21 = arith.muli %20, %c16_i32 : i32
    %22 = tpu.assume_multiple %21, 16 : i32
    %cst_15 = arith.constant 0.000000e+00 : bf16
    %23 = vector.broadcast %cst_15 : bf16 to vector<64x384xbf16>
    %c0_16 = arith.constant 0 : index
    %24 = arith.index_cast %22 : i32 to index
    %c0_17 = arith.constant 0 : index
    %25 = vector.load %arg5[%c0_16, %24, %c0_17] : memref<1x896x384xbf16, #tpu.memory_space<vmem>>, vector<1x64x384xbf16>
    %26 = vector.shape_cast %25 : vector<1x64x384xbf16> to vector<64x384xbf16>
    %27 = vector.shape_cast %23 : vector<64x384xbf16> to vector<1x64x384xbf16>
    tpu.vector_store %arg5[%c0_16, %24, %c0_17], %27 {strides = array<i32>} : memref<1x896x384xbf16, #tpu.memory_space<vmem>>, vector<1x64x384xbf16>,
    %c0_i32 = arith.constant 0 : i32
    %c0_i32_18 = arith.constant 0 : i32
    %28 = arith.subi %0, %c0_i32_18 : i32
    %29 = arith.addi %c0_i32_18, %28 : i32
    %c1_i32 = arith.constant 1 : i32
    scf.for %arg6 = %c0_i32_18 to %29 step %c1_i32  : i32 {
      %c4_i32_19 = arith.constant 4 : i32
      %30 = arith.addi %c4_i32_19, %arg6 : i32
      %c0_i32_20 = arith.constant 0 : i32
      %31 = arith.subi %30, %c0_i32_20 : i32
      %c16_i32_21 = arith.constant 16 : i32
      %32 = arith.muli %31, %c16_i32_21 : i32
      %33 = tpu.assume_multiple %32, 16 : i32
      %c0_22 = arith.constant 0 : index
      %34 = arith.index_cast %33 : i32 to index
      %c0_23 = arith.constant 0 : index
      %35 = vector.load %arg2[%c0_22, %34, %c0_23] : memref<1x896x384xbf16, #tpu.memory_space<vmem>>, vector<1x48x384xbf16>
      %36 = vector.shape_cast %35 : vector<1x48x384xbf16> to vector<48x384xbf16>
      %cst_24 = arith.constant 0.000000e+00 : f32
      %37 = vector.broadcast %cst_24 : f32 to vector<16x384xf32>
      %cst_25 = arith.constant dense<0.000000e+00> : vector<16x384xf32>
      %38 = tpu.matmul %3, %36, %cst_25 {dimension_numbers = #tpu.dot_dimension_numbers<[1], [0], [0], [1], [0, 0, 1, 1], [], []>} : vector<16x48xbf16>, vector<48x384xbf16>, vector<16x384xf32> -> vector<16x384xf32>
      %39 = arith.addf %37, %38 : vector<16x384xf32>
      %cst_26 = arith.constant dense<0.000000e+00> : vector<16x384xf32>
      %40 = tpu.matmul %5, %36, %cst_26 {dimension_numbers = #tpu.dot_dimension_numbers<[1], [0], [0], [1], [0, 0, 1, 1], [], []>} : vector<16x48xbf16>, vector<48x384xbf16>, vector<16x384xf32> -> vector<16x384xf32>
      %c383_i32 = arith.constant 383 : i32
      %41 = tpu.dynamic_rotate %40 by %c383_i32 dim 1 : vector<16x384xf32>, i32 -> vector<16x384xf32>
      %42 = arith.addf %39, %41 : vector<16x384xf32>
      %cst_27 = arith.constant dense<0.000000e+00> : vector<16x384xf32>
      %43 = tpu.matmul %7, %36, %cst_27 {dimension_numbers = #tpu.dot_dimension_numbers<[1], [0], [0], [1], [0, 0, 1, 1], [], []>} : vector<16x48xbf16>, vector<48x384xbf16>, vector<16x384xf32> -> vector<16x384xf32>
      %c382_i32 = arith.constant 382 : i32
      %44 = tpu.dynamic_rotate %43 by %c382_i32 dim 1 : vector<16x384xf32>, i32 -> vector<16x384xf32>
      %45 = arith.addf %42, %44 : vector<16x384xf32>
      %46 = vector.broadcast %8 : vector<16x1xf32> to vector<16x384xf32>
      %47 = arith.addf %45, %46 : vector<16x384xf32>
      %cst_28 = arith.constant 0.000000e+00 : f32
      %48 = vector.broadcast %cst_28 : f32 to vector<16x384xf32>
      %49 = arith.maximumf %47, %48 : vector<16x384xf32>
      %cst_29 = arith.constant 0.000000e+00 : f32
      %50 = vector.broadcast %cst_29 : f32 to vector<16x384xf32>
      %51 = arith.select %15, %49, %50 : vector<16x384xi1>, vector<16x384xf32>
      %52 = arith.truncf %51 : vector<16x384xf32> to vector<16x384xbf16>
      %c16_i32_30 = arith.constant 16 : i32
      %53 = arith.muli %30, %c16_i32_30 : i32
      %54 = tpu.assume_multiple %53, 16 : i32
      %c0_31 = arith.constant 0 : index
      %55 = arith.index_cast %54 : i32 to index
      %c0_32 = arith.constant 0 : index
      %56 = vector.load %arg5[%c0_31, %55, %c0_32] : memref<1x896x384xbf16, #tpu.memory_space<vmem>>, vector<1x16x384xbf16>
      %57 = vector.shape_cast %56 : vector<1x16x384xbf16> to vector<16x384xbf16>
      %58 = vector.shape_cast %52 : vector<16x384xbf16> to vector<1x16x384xbf16>
      tpu.vector_store %arg5[%c0_31, %55, %c0_32], %58 {strides = array<i32>} : memref<1x896x384xbf16, #tpu.memory_space<vmem>>, vector<1x16x384xbf16>,
    }
    return
  }
  func.func @transform_0(%arg0: i32, %arg1: memref<2xi32, #tpu.memory_space<smem>>) -> (i32, i32, i32) {
    %c0_i32 = arith.constant 0 : i32
    %c0_i32_0 = arith.constant 0 : i32
    %c0_i32_1 = arith.constant 0 : i32
    return %arg0, %c0_i32, %c0_i32_0 : i32, i32, i32
  }
  func.func @transform_1(%arg0: i32, %arg1: memref<2xi32, #tpu.memory_space<smem>>) -> (i32, i32, i32) {
    %c0_i32 = arith.constant 0 : i32
    %c0_i32_0 = arith.constant 0 : i32
    %c0_i32_1 = arith.constant 0 : i32
    %c0_i32_2 = arith.constant 0 : i32
    return %c0_i32, %c0_i32_0, %c0_i32_1 : i32, i32, i32
  }
  func.func @transform_2(%arg0: i32, %arg1: memref<2xi32, #tpu.memory_space<smem>>) -> (i32, i32) {
    %c0_i32 = arith.constant 0 : i32
    %c0_i32_0 = arith.constant 0 : i32
    %c0_i32_1 = arith.constant 0 : i32
    return %c0_i32, %c0_i32_0 : i32, i32
  }
  func.func @transform_3(%arg0: i32, %arg1: memref<2xi32, #tpu.memory_space<smem>>) -> (i32, i32, i32) {
    %c0_i32 = arith.constant 0 : i32
    %c0_i32_0 = arith.constant 0 : i32
    %c0_i32_1 = arith.constant 0 : i32
    return %arg0, %c0_i32, %c0_i32_0 : i32, i32, i32
  }
}

module attributes {stable_mosaic.version = 11 : i64} {
  func.func @_fc_acc_kernel(%arg0: i32, %arg1: memref<1x1408xf32, #tpu.memory_space<vmem>>, %arg2: memref<1408x200xf32, #tpu.memory_space<vmem>>, %arg3: memref<1x200xf32, #tpu.memory_space<vmem>>, %arg4: memref<1x200xf32, #tpu.memory_space<vmem>>, %arg5: memref<1x200xf32, #tpu.memory_space<vmem>>) attributes {dimension_semantics = [#tpu.dimension_semantics<arbitrary>], iteration_bounds = array<i64: 12>, scalar_prefetch = 0 : i64, scratch_operands = 1 : i64, tpu.core_type = #tpu.core_type<tc>, window_params = [{transform_indices = @transform_0, window_bounds = array<i64: 1, 1408>}, {transform_indices = @transform_1, window_bounds = array<i64: 1408, 200>}, {pipeline_mode = #tpu.pipeline_mode<synchronous>, transform_indices = @transform_2, window_bounds = array<i64: 1, 200>}, {pipeline_mode = #tpu.pipeline_mode<synchronous>, transform_indices = @transform_3, window_bounds = array<i64: 1, 200>}]} {
    %c0_i32 = arith.constant 0 : i32
    %0 = arith.cmpi eq, %arg0, %c0_i32 : i32
    %1 = arith.extui %0 : i1 to i32
    %c0_i32_0 = arith.constant 0 : i32
    %2 = arith.cmpi ne, %1, %c0_i32_0 : i32
    scf.if %2 {
      %cst_9 = arith.constant 0.000000e+00 : f32
      %12 = vector.broadcast %cst_9 : f32 to vector<1x200xf32>
      %c0_10 = arith.constant 0 : index
      %c0_11 = arith.constant 0 : index
      %13 = vector.load %arg5[%c0_10, %c0_11] : memref<1x200xf32, #tpu.memory_space<vmem>>, vector<1x200xf32>
      tpu.vector_store %arg5[%c0_10, %c0_11], %12 {strides = array<i32>} : memref<1x200xf32, #tpu.memory_space<vmem>>, vector<1x200xf32>,
    } else {
    }
    %c0 = arith.constant 0 : index
    %c0_1 = arith.constant 0 : index
    %3 = vector.load %arg5[%c0, %c0_1] : memref<1x200xf32, #tpu.memory_space<vmem>>, vector<1x200xf32>
    %c0_2 = arith.constant 0 : index
    %c0_3 = arith.constant 0 : index
    %4 = vector.load %arg1[%c0_2, %c0_3] : memref<1x1408xf32, #tpu.memory_space<vmem>>, vector<1x1408xf32>
    %c0_4 = arith.constant 0 : index
    %c0_5 = arith.constant 0 : index
    %5 = vector.load %arg2[%c0_4, %c0_5] : memref<1408x200xf32, #tpu.memory_space<vmem>>, vector<1408x200xf32>
    %cst = arith.constant dense<0.000000e+00> : vector<1x200xf32>
    %6 = tpu.matmul %4, %5, %cst {dimension_numbers = #tpu.dot_dimension_numbers<[1], [0], [0], [1], [0, 0, 1, 1], [], []>} : vector<1x1408xf32>, vector<1408x200xf32>, vector<1x200xf32> -> vector<1x200xf32>
    %7 = arith.addf %3, %6 : vector<1x200xf32>
    %c0_6 = arith.constant 0 : index
    %c0_7 = arith.constant 0 : index
    %8 = vector.load %arg5[%c0_6, %c0_7] : memref<1x200xf32, #tpu.memory_space<vmem>>, vector<1x200xf32>
    tpu.vector_store %arg5[%c0_6, %c0_7], %7 {strides = array<i32>} : memref<1x200xf32, #tpu.memory_space<vmem>>, vector<1x200xf32>,
    %c11_i32 = arith.constant 11 : i32
    %9 = arith.cmpi eq, %arg0, %c11_i32 : i32
    %10 = arith.extui %9 : i1 to i32
    %c0_i32_8 = arith.constant 0 : i32
    %11 = arith.cmpi ne, %10, %c0_i32_8 : i32
    scf.if %11 {
      %c0_9 = arith.constant 0 : index
      %c0_10 = arith.constant 0 : index
      %12 = vector.load %arg5[%c0_9, %c0_10] : memref<1x200xf32, #tpu.memory_space<vmem>>, vector<1x200xf32>
      %c0_11 = arith.constant 0 : index
      %c0_12 = arith.constant 0 : index
      %13 = vector.load %arg3[%c0_11, %c0_12] : memref<1x200xf32, #tpu.memory_space<vmem>>, vector<1x200xf32>
      %14 = arith.addf %12, %13 : vector<1x200xf32>
      %c0_13 = arith.constant 0 : index
      %c0_14 = arith.constant 0 : index
      %15 = vector.load %arg4[%c0_13, %c0_14] : memref<1x200xf32, #tpu.memory_space<vmem>>, vector<1x200xf32>
      tpu.vector_store %arg4[%c0_13, %c0_14], %14 {strides = array<i32>} : memref<1x200xf32, #tpu.memory_space<vmem>>, vector<1x200xf32>,
    } else {
    }
    return
  }
  func.func @transform_0(%arg0: i32) -> (i32, i32) {
    %c0_i32 = arith.constant 0 : i32
    %c0_i32_0 = arith.constant 0 : i32
    return %c0_i32, %arg0 : i32, i32
  }
  func.func @transform_1(%arg0: i32) -> (i32, i32) {
    %c0_i32 = arith.constant 0 : i32
    %c0_i32_0 = arith.constant 0 : i32
    return %arg0, %c0_i32 : i32, i32
  }
  func.func @transform_2(%arg0: i32) -> (i32, i32) {
    %c0_i32 = arith.constant 0 : i32
    %c0_i32_0 = arith.constant 0 : i32
    %c0_i32_1 = arith.constant 0 : i32
    return %c0_i32, %c0_i32_0 : i32, i32
  }
  func.func @transform_3(%arg0: i32) -> (i32, i32) {
    %c0_i32 = arith.constant 0 : i32
    %c0_i32_0 = arith.constant 0 : i32
    %c0_i32_1 = arith.constant 0 : i32
    return %c0_i32, %c0_i32_0 : i32, i32
  }
}

module attributes {stable_mosaic.version = 11 : i64} {
  func.func @_sample_kernel(%arg0: memref<1x100xf32, #tpu.memory_space<vmem>>, %arg1: memref<1x100xf32, #tpu.memory_space<vmem>>, %arg2: memref<1x100xf32, #tpu.memory_space<vmem>>, %arg3: memref<1x100xf32, #tpu.memory_space<vmem>>) attributes {dimension_semantics = [], scalar_prefetch = 0 : i64, scratch_operands = 0 : i64, tpu.core_type = #tpu.core_type<tc>} {
    %c0 = arith.constant 0 : index
    %c0_0 = arith.constant 0 : index
    %0 = vector.load %arg0[%c0, %c0_0] : memref<1x100xf32, #tpu.memory_space<vmem>>, vector<1x100xf32>
    %c0_1 = arith.constant 0 : index
    %c0_2 = arith.constant 0 : index
    %1 = vector.load %arg2[%c0_1, %c0_2] : memref<1x100xf32, #tpu.memory_space<vmem>>, vector<1x100xf32>
    %c0_3 = arith.constant 0 : index
    %c0_4 = arith.constant 0 : index
    %2 = vector.load %arg1[%c0_3, %c0_4] : memref<1x100xf32, #tpu.memory_space<vmem>>, vector<1x100xf32>
    %cst = arith.constant 5.000000e-01 : f32
    %3 = vector.broadcast %cst : f32 to vector<1x100xf32>
    %4 = arith.mulf %3, %2 : vector<1x100xf32>
    %5 = math.exp %4 : vector<1x100xf32>
    %6 = arith.mulf %1, %5 : vector<1x100xf32>
    %7 = arith.addf %0, %6 : vector<1x100xf32>
    %c0_5 = arith.constant 0 : index
    %c0_6 = arith.constant 0 : index
    %8 = vector.load %arg3[%c0_5, %c0_6] : memref<1x100xf32, #tpu.memory_space<vmem>>, vector<1x100xf32>
    tpu.vector_store %arg3[%c0_5, %c0_6], %7 {strides = array<i32>} : memref<1x100xf32, #tpu.memory_space<vmem>>, vector<1x100xf32>,
    return
  }
}

module attributes {stable_mosaic.version = 11 : i64} {
  func.func @_fc_tile_kernel(%arg0: i32, %arg1: memref<1x100xf32, #tpu.memory_space<vmem>>, %arg2: memref<100x1408xf32, #tpu.memory_space<vmem>>, %arg3: memref<1x1408xf32, #tpu.memory_space<vmem>>, %arg4: memref<1x1408xf32, #tpu.memory_space<vmem>>) attributes {dimension_semantics = [#tpu.dimension_semantics<parallel>], iteration_bounds = array<i64: 12>, scalar_prefetch = 0 : i64, scratch_operands = 0 : i64, tpu.core_type = #tpu.core_type<tc>, window_params = [{pipeline_mode = #tpu.pipeline_mode<synchronous>, transform_indices = @transform_0, window_bounds = array<i64: 1, 100>}, {transform_indices = @transform_1, window_bounds = array<i64: 100, 1408>}, {transform_indices = @transform_2, window_bounds = array<i64: 1, 1408>}, {transform_indices = @transform_3, window_bounds = array<i64: 1, 1408>}]} {
    %c0 = arith.constant 0 : index
    %c0_0 = arith.constant 0 : index
    %0 = vector.load %arg1[%c0, %c0_0] : memref<1x100xf32, #tpu.memory_space<vmem>>, vector<1x100xf32>
    %c0_1 = arith.constant 0 : index
    %c0_2 = arith.constant 0 : index
    %1 = vector.load %arg2[%c0_1, %c0_2] : memref<100x1408xf32, #tpu.memory_space<vmem>>, vector<100x1408xf32>
    %cst = arith.constant dense<0.000000e+00> : vector<1x1408xf32>
    %2 = tpu.matmul %0, %1, %cst {dimension_numbers = #tpu.dot_dimension_numbers<[1], [0], [0], [1], [0, 0, 1, 1], [], []>} : vector<1x100xf32>, vector<100x1408xf32>, vector<1x1408xf32> -> vector<1x1408xf32>
    %c0_3 = arith.constant 0 : index
    %c0_4 = arith.constant 0 : index
    %3 = vector.load %arg3[%c0_3, %c0_4] : memref<1x1408xf32, #tpu.memory_space<vmem>>, vector<1x1408xf32>
    %4 = arith.addf %2, %3 : vector<1x1408xf32>
    %cst_5 = arith.constant 0.000000e+00 : f32
    %5 = vector.broadcast %cst_5 : f32 to vector<1x1408xf32>
    %6 = arith.maximumf %4, %5 : vector<1x1408xf32>
    %c0_6 = arith.constant 0 : index
    %c0_7 = arith.constant 0 : index
    %7 = vector.load %arg4[%c0_6, %c0_7] : memref<1x1408xf32, #tpu.memory_space<vmem>>, vector<1x1408xf32>
    tpu.vector_store %arg4[%c0_6, %c0_7], %6 {strides = array<i32>} : memref<1x1408xf32, #tpu.memory_space<vmem>>, vector<1x1408xf32>,
    return
  }
  func.func @transform_0(%arg0: i32) -> (i32, i32) {
    %c0_i32 = arith.constant 0 : i32
    %c0_i32_0 = arith.constant 0 : i32
    %c0_i32_1 = arith.constant 0 : i32
    return %c0_i32, %c0_i32_0 : i32, i32
  }
  func.func @transform_1(%arg0: i32) -> (i32, i32) {
    %c0_i32 = arith.constant 0 : i32
    %c0_i32_0 = arith.constant 0 : i32
    return %c0_i32, %arg0 : i32, i32
  }
  func.func @transform_2(%arg0: i32) -> (i32, i32) {
    %c0_i32 = arith.constant 0 : i32
    %c0_i32_0 = arith.constant 0 : i32
    return %c0_i32, %arg0 : i32, i32
  }
  func.func @transform_3(%arg0: i32) -> (i32, i32) {
    %c0_i32 = arith.constant 0 : i32
    %c0_i32_0 = arith.constant 0 : i32
    return %c0_i32, %arg0 : i32, i32
  }
}

module attributes {stable_mosaic.version = 11 : i64} {
  func.func @_conv_canvas_kernel(%arg0: i32, %arg1: memref<2xi32, #tpu.memory_space<smem>>, %arg2: memref<1x896x384xbf16, #tpu.memory_space<vmem>>, %arg3: memref<3x16x48xbf16, #tpu.memory_space<vmem>>, %arg4: memref<16x1xf32, #tpu.memory_space<vmem>>, %arg5: memref<1x896x384xbf16, #tpu.memory_space<vmem>>) attributes {dimension_semantics = [#tpu.dimension_semantics<parallel>], iteration_bounds = array<i64: 1>, scalar_prefetch = 1 : i64, scratch_operands = 0 : i64, tpu.core_type = #tpu.core_type<tc>, window_params = [{transform_indices = @transform_0, window_bounds = array<i64: 1, 896, 384>}, {pipeline_mode = #tpu.pipeline_mode<synchronous>, transform_indices = @transform_1, window_bounds = array<i64: 3, 16, 48>}, {pipeline_mode = #tpu.pipeline_mode<synchronous>, transform_indices = @transform_2, window_bounds = array<i64: 16, 1>}, {transform_indices = @transform_3, window_bounds = array<i64: 1, 896, 384>}]} {
    %c0 = arith.constant 0 : index
    %0 = memref.load %arg1[%c0] : memref<2xi32, #tpu.memory_space<smem>>
    %c1 = arith.constant 1 : index
    %1 = memref.load %arg1[%c1] : memref<2xi32, #tpu.memory_space<smem>>
    %c0_0 = arith.constant 0 : index
    %c0_1 = arith.constant 0 : index
    %c0_2 = arith.constant 0 : index
    %2 = vector.load %arg3[%c0_0, %c0_1, %c0_2] : memref<3x16x48xbf16, #tpu.memory_space<vmem>>, vector<1x16x48xbf16>
    %3 = vector.shape_cast %2 : vector<1x16x48xbf16> to vector<16x48xbf16>
    %c1_3 = arith.constant 1 : index
    %c0_4 = arith.constant 0 : index
    %c0_5 = arith.constant 0 : index
    %4 = vector.load %arg3[%c1_3, %c0_4, %c0_5] : memref<3x16x48xbf16, #tpu.memory_space<vmem>>, vector<1x16x48xbf16>
    %5 = vector.shape_cast %4 : vector<1x16x48xbf16> to vector<16x48xbf16>
    %c2 = arith.constant 2 : index
    %c0_6 = arith.constant 0 : index
    %c0_7 = arith.constant 0 : index
    %6 = vector.load %arg3[%c2, %c0_6, %c0_7] : memref<3x16x48xbf16, #tpu.memory_space<vmem>>, vector<1x16x48xbf16>
    %7 = vector.shape_cast %6 : vector<1x16x48xbf16> to vector<16x48xbf16>
    %c0_8 = arith.constant 0 : index
    %c0_9 = arith.constant 0 : index
    %8 = vector.load %arg4[%c0_8, %c0_9] : memref<16x1xf32, #tpu.memory_space<vmem>>, vector<16x1xf32>
    %9 = tpu.iota {dimensions = array<i32: 1>} : vector<16x384xi32>
    %c4_i32 = arith.constant 4 : i32
    %10 = vector.broadcast %c4_i32 : i32 to vector<16x384xi32>
    %11 = arith.cmpi sge, %9, %10 : vector<16x384xi32>
    %c4_i32_10 = arith.constant 4 : i32
    %12 = arith.addi %c4_i32_10, %1 : i32
    %13 = vector.broadcast %12 : i32 to vector<16x384xi32>
    %14 = arith.cmpi slt, %9, %13 : vector<16x384xi32>
    %15 = arith.andi %11, %14 : vector<16x384xi1>
    %cst = arith.constant 0.000000e+00 : bf16
    %16 = vector.broadcast %cst : bf16 to vector<64x384xbf16>
    %c0_11 = arith.constant 0 : index
    %c0_12 = arith.constant 0 : index
    %c0_13 = arith.constant 0 : index
    %17 = vector.load %arg5[%c0_11, %c0_12, %c0_13] : memref<1x896x384xbf16, #tpu.memory_space<vmem>>, vector<1x64x384xbf16>
    %18 = vector.shape_cast %17 : vector<1x64x384xbf16> to vector<64x384xbf16>
    %19 = vector.shape_cast %16 : vector<64x384xbf16> to vector<1x64x384xbf16>
    tpu.vector_store %arg5[%c0_11, %c0_12, %c0_13], %19 {strides = array<i32>} : memref<1x896x384xbf16, #tpu.memory_space<vmem>>, vector<1x64x384xbf16>,
    %c4_i32_14 = arith.constant 4 : i32
    %20 = arith.addi %c4_i32_14, %0 : i32
    %c16_i32 = arith.constant 16 : i32
    %21 = arith.muli %20, %c16_i32 : i32
    %22 = tpu.assume_multiple %21, 16 : i32
    %cst_15 = arith.constant 0.000000e+00 : bf16
    %23 = vector.broadcast %cst_15 : bf16 to vector<64x384xbf16>
    %c0_16 = arith.constant 0 : index
    %24 = arith.index_cast %22 : i32 to index
    %c0_17 = arith.constant 0 : index
    %25 = vector.load %arg5[%c0_16, %24, %c0_17] : memref<1x896x384xbf16, #tpu.memory_space<vmem>>, vector<1x64x384xbf16>
    %26 = vector.shape_cast %25 : vector<1x64x384xbf16> to vector<64x384xbf16>
    %27 = vector.shape_cast %23 : vector<64x384xbf16> to vector<1x64x384xbf16>
    tpu.vector_store %arg5[%c0_16, %24, %c0_17], %27 {strides = array<i32>} : memref<1x896x384xbf16, #tpu.memory_space<vmem>>, vector<1x64x384xbf16>,
    %c0_i32 = arith.constant 0 : i32
    %c0_i32_18 = arith.constant 0 : i32
    %28 = arith.subi %0, %c0_i32_18 : i32
    %29 = arith.addi %c0_i32_18, %28 : i32
    %c1_i32 = arith.constant 1 : i32
    scf.for %arg6 = %c0_i32_18 to %29 step %c1_i32  : i32 {
      %c4_i32_19 = arith.constant 4 : i32
      %30 = arith.addi %c4_i32_19, %arg6 : i32
      %c2_i32 = arith.constant 2 : i32
      %31 = arith.subi %30, %c2_i32 : i32
      %c16_i32_20 = arith.constant 16 : i32
      %32 = arith.muli %31, %c16_i32_20 : i32
      %33 = tpu.assume_multiple %32, 16 : i32
      %c0_21 = arith.constant 0 : index
      %34 = arith.index_cast %33 : i32 to index
      %c0_22 = arith.constant 0 : index
      %35 = vector.load %arg2[%c0_21, %34, %c0_22] : memref<1x896x384xbf16, #tpu.memory_space<vmem>>, vector<1x48x384xbf16>
      %36 = vector.shape_cast %35 : vector<1x48x384xbf16> to vector<48x384xbf16>
      %cst_23 = arith.constant 0.000000e+00 : f32
      %37 = vector.broadcast %cst_23 : f32 to vector<16x384xf32>
      %cst_24 = arith.constant dense<0.000000e+00> : vector<16x384xf32>
      %38 = tpu.matmul %3, %36, %cst_24 {dimension_numbers = #tpu.dot_dimension_numbers<[1], [0], [0], [1], [0, 0, 1, 1], [], []>} : vector<16x48xbf16>, vector<48x384xbf16>, vector<16x384xf32> -> vector<16x384xf32>
      %c2_i32_25 = arith.constant 2 : i32
      %39 = tpu.dynamic_rotate %38 by %c2_i32_25 dim 1 : vector<16x384xf32>, i32 -> vector<16x384xf32>
      %40 = arith.addf %37, %39 : vector<16x384xf32>
      %cst_26 = arith.constant dense<0.000000e+00> : vector<16x384xf32>
      %41 = tpu.matmul %5, %36, %cst_26 {dimension_numbers = #tpu.dot_dimension_numbers<[1], [0], [0], [1], [0, 0, 1, 1], [], []>} : vector<16x48xbf16>, vector<48x384xbf16>, vector<16x384xf32> -> vector<16x384xf32>
      %c1_i32_27 = arith.constant 1 : i32
      %42 = tpu.dynamic_rotate %41 by %c1_i32_27 dim 1 : vector<16x384xf32>, i32 -> vector<16x384xf32>
      %43 = arith.addf %40, %42 : vector<16x384xf32>
      %cst_28 = arith.constant dense<0.000000e+00> : vector<16x384xf32>
      %44 = tpu.matmul %7, %36, %cst_28 {dimension_numbers = #tpu.dot_dimension_numbers<[1], [0], [0], [1], [0, 0, 1, 1], [], []>} : vector<16x48xbf16>, vector<48x384xbf16>, vector<16x384xf32> -> vector<16x384xf32>
      %45 = arith.addf %43, %44 : vector<16x384xf32>
      %46 = vector.broadcast %8 : vector<16x1xf32> to vector<16x384xf32>
      %47 = arith.addf %45, %46 : vector<16x384xf32>
      %cst_29 = arith.constant 0.000000e+00 : f32
      %48 = vector.broadcast %cst_29 : f32 to vector<16x384xf32>
      %49 = arith.maximumf %47, %48 : vector<16x384xf32>
      %cst_30 = arith.constant 0.000000e+00 : f32
      %50 = vector.broadcast %cst_30 : f32 to vector<16x384xf32>
      %51 = arith.select %15, %49, %50 : vector<16x384xi1>, vector<16x384xf32>
      %52 = arith.truncf %51 : vector<16x384xf32> to vector<16x384xbf16>
      %c16_i32_31 = arith.constant 16 : i32
      %53 = arith.muli %30, %c16_i32_31 : i32
      %54 = tpu.assume_multiple %53, 16 : i32
      %c0_32 = arith.constant 0 : index
      %55 = arith.index_cast %54 : i32 to index
      %c0_33 = arith.constant 0 : index
      %56 = vector.load %arg5[%c0_32, %55, %c0_33] : memref<1x896x384xbf16, #tpu.memory_space<vmem>>, vector<1x16x384xbf16>
      %57 = vector.shape_cast %56 : vector<1x16x384xbf16> to vector<16x384xbf16>
      %58 = vector.shape_cast %52 : vector<16x384xbf16> to vector<1x16x384xbf16>
      tpu.vector_store %arg5[%c0_32, %55, %c0_33], %58 {strides = array<i32>} : memref<1x896x384xbf16, #tpu.memory_space<vmem>>, vector<1x16x384xbf16>,
    }
    return
  }
  func.func @transform_0(%arg0: i32, %arg1: memref<2xi32, #tpu.memory_space<smem>>) -> (i32, i32, i32) {
    %c0_i32 = arith.constant 0 : i32
    %c0_i32_0 = arith.constant 0 : i32
    %c0_i32_1 = arith.constant 0 : i32
    return %arg0, %c0_i32, %c0_i32_0 : i32, i32, i32
  }
  func.func @transform_1(%arg0: i32, %arg1: memref<2xi32, #tpu.memory_space<smem>>) -> (i32, i32, i32) {
    %c0_i32 = arith.constant 0 : i32
    %c0_i32_0 = arith.constant 0 : i32
    %c0_i32_1 = arith.constant 0 : i32
    %c0_i32_2 = arith.constant 0 : i32
    return %c0_i32, %c0_i32_0, %c0_i32_1 : i32, i32, i32
  }
  func.func @transform_2(%arg0: i32, %arg1: memref<2xi32, #tpu.memory_space<smem>>) -> (i32, i32) {
    %c0_i32 = arith.constant 0 : i32
    %c0_i32_0 = arith.constant 0 : i32
    %c0_i32_1 = arith.constant 0 : i32
    return %c0_i32, %c0_i32_0 : i32, i32
  }
  func.func @transform_3(%arg0: i32, %arg1: memref<2xi32, #tpu.memory_space<smem>>) -> (i32, i32, i32) {
    %c0_i32 = arith.constant 0 : i32
    %c0_i32_0 = arith.constant 0 : i32
    %c0_i32_1 = arith.constant 0 : i32
    return %arg0, %c0_i32, %c0_i32_0 : i32, i32, i32
  }
}

module attributes {stable_mosaic.version = 11 : i64} {
  func.func @_conv_canvas_kernel(%arg0: i32, %arg1: memref<2xi32, #tpu.memory_space<smem>>, %arg2: memref<1x2176x512xbf16, #tpu.memory_space<vmem>>, %arg3: memref<5x16x80xbf16, #tpu.memory_space<vmem>>, %arg4: memref<16x1xf32, #tpu.memory_space<vmem>>, %arg5: memref<1x2176x512xbf16, #tpu.memory_space<vmem>>) attributes {dimension_semantics = [#tpu.dimension_semantics<parallel>], iteration_bounds = array<i64: 1>, scalar_prefetch = 1 : i64, scratch_operands = 0 : i64, tpu.core_type = #tpu.core_type<tc>, window_params = [{transform_indices = @transform_0, window_bounds = array<i64: 1, 2176, 512>}, {pipeline_mode = #tpu.pipeline_mode<synchronous>, transform_indices = @transform_1, window_bounds = array<i64: 5, 16, 80>}, {pipeline_mode = #tpu.pipeline_mode<synchronous>, transform_indices = @transform_2, window_bounds = array<i64: 16, 1>}, {transform_indices = @transform_3, window_bounds = array<i64: 1, 2176, 512>}]} {
    %c0 = arith.constant 0 : index
    %0 = memref.load %arg1[%c0] : memref<2xi32, #tpu.memory_space<smem>>
    %c1 = arith.constant 1 : index
    %1 = memref.load %arg1[%c1] : memref<2xi32, #tpu.memory_space<smem>>
    %c0_0 = arith.constant 0 : index
    %c0_1 = arith.constant 0 : index
    %c0_2 = arith.constant 0 : index
    %2 = vector.load %arg3[%c0_0, %c0_1, %c0_2] : memref<5x16x80xbf16, #tpu.memory_space<vmem>>, vector<1x16x80xbf16>
    %3 = vector.shape_cast %2 : vector<1x16x80xbf16> to vector<16x80xbf16>
    %c1_3 = arith.constant 1 : index
    %c0_4 = arith.constant 0 : index
    %c0_5 = arith.constant 0 : index
    %4 = vector.load %arg3[%c1_3, %c0_4, %c0_5] : memref<5x16x80xbf16, #tpu.memory_space<vmem>>, vector<1x16x80xbf16>
    %5 = vector.shape_cast %4 : vector<1x16x80xbf16> to vector<16x80xbf16>
    %c2 = arith.constant 2 : index
    %c0_6 = arith.constant 0 : index
    %c0_7 = arith.constant 0 : index
    %6 = vector.load %arg3[%c2, %c0_6, %c0_7] : memref<5x16x80xbf16, #tpu.memory_space<vmem>>, vector<1x16x80xbf16>
    %7 = vector.shape_cast %6 : vector<1x16x80xbf16> to vector<16x80xbf16>
    %c3 = arith.constant 3 : index
    %c0_8 = arith.constant 0 : index
    %c0_9 = arith.constant 0 : index
    %8 = vector.load %arg3[%c3, %c0_8, %c0_9] : memref<5x16x80xbf16, #tpu.memory_space<vmem>>, vector<1x16x80xbf16>
    %9 = vector.shape_cast %8 : vector<1x16x80xbf16> to vector<16x80xbf16>
    %c4 = arith.constant 4 : index
    %c0_10 = arith.constant 0 : index
    %c0_11 = arith.constant 0 : index
    %10 = vector.load %arg3[%c4, %c0_10, %c0_11] : memref<5x16x80xbf16, #tpu.memory_space<vmem>>, vector<1x16x80xbf16>
    %11 = vector.shape_cast %10 : vector<1x16x80xbf16> to vector<16x80xbf16>
    %c0_12 = arith.constant 0 : index
    %c0_13 = arith.constant 0 : index
    %12 = vector.load %arg4[%c0_12, %c0_13] : memref<16x1xf32, #tpu.memory_space<vmem>>, vector<16x1xf32>
    %13 = tpu.iota {dimensions = array<i32: 1>} : vector<16x512xi32>
    %c4_i32 = arith.constant 4 : i32
    %14 = vector.broadcast %c4_i32 : i32 to vector<16x512xi32>
    %15 = arith.cmpi sge, %13, %14 : vector<16x512xi32>
    %c4_i32_14 = arith.constant 4 : i32
    %16 = arith.addi %c4_i32_14, %1 : i32
    %17 = vector.broadcast %16 : i32 to vector<16x512xi32>
    %18 = arith.cmpi slt, %13, %17 : vector<16x512xi32>
    %19 = arith.andi %15, %18 : vector<16x512xi1>
    %cst = arith.constant 0.000000e+00 : bf16
    %20 = vector.broadcast %cst : bf16 to vector<64x512xbf16>
    %c0_15 = arith.constant 0 : index
    %c0_16 = arith.constant 0 : index
    %c0_17 = arith.constant 0 : index
    %21 = vector.load %arg5[%c0_15, %c0_16, %c0_17] : memref<1x2176x512xbf16, #tpu.memory_space<vmem>>, vector<1x64x512xbf16>
    %22 = vector.shape_cast %21 : vector<1x64x512xbf16> to vector<64x512xbf16>
    %23 = vector.shape_cast %20 : vector<64x512xbf16> to vector<1x64x512xbf16>
    tpu.vector_store %arg5[%c0_15, %c0_16, %c0_17], %23 {strides = array<i32>} : memref<1x2176x512xbf16, #tpu.memory_space<vmem>>, vector<1x64x512xbf16>,
    %c4_i32_18 = arith.constant 4 : i32
    %24 = arith.addi %c4_i32_18, %0 : i32
    %c16_i32 = arith.constant 16 : i32
    %25 = arith.muli %24, %c16_i32 : i32
    %26 = tpu.assume_multiple %25, 16 : i32
    %cst_19 = arith.constant 0.000000e+00 : bf16
    %27 = vector.broadcast %cst_19 : bf16 to vector<64x512xbf16>
    %c0_20 = arith.constant 0 : index
    %28 = arith.index_cast %26 : i32 to index
    %c0_21 = arith.constant 0 : index
    %29 = vector.load %arg5[%c0_20, %28, %c0_21] : memref<1x2176x512xbf16, #tpu.memory_space<vmem>>, vector<1x64x512xbf16>
    %30 = vector.shape_cast %29 : vector<1x64x512xbf16> to vector<64x512xbf16>
    %31 = vector.shape_cast %27 : vector<64x512xbf16> to vector<1x64x512xbf16>
    tpu.vector_store %arg5[%c0_20, %28, %c0_21], %31 {strides = array<i32>} : memref<1x2176x512xbf16, #tpu.memory_space<vmem>>, vector<1x64x512xbf16>,
    %c0_i32 = arith.constant 0 : i32
    %c0_i32_22 = arith.constant 0 : i32
    %32 = arith.subi %0, %c0_i32_22 : i32
    %33 = arith.addi %c0_i32_22, %32 : i32
    %c1_i32 = arith.constant 1 : i32
    scf.for %arg6 = %c0_i32_22 to %33 step %c1_i32  : i32 {
      %c4_i32_23 = arith.constant 4 : i32
      %34 = arith.addi %c4_i32_23, %arg6 : i32
      %c4_i32_24 = arith.constant 4 : i32
      %35 = arith.subi %34, %c4_i32_24 : i32
      %c16_i32_25 = arith.constant 16 : i32
      %36 = arith.muli %35, %c16_i32_25 : i32
      %37 = tpu.assume_multiple %36, 16 : i32
      %c0_26 = arith.constant 0 : index
      %38 = arith.index_cast %37 : i32 to index
      %c0_27 = arith.constant 0 : index
      %39 = vector.load %arg2[%c0_26, %38, %c0_27] : memref<1x2176x512xbf16, #tpu.memory_space<vmem>>, vector<1x80x512xbf16>
      %40 = vector.shape_cast %39 : vector<1x80x512xbf16> to vector<80x512xbf16>
      %cst_28 = arith.constant 0.000000e+00 : f32
      %41 = vector.broadcast %cst_28 : f32 to vector<16x512xf32>
      %cst_29 = arith.constant dense<0.000000e+00> : vector<16x512xf32>
      %42 = tpu.matmul %3, %40, %cst_29 {dimension_numbers = #tpu.dot_dimension_numbers<[1], [0], [0], [1], [0, 0, 1, 1], [], []>} : vector<16x80xbf16>, vector<80x512xbf16>, vector<16x512xf32> -> vector<16x512xf32>
      %c4_i32_30 = arith.constant 4 : i32
      %43 = tpu.dynamic_rotate %42 by %c4_i32_30 dim 1 : vector<16x512xf32>, i32 -> vector<16x512xf32>
      %44 = arith.addf %41, %43 : vector<16x512xf32>
      %cst_31 = arith.constant dense<0.000000e+00> : vector<16x512xf32>
      %45 = tpu.matmul %5, %40, %cst_31 {dimension_numbers = #tpu.dot_dimension_numbers<[1], [0], [0], [1], [0, 0, 1, 1], [], []>} : vector<16x80xbf16>, vector<80x512xbf16>, vector<16x512xf32> -> vector<16x512xf32>
      %c3_i32 = arith.constant 3 : i32
      %46 = tpu.dynamic_rotate %45 by %c3_i32 dim 1 : vector<16x512xf32>, i32 -> vector<16x512xf32>
      %47 = arith.addf %44, %46 : vector<16x512xf32>
      %cst_32 = arith.constant dense<0.000000e+00> : vector<16x512xf32>
      %48 = tpu.matmul %7, %40, %cst_32 {dimension_numbers = #tpu.dot_dimension_numbers<[1], [0], [0], [1], [0, 0, 1, 1], [], []>} : vector<16x80xbf16>, vector<80x512xbf16>, vector<16x512xf32> -> vector<16x512xf32>
      %c2_i32 = arith.constant 2 : i32
      %49 = tpu.dynamic_rotate %48 by %c2_i32 dim 1 : vector<16x512xf32>, i32 -> vector<16x512xf32>
      %50 = arith.addf %47, %49 : vector<16x512xf32>
      %cst_33 = arith.constant dense<0.000000e+00> : vector<16x512xf32>
      %51 = tpu.matmul %9, %40, %cst_33 {dimension_numbers = #tpu.dot_dimension_numbers<[1], [0], [0], [1], [0, 0, 1, 1], [], []>} : vector<16x80xbf16>, vector<80x512xbf16>, vector<16x512xf32> -> vector<16x512xf32>
      %c1_i32_34 = arith.constant 1 : i32
      %52 = tpu.dynamic_rotate %51 by %c1_i32_34 dim 1 : vector<16x512xf32>, i32 -> vector<16x512xf32>
      %53 = arith.addf %50, %52 : vector<16x512xf32>
      %cst_35 = arith.constant dense<0.000000e+00> : vector<16x512xf32>
      %54 = tpu.matmul %11, %40, %cst_35 {dimension_numbers = #tpu.dot_dimension_numbers<[1], [0], [0], [1], [0, 0, 1, 1], [], []>} : vector<16x80xbf16>, vector<80x512xbf16>, vector<16x512xf32> -> vector<16x512xf32>
      %55 = arith.addf %53, %54 : vector<16x512xf32>
      %56 = vector.broadcast %12 : vector<16x1xf32> to vector<16x512xf32>
      %57 = arith.addf %55, %56 : vector<16x512xf32>
      %cst_36 = arith.constant 0.000000e+00 : f32
      %58 = vector.broadcast %cst_36 : f32 to vector<16x512xf32>
      %59 = arith.maximumf %57, %58 : vector<16x512xf32>
      %cst_37 = arith.constant 0.000000e+00 : f32
      %60 = vector.broadcast %cst_37 : f32 to vector<16x512xf32>
      %61 = arith.select %19, %59, %60 : vector<16x512xi1>, vector<16x512xf32>
      %62 = arith.truncf %61 : vector<16x512xf32> to vector<16x512xbf16>
      %c16_i32_38 = arith.constant 16 : i32
      %63 = arith.muli %34, %c16_i32_38 : i32
      %64 = tpu.assume_multiple %63, 16 : i32
      %c0_39 = arith.constant 0 : index
      %65 = arith.index_cast %64 : i32 to index
      %c0_40 = arith.constant 0 : index
      %66 = vector.load %arg5[%c0_39, %65, %c0_40] : memref<1x2176x512xbf16, #tpu.memory_space<vmem>>, vector<1x16x512xbf16>
      %67 = vector.shape_cast %66 : vector<1x16x512xbf16> to vector<16x512xbf16>
      %68 = vector.shape_cast %62 : vector<16x512xbf16> to vector<1x16x512xbf16>
      tpu.vector_store %arg5[%c0_39, %65, %c0_40], %68 {strides = array<i32>} : memref<1x2176x512xbf16, #tpu.memory_space<vmem>>, vector<1x16x512xbf16>,
    }
    return
  }
  func.func @transform_0(%arg0: i32, %arg1: memref<2xi32, #tpu.memory_space<smem>>) -> (i32, i32, i32) {
    %c0_i32 = arith.constant 0 : i32
    %c0_i32_0 = arith.constant 0 : i32
    %c0_i32_1 = arith.constant 0 : i32
    return %arg0, %c0_i32, %c0_i32_0 : i32, i32, i32
  }
  func.func @transform_1(%arg0: i32, %arg1: memref<2xi32, #tpu.memory_space<smem>>) -> (i32, i32, i32) {
    %c0_i32 = arith.constant 0 : i32
    %c0_i32_0 = arith.constant 0 : i32
    %c0_i32_1 = arith.constant 0 : i32
    %c0_i32_2 = arith.constant 0 : i32
    return %c0_i32, %c0_i32_0, %c0_i32_1 : i32, i32, i32
  }
  func.func @transform_2(%arg0: i32, %arg1: memref<2xi32, #tpu.memory_space<smem>>) -> (i32, i32) {
    %c0_i32 = arith.constant 0 : i32
    %c0_i32_0 = arith.constant 0 : i32
    %c0_i32_1 = arith.constant 0 : i32
    return %c0_i32, %c0_i32_0 : i32, i32
  }
  func.func @transform_3(%arg0: i32, %arg1: memref<2xi32, #tpu.memory_space<smem>>) -> (i32, i32, i32) {
    %c0_i32 = arith.constant 0 : i32
    %c0_i32_0 = arith.constant 0 : i32
    %c0_i32_1 = arith.constant 0 : i32
    return %arg0, %c0_i32, %c0_i32_0 : i32, i32, i32
  }
}

module attributes {stable_mosaic.version = 11 : i64} {
  func.func @_conv_canvas_kernel(%arg0: i32, %arg1: memref<2xi32, #tpu.memory_space<smem>>, %arg2: memref<1x2176x512xbf16, #tpu.memory_space<vmem>>, %arg3: memref<3x16x48xbf16, #tpu.memory_space<vmem>>, %arg4: memref<16x1xf32, #tpu.memory_space<vmem>>, %arg5: memref<1x2176x512xbf16, #tpu.memory_space<vmem>>) attributes {dimension_semantics = [#tpu.dimension_semantics<parallel>], iteration_bounds = array<i64: 1>, scalar_prefetch = 1 : i64, scratch_operands = 0 : i64, tpu.core_type = #tpu.core_type<tc>, window_params = [{transform_indices = @transform_0, window_bounds = array<i64: 1, 2176, 512>}, {pipeline_mode = #tpu.pipeline_mode<synchronous>, transform_indices = @transform_1, window_bounds = array<i64: 3, 16, 48>}, {pipeline_mode = #tpu.pipeline_mode<synchronous>, transform_indices = @transform_2, window_bounds = array<i64: 16, 1>}, {transform_indices = @transform_3, window_bounds = array<i64: 1, 2176, 512>}]} {
    %c0 = arith.constant 0 : index
    %0 = memref.load %arg1[%c0] : memref<2xi32, #tpu.memory_space<smem>>
    %c1 = arith.constant 1 : index
    %1 = memref.load %arg1[%c1] : memref<2xi32, #tpu.memory_space<smem>>
    %c0_0 = arith.constant 0 : index
    %c0_1 = arith.constant 0 : index
    %c0_2 = arith.constant 0 : index
    %2 = vector.load %arg3[%c0_0, %c0_1, %c0_2] : memref<3x16x48xbf16, #tpu.memory_space<vmem>>, vector<1x16x48xbf16>
    %3 = vector.shape_cast %2 : vector<1x16x48xbf16> to vector<16x48xbf16>
    %c1_3 = arith.constant 1 : index
    %c0_4 = arith.constant 0 : index
    %c0_5 = arith.constant 0 : index
    %4 = vector.load %arg3[%c1_3, %c0_4, %c0_5] : memref<3x16x48xbf16, #tpu.memory_space<vmem>>, vector<1x16x48xbf16>
    %5 = vector.shape_cast %4 : vector<1x16x48xbf16> to vector<16x48xbf16>
    %c2 = arith.constant 2 : index
    %c0_6 = arith.constant 0 : index
    %c0_7 = arith.constant 0 : index
    %6 = vector.load %arg3[%c2, %c0_6, %c0_7] : memref<3x16x48xbf16, #tpu.memory_space<vmem>>, vector<1x16x48xbf16>
    %7 = vector.shape_cast %6 : vector<1x16x48xbf16> to vector<16x48xbf16>
    %c0_8 = arith.constant 0 : index
    %c0_9 = arith.constant 0 : index
    %8 = vector.load %arg4[%c0_8, %c0_9] : memref<16x1xf32, #tpu.memory_space<vmem>>, vector<16x1xf32>
    %9 = tpu.iota {dimensions = array<i32: 1>} : vector<16x512xi32>
    %c4_i32 = arith.constant 4 : i32
    %10 = vector.broadcast %c4_i32 : i32 to vector<16x512xi32>
    %11 = arith.cmpi sge, %9, %10 : vector<16x512xi32>
    %c4_i32_10 = arith.constant 4 : i32
    %12 = arith.addi %c4_i32_10, %1 : i32
    %13 = vector.broadcast %12 : i32 to vector<16x512xi32>
    %14 = arith.cmpi slt, %9, %13 : vector<16x512xi32>
    %15 = arith.andi %11, %14 : vector<16x512xi1>
    %cst = arith.constant 0.000000e+00 : bf16
    %16 = vector.broadcast %cst : bf16 to vector<64x512xbf16>
    %c0_11 = arith.constant 0 : index
    %c0_12 = arith.constant 0 : index
    %c0_13 = arith.constant 0 : index
    %17 = vector.load %arg5[%c0_11, %c0_12, %c0_13] : memref<1x2176x512xbf16, #tpu.memory_space<vmem>>, vector<1x64x512xbf16>
    %18 = vector.shape_cast %17 : vector<1x64x512xbf16> to vector<64x512xbf16>
    %19 = vector.shape_cast %16 : vector<64x512xbf16> to vector<1x64x512xbf16>
    tpu.vector_store %arg5[%c0_11, %c0_12, %c0_13], %19 {strides = array<i32>} : memref<1x2176x512xbf16, #tpu.memory_space<vmem>>, vector<1x64x512xbf16>,
    %c4_i32_14 = arith.constant 4 : i32
    %20 = arith.addi %c4_i32_14, %0 : i32
    %c16_i32 = arith.constant 16 : i32
    %21 = arith.muli %20, %c16_i32 : i32
    %22 = tpu.assume_multiple %21, 16 : i32
    %cst_15 = arith.constant 0.000000e+00 : bf16
    %23 = vector.broadcast %cst_15 : bf16 to vector<64x512xbf16>
    %c0_16 = arith.constant 0 : index
    %24 = arith.index_cast %22 : i32 to index
    %c0_17 = arith.constant 0 : index
    %25 = vector.load %arg5[%c0_16, %24, %c0_17] : memref<1x2176x512xbf16, #tpu.memory_space<vmem>>, vector<1x64x512xbf16>
    %26 = vector.shape_cast %25 : vector<1x64x512xbf16> to vector<64x512xbf16>
    %27 = vector.shape_cast %23 : vector<64x512xbf16> to vector<1x64x512xbf16>
    tpu.vector_store %arg5[%c0_16, %24, %c0_17], %27 {strides = array<i32>} : memref<1x2176x512xbf16, #tpu.memory_space<vmem>>, vector<1x64x512xbf16>,
    %c0_i32 = arith.constant 0 : i32
    %c0_i32_18 = arith.constant 0 : i32
    %28 = arith.subi %0, %c0_i32_18 : i32
    %29 = arith.addi %c0_i32_18, %28 : i32
    %c1_i32 = arith.constant 1 : i32
    scf.for %arg6 = %c0_i32_18 to %29 step %c1_i32  : i32 {
      %c4_i32_19 = arith.constant 4 : i32
      %30 = arith.addi %c4_i32_19, %arg6 : i32
      %c2_i32 = arith.constant 2 : i32
      %31 = arith.subi %30, %c2_i32 : i32
      %c16_i32_20 = arith.constant 16 : i32
      %32 = arith.muli %31, %c16_i32_20 : i32
      %33 = tpu.assume_multiple %32, 16 : i32
      %c0_21 = arith.constant 0 : index
      %34 = arith.index_cast %33 : i32 to index
      %c0_22 = arith.constant 0 : index
      %35 = vector.load %arg2[%c0_21, %34, %c0_22] : memref<1x2176x512xbf16, #tpu.memory_space<vmem>>, vector<1x48x512xbf16>
      %36 = vector.shape_cast %35 : vector<1x48x512xbf16> to vector<48x512xbf16>
      %cst_23 = arith.constant 0.000000e+00 : f32
      %37 = vector.broadcast %cst_23 : f32 to vector<16x512xf32>
      %cst_24 = arith.constant dense<0.000000e+00> : vector<16x512xf32>
      %38 = tpu.matmul %3, %36, %cst_24 {dimension_numbers = #tpu.dot_dimension_numbers<[1], [0], [0], [1], [0, 0, 1, 1], [], []>} : vector<16x48xbf16>, vector<48x512xbf16>, vector<16x512xf32> -> vector<16x512xf32>
      %c2_i32_25 = arith.constant 2 : i32
      %39 = tpu.dynamic_rotate %38 by %c2_i32_25 dim 1 : vector<16x512xf32>, i32 -> vector<16x512xf32>
      %40 = arith.addf %37, %39 : vector<16x512xf32>
      %cst_26 = arith.constant dense<0.000000e+00> : vector<16x512xf32>
      %41 = tpu.matmul %5, %36, %cst_26 {dimension_numbers = #tpu.dot_dimension_numbers<[1], [0], [0], [1], [0, 0, 1, 1], [], []>} : vector<16x48xbf16>, vector<48x512xbf16>, vector<16x512xf32> -> vector<16x512xf32>
      %c1_i32_27 = arith.constant 1 : i32
      %42 = tpu.dynamic_rotate %41 by %c1_i32_27 dim 1 : vector<16x512xf32>, i32 -> vector<16x512xf32>
      %43 = arith.addf %40, %42 : vector<16x512xf32>
      %cst_28 = arith.constant dense<0.000000e+00> : vector<16x512xf32>
      %44 = tpu.matmul %7, %36, %cst_28 {dimension_numbers = #tpu.dot_dimension_numbers<[1], [0], [0], [1], [0, 0, 1, 1], [], []>} : vector<16x48xbf16>, vector<48x512xbf16>, vector<16x512xf32> -> vector<16x512xf32>
      %45 = arith.addf %43, %44 : vector<16x512xf32>
      %46 = vector.broadcast %8 : vector<16x1xf32> to vector<16x512xf32>
      %47 = arith.addf %45, %46 : vector<16x512xf32>
      %cst_29 = arith.constant 0.000000e+00 : f32
      %48 = vector.broadcast %cst_29 : f32 to vector<16x512xf32>
      %49 = arith.select %15, %47, %48 : vector<16x512xi1>, vector<16x512xf32>
      %50 = arith.truncf %49 : vector<16x512xf32> to vector<16x512xbf16>
      %c16_i32_30 = arith.constant 16 : i32
      %51 = arith.muli %30, %c16_i32_30 : i32
      %52 = tpu.assume_multiple %51, 16 : i32
      %c0_31 = arith.constant 0 : index
      %53 = arith.index_cast %52 : i32 to index
      %c0_32 = arith.constant 0 : index
      %54 = vector.load %arg5[%c0_31, %53, %c0_32] : memref<1x2176x512xbf16, #tpu.memory_space<vmem>>, vector<1x16x512xbf16>
      %55 = vector.shape_cast %54 : vector<1x16x512xbf16> to vector<16x512xbf16>
      %56 = vector.shape_cast %50 : vector<16x512xbf16> to vector<1x16x512xbf16>
      tpu.vector_store %arg5[%c0_31, %53, %c0_32], %56 {strides = array<i32>} : memref<1x2176x512xbf16, #tpu.memory_space<vmem>>, vector<1x16x512xbf16>,
    }
    return
  }
  func.func @transform_0(%arg0: i32, %arg1: memref<2xi32, #tpu.memory_space<smem>>) -> (i32, i32, i32) {
    %c0_i32 = arith.constant 0 : i32
    %c0_i32_0 = arith.constant 0 : i32
    %c0_i32_1 = arith.constant 0 : i32
    return %arg0, %c0_i32, %c0_i32_0 : i32, i32, i32
  }
  func.func @transform_1(%arg0: i32, %arg1: memref<2xi32, #tpu.memory_space<smem>>) -> (i32, i32, i32) {
    %c0_i32 = arith.constant 0 : i32
    %c0_i32_0 = arith.constant 0 : i32
    %c0_i32_1 = arith.constant 0 : i32
    %c0_i32_2 = arith.constant 0 : i32
    return %c0_i32, %c0_i32_0, %c0_i32_1 : i32, i32, i32
  }
  func.func @transform_2(%arg0: i32, %arg1: memref<2xi32, #tpu.memory_space<smem>>) -> (i32, i32) {
    %c0_i32 = arith.constant 0 : i32
    %c0_i32_0 = arith.constant 0 : i32
    %c0_i32_1 = arith.constant 0 : i32
    return %c0_i32, %c0_i32_0 : i32, i32
  }
  func.func @transform_3(%arg0: i32, %arg1: memref<2xi32, #tpu.memory_space<smem>>) -> (i32, i32, i32) {
    %c0_i32 = arith.constant 0 : i32
    %c0_i32_0 = arith.constant 0 : i32
    %c0_i32_1 = arith.constant 0 : i32
    return %arg0, %c0_i32, %c0_i32_0 : i32, i32, i32
  }
}

</mosaic_0001>

<llo_original>
// kernel: audio_vae_forward.7
$region0: #{audio_vae_forward.7}
  #allocation0 [shape = 'u32[]', space=smem, size = 0x4, offset = 0x4, fixed_abs, tag = 'smem constant byte address 0x4 - core index']
  #allocation1 [shape = 'u32[144,128]{1,0:T(1,128)}', space=vmem, size = 0x12000, scoped, tag = 'internal scratch']
  #allocation2 [shape = 's32[1]{0}', space=sflag, size = 0x4, scoped, tag = 'scoped memory for audio_vae_forward.7']
  #allocation3 [shape = 'u8[512]{0}', space=smem, size = 0x200, scoped, tag = 'prefetched SMEM operand 0']
  %s0 = inlined_call_operand.vmem [shape: s32[2], index: 0, kind: input, shape index: {}]
  %s1 = inlined_call_operand.vmem [shape: bf16[1,2176,512], index: 1, kind: input, shape index: {}]
  %s2 = inlined_call_operand.vmem [shape: bf16[3,16,48], index: 2, kind: input, shape index: {}]
  %s3 = inlined_call_operand.vmem [shape: f32[16,1], index: 3, kind: input, shape index: {}]
  %s4 = inlined_call_operand.vmem [shape: bf16[1,2176,512], index: 4, kind: output, shape index: {}]
  %s5 = sld [smem:[#allocation0]]
  $region29: #{audio_vae_forward.7} parent=0
    _
  %s7 = ssub.s32 1, %s5
  %s8 = scalar_select 0, %s7, %s5
  %s9 = sshll.u32 %s0, 4
  %s10 = int_to_ptr.vmem [resolvable:$true] %s9
  %12 = dma.vmem_to_smem %s10, 16, [#allocation3], [#allocation2]
  %13 = dma.done [#allocation2], 16
  %14 = sfence
  // Predicated region
  $region2: #{audio_vae_forward.7} parent=0 // pred_check
    _
  $region3: #{audio_vae_forward.7} parent=0 // pred_check_branch
    %16 = sbr.rel (0) target = $region5
  $region4: #{audio_vae_forward.7} parent=0 // pred_region
    _
  $region5: #{audio_vae_forward.7} parent=0 // pred_fallthru
    _
  // Predicated region
  $region6: #{audio_vae_forward.7} parent=0 // pred_check
    _
  $region7: #{audio_vae_forward.7} parent=0 // pred_check_branch
    %18 = sbr.rel (0) target = $region9
  $region8: #{audio_vae_forward.7} parent=0 // pred_region
    _
  $region9: #{audio_vae_forward.7} parent=0 // pred_fallthru
    _
  // Predicated region
  $region10: #{audio_vae_forward.7} parent=0 // pred_check
    _
  $region11: #{audio_vae_forward.7} parent=0 // pred_check_branch
    %20 = sbr.rel (0) target = $region13
  $region12: #{audio_vae_forward.7} parent=0 // pred_region
    _
  $region13: #{audio_vae_forward.7} parent=0 // pred_fallthru
    _
  %s22 = sld [smem:[#allocation3]]
  %s23 = sld [smem:[#allocation3 + $0x1]]
  %v24 = vld [vmem:[%s2] sm:$0xf]
  %v25 = vld [vmem:[%s2 + $0x4] sm:$0xf]
  %s26 = scalar_lea.vmem %s2, 8
  %v27 = vld [vmem:[%s26] sm:$0xf]
  %v28 = vld [vmem:[%s26 + $0x4] sm:$0xf]
  %s29 = scalar_lea.vmem %s2, 16
  %v30 = vld [vmem:[%s29] sm:$0xf]
  %v31 = vld [vmem:[%s29 + $0x4] sm:$0xf]
  %v32 = vld [vmem:[%s3] sm:$0xff]
  %v33 = vld [vmem:[%s3 + $0x8] sm:$0xff]
  %v34 = vlaneseq
  %v35 = vand.u32 %v34, 127
  %v36 = vadd.s32 %v35, 128
  %v37 = vadd.s32 %v35, 256
  %v38 = vadd.s32 %v35, 384
  %vm39 = vcmp.ge.s32.totalorder %v35, 4
  %vm40 = vcmp.ge.s32.totalorder %v36, 4
  %vm41 = vcmp.ge.s32.totalorder %v37, 4
  %vm42 = vcmp.ge.s32.totalorder %v38, 4
  %s43 = sadd.s32 %s23, 4
  %v44 = vstv %s43
  %vm45 = vcmp.lt.s32.totalorder %v35, %v44
  %vm46 = vcmp.lt.s32.totalorder %v36, %v44
  %vm47 = vcmp.lt.s32.totalorder %v37, %v44
  %vm48 = vcmp.lt.s32.totalorder %v38, %v44
  %vm49 = vmand %vm39, %vm45
  %vm50 = vmand %vm40, %vm46
  %vm51 = vmand %vm41, %vm47
  %vm52 = vmand %vm42, %vm48
  %53 = vst [vmem:[%s4] sm:$0xff] 0
  %54 = vst [vmem:[%s4 + $0x8] sm:$0xff] 0
  %55 = vst [vmem:[%s4 + $0x10] sm:$0xff] 0
  %56 = vst [vmem:[%s4 + $0x18] sm:$0xff] 0
  %57 = vst [vmem:[%s4 + $0x20] sm:$0xff] 0
  %58 = vst [vmem:[%s4 + $0x28] sm:$0xff] 0
  %59 = vst [vmem:[%s4 + $0x30] sm:$0xff] 0
  %60 = vst [vmem:[%s4 + $0x38] sm:$0xff] 0
  %61 = vst [vmem:[%s4 + $0x40] sm:$0xff] 0
  %62 = vst [vmem:[%s4 + $0x48] sm:$0xff] 0
  %63 = vst [vmem:[%s4 + $0x50] sm:$0xff] 0
  %64 = vst [vmem:[%s4 + $0x58] sm:$0xff] 0
  %65 = vst [vmem:[%s4 + $0x60] sm:$0xff] 0
  %66 = vst [vmem:[%s4 + $0x68] sm:$0xff] 0
  %67 = vst [vmem:[%s4 + $0x70] sm:$0xff] 0
  %68 = vst [vmem:[%s4 + $0x78] sm:$0xff] 0
  %s69 = sadd.s32 %s22, 4
  %s70 = smul.u32 %s69, 16
  %s71 = sshra.s32 %s70, 3
  %s72 = sand.u32 %s70, 7
  %s73 = smul.u32 %s71, 4
  %s74 = smul.addr %s73, 4
  %s75 = scalar_lea.vmem %s4, %s74
  %76 = vst [vmem:[%s75] sm:$0xff] 0
  %77 = vst [vmem:[%s75 + $0x8] sm:$0xff] 0
  %78 = vst [vmem:[%s75 + $0x10] sm:$0xff] 0
  %79 = vst [vmem:[%s75 + $0x18] sm:$0xff] 0
  %80 = vst [vmem:[%s75 + $0x20] sm:$0xff] 0
  %81 = vst [vmem:[%s75 + $0x28] sm:$0xff] 0
  %82 = vst [vmem:[%s75 + $0x30] sm:$0xff] 0
  %83 = vst [vmem:[%s75 + $0x38] sm:$0xff] 0
  %84 = vst [vmem:[%s75 + $0x40] sm:$0xff] 0
  %85 = vst [vmem:[%s75 + $0x48] sm:$0xff] 0
  %86 = vst [vmem:[%s75 + $0x50] sm:$0xff] 0
  %87 = vst [vmem:[%s75 + $0x58] sm:$0xff] 0
  %88 = vst [vmem:[%s75 + $0x60] sm:$0xff] 0
  %89 = vst [vmem:[%s75 + $0x68] sm:$0xff] 0
  %90 = vst [vmem:[%s75 + $0x70] sm:$0xff] 0
  %91 = vst [vmem:[%s75 + $0x78] sm:$0xff] 0
  // While loop
  $region14: #{audio_vae_forward.7} parent=0 // loop_pre_header
    _
  $region15: #{audio_vae_forward.7} parent=0 // loop_header
    %s93 = sphi 0, %s95
    %p94 = scmp.ge.s32.totalorder %s93, %s22
  $region16: #{audio_vae_forward.7} parent=0 // loop_header_branch
    %97 = sbr.rel (%p94) target = $region20
  $region17: #{audio_vae_forward.7} parent=0 // loop_body
    %s98 = sadd.s32 %s93, 4
    %s99 = smul.u32 %s98, 16
    %s100 = sshra.s32 %s99, 3
    %s101 = sand.u32 %s99, 7
    %s102 = smul.u32 %s100, 4
    %s103 = smul.addr %s102, 4
    %s104 = scalar_lea.vmem %s1, %s103
    %v105 = vld [vmem:[%s104] sm:$0xff]
    %v106 = vld [vmem:[%s104 + $0x8] sm:$0xff]
    %v107 = vld [vmem:[%s104 + $0x10] sm:$0xff]
    %v108 = vld [vmem:[%s104 + $0x18] sm:$0xff]
    %v109 = vld [vmem:[%s104 + $0x20] sm:$0xff]
    %v110 = vld [vmem:[%s104 + $0x28] sm:$0xff]
    %v111 = vld [vmem:[%s104 + $0x30] sm:$0xff]
    %v112 = vld [vmem:[%s104 + $0x38] sm:$0xff]
    %v113 = vld [vmem:[%s104 + $0x40] sm:$0xff]
    %v114 = vld [vmem:[%s104 + $0x48] sm:$0xff]
    %v115 = vld [vmem:[%s104 + $0x50] sm:$0xff]
    %v116 = vld [vmem:[%s104 + $0x58] sm:$0xff]
    %v119 = vunpack.c.l.b16 %v27
    %v120 = vunpack.c.l.b16 %v28
    %v121 = vpack.c.b16 %v120, %v119
    %v134 = vunpack.c.l.b16 %v105
    %v135 = vunpack.c.h.b16 %v105
    %v136 = vunpack.c.l.b16 %v106
    %v137 = vunpack.c.h.b16 %v106
    %v138 = vunpack.c.l.b16 %v107
    %v139 = vunpack.c.h.b16 %v107
    %v140 = vunpack.c.l.b16 %v108
    %v141 = vunpack.c.h.b16 %v108
    %v142 = vunpack.c.l.b16 %v109
    %v143 = vunpack.c.h.b16 %v109
    %v144 = vunpack.c.l.b16 %v110
    %v145 = vunpack.c.h.b16 %v110
    %v146 = vunpack.c.l.b16 %v111
    %v147 = vunpack.c.h.b16 %v111
    %v148 = vunpack.c.l.b16 %v112
    %v149 = vunpack.c.h.b16 %v112
    %v150 = vunpack.c.l.b16 %v113
    %v151 = vunpack.c.h.b16 %v113
    %v152 = vunpack.c.l.b16 %v114
    %v153 = vunpack.c.h.b16 %v114
    %v154 = vunpack.c.l.b16 %v115
    %v155 = vunpack.c.h.b16 %v115
    %v156 = vunpack.c.l.b16 %v116
    %v157 = vunpack.c.h.b16 %v116
    %v158 = vpack.c.b16 %v138, %v134
    %v159 = vpack.c.b16 %v139, %v135
    %v160 = vpack.c.b16 %v140, %v136
    %v161 = vpack.c.b16 %v141, %v137
    %v162 = vpack.c.b16 %v146, %v142
    %v163 = vpack.c.b16 %v147, %v143
    %v164 = vpack.c.b16 %v148, %v144
    %v165 = vpack.c.b16 %v149, %v145
    %v166 = vpack.c.b16 %v154, %v150
    %v167 = vpack.c.b16 %v155, %v151
    %v168 = vpack.c.b16 %v156, %v152
    %v169 = vpack.c.b16 %v157, %v153
    %vm182 = vcmask 392192
    %v184 = vsel %vm182, %v121, 0
    %186 = vmatprep.subr.bf16.mxu0 %v159
    %187 = vmatpush1.bf16.msra.mxu0 %v158
    %188 = vmatprep.subr.bf16.mxu0 %v163
    %189 = vmatpush1.bf16.msra.mxu0 %v162
    %190 = vmatprep.subr.bf16.mxu0 %v167
    %191 = vmatpush1.bf16.msra.mxu0 %v166
    %192 = vmatprep.subr.bf16.mxu0 0
    %193 = vmatpush1.bf16.msra.mxu0 0
    %194 = vmatprep.subr.bf16.mxu0 0
    %195 = vmatpush1.bf16.msra.mxu0 0
    %196 = vmatprep.subr.bf16.mxu0 0
    %197 = vmatpush1.bf16.msra.mxu0 0
    %198 = vmatprep.subr.bf16.mxu0 0
    %199 = vmatpush1.bf16.msra.mxu0 0
    %200 = vmatprep.subr.bf16.mxu0 0
    %201 = vmatpush1.bf16.msra.mxu0 0
    %202 = vmatprep.subr.bf16.mxu0 0
    %203 = vmatpush1.bf16.msra.mxu0 0
    %204 = vmatprep.subr.bf16.mxu0 0
    %205 = vmatpush1.bf16.msra.mxu0 0
    %206 = vmatprep.subr.bf16.mxu0 0
    %207 = vmatpush1.bf16.msra.mxu0 0
    %208 = vmatprep.subr.bf16.mxu0 0
    %209 = vmatpush1.bf16.msra.mxu0 0
    %210 = vmatprep.subr.bf16.mxu0 0
    %211 = vmatpush1.bf16.msra.mxu0 0
    %212 = vmatprep.subr.bf16.mxu0 0
    %213 = vmatpush1.bf16.msra.mxu0 0
    %214 = vmatprep.subr.bf16.mxu0 0
    %215 = vmatpush1.bf16.msra.mxu0 0
    %216 = vmatprep.subr.bf16.mxu0 0
    %217 = vmatpush1.bf16.msra.mxu0 0
    %218 = vmatprep.mubr.bf16.mxu0 0
    %219 = vmatmul.mubr.bf16.gmra.mrb[0].mxu0 %v184
    %v220 = vpop.f32.mrb[0].mxu0
    %v221 = vadd.f32 0.0, %v220
    %v222 = vpop.f32.mrb[0].mxu0
    %v223 = vadd.f32 0.0, %v222
    %v224 = vpop.f32.mrb[0].mxu0
    %v225 = vadd.f32 0.0, %v224
    %v226 = vpop.f32.mrb[0].mxu0
    %v227 = vadd.f32 0.0, %v226
    %228 = vdwg.mxu0
    %229 = vmatprep.subr.bf16.mxu0 %v161
    %230 = vmatpush1.bf16.msra.mxu0 %v160
    %231 = vmatprep.subr.bf16.mxu0 %v165
    %232 = vmatpush1.bf16.msra.mxu0 %v164
    %233 = vmatprep.subr.bf16.mxu0 %v169
    %234 = vmatpush1.bf16.msra.mxu0 %v168
    %235 = vmatprep.subr.bf16.mxu0 0
    %236 = vmatpush1.bf16.msra.mxu0 0
    %237 = vmatprep.subr.bf16.mxu0 0
    %238 = vmatpush1.bf16.msra.mxu0 0
    %239 = vmatprep.subr.bf16.mxu0 0
    %240 = vmatpush1.bf16.msra.mxu0 0
    %241 = vmatprep.subr.bf16.mxu0 0
    %242 = vmatpush1.bf16.msra.mxu0 0
    %243 = vmatprep.subr.bf16.mxu0 0
    %244 = vmatpush1.bf16.msra.mxu0 0
    %245 = vmatprep.subr.bf16.mxu0 0
    %246 = vmatpush1.bf16.msra.mxu0 0
    %247 = vmatprep.subr.bf16.mxu0 0
    %248 = vmatpush1.bf16.msra.mxu0 0
    %249 = vmatprep.subr.bf16.mxu0 0
    %250 = vmatpush1.bf16.msra.mxu0 0
    %251 = vmatprep.subr.bf16.mxu0 0
    %252 = vmatpush1.bf16.msra.mxu0 0
    %253 = vmatprep.subr.bf16.mxu0 0
    %254 = vmatpush1.bf16.msra.mxu0 0
    %255 = vmatprep.subr.bf16.mxu0 0
    %256 = vmatpush1.bf16.msra.mxu0 0
    %257 = vmatprep.subr.bf16.mxu0 0
    %258 = vmatpush1.bf16.msra.mxu0 0
    %259 = vmatprep.subr.bf16.mxu0 0
    %260 = vmatpush1.bf16.msra.mxu0 0
    %261 = vmatprep.mubr.bf16.mxu0 0
    %262 = vmatmul.mubr.bf16.gmra.mrb[0].mxu0 %v184
    %v263 = vpop.f32.mrb[0].mxu0
    %v264 = vadd.f32 0.0, %v263
    %v265 = vpop.f32.mrb[0].mxu0
    %v266 = vadd.f32 0.0, %v265
    %v267 = vpop.f32.mrb[0].mxu0
    %v268 = vadd.f32 0.0, %v267
    %v269 = vpop.f32.mrb[0].mxu0
    %v270 = vadd.f32 0.0, %v269
    %271 = vdwg.mxu0
    %272 = vrot.lane.b32.xlu0 %v221, 127
    %v273 = vpop.permute.xlu0 %272
    %274 = vrot.lane.b32.xlu0 %v225, 127
    %v275 = vpop.permute.xlu0 %274
    %276 = vrot.lane.b32.xlu0 %v223, 127
    %v277 = vpop.permute.xlu0 %276
    %278 = vrot.lane.b32.xlu0 %v227, 127
    %v279 = vpop.permute.xlu0 %278
    %280 = vrot.lane.b32.xlu0 %v264, 127
    %v281 = vpop.permute.xlu0 %280
    %282 = vrot.lane.b32.xlu0 %v268, 127
    %v283 = vpop.permute.xlu0 %282
    %284 = vrot.lane.b32.xlu0 %v266, 127
    %v285 = vpop.permute.xlu0 %284
    %286 = vrot.lane.b32.xlu0 %v270, 127
    %v287 = vpop.permute.xlu0 %286
    %vm288 = vcmp.lt.s32.totalorder %v35, 127
    %v289 = vsel %vm288, %v281, %v285
    %v290 = vsel %vm288, %v283, %v287
    %v291 = vsel %vm288, %v277, %v281
    %v292 = vsel %vm288, %v279, %v283
    %v293 = vsel %vm288, %v273, %v277
    %v294 = vsel %vm288, %v275, %v279
    %v295 = vsel %vm288, %v285, %v273
    %v296 = vsel %vm288, %v287, %v275
    %v299 = vunpack.c.l.b16 %v24
    %v300 = vunpack.c.l.b16 %v25
    %v301 = vpack.c.b16 %v300, %v299
    %v303 = vsel %vm182, %v301, 0
    %305 = vmatprep.subr.bf16.mxu0 %v159
    %306 = vmatpush1.bf16.msra.mxu0 %v158
    %307 = vmatprep.subr.bf16.mxu0 %v163
    %308 = vmatpush1.bf16.msra.mxu0 %v162
    %309 = vmatprep.subr.bf16.mxu0 %v167
    %310 = vmatpush1.bf16.msra.mxu0 %v166
    %311 = vmatprep.subr.bf16.mxu0 0
    %312 = vmatpush1.bf16.msra.mxu0 0
    %313 = vmatprep.subr.bf16.mxu0 0
    %314 = vmatpush1.bf16.msra.mxu0 0
    %315 = vmatprep.subr.bf16.mxu0 0
    %316 = vmatpush1.bf16.msra.mxu0 0
    %317 = vmatprep.subr.bf16.mxu0 0
    %318 = vmatpush1.bf16.msra.mxu0 0
    %319 = vmatprep.subr.bf16.mxu0 0
    %320 = vmatpush1.bf16.msra.mxu0 0
    %321 = vmatprep.subr.bf16.mxu0 0
    %322 = vmatpush1.bf16.msra.mxu0 0
    %323 = vmatprep.subr.bf16.mxu0 0
    %324 = vmatpush1.bf16.msra.mxu0 0
    %325 = vmatprep.subr.bf16.mxu0 0
    %326 = vmatpush1.bf16.msra.mxu0 0
    %327 = vmatprep.subr.bf16.mxu0 0
    %328 = vmatpush1.bf16.msra.mxu0 0
    %329 = vmatprep.subr.bf16.mxu0 0
    %330 = vmatpush1.bf16.msra.mxu0 0
    %331 = vmatprep.subr.bf16.mxu0 0
    %332 = vmatpush1.bf16.msra.mxu0 0
    %333 = vmatprep.subr.bf16.mxu0 0
    %334 = vmatpush1.bf16.msra.mxu0 0
    %335 = vmatprep.subr.bf16.mxu0 0
    %336 = vmatpush1.bf16.msra.mxu0 0
    %337 = vmatprep.mubr.bf16.mxu0 0
    %338 = vmatmul.mubr.bf16.gmra.mrb[0].mxu0 %v303
    %v339 = vpop.f32.mrb[0].mxu0
    %v340 = vadd.f32 %v293, %v339
    %v341 = vpop.f32.mrb[0].mxu0
    %v342 = vadd.f32 %v291, %v341
    %v343 = vpop.f32.mrb[0].mxu0
    %v344 = vadd.f32 %v294, %v343
    %v345 = vpop.f32.mrb[0].mxu0
    %v346 = vadd.f32 %v292, %v345
    %347 = vdwg.mxu0
    %348 = vmatprep.subr.bf16.mxu0 %v161
    %349 = vmatpush1.bf16.msra.mxu0 %v160
    %350 = vmatprep.subr.bf16.mxu0 %v165
    %351 = vmatpush1.bf16.msra.mxu0 %v164
    %352 = vmatprep.subr.bf16.mxu0 %v169
    %353 = vmatpush1.bf16.msra.mxu0 %v168
    %354 = vmatprep.subr.bf16.mxu0 0
    %355 = vmatpush1.bf16.msra.mxu0 0
    %356 = vmatprep.subr.bf16.mxu0 0
    %357 = vmatpush1.bf16.msra.mxu0 0
    %358 = vmatprep.subr.bf16.mxu0 0
    %359 = vmatpush1.bf16.msra.mxu0 0
    %360 = vmatprep.subr.bf16.mxu0 0
    %361 = vmatpush1.bf16.msra.mxu0 0
    %362 = vmatprep.subr.bf16.mxu0 0
    %363 = vmatpush1.bf16.msra.mxu0 0
    %364 = vmatprep.subr.bf16.mxu0 0
    %365 = vmatpush1.bf16.msra.mxu0 0
    %366 = vmatprep.subr.bf16.mxu0 0
    %367 = vmatpush1.bf16.msra.mxu0 0
    %368 = vmatprep.subr.bf16.mxu0 0
    %369 = vmatpush1.bf16.msra.mxu0 0
    %370 = vmatprep.subr.bf16.mxu0 0
    %371 = vmatpush1.bf16.msra.mxu0 0
    %372 = vmatprep.subr.bf16.mxu0 0
    %373 = vmatpush1.bf16.msra.mxu0 0
    %374 = vmatprep.subr.bf16.mxu0 0
    %375 = vmatpush1.bf16.msra.mxu0 0
    %376 = vmatprep.subr.bf16.mxu0 0
    %377 = vmatpush1.bf16.msra.mxu0 0
    %378 = vmatprep.subr.bf16.mxu0 0
    %379 = vmatpush1.bf16.msra.mxu0 0
    %380 = vmatprep.mubr.bf16.mxu0 0
    %381 = vmatmul.mubr.bf16.gmra.mrb[0].mxu0 %v303
    %v382 = vpop.f32.mrb[0].mxu0
    %v383 = vadd.f32 %v289, %v382
    %v384 = vpop.f32.mrb[0].mxu0
    %v385 = vadd.f32 %v295, %v384
    %v386 = vpop.f32.mrb[0].mxu0
    %v387 = vadd.f32 %v290, %v386
    %v388 = vpop.f32.mrb[0].mxu0
    %v389 = vadd.f32 %v296, %v388
    %390 = vdwg.mxu0
    %v393 = vunpack.c.l.b16 %v30
    %v394 = vunpack.c.l.b16 %v31
    %v395 = vpack.c.b16 %v394, %v393
    %v397 = vsel %vm182, %v395, 0
    %399 = vmatprep.subr.bf16.mxu0 %v159
    %400 = vmatpush1.bf16.msra.mxu0 %v158
    %401 = vmatprep.subr.bf16.mxu0 %v163
    %402 = vmatpush1.bf16.msra.mxu0 %v162
    %403 = vmatprep.subr.bf16.mxu0 %v167
    %404 = vmatpush1.bf16.msra.mxu0 %v166
    %405 = vmatprep.subr.bf16.mxu0 0
    %406 = vmatpush1.bf16.msra.mxu0 0
    %407 = vmatprep.subr.bf16.mxu0 0
    %408 = vmatpush1.bf16.msra.mxu0 0
    %409 = vmatprep.subr.bf16.mxu0 0
    %410 = vmatpush1.bf16.msra.mxu0 0
    %411 = vmatprep.subr.bf16.mxu0 0
    %412 = vmatpush1.bf16.msra.mxu0 0
    %413 = vmatprep.subr.bf16.mxu0 0
    %414 = vmatpush1.bf16.msra.mxu0 0
    %415 = vmatprep.subr.bf16.mxu0 0
    %416 = vmatpush1.bf16.msra.mxu0 0
    %417 = vmatprep.subr.bf16.mxu0 0
    %418 = vmatpush1.bf16.msra.mxu0 0
    %419 = vmatprep.subr.bf16.mxu0 0
    %420 = vmatpush1.bf16.msra.mxu0 0
    %421 = vmatprep.subr.bf16.mxu0 0
    %422 = vmatpush1.bf16.msra.mxu0 0
    %423 = vmatprep.subr.bf16.mxu0 0
    %424 = vmatpush1.bf16.msra.mxu0 0
    %425 = vmatprep.subr.bf16.mxu0 0
    %426 = vmatpush1.bf16.msra.mxu0 0
    %427 = vmatprep.subr.bf16.mxu0 0
    %428 = vmatpush1.bf16.msra.mxu0 0
    %429 = vmatprep.subr.bf16.mxu0 0
    %430 = vmatpush1.bf16.msra.mxu0 0
    %431 = vmatprep.mubr.bf16.mxu0 0
    %432 = vmatmul.mubr.bf16.gmra.mrb[0].mxu0 %v397
    %v433 = vpop.f32.mrb[0].mxu0
    %v434 = vadd.f32 0.0, %v433
    %v435 = vpop.f32.mrb[0].mxu0
    %v436 = vadd.f32 0.0, %v435
    %v437 = vpop.f32.mrb[0].mxu0
    %v438 = vadd.f32 0.0, %v437
    %v439 = vpop.f32.mrb[0].mxu0
    %v440 = vadd.f32 0.0, %v439
    %441 = vdwg.mxu0
    %442 = vmatprep.subr.bf16.mxu0 %v161
    %443 = vmatpush1.bf16.msra.mxu0 %v160
    %444 = vmatprep.subr.bf16.mxu0 %v165
    %445 = vmatpush1.bf16.msra.mxu0 %v164
    %446 = vmatprep.subr.bf16.mxu0 %v169
    %447 = vmatpush1.bf16.msra.mxu0 %v168
    %448 = vmatprep.subr.bf16.mxu0 0
    %449 = vmatpush1.bf16.msra.mxu0 0
    %450 = vmatprep.subr.bf16.mxu0 0
    %451 = vmatpush1.bf16.msra.mxu0 0
    %452 = vmatprep.subr.bf16.mxu0 0
    %453 = vmatpush1.bf16.msra.mxu0 0
    %454 = vmatprep.subr.bf16.mxu0 0
    %455 = vmatpush1.bf16.msra.mxu0 0
    %456 = vmatprep.subr.bf16.mxu0 0
    %457 = vmatpush1.bf16.msra.mxu0 0
    %458 = vmatprep.subr.bf16.mxu0 0
    %459 = vmatpush1.bf16.msra.mxu0 0
    %460 = vmatprep.subr.bf16.mxu0 0
    %461 = vmatpush1.bf16.msra.mxu0 0
    %462 = vmatprep.subr.bf16.mxu0 0
    %463 = vmatpush1.bf16.msra.mxu0 0
    %464 = vmatprep.subr.bf16.mxu0 0
    %465 = vmatpush1.bf16.msra.mxu0 0
    %466 = vmatprep.subr.bf16.mxu0 0
    %467 = vmatpush1.bf16.msra.mxu0 0
    %468 = vmatprep.subr.bf16.mxu0 0
    %469 = vmatpush1.bf16.msra.mxu0 0
    %470 = vmatprep.subr.bf16.mxu0 0
    %471 = vmatpush1.bf16.msra.mxu0 0
    %472 = vmatprep.subr.bf16.mxu0 0
    %473 = vmatpush1.bf16.msra.mxu0 0
    %474 = vmatprep.mubr.bf16.mxu0 0
    %475 = vmatmul.mubr.bf16.gmra.mrb[0].mxu0 %v397
    %v476 = vpop.f32.mrb[0].mxu0
    %v477 = vadd.f32 0.0, %v476
    %v478 = vpop.f32.mrb[0].mxu0
    %v479 = vadd.f32 0.0, %v478
    %v480 = vpop.f32.mrb[0].mxu0
    %v481 = vadd.f32 0.0, %v480
    %v482 = vpop.f32.mrb[0].mxu0
    %v483 = vadd.f32 0.0, %v482
    %484 = vdwg.mxu0
    %485 = vrot.lane.b32.xlu0 %v434, 126
    %v486 = vpop.permute.xlu0 %485
    %487 = vrot.lane.b32.xlu0 %v438, 126
    %v488 = vpop.permute.xlu0 %487
    %489 = vrot.lane.b32.xlu0 %v436, 126
    %v490 = vpop.permute.xlu0 %489
    %491 = vrot.lane.b32.xlu0 %v440, 126
    %v492 = vpop.permute.xlu0 %491
    %493 = vrot.lane.b32.xlu0 %v477, 126
    %v494 = vpop.permute.xlu0 %493
    %495 = vrot.lane.b32.xlu0 %v481, 126
    %v496 = vpop.permute.xlu0 %495
    %497 = vrot.lane.b32.xlu0 %v479, 126
    %v498 = vpop.permute.xlu0 %497
    %499 = vrot.lane.b32.xlu0 %v483, 126
    %v500 = vpop.permute.xlu0 %499
    %vm501 = vcmp.lt.s32.totalorder %v35, 126
    %v502 = vsel %vm501, %v494, %v498
    %v503 = vsel %vm501, %v496, %v500
    %v504 = vsel %vm501, %v490, %v494
    %v505 = vsel %vm501, %v492, %v496
    %v506 = vsel %vm501, %v486, %v490
    %v507 = vsel %vm501, %v488, %v492
    %v508 = vsel %vm501, %v498, %v486
    %v509 = vsel %vm501, %v500, %v488
    %v510 = vadd.f32 %v340, %v506
    %v511 = vadd.f32 %v342, %v504
    %v512 = vadd.f32 %v383, %v502
    %v513 = vadd.f32 %v385, %v508
    %v514 = vadd.f32 %v344, %v507
    %v515 = vadd.f32 %v346, %v505
    %v516 = vadd.f32 %v387, %v503
    %v517 = vadd.f32 %v389, %v509
    %519 = vset.pattern.permute.xlu0 0
    %520 = vperm.xlu0 %519, %v32
    %v521 = vpop.permute.xlu0 %520
    %524 = vset.pattern.permute.xlu0 0
    %525 = vperm.xlu0 %524, %v33
    %v526 = vpop.permute.xlu0 %525
    %v528 = vadd.f32 %v510, %v521
    %v529 = vadd.f32 %v511, %v521
    %v530 = vadd.f32 %v512, %v521
    %v531 = vadd.f32 %v513, %v521
    %v532 = vadd.f32 %v514, %v526
    %v533 = vadd.f32 %v515, %v526
    %v534 = vadd.f32 %v516, %v526
    %v535 = vadd.f32 %v517, %v526
    %v536 = vmax.f32 %v528, 0.0
    %v537 = vmax.f32 %v529, 0.0
    %v538 = vmax.f32 %v530, 0.0
    %v539 = vmax.f32 %v531, 0.0
    %v540 = vmax.f32 %v532, 0.0
    %v541 = vmax.f32 %v533, 0.0
    %v542 = vmax.f32 %v534, 0.0
    %v543 = vmax.f32 %v535, 0.0
    %v544 = vsel %vm49, %v536, 0.0
    %v545 = vsel %vm50, %v537, 0.0
    %v546 = vsel %vm51, %v538, 0.0
    %v547 = vsel %vm52, %v539, 0.0
    %v548 = vsel %vm49, %v540, 0.0
    %v549 = vsel %vm50, %v541, 0.0
    %v550 = vsel %vm51, %v542, 0.0
    %v551 = vsel %vm52, %v543, 0.0
    %v552 = vpack.c.bf16 %v548, %v544
    %v553 = vpack.c.bf16 %v549, %v545
    %v554 = vpack.c.bf16 %v550, %v546
    %v555 = vpack.c.bf16 %v551, %v547
    %v560 = vunpack.c.l.b16 %v552
    %v561 = vunpack.c.l.b16 %v553
    %v562 = vunpack.c.l.b16 %v554
    %v563 = vunpack.c.l.b16 %v555
    %v564 = vunpack.c.h.b16 %v552
    %v565 = vunpack.c.h.b16 %v553
    %v566 = vunpack.c.h.b16 %v554
    %v567 = vunpack.c.h.b16 %v555
    %v568 = vpack.c.b16 %v561, %v560
    %v569 = vpack.c.b16 %v563, %v562
    %v570 = vpack.c.b16 %v565, %v564
    %v571 = vpack.c.b16 %v567, %v566
    %s576 = smul.addr %s102, 4
    %s577 = scalar_lea.vmem %s4, %s576
    %578 = vst [vmem:[%s577] sm:$0xff] %v568
    %579 = vst [vmem:[%s577 + $0x8] sm:$0xff] %v569
    %580 = vst [vmem:[%s577 + $0x10] sm:$0xff] %v570
    %581 = vst [vmem:[%s577 + $0x18] sm:$0xff] %v571
  $region18: #{audio_vae_forward.7} parent=0 // loop_footer
    %s95 = sadd.s32 %s93, 1
  $region19: #{audio_vae_forward.7} parent=0 // loop_footer_branch
    %92 = sbr.rel target = $region15
  $region20: #{audio_vae_forward.7} parent=0 // loop_exit
    _
  // Predicated region
  $region21: #{audio_vae_forward.7} parent=0 // pred_check
    _
  $region22: #{audio_vae_forward.7} parent=0 // pred_check_branch
    %583 = sbr.rel (0) target = $region24
  $region23: #{audio_vae_forward.7} parent=0 // pred_region
    _
  $region24: #{audio_vae_forward.7} parent=0 // pred_fallthru
    _
  // Predicated region
  $region25: #{audio_vae_forward.7} parent=0 // pred_check
    _
  $region26: #{audio_vae_forward.7} parent=0 // pred_check_branch
    %585 = sbr.rel (0) target = $region28
  $region27: #{audio_vae_forward.7} parent=0 // pred_region
    _
  $region28: #{audio_vae_forward.7} parent=0 // pred_fallthru
    _

// kernel: closed_call.30
$region0: #{closed_call.30}
  #allocation0 [shape = 'u32[]', space=smem, size = 0x4, offset = 0x4, fixed_abs, tag = 'smem constant byte address 0x4 - core index']
  #allocation1 [shape = 'u32[144,128]{1,0:T(1,128)}', space=vmem, size = 0x12000, scoped, tag = 'internal scratch']
  #allocation2 [shape = 's32[1]{0}', space=sflag, size = 0x4, scoped, tag = 'scoped memory for closed_call.30']
  #allocation3 [shape = 'u8[512]{0}', space=smem, size = 0x200, scoped, tag = 'prefetched SMEM operand 0']
  %s0 = inlined_call_operand.vmem [shape: s32[2], index: 0, kind: input, shape index: {}]
  %s1 = inlined_call_operand.vmem [shape: bf16[1,2176,512], index: 1, kind: input, shape index: {}]
  %s2 = inlined_call_operand.vmem [shape: bf16[5,16,80], index: 2, kind: input, shape index: {}]
  %s3 = inlined_call_operand.vmem [shape: f32[16,1], index: 3, kind: input, shape index: {}]
  %s4 = inlined_call_operand.vmem [shape: bf16[1,2176,512], index: 4, kind: output, shape index: {}]
  %s5 = sld [smem:[#allocation0]]
  $region29: #{closed_call.30} parent=0
    _
  %s7 = ssub.s32 1, %s5
  %s8 = scalar_select 0, %s7, %s5
  %s9 = sshll.u32 %s0, 4
  %s10 = int_to_ptr.vmem [resolvable:$true] %s9
  %12 = dma.vmem_to_smem %s10, 16, [#allocation3], [#allocation2]
  %13 = dma.done [#allocation2], 16
  %14 = sfence
  // Predicated region
  $region2: #{closed_call.30} parent=0 // pred_check
    _
  $region3: #{closed_call.30} parent=0 // pred_check_branch
    %16 = sbr.rel (0) target = $region5
  $region4: #{closed_call.30} parent=0 // pred_region
    _
  $region5: #{closed_call.30} parent=0 // pred_fallthru
    _
  // Predicated region
  $region6: #{closed_call.30} parent=0 // pred_check
    _
  $region7: #{closed_call.30} parent=0 // pred_check_branch
    %18 = sbr.rel (0) target = $region9
  $region8: #{closed_call.30} parent=0 // pred_region
    _
  $region9: #{closed_call.30} parent=0 // pred_fallthru
    _
  // Predicated region
  $region10: #{closed_call.30} parent=0 // pred_check
    _
  $region11: #{closed_call.30} parent=0 // pred_check_branch
    %20 = sbr.rel (0) target = $region13
  $region12: #{closed_call.30} parent=0 // pred_region
    _
  $region13: #{closed_call.30} parent=0 // pred_fallthru
    _
  %s22 = sld [smem:[#allocation3]]
  %s23 = sld [smem:[#allocation3 + $0x1]]
  %v24 = vld [vmem:[%s2] sm:$0xf]
  %v25 = vld [vmem:[%s2 + $0x4] sm:$0xf]
  %s26 = scalar_lea.vmem %s2, 8
  %v27 = vld [vmem:[%s26] sm:$0xf]
  %v28 = vld [vmem:[%s26 + $0x4] sm:$0xf]
  %s29 = scalar_lea.vmem %s2, 16
  %v30 = vld [vmem:[%s29] sm:$0xf]
  %v31 = vld [vmem:[%s29 + $0x4] sm:$0xf]
  %s32 = scalar_lea.vmem %s2, 24
  %v33 = vld [vmem:[%s32] sm:$0xf]
  %v34 = vld [vmem:[%s32 + $0x4] sm:$0xf]
  %s35 = scalar_lea.vmem %s2, 32
  %v36 = vld [vmem:[%s35] sm:$0xf]
  %v37 = vld [vmem:[%s35 + $0x4] sm:$0xf]
  %v38 = vld [vmem:[%s3] sm:$0xff]
  %v39 = vld [vmem:[%s3 + $0x8] sm:$0xff]
  %v40 = vlaneseq
  %v41 = vand.u32 %v40, 127
  %v42 = vadd.s32 %v41, 128
  %v43 = vadd.s32 %v41, 256
  %v44 = vadd.s32 %v41, 384
  %vm45 = vcmp.ge.s32.totalorder %v41, 4
  %vm46 = vcmp.ge.s32.totalorder %v42, 4
  %vm47 = vcmp.ge.s32.totalorder %v43, 4
  %vm48 = vcmp.ge.s32.totalorder %v44, 4
  %s49 = sadd.s32 %s23, 4
  %v50 = vstv %s49
  %vm51 = vcmp.lt.s32.totalorder %v41, %v50
  %vm52 = vcmp.lt.s32.totalorder %v42, %v50
  %vm53 = vcmp.lt.s32.totalorder %v43, %v50
  %vm54 = vcmp.lt.s32.totalorder %v44, %v50
  %vm55 = vmand %vm45, %vm51
  %vm56 = vmand %vm46, %vm52
  %vm57 = vmand %vm47, %vm53
  %vm58 = vmand %vm48, %vm54
  %59 = vst [vmem:[%s4] sm:$0xff] 0
  %60 = vst [vmem:[%s4 + $0x8] sm:$0xff] 0
  %61 = vst [vmem:[%s4 + $0x10] sm:$0xff] 0
  %62 = vst [vmem:[%s4 + $0x18] sm:$0xff] 0
  %63 = vst [vmem:[%s4 + $0x20] sm:$0xff] 0
  %64 = vst [vmem:[%s4 + $0x28] sm:$0xff] 0
  %65 = vst [vmem:[%s4 + $0x30] sm:$0xff] 0
  %66 = vst [vmem:[%s4 + $0x38] sm:$0xff] 0
  %67 = vst [vmem:[%s4 + $0x40] sm:$0xff] 0
  %68 = vst [vmem:[%s4 + $0x48] sm:$0xff] 0
  %69 = vst [vmem:[%s4 + $0x50] sm:$0xff] 0
  %70 = vst [vmem:[%s4 + $0x58] sm:$0xff] 0
  %71 = vst [vmem:[%s4 + $0x60] sm:$0xff] 0
  %72 = vst [vmem:[%s4 + $0x68] sm:$0xff] 0
  %73 = vst [vmem:[%s4 + $0x70] sm:$0xff] 0
  %74 = vst [vmem:[%s4 + $0x78] sm:$0xff] 0
  %s75 = sadd.s32 %s22, 4
  %s76 = smul.u32 %s75, 16
  %s77 = sshra.s32 %s76, 3
  %s78 = sand.u32 %s76, 7
  %s79 = smul.u32 %s77, 4
  %s80 = smul.addr %s79, 4
  %s81 = scalar_lea.vmem %s4, %s80
  %82 = vst [vmem:[%s81] sm:$0xff] 0
  %83 = vst [vmem:[%s81 + $0x8] sm:$0xff] 0
  %84 = vst [vmem:[%s81 + $0x10] sm:$0xff] 0
  %85 = vst [vmem:[%s81 + $0x18] sm:$0xff] 0
  %86 = vst [vmem:[%s81 + $0x20] sm:$0xff] 0
  %87 = vst [vmem:[%s81 + $0x28] sm:$0xff] 0
  %88 = vst [vmem:[%s81 + $0x30] sm:$0xff] 0
  %89 = vst [vmem:[%s81 + $0x38] sm:$0xff] 0
  %90 = vst [vmem:[%s81 + $0x40] sm:$0xff] 0
  %91 = vst [vmem:[%s81 + $0x48] sm:$0xff] 0
  %92 = vst [vmem:[%s81 + $0x50] sm:$0xff] 0
  %93 = vst [vmem:[%s81 + $0x58] sm:$0xff] 0
  %94 = vst [vmem:[%s81 + $0x60] sm:$0xff] 0
  %95 = vst [vmem:[%s81 + $0x68] sm:$0xff] 0
  %96 = vst [vmem:[%s81 + $0x70] sm:$0xff] 0
  %97 = vst [vmem:[%s81 + $0x78] sm:$0xff] 0
  // While loop
  $region14: #{closed_call.30} parent=0 // loop_pre_header
    _
  $region15: #{closed_call.30} parent=0 // loop_header
    %s99 = sphi 0, %s101
    %p100 = scmp.ge.s32.totalorder %s99, %s22
  $region16: #{closed_call.30} parent=0 // loop_header_branch
    %103 = sbr.rel (%p100) target = $region20
  $region17: #{closed_call.30} parent=0 // loop_body
    %s104 = sadd.s32 %s99, 4
    %s105 = smul.u32 %s104, 16
    %s106 = sshra.s32 %s105, 3
    %s107 = sand.u32 %s105, 7
    %s108 = smul.u32 %s106, 4
    %s109 = smul.addr %s108, 4
    %s110 = scalar_lea.vmem %s1, %s109
    %v111 = vld [vmem:[%s110] sm:$0xff]
    %v112 = vld [vmem:[%s110 + $0x8] sm:$0xff]
    %v113 = vld [vmem:[%s110 + $0x10] sm:$0xff]
    %v114 = vld [vmem:[%s110 + $0x18] sm:$0xff]
    %v115 = vld [vmem:[%s110 + $0x20] sm:$0xff]
    %v116 = vld [vmem:[%s110 + $0x28] sm:$0xff]
    %v117 = vld [vmem:[%s110 + $0x30] sm:$0xff]
    %v118 = vld [vmem:[%s110 + $0x38] sm:$0xff]
    %v119 = vld [vmem:[%s110 + $0x40] sm:$0xff]
    %v120 = vld [vmem:[%s110 + $0x48] sm:$0xff]
    %v121 = vld [vmem:[%s110 + $0x50] sm:$0xff]
    %v122 = vld [vmem:[%s110 + $0x58] sm:$0xff]
    %v123 = vld [vmem:[%s110 + $0x60] sm:$0xff]
    %v124 = vld [vmem:[%s110 + $0x68] sm:$0xff]
    %v125 = vld [vmem:[%s110 + $0x70] sm:$0xff]
    %v126 = vld [vmem:[%s110 + $0x78] sm:$0xff]
    %v127 = vld [vmem:[%s110 + $0x80] sm:$0xff]
    %v128 = vld [vmem:[%s110 + $0x88] sm:$0xff]
    %v129 = vld [vmem:[%s110 + $0x90] sm:$0xff]
    %v130 = vld [vmem:[%s110 + $0x98] sm:$0xff]
    %v133 = vunpack.c.l.b16 %v27
    %v134 = vunpack.c.l.b16 %v28
    %v135 = vpack.c.b16 %v134, %v133
    %v156 = vunpack.c.l.b16 %v111
    %v157 = vunpack.c.h.b16 %v111
    %v158 = vunpack.c.l.b16 %v112
    %v159 = vunpack.c.h.b16 %v112
    %v160 = vunpack.c.l.b16 %v113
    %v161 = vunpack.c.h.b16 %v113
    %v162 = vunpack.c.l.b16 %v114
    %v163 = vunpack.c.h.b16 %v114
    %v164 = vunpack.c.l.b16 %v115
    %v165 = vunpack.c.h.b16 %v115
    %v166 = vunpack.c.l.b16 %v116
    %v167 = vunpack.c.h.b16 %v116
    %v168 = vunpack.c.l.b16 %v117
    %v169 = vunpack.c.h.b16 %v117
    %v170 = vunpack.c.l.b16 %v118
    %v171 = vunpack.c.h.b16 %v118
    %v172 = vunpack.c.l.b16 %v119
    %v173 = vunpack.c.h.b16 %v119
    %v174 = vunpack.c.l.b16 %v120
    %v175 = vunpack.c.h.b16 %v120
    %v176 = vunpack.c.l.b16 %v121
    %v177 = vunpack.c.h.b16 %v121
    %v178 = vunpack.c.l.b16 %v122
    %v179 = vunpack.c.h.b16 %v122
    %v180 = vunpack.c.l.b16 %v123
    %v181 = vunpack.c.h.b16 %v123
    %v182 = vunpack.c.l.b16 %v124
    %v183 = vunpack.c.h.b16 %v124
    %v184 = vunpack.c.l.b16 %v125
    %v185 = vunpack.c.h.b16 %v125
    %v186 = vunpack.c.l.b16 %v126
    %v187 = vunpack.c.h.b16 %v126
    %v188 = vunpack.c.l.b16 %v127
    %v189 = vunpack.c.h.b16 %v127
    %v190 = vunpack.c.l.b16 %v128
    %v191 = vunpack.c.h.b16 %v128
    %v192 = vunpack.c.l.b16 %v129
    %v193 = vunpack.c.h.b16 %v129
    %v194 = vunpack.c.l.b16 %v130
    %v195 = vunpack.c.h.b16 %v130
    %v196 = vpack.c.b16 %v160, %v156
    %v197 = vpack.c.b16 %v161, %v157
    %v198 = vpack.c.b16 %v162, %v158
    %v199 = vpack.c.b16 %v163, %v159
    %v200 = vpack.c.b16 %v168, %v164
    %v201 = vpack.c.b16 %v169, %v165
    %v202 = vpack.c.b16 %v170, %v166
    %v203 = vpack.c.b16 %v171, %v167
    %v204 = vpack.c.b16 %v176, %v172
    %v205 = vpack.c.b16 %v177, %v173
    %v206 = vpack.c.b16 %v178, %v174
    %v207 = vpack.c.b16 %v179, %v175
    %v208 = vpack.c.b16 %v184, %v180
    %v209 = vpack.c.b16 %v185, %v181
    %v210 = vpack.c.b16 %v186, %v182
    %v211 = vpack.c.b16 %v187, %v183
    %v212 = vpack.c.b16 %v192, %v188
    %v213 = vpack.c.b16 %v193, %v189
    %v214 = vpack.c.b16 %v194, %v190
    %v215 = vpack.c.b16 %v195, %v191
    %vm236 = vcmask 654336
    %v238 = vsel %vm236, %v135, 0
    %240 = vmatprep.subr.bf16.mxu0 %v197
    %241 = vmatpush1.bf16.msra.mxu0 %v196
    %242 = vmatprep.subr.bf16.mxu0 %v201
    %243 = vmatpush1.bf16.msra.mxu0 %v200
    %244 = vmatprep.subr.bf16.mxu0 %v205
    %245 = vmatpush1.bf16.msra.mxu0 %v204
    %246 = vmatprep.subr.bf16.mxu0 %v209
    %247 = vmatpush1.bf16.msra.mxu0 %v208
    %248 = vmatprep.subr.bf16.mxu0 %v213
    %249 = vmatpush1.bf16.msra.mxu0 %v212
    %250 = vmatprep.subr.bf16.mxu0 0
    %251 = vmatpush1.bf16.msra.mxu0 0
    %252 = vmatprep.subr.bf16.mxu0 0
    %253 = vmatpush1.bf16.msra.mxu0 0
    %254 = vmatprep.subr.bf16.mxu0 0
    %255 = vmatpush1.bf16.msra.mxu0 0
    %256 = vmatprep.subr.bf16.mxu0 0
    %257 = vmatpush1.bf16.msra.mxu0 0
    %258 = vmatprep.subr.bf16.mxu0 0
    %259 = vmatpush1.bf16.msra.mxu0 0
    %260 = vmatprep.subr.bf16.mxu0 0
    %261 = vmatpush1.bf16.msra.mxu0 0
    %262 = vmatprep.subr.bf16.mxu0 0
    %263 = vmatpush1.bf16.msra.mxu0 0
    %264 = vmatprep.subr.bf16.mxu0 0
    %265 = vmatpush1.bf16.msra.mxu0 0
    %266 = vmatprep.subr.bf16.mxu0 0
    %267 = vmatpush1.bf16.msra.mxu0 0
    %268 = vmatprep.subr.bf16.mxu0 0
    %269 = vmatpush1.bf16.msra.mxu0 0
    %270 = vmatprep.subr.bf16.mxu0 0
    %271 = vmatpush1.bf16.msra.mxu0 0
    %272 = vmatprep.mubr.bf16.mxu0 0
    %273 = vmatmul.mubr.bf16.gmra.mrb[0].mxu0 %v238
    %v274 = vpop.f32.mrb[0].mxu0
    %v275 = vadd.f32 0.0, %v274
    %v276 = vpop.f32.mrb[0].mxu0
    %v277 = vadd.f32 0.0, %v276
    %v278 = vpop.f32.mrb[0].mxu0
    %v279 = vadd.f32 0.0, %v278
    %v280 = vpop.f32.mrb[0].mxu0
    %v281 = vadd.f32 0.0, %v280
    %282 = vdwg.mxu0
    %283 = vmatprep.subr.bf16.mxu0 %v199
    %284 = vmatpush1.bf16.msra.mxu0 %v198
    %285 = vmatprep.subr.bf16.mxu0 %v203
    %286 = vmatpush1.bf16.msra.mxu0 %v202
    %287 = vmatprep.subr.bf16.mxu0 %v207
    %288 = vmatpush1.bf16.msra.mxu0 %v206
    %289 = vmatprep.subr.bf16.mxu0 %v211
    %290 = vmatpush1.bf16.msra.mxu0 %v210
    %291 = vmatprep.subr.bf16.mxu0 %v215
    %292 = vmatpush1.bf16.msra.mxu0 %v214
    %293 = vmatprep.subr.bf16.mxu0 0
    %294 = vmatpush1.bf16.msra.mxu0 0
    %295 = vmatprep.subr.bf16.mxu0 0
    %296 = vmatpush1.bf16.msra.mxu0 0
    %297 = vmatprep.subr.bf16.mxu0 0
    %298 = vmatpush1.bf16.msra.mxu0 0
    %299 = vmatprep.subr.bf16.mxu0 0
    %300 = vmatpush1.bf16.msra.mxu0 0
    %301 = vmatprep.subr.bf16.mxu0 0
    %302 = vmatpush1.bf16.msra.mxu0 0
    %303 = vmatprep.subr.bf16.mxu0 0
    %304 = vmatpush1.bf16.msra.mxu0 0
    %305 = vmatprep.subr.bf16.mxu0 0
    %306 = vmatpush1.bf16.msra.mxu0 0
    %307 = vmatprep.subr.bf16.mxu0 0
    %308 = vmatpush1.bf16.msra.mxu0 0
    %309 = vmatprep.subr.bf16.mxu0 0
    %310 = vmatpush1.bf16.msra.mxu0 0
    %311 = vmatprep.subr.bf16.mxu0 0
    %312 = vmatpush1.bf16.msra.mxu0 0
    %313 = vmatprep.subr.bf16.mxu0 0
    %314 = vmatpush1.bf16.msra.mxu0 0
    %315 = vmatprep.mubr.bf16.mxu0 0
    %316 = vmatmul.mubr.bf16.gmra.mrb[0].mxu0 %v238
    %v317 = vpop.f32.mrb[0].mxu0
    %v318 = vadd.f32 0.0, %v317
    %v319 = vpop.f32.mrb[0].mxu0
    %v320 = vadd.f32 0.0, %v319
    %v321 = vpop.f32.mrb[0].mxu0
    %v322 = vadd.f32 0.0, %v321
    %v323 = vpop.f32.mrb[0].mxu0
    %v324 = vadd.f32 0.0, %v323
    %325 = vdwg.mxu0
    %326 = vrot.lane.b32.xlu0 %v275, 127
    %v327 = vpop.permute.xlu0 %326
    %328 = vrot.lane.b32.xlu0 %v279, 127
    %v329 = vpop.permute.xlu0 %328
    %330 = vrot.lane.b32.xlu0 %v277, 127
    %v331 = vpop.permute.xlu0 %330
    %332 = vrot.lane.b32.xlu0 %v281, 127
    %v333 = vpop.permute.xlu0 %332
    %334 = vrot.lane.b32.xlu0 %v318, 127
    %v335 = vpop.permute.xlu0 %334
    %336 = vrot.lane.b32.xlu0 %v322, 127
    %v337 = vpop.permute.xlu0 %336
    %338 = vrot.lane.b32.xlu0 %v320, 127
    %v339 = vpop.permute.xlu0 %338
    %340 = vrot.lane.b32.xlu0 %v324, 127
    %v341 = vpop.permute.xlu0 %340
    %vm342 = vcmp.lt.s32.totalorder %v41, 127
    %v343 = vsel %vm342, %v335, %v339
    %v344 = vsel %vm342, %v337, %v341
    %v345 = vsel %vm342, %v331, %v335
    %v346 = vsel %vm342, %v333, %v337
    %v347 = vsel %vm342, %v327, %v331
    %v348 = vsel %vm342, %v329, %v333
    %v349 = vsel %vm342, %v339, %v327
    %v350 = vsel %vm342, %v341, %v329
    %v353 = vunpack.c.l.b16 %v24
    %v354 = vunpack.c.l.b16 %v25
    %v355 = vpack.c.b16 %v354, %v353
    %v357 = vsel %vm236, %v355, 0
    %359 = vmatprep.subr.bf16.mxu0 %v197
    %360 = vmatpush1.bf16.msra.mxu0 %v196
    %361 = vmatprep.subr.bf16.mxu0 %v201
    %362 = vmatpush1.bf16.msra.mxu0 %v200
    %363 = vmatprep.subr.bf16.mxu0 %v205
    %364 = vmatpush1.bf16.msra.mxu0 %v204
    %365 = vmatprep.subr.bf16.mxu0 %v209
    %366 = vmatpush1.bf16.msra.mxu0 %v208
    %367 = vmatprep.subr.bf16.mxu0 %v213
    %368 = vmatpush1.bf16.msra.mxu0 %v212
    %369 = vmatprep.subr.bf16.mxu0 0
    %370 = vmatpush1.bf16.msra.mxu0 0
    %371 = vmatprep.subr.bf16.mxu0 0
    %372 = vmatpush1.bf16.msra.mxu0 0
    %373 = vmatprep.subr.bf16.mxu0 0
    %374 = vmatpush1.bf16.msra.mxu0 0
    %375 = vmatprep.subr.bf16.mxu0 0
    %376 = vmatpush1.bf16.msra.mxu0 0
    %377 = vmatprep.subr.bf16.mxu0 0
    %378 = vmatpush1.bf16.msra.mxu0 0
    %379 = vmatprep.subr.bf16.mxu0 0
    %380 = vmatpush1.bf16.msra.mxu0 0
    %381 = vmatprep.subr.bf16.mxu0 0
    %382 = vmatpush1.bf16.msra.mxu0 0
    %383 = vmatprep.subr.bf16.mxu0 0
    %384 = vmatpush1.bf16.msra.mxu0 0
    %385 = vmatprep.subr.bf16.mxu0 0
    %386 = vmatpush1.bf16.msra.mxu0 0
    %387 = vmatprep.subr.bf16.mxu0 0
    %388 = vmatpush1.bf16.msra.mxu0 0
    %389 = vmatprep.subr.bf16.mxu0 0
    %390 = vmatpush1.bf16.msra.mxu0 0
    %391 = vmatprep.mubr.bf16.mxu0 0
    %392 = vmatmul.mubr.bf16.gmra.mrb[0].mxu0 %v357
    %v393 = vpop.f32.mrb[0].mxu0
    %v394 = vadd.f32 %v347, %v393
    %v395 = vpop.f32.mrb[0].mxu0
    %v396 = vadd.f32 %v345, %v395
    %v397 = vpop.f32.mrb[0].mxu0
    %v398 = vadd.f32 %v348, %v397
    %v399 = vpop.f32.mrb[0].mxu0
    %v400 = vadd.f32 %v346, %v399
    %401 = vdwg.mxu0
    %402 = vmatprep.subr.bf16.mxu0 %v199
    %403 = vmatpush1.bf16.msra.mxu0 %v198
    %404 = vmatprep.subr.bf16.mxu0 %v203
    %405 = vmatpush1.bf16.msra.mxu0 %v202
    %406 = vmatprep.subr.bf16.mxu0 %v207
    %407 = vmatpush1.bf16.msra.mxu0 %v206
    %408 = vmatprep.subr.bf16.mxu0 %v211
    %409 = vmatpush1.bf16.msra.mxu0 %v210
    %410 = vmatprep.subr.bf16.mxu0 %v215
    %411 = vmatpush1.bf16.msra.mxu0 %v214
    %412 = vmatprep.subr.bf16.mxu0 0
    %413 = vmatpush1.bf16.msra.mxu0 0
    %414 = vmatprep.subr.bf16.mxu0 0
    %415 = vmatpush1.bf16.msra.mxu0 0
    %416 = vmatprep.subr.bf16.mxu0 0
    %417 = vmatpush1.bf16.msra.mxu0 0
    %418 = vmatprep.subr.bf16.mxu0 0
    %419 = vmatpush1.bf16.msra.mxu0 0
    %420 = vmatprep.subr.bf16.mxu0 0
    %421 = vmatpush1.bf16.msra.mxu0 0
    %422 = vmatprep.subr.bf16.mxu0 0
    %423 = vmatpush1.bf16.msra.mxu0 0
    %424 = vmatprep.subr.bf16.mxu0 0
    %425 = vmatpush1.bf16.msra.mxu0 0
    %426 = vmatprep.subr.bf16.mxu0 0
    %427 = vmatpush1.bf16.msra.mxu0 0
    %428 = vmatprep.subr.bf16.mxu0 0
    %429 = vmatpush1.bf16.msra.mxu0 0
    %430 = vmatprep.subr.bf16.mxu0 0
    %431 = vmatpush1.bf16.msra.mxu0 0
    %432 = vmatprep.subr.bf16.mxu0 0
    %433 = vmatpush1.bf16.msra.mxu0 0
    %434 = vmatprep.mubr.bf16.mxu0 0
    %435 = vmatmul.mubr.bf16.gmra.mrb[0].mxu0 %v357
    %v436 = vpop.f32.mrb[0].mxu0
    %v437 = vadd.f32 %v343, %v436
    %v438 = vpop.f32.mrb[0].mxu0
    %v439 = vadd.f32 %v349, %v438
    %v440 = vpop.f32.mrb[0].mxu0
    %v441 = vadd.f32 %v344, %v440
    %v442 = vpop.f32.mrb[0].mxu0
    %v443 = vadd.f32 %v350, %v442
    %444 = vdwg.mxu0
    %v447 = vunpack.c.l.b16 %v30
    %v448 = vunpack.c.l.b16 %v31
    %v449 = vpack.c.b16 %v448, %v447
    %v451 = vsel %vm236, %v449, 0
    %453 = vmatprep.subr.bf16.mxu0 %v197
    %454 = vmatpush1.bf16.msra.mxu0 %v196
    %455 = vmatprep.subr.bf16.mxu0 %v201
    %456 = vmatpush1.bf16.msra.mxu0 %v200
    %457 = vmatprep.subr.bf16.mxu0 %v205
    %458 = vmatpush1.bf16.msra.mxu0 %v204
    %459 = vmatprep.subr.bf16.mxu0 %v209
    %460 = vmatpush1.bf16.msra.mxu0 %v208
    %461 = vmatprep.subr.bf16.mxu0 %v213
    %462 = vmatpush1.bf16.msra.mxu0 %v212
    %463 = vmatprep.subr.bf16.mxu0 0
    %464 = vmatpush1.bf16.msra.mxu0 0
    %465 = vmatprep.subr.bf16.mxu0 0
    %466 = vmatpush1.bf16.msra.mxu0 0
    %467 = vmatprep.subr.bf16.mxu0 0
    %468 = vmatpush1.bf16.msra.mxu0 0
    %469 = vmatprep.subr.bf16.mxu0 0
    %470 = vmatpush1.bf16.msra.mxu0 0
    %471 = vmatprep.subr.bf16.mxu0 0
    %472 = vmatpush1.bf16.msra.mxu0 0
    %473 = vmatprep.subr.bf16.mxu0 0
    %474 = vmatpush1.bf16.msra.mxu0 0
    %475 = vmatprep.subr.bf16.mxu0 0
    %476 = vmatpush1.bf16.msra.mxu0 0
    %477 = vmatprep.subr.bf16.mxu0 0
    %478 = vmatpush1.bf16.msra.mxu0 0
    %479 = vmatprep.subr.bf16.mxu0 0
    %480 = vmatpush1.bf16.msra.mxu0 0
    %481 = vmatprep.subr.bf16.mxu0 0
    %482 = vmatpush1.bf16.msra.mxu0 0
    %483 = vmatprep.subr.bf16.mxu0 0
    %484 = vmatpush1.bf16.msra.mxu0 0
    %485 = vmatprep.mubr.bf16.mxu0 0
    %486 = vmatmul.mubr.bf16.gmra.mrb[0].mxu0 %v451
    %v487 = vpop.f32.mrb[0].mxu0
    %v488 = vadd.f32 0.0, %v487
    %v489 = vpop.f32.mrb[0].mxu0
    %v490 = vadd.f32 0.0, %v489
    %v491 = vpop.f32.mrb[0].mxu0
    %v492 = vadd.f32 0.0, %v491
    %v493 = vpop.f32.mrb[0].mxu0
    %v494 = vadd.f32 0.0, %v493
    %495 = vdwg.mxu0
    %496 = vmatprep.subr.bf16.mxu0 %v199
    %497 = vmatpush1.bf16.msra.mxu0 %v198
    %498 = vmatprep.subr.bf16.mxu0 %v203
    %499 = vmatpush1.bf16.msra.mxu0 %v202
    %500 = vmatprep.subr.bf16.mxu0 %v207
    %501 = vmatpush1.bf16.msra.mxu0 %v206
    %502 = vmatprep.subr.bf16.mxu0 %v211
    %503 = vmatpush1.bf16.msra.mxu0 %v210
    %504 = vmatprep.subr.bf16.mxu0 %v215
    %505 = vmatpush1.bf16.msra.mxu0 %v214
    %506 = vmatprep.subr.bf16.mxu0 0
    %507 = vmatpush1.bf16.msra.mxu0 0
    %508 = vmatprep.subr.bf16.mxu0 0
    %509 = vmatpush1.bf16.msra.mxu0 0
    %510 = vmatprep.subr.bf16.mxu0 0
    %511 = vmatpush1.bf16.msra.mxu0 0
    %512 = vmatprep.subr.bf16.mxu0 0
    %513 = vmatpush1.bf16.msra.mxu0 0
    %514 = vmatprep.subr.bf16.mxu0 0
    %515 = vmatpush1.bf16.msra.mxu0 0
    %516 = vmatprep.subr.bf16.mxu0 0
    %517 = vmatpush1.bf16.msra.mxu0 0
    %518 = vmatprep.subr.bf16.mxu0 0
    %519 = vmatpush1.bf16.msra.mxu0 0
    %520 = vmatprep.subr.bf16.mxu0 0
    %521 = vmatpush1.bf16.msra.mxu0 0
    %522 = vmatprep.subr.bf16.mxu0 0
    %523 = vmatpush1.bf16.msra.mxu0 0
    %524 = vmatprep.subr.bf16.mxu0 0
    %525 = vmatpush1.bf16.msra.mxu0 0
    %526 = vmatprep.subr.bf16.mxu0 0
    %527 = vmatpush1.bf16.msra.mxu0 0
    %528 = vmatprep.mubr.bf16.mxu0 0
    %529 = vmatmul.mubr.bf16.gmra.mrb[0].mxu0 %v451
    %v530 = vpop.f32.mrb[0].mxu0
    %v531 = vadd.f32 0.0, %v530
    %v532 = vpop.f32.mrb[0].mxu0
    %v533 = vadd.f32 0.0, %v532
    %v534 = vpop.f32.mrb[0].mxu0
    %v535 = vadd.f32 0.0, %v534
    %v536 = vpop.f32.mrb[0].mxu0
    %v537 = vadd.f32 0.0, %v536
    %538 = vdwg.mxu0
    %539 = vrot.lane.b32.xlu0 %v488, 126
    %v540 = vpop.permute.xlu0 %539
    %541 = vrot.lane.b32.xlu0 %v492, 126
    %v542 = vpop.permute.xlu0 %541
    %543 = vrot.lane.b32.xlu0 %v490, 126
    %v544 = vpop.permute.xlu0 %543
    %545 = vrot.lane.b32.xlu0 %v494, 126
    %v546 = vpop.permute.xlu0 %545
    %547 = vrot.lane.b32.xlu0 %v531, 126
    %v548 = vpop.permute.xlu0 %547
    %549 = vrot.lane.b32.xlu0 %v535, 126
    %v550 = vpop.permute.xlu0 %549
    %551 = vrot.lane.b32.xlu0 %v533, 126
    %v552 = vpop.permute.xlu0 %551
    %553 = vrot.lane.b32.xlu0 %v537, 126
    %v554 = vpop.permute.xlu0 %553
    %vm555 = vcmp.lt.s32.totalorder %v41, 126
    %v556 = vsel %vm555, %v548, %v552
    %v557 = vsel %vm555, %v550, %v554
    %v558 = vsel %vm555, %v544, %v548
    %v559 = vsel %vm555, %v546, %v550
    %v560 = vsel %vm555, %v540, %v544
    %v561 = vsel %vm555, %v542, %v546
    %v562 = vsel %vm555, %v552, %v540
    %v563 = vsel %vm555, %v554, %v542
    %v564 = vadd.f32 %v394, %v560
    %v565 = vadd.f32 %v396, %v558
    %v566 = vadd.f32 %v437, %v556
    %v567 = vadd.f32 %v439, %v562
    %v568 = vadd.f32 %v398, %v561
    %v569 = vadd.f32 %v400, %v559
    %v570 = vadd.f32 %v441, %v557
    %v571 = vadd.f32 %v443, %v563
    %v574 = vunpack.c.l.b16 %v33
    %v575 = vunpack.c.l.b16 %v34
    %v576 = vpack.c.b16 %v575, %v574
    %v578 = vsel %vm236, %v576, 0
    %580 = vmatprep.subr.bf16.mxu0 %v197
    %581 = vmatpush1.bf16.msra.mxu0 %v196
    %582 = vmatprep.subr.bf16.mxu0 %v201
    %583 = vmatpush1.bf16.msra.mxu0 %v200
    %584 = vmatprep.subr.bf16.mxu0 %v205
    %585 = vmatpush1.bf16.msra.mxu0 %v204
    %586 = vmatprep.subr.bf16.mxu0 %v209
    %587 = vmatpush1.bf16.msra.mxu0 %v208
    %588 = vmatprep.subr.bf16.mxu0 %v213
    %589 = vmatpush1.bf16.msra.mxu0 %v212
    %590 = vmatprep.subr.bf16.mxu0 0
    %591 = vmatpush1.bf16.msra.mxu0 0
    %592 = vmatprep.subr.bf16.mxu0 0
    %593 = vmatpush1.bf16.msra.mxu0 0
    %594 = vmatprep.subr.bf16.mxu0 0
    %595 = vmatpush1.bf16.msra.mxu0 0
    %596 = vmatprep.subr.bf16.mxu0 0
    %597 = vmatpush1.bf16.msra.mxu0 0
    %598 = vmatprep.subr.bf16.mxu0 0
    %599 = vmatpush1.bf16.msra.mxu0 0
    %600 = vmatprep.subr.bf16.mxu0 0
    %601 = vmatpush1.bf16.msra.mxu0 0
    %602 = vmatprep.subr.bf16.mxu0 0
    %603 = vmatpush1.bf16.msra.mxu0 0
    %604 = vmatprep.subr.bf16.mxu0 0
    %605 = vmatpush1.bf16.msra.mxu0 0
    %606 = vmatprep.subr.bf16.mxu0 0
    %607 = vmatpush1.bf16.msra.mxu0 0
    %608 = vmatprep.subr.bf16.mxu0 0
    %609 = vmatpush1.bf16.msra.mxu0 0
    %610 = vmatprep.subr.bf16.mxu0 0
    %611 = vmatpush1.bf16.msra.mxu0 0
    %612 = vmatprep.mubr.bf16.mxu0 0
    %613 = vmatmul.mubr.bf16.gmra.mrb[0].mxu0 %v578
    %v614 = vpop.f32.mrb[0].mxu0
    %v615 = vadd.f32 0.0, %v614
    %v616 = vpop.f32.mrb[0].mxu0
    %v617 = vadd.f32 0.0, %v616
    %v618 = vpop.f32.mrb[0].mxu0
    %v619 = vadd.f32 0.0, %v618
    %v620 = vpop.f32.mrb[0].mxu0
    %v621 = vadd.f32 0.0, %v620
    %622 = vdwg.mxu0
    %623 = vmatprep.subr.bf16.mxu0 %v199
    %624 = vmatpush1.bf16.msra.mxu0 %v198
    %625 = vmatprep.subr.bf16.mxu0 %v203
    %626 = vmatpush1.bf16.msra.mxu0 %v202
    %627 = vmatprep.subr.bf16.mxu0 %v207
    %628 = vmatpush1.bf16.msra.mxu0 %v206
    %629 = vmatprep.subr.bf16.mxu0 %v211
    %630 = vmatpush1.bf16.msra.mxu0 %v210
    %631 = vmatprep.subr.bf16.mxu0 %v215
    %632 = vmatpush1.bf16.msra.mxu0 %v214
    %633 = vmatprep.subr.bf16.mxu0 0
    %634 = vmatpush1.bf16.msra.mxu0 0
    %635 = vmatprep.subr.bf16.mxu0 0
    %636 = vmatpush1.bf16.msra.mxu0 0
    %637 = vmatprep.subr.bf16.mxu0 0
    %638 = vmatpush1.bf16.msra.mxu0 0
    %639 = vmatprep.subr.bf16.mxu0 0
    %640 = vmatpush1.bf16.msra.mxu0 0
    %641 = vmatprep.subr.bf16.mxu0 0
    %642 = vmatpush1.bf16.msra.mxu0 0
    %643 = vmatprep.subr.bf16.mxu0 0
    %644 = vmatpush1.bf16.msra.mxu0 0
    %645 = vmatprep.subr.bf16.mxu0 0
    %646 = vmatpush1.bf16.msra.mxu0 0
    %647 = vmatprep.subr.bf16.mxu0 0
    %648 = vmatpush1.bf16.msra.mxu0 0
    %649 = vmatprep.subr.bf16.mxu0 0
    %650 = vmatpush1.bf16.msra.mxu0 0
    %651 = vmatprep.subr.bf16.mxu0 0
    %652 = vmatpush1.bf16.msra.mxu0 0
    %653 = vmatprep.subr.bf16.mxu0 0
    %654 = vmatpush1.bf16.msra.mxu0 0
    %655 = vmatprep.mubr.bf16.mxu0 0
    %656 = vmatmul.mubr.bf16.gmra.mrb[0].mxu0 %v578
    %v657 = vpop.f32.mrb[0].mxu0
    %v658 = vadd.f32 0.0, %v657
    %v659 = vpop.f32.mrb[0].mxu0
    %v660 = vadd.f32 0.0, %v659
    %v661 = vpop.f32.mrb[0].mxu0
    %v662 = vadd.f32 0.0, %v661
    %v663 = vpop.f32.mrb[0].mxu0
    %v664 = vadd.f32 0.0, %v663
    %665 = vdwg.mxu0
    %666 = vrot.lane.b32.xlu0 %v615, 125
    %v667 = vpop.permute.xlu0 %666
    %668 = vrot.lane.b32.xlu0 %v619, 125
    %v669 = vpop.permute.xlu0 %668
    %670 = vrot.lane.b32.xlu0 %v617, 125
    %v671 = vpop.permute.xlu0 %670
    %672 = vrot.lane.b32.xlu0 %v621, 125
    %v673 = vpop.permute.xlu0 %672
    %674 = vrot.lane.b32.xlu0 %v658, 125
    %v675 = vpop.permute.xlu0 %674
    %676 = vrot.lane.b32.xlu0 %v662, 125
    %v677 = vpop.permute.xlu0 %676
    %678 = vrot.lane.b32.xlu0 %v660, 125
    %v679 = vpop.permute.xlu0 %678
    %680 = vrot.lane.b32.xlu0 %v664, 125
    %v681 = vpop.permute.xlu0 %680
    %vm682 = vcmp.lt.s32.totalorder %v41, 125
    %v683 = vsel %vm682, %v675, %v679
    %v684 = vsel %vm682, %v677, %v681
    %v685 = vsel %vm682, %v671, %v675
    %v686 = vsel %vm682, %v673, %v677
    %v687 = vsel %vm682, %v667, %v671
    %v688 = vsel %vm682, %v669, %v673
    %v689 = vsel %vm682, %v679, %v667
    %v690 = vsel %vm682, %v681, %v669
    %v691 = vadd.f32 %v564, %v687
    %v692 = vadd.f32 %v565, %v685
    %v693 = vadd.f32 %v566, %v683
    %v694 = vadd.f32 %v567, %v689
    %v695 = vadd.f32 %v568, %v688
    %v696 = vadd.f32 %v569, %v686
    %v697 = vadd.f32 %v570, %v684
    %v698 = vadd.f32 %v571, %v690
    %v701 = vunpack.c.l.b16 %v36
    %v702 = vunpack.c.l.b16 %v37
    %v703 = vpack.c.b16 %v702, %v701
    %v705 = vsel %vm236, %v703, 0
    %707 = vmatprep.subr.bf16.mxu0 %v197
    %708 = vmatpush1.bf16.msra.mxu0 %v196
    %709 = vmatprep.subr.bf16.mxu0 %v201
    %710 = vmatpush1.bf16.msra.mxu0 %v200
    %711 = vmatprep.subr.bf16.mxu0 %v205
    %712 = vmatpush1.bf16.msra.mxu0 %v204
    %713 = vmatprep.subr.bf16.mxu0 %v209
    %714 = vmatpush1.bf16.msra.mxu0 %v208
    %715 = vmatprep.subr.bf16.mxu0 %v213
    %716 = vmatpush1.bf16.msra.mxu0 %v212
    %717 = vmatprep.subr.bf16.mxu0 0
    %718 = vmatpush1.bf16.msra.mxu0 0
    %719 = vmatprep.subr.bf16.mxu0 0
    %720 = vmatpush1.bf16.msra.mxu0 0
    %721 = vmatprep.subr.bf16.mxu0 0
    %722 = vmatpush1.bf16.msra.mxu0 0
    %723 = vmatprep.subr.bf16.mxu0 0
    %724 = vmatpush1.bf16.msra.mxu0 0
    %725 = vmatprep.subr.bf16.mxu0 0
    %726 = vmatpush1.bf16.msra.mxu0 0
    %727 = vmatprep.subr.bf16.mxu0 0
    %728 = vmatpush1.bf16.msra.mxu0 0
    %729 = vmatprep.subr.bf16.mxu0 0
    %730 = vmatpush1.bf16.msra.mxu0 0
    %731 = vmatprep.subr.bf16.mxu0 0
    %732 = vmatpush1.bf16.msra.mxu0 0
    %733 = vmatprep.subr.bf16.mxu0 0
    %734 = vmatpush1.bf16.msra.mxu0 0
    %735 = vmatprep.subr.bf16.mxu0 0
    %736 = vmatpush1.bf16.msra.mxu0 0
    %737 = vmatprep.subr.bf16.mxu0 0
    %738 = vmatpush1.bf16.msra.mxu0 0
    %739 = vmatprep.mubr.bf16.mxu0 0
    %740 = vmatmul.mubr.bf16.gmra.mrb[0].mxu0 %v705
    %v741 = vpop.f32.mrb[0].mxu0
    %v742 = vadd.f32 0.0, %v741
    %v743 = vpop.f32.mrb[0].mxu0
    %v744 = vadd.f32 0.0, %v743
    %v745 = vpop.f32.mrb[0].mxu0
    %v746 = vadd.f32 0.0, %v745
    %v747 = vpop.f32.mrb[0].mxu0
    %v748 = vadd.f32 0.0, %v747
    %749 = vdwg.mxu0
    %750 = vmatprep.subr.bf16.mxu0 %v199
    %751 = vmatpush1.bf16.msra.mxu0 %v198
    %752 = vmatprep.subr.bf16.mxu0 %v203
    %753 = vmatpush1.bf16.msra.mxu0 %v202
    %754 = vmatprep.subr.bf16.mxu0 %v207
    %755 = vmatpush1.bf16.msra.mxu0 %v206
    %756 = vmatprep.subr.bf16.mxu0 %v211
    %757 = vmatpush1.bf16.msra.mxu0 %v210
    %758 = vmatprep.subr.bf16.mxu0 %v215
    %759 = vmatpush1.bf16.msra.mxu0 %v214
    %760 = vmatprep.subr.bf16.mxu0 0
    %761 = vmatpush1.bf16.msra.mxu0 0
    %762 = vmatprep.subr.bf16.mxu0 0
    %763 = vmatpush1.bf16.msra.mxu0 0
    %764 = vmatprep.subr.bf16.mxu0 0
    %765 = vmatpush1.bf16.msra.mxu0 0
    %766 = vmatprep.subr.bf16.mxu0 0
    %767 = vmatpush1.bf16.msra.mxu0 0
    %768 = vmatprep.subr.bf16.mxu0 0
    %769 = vmatpush1.bf16.msra.mxu0 0
    %770 = vmatprep.subr.bf16.mxu0 0
    %771 = vmatpush1.bf16.msra.mxu0 0
    %772 = vmatprep.subr.bf16.mxu0 0
    %773 = vmatpush1.bf16.msra.mxu0 0
    %774 = vmatprep.subr.bf16.mxu0 0
    %775 = vmatpush1.bf16.msra.mxu0 0
    %776 = vmatprep.subr.bf16.mxu0 0
    %777 = vmatpush1.bf16.msra.mxu0 0
    %778 = vmatprep.subr.bf16.mxu0 0
    %779 = vmatpush1.bf16.msra.mxu0 0
    %780 = vmatprep.subr.bf16.mxu0 0
    %781 = vmatpush1.bf16.msra.mxu0 0
    %782 = vmatprep.mubr.bf16.mxu0 0
    %783 = vmatmul.mubr.bf16.gmra.mrb[0].mxu0 %v705
    %v784 = vpop.f32.mrb[0].mxu0
    %v785 = vadd.f32 0.0, %v784
    %v786 = vpop.f32.mrb[0].mxu0
    %v787 = vadd.f32 0.0, %v786
    %v788 = vpop.f32.mrb[0].mxu0
    %v789 = vadd.f32 0.0, %v788
    %v790 = vpop.f32.mrb[0].mxu0
    %v791 = vadd.f32 0.0, %v790
    %792 = vdwg.mxu0
    %793 = vrot.lane.b32.xlu0 %v742, 124
    %v794 = vpop.permute.xlu0 %793
    %795 = vrot.lane.b32.xlu0 %v746, 124
    %v796 = vpop.permute.xlu0 %795
    %797 = vrot.lane.b32.xlu0 %v744, 124
    %v798 = vpop.permute.xlu0 %797
    %799 = vrot.lane.b32.xlu0 %v748, 124
    %v800 = vpop.permute.xlu0 %799
    %801 = vrot.lane.b32.xlu0 %v785, 124
    %v802 = vpop.permute.xlu0 %801
    %803 = vrot.lane.b32.xlu0 %v789, 124
    %v804 = vpop.permute.xlu0 %803
    %805 = vrot.lane.b32.xlu0 %v787, 124
    %v806 = vpop.permute.xlu0 %805
    %807 = vrot.lane.b32.xlu0 %v791, 124
    %v808 = vpop.permute.xlu0 %807
    %vm809 = vcmp.lt.s32.totalorder %v41, 124
    %v810 = vsel %vm809, %v802, %v806
    %v811 = vsel %vm809, %v804, %v808
    %v812 = vsel %vm809, %v798, %v802
    %v813 = vsel %vm809, %v800, %v804
    %v814 = vsel %vm809, %v794, %v798
    %v815 = vsel %vm809, %v796, %v800
    %v816 = vsel %vm809, %v806, %v794
    %v817 = vsel %vm809, %v808, %v796
    %v818 = vadd.f32 %v691, %v814
    %v819 = vadd.f32 %v692, %v812
    %v820 = vadd.f32 %v693, %v810
    %v821 = vadd.f32 %v694, %v816
    %v822 = vadd.f32 %v695, %v815
    %v823 = vadd.f32 %v696, %v813
    %v824 = vadd.f32 %v697, %v811
    %v825 = vadd.f32 %v698, %v817
    %827 = vset.pattern.permute.xlu0 0
    %828 = vperm.xlu0 %827, %v38
    %v829 = vpop.permute.xlu0 %828
    %832 = vset.pattern.permute.xlu0 0
    %833 = vperm.xlu0 %832, %v39
    %v834 = vpop.permute.xlu0 %833
    %v836 = vadd.f32 %v818, %v829
    %v837 = vadd.f32 %v819, %v829
    %v838 = vadd.f32 %v820, %v829
    %v839 = vadd.f32 %v821, %v829
    %v840 = vadd.f32 %v822, %v834
    %v841 = vadd.f32 %v823, %v834
    %v842 = vadd.f32 %v824, %v834
    %v843 = vadd.f32 %v825, %v834
    %v844 = vmax.f32 %v836, 0.0
    %v845 = vmax.f32 %v837, 0.0
    %v846 = vmax.f32 %v838, 0.0
    %v847 = vmax.f32 %v839, 0.0
    %v848 = vmax.f32 %v840, 0.0
    %v849 = vmax.f32 %v841, 0.0
    %v850 = vmax.f32 %v842, 0.0
    %v851 = vmax.f32 %v843, 0.0
    %v852 = vsel %vm55, %v844, 0.0
    %v853 = vsel %vm56, %v845, 0.0
    %v854 = vsel %vm57, %v846, 0.0
    %v855 = vsel %vm58, %v847, 0.0
    %v856 = vsel %vm55, %v848, 0.0
    %v857 = vsel %vm56, %v849, 0.0
    %v858 = vsel %vm57, %v850, 0.0
    %v859 = vsel %vm58, %v851, 0.0
    %v860 = vpack.c.bf16 %v856, %v852
    %v861 = vpack.c.bf16 %v857, %v853
    %v862 = vpack.c.bf16 %v858, %v854
    %v863 = vpack.c.bf16 %v859, %v855
    %v868 = vunpack.c.l.b16 %v860
    %v869 = vunpack.c.l.b16 %v861
    %v870 = vunpack.c.l.b16 %v862
    %v871 = vunpack.c.l.b16 %v863
    %v872 = vunpack.c.h.b16 %v860
    %v873 = vunpack.c.h.b16 %v861
    %v874 = vunpack.c.h.b16 %v862
    %v875 = vunpack.c.h.b16 %v863
    %v876 = vpack.c.b16 %v869, %v868
    %v877 = vpack.c.b16 %v871, %v870
    %v878 = vpack.c.b16 %v873, %v872
    %v879 = vpack.c.b16 %v875, %v874
    %s884 = smul.addr %s108, 4
    %s885 = scalar_lea.vmem %s4, %s884
    %886 = vst [vmem:[%s885] sm:$0xff] %v876
    %887 = vst [vmem:[%s885 + $0x8] sm:$0xff] %v877
    %888 = vst [vmem:[%s885 + $0x10] sm:$0xff] %v878
    %889 = vst [vmem:[%s885 + $0x18] sm:$0xff] %v879
  $region18: #{closed_call.30} parent=0 // loop_footer
    %s101 = sadd.s32 %s99, 1
  $region19: #{closed_call.30} parent=0 // loop_footer_branch
    %98 = sbr.rel target = $region15
  $region20: #{closed_call.30} parent=0 // loop_exit
    _
  // Predicated region
  $region21: #{closed_call.30} parent=0 // pred_check
    _
  $region22: #{closed_call.30} parent=0 // pred_check_branch
    %891 = sbr.rel (0) target = $region24
  $region23: #{closed_call.30} parent=0 // pred_region
    _
  $region24: #{closed_call.30} parent=0 // pred_fallthru
    _
  // Predicated region
  $region25: #{closed_call.30} parent=0 // pred_check
    _
  $region26: #{closed_call.30} parent=0 // pred_check_branch
    %893 = sbr.rel (0) target = $region28
  $region27: #{closed_call.30} parent=0 // pred_region
    _
  $region28: #{closed_call.30} parent=0 // pred_fallthru
    _

// kernel: closed_call.31
$region0: #{closed_call.31}
  #allocation0 [shape = 'u32[]', space=smem, size = 0x4, offset = 0x4, fixed_abs, tag = 'smem constant byte address 0x4 - core index']
  #allocation1 [shape = 'u32[144,128]{1,0:T(1,128)}', space=vmem, size = 0x12000, scoped, tag = 'internal scratch']
  #allocation2 [shape = 's32[1]{0}', space=sflag, size = 0x4, scoped, tag = 'scoped memory for closed_call.31']
  #allocation3 [shape = 'u8[512]{0}', space=smem, size = 0x200, scoped, tag = 'prefetched SMEM operand 0']
  %s0 = inlined_call_operand.vmem [shape: s32[2], index: 0, kind: input, shape index: {}]
  %s1 = inlined_call_operand.vmem [shape: bf16[1,896,384], index: 1, kind: input, shape index: {}]
  %s2 = inlined_call_operand.vmem [shape: bf16[3,16,48], index: 2, kind: input, shape index: {}]
  %s3 = inlined_call_operand.vmem [shape: f32[16,1], index: 3, kind: input, shape index: {}]
  %s4 = inlined_call_operand.vmem [shape: bf16[1,896,384], index: 4, kind: output, shape index: {}]
  %s5 = sld [smem:[#allocation0]]
  $region29: #{closed_call.31} parent=0
    _
  %s7 = ssub.s32 1, %s5
  %s8 = scalar_select 0, %s7, %s5
  %s9 = sshll.u32 %s0, 4
  %s10 = int_to_ptr.vmem [resolvable:$true] %s9
  %12 = dma.vmem_to_smem %s10, 16, [#allocation3], [#allocation2]
  %13 = dma.done [#allocation2], 16
  %14 = sfence
  // Predicated region
  $region2: #{closed_call.31} parent=0 // pred_check
    _
  $region3: #{closed_call.31} parent=0 // pred_check_branch
    %16 = sbr.rel (0) target = $region5
  $region4: #{closed_call.31} parent=0 // pred_region
    _
  $region5: #{closed_call.31} parent=0 // pred_fallthru
    _
  // Predicated region
  $region6: #{closed_call.31} parent=0 // pred_check
    _
  $region7: #{closed_call.31} parent=0 // pred_check_branch
    %18 = sbr.rel (0) target = $region9
  $region8: #{closed_call.31} parent=0 // pred_region
    _
  $region9: #{closed_call.31} parent=0 // pred_fallthru
    _
  // Predicated region
  $region10: #{closed_call.31} parent=0 // pred_check
    _
  $region11: #{closed_call.31} parent=0 // pred_check_branch
    %20 = sbr.rel (0) target = $region13
  $region12: #{closed_call.31} parent=0 // pred_region
    _
  $region13: #{closed_call.31} parent=0 // pred_fallthru
    _
  %s22 = sld [smem:[#allocation3]]
  %s23 = sld [smem:[#allocation3 + $0x1]]
  %v24 = vld [vmem:[%s2] sm:$0xf]
  %v25 = vld [vmem:[%s2 + $0x4] sm:$0xf]
  %s26 = scalar_lea.vmem %s2, 8
  %v27 = vld [vmem:[%s26] sm:$0xf]
  %v28 = vld [vmem:[%s26 + $0x4] sm:$0xf]
  %s29 = scalar_lea.vmem %s2, 16
  %v30 = vld [vmem:[%s29] sm:$0xf]
  %v31 = vld [vmem:[%s29 + $0x4] sm:$0xf]
  %v32 = vld [vmem:[%s3] sm:$0xff]
  %v33 = vld [vmem:[%s3 + $0x8] sm:$0xff]
  %v34 = vlaneseq
  %v35 = vand.u32 %v34, 127
  %v36 = vadd.s32 %v35, 128
  %v37 = vadd.s32 %v35, 256
  %vm38 = vcmp.ge.s32.totalorder %v35, 4
  %vm39 = vcmp.ge.s32.totalorder %v36, 4
  %vm40 = vcmp.ge.s32.totalorder %v37, 4
  %s41 = sadd.s32 %s23, 4
  %v42 = vstv %s41
  %vm43 = vcmp.lt.s32.totalorder %v35, %v42
  %vm44 = vcmp.lt.s32.totalorder %v36, %v42
  %vm45 = vcmp.lt.s32.totalorder %v37, %v42
  %vm46 = vmand %vm38, %vm43
  %vm47 = vmand %vm39, %vm44
  %vm48 = vmand %vm40, %vm45
  %49 = vst [vmem:[%s4] sm:$0xff] 0
  %50 = vst [vmem:[%s4 + $0x8] sm:$0xf] 0
  %51 = vst [vmem:[%s4 + $0xc] sm:$0xff] 0
  %52 = vst [vmem:[%s4 + $0x14] sm:$0xf] 0
  %53 = vst [vmem:[%s4 + $0x18] sm:$0xff] 0
  %54 = vst [vmem:[%s4 + $0x20] sm:$0xf] 0
  %55 = vst [vmem:[%s4 + $0x24] sm:$0xff] 0
  %56 = vst [vmem:[%s4 + $0x2c] sm:$0xf] 0
  %57 = vst [vmem:[%s4 + $0x30] sm:$0xff] 0
  %58 = vst [vmem:[%s4 + $0x38] sm:$0xf] 0
  %59 = vst [vmem:[%s4 + $0x3c] sm:$0xff] 0
  %60 = vst [vmem:[%s4 + $0x44] sm:$0xf] 0
  %61 = vst [vmem:[%s4 + $0x48] sm:$0xff] 0
  %62 = vst [vmem:[%s4 + $0x50] sm:$0xf] 0
  %63 = vst [vmem:[%s4 + $0x54] sm:$0xff] 0
  %64 = vst [vmem:[%s4 + $0x5c] sm:$0xf] 0
  %s65 = sadd.s32 %s22, 4
  %s66 = smul.u32 %s65, 16
  %s67 = sshra.s32 %s66, 3
  %s68 = sand.u32 %s66, 7
  %s69 = smul.u32 %s67, 3
  %s70 = smul.addr %s69, 4
  %s71 = scalar_lea.vmem %s4, %s70
  %72 = vst [vmem:[%s71] sm:$0xff] 0
  %73 = vst [vmem:[%s71 + $0x8] sm:$0xf] 0
  %74 = vst [vmem:[%s71 + $0xc] sm:$0xff] 0
  %75 = vst [vmem:[%s71 + $0x14] sm:$0xf] 0
  %76 = vst [vmem:[%s71 + $0x18] sm:$0xff] 0
  %77 = vst [vmem:[%s71 + $0x20] sm:$0xf] 0
  %78 = vst [vmem:[%s71 + $0x24] sm:$0xff] 0
  %79 = vst [vmem:[%s71 + $0x2c] sm:$0xf] 0
  %80 = vst [vmem:[%s71 + $0x30] sm:$0xff] 0
  %81 = vst [vmem:[%s71 + $0x38] sm:$0xf] 0
  %82 = vst [vmem:[%s71 + $0x3c] sm:$0xff] 0
  %83 = vst [vmem:[%s71 + $0x44] sm:$0xf] 0
  %84 = vst [vmem:[%s71 + $0x48] sm:$0xff] 0
  %85 = vst [vmem:[%s71 + $0x50] sm:$0xf] 0
  %86 = vst [vmem:[%s71 + $0x54] sm:$0xff] 0
  %87 = vst [vmem:[%s71 + $0x5c] sm:$0xf] 0
  // While loop
  $region14: #{closed_call.31} parent=0 // loop_pre_header
    _
  $region15: #{closed_call.31} parent=0 // loop_header
    %s89 = sphi 0, %s91
    %p90 = scmp.ge.s32.totalorder %s89, %s22
  $region16: #{closed_call.31} parent=0 // loop_header_branch
    %93 = sbr.rel (%p90) target = $region20
  $region17: #{closed_call.31} parent=0 // loop_body
    %s94 = sadd.s32 %s89, 4
    %s95 = sadd.s32 %s89, 3
    %s96 = smul.u32 %s95, 16
    %s97 = sshra.s32 %s96, 3
    %s98 = sand.u32 %s96, 7
    %s99 = smul.u32 %s97, 3
    %s100 = smul.addr %s99, 4
    %s101 = scalar_lea.vmem %s1, %s100
    %v102 = vld [vmem:[%s101] sm:$0xff]
    %v103 = vld [vmem:[%s101 + $0x8] sm:$0xf]
    %v104 = vld [vmem:[%s101 + $0xc] sm:$0xff]
    %v105 = vld [vmem:[%s101 + $0x14] sm:$0xf]
    %v106 = vld [vmem:[%s101 + $0x18] sm:$0xff]
    %v107 = vld [vmem:[%s101 + $0x20] sm:$0xf]
    %v108 = vld [vmem:[%s101 + $0x24] sm:$0xff]
    %v109 = vld [vmem:[%s101 + $0x2c] sm:$0xf]
    %v110 = vld [vmem:[%s101 + $0x30] sm:$0xff]
    %v111 = vld [vmem:[%s101 + $0x38] sm:$0xf]
    %v112 = vld [vmem:[%s101 + $0x3c] sm:$0xff]
    %v113 = vld [vmem:[%s101 + $0x44] sm:$0xf]
    %v116 = vunpack.c.l.b16 %v24
    %v117 = vunpack.c.l.b16 %v25
    %v118 = vpack.c.b16 %v117, %v116
    %v131 = vunpack.c.l.b16 %v102
    %v132 = vunpack.c.h.b16 %v102
    %v133 = vunpack.c.l.b16 %v103
    %v134 = vunpack.c.l.b16 %v104
    %v135 = vunpack.c.h.b16 %v104
    %v136 = vunpack.c.l.b16 %v105
    %v137 = vunpack.c.l.b16 %v106
    %v138 = vunpack.c.h.b16 %v106
    %v139 = vunpack.c.l.b16 %v107
    %v140 = vunpack.c.l.b16 %v108
    %v141 = vunpack.c.h.b16 %v108
    %v142 = vunpack.c.l.b16 %v109
    %v143 = vunpack.c.l.b16 %v110
    %v144 = vunpack.c.h.b16 %v110
    %v145 = vunpack.c.l.b16 %v111
    %v146 = vunpack.c.l.b16 %v112
    %v147 = vunpack.c.h.b16 %v112
    %v148 = vunpack.c.l.b16 %v113
    %v149 = vpack.c.b16 %v134, %v131
    %v150 = vpack.c.b16 %v135, %v132
    %v151 = vpack.c.b16 %v136, %v133
    %v152 = vpack.c.b16 %v140, %v137
    %v153 = vpack.c.b16 %v141, %v138
    %v154 = vpack.c.b16 %v142, %v139
    %v155 = vpack.c.b16 %v146, %v143
    %v156 = vpack.c.b16 %v147, %v144
    %v157 = vpack.c.b16 %v148, %v145
    %vm167 = vcmask 392192
    %v169 = vsel %vm167, %v118, 0
    %171 = vmatprep.subr.bf16.mxu0 %v150
    %172 = vmatpush1.bf16.msra.mxu0 %v149
    %173 = vmatprep.subr.bf16.mxu0 %v153
    %174 = vmatpush1.bf16.msra.mxu0 %v152
    %175 = vmatprep.subr.bf16.mxu0 %v156
    %176 = vmatpush1.bf16.msra.mxu0 %v155
    %177 = vmatprep.subr.bf16.mxu0 0
    %178 = vmatpush1.bf16.msra.mxu0 0
    %179 = vmatprep.subr.bf16.mxu0 0
    %180 = vmatpush1.bf16.msra.mxu0 0
    %181 = vmatprep.subr.bf16.mxu0 0
    %182 = vmatpush1.bf16.msra.mxu0 0
    %183 = vmatprep.subr.bf16.mxu0 0
    %184 = vmatpush1.bf16.msra.mxu0 0
    %185 = vmatprep.subr.bf16.mxu0 0
    %186 = vmatpush1.bf16.msra.mxu0 0
    %187 = vmatprep.subr.bf16.mxu0 0
    %188 = vmatpush1.bf16.msra.mxu0 0
    %189 = vmatprep.subr.bf16.mxu0 0
    %190 = vmatpush1.bf16.msra.mxu0 0
    %191 = vmatprep.subr.bf16.mxu0 0
    %192 = vmatpush1.bf16.msra.mxu0 0
    %193 = vmatprep.subr.bf16.mxu0 0
    %194 = vmatpush1.bf16.msra.mxu0 0
    %195 = vmatprep.subr.bf16.mxu0 0
    %196 = vmatpush1.bf16.msra.mxu0 0
    %197 = vmatprep.subr.bf16.mxu0 0
    %198 = vmatpush1.bf16.msra.mxu0 0
    %199 = vmatprep.subr.bf16.mxu0 0
    %200 = vmatpush1.bf16.msra.mxu0 0
    %201 = vmatprep.subr.bf16.mxu0 0
    %202 = vmatpush1.bf16.msra.mxu0 0
    %203 = vmatprep.mubr.bf16.mxu0 0
    %204 = vmatmul.mubr.bf16.gmra.mrb[0].mxu0 %v169
    %v205 = vpop.f32.mrb[0].mxu0
    %v206 = vadd.f32 0.0, %v205
    %v207 = vpop.f32.mrb[0].mxu0
    %v208 = vadd.f32 0.0, %v207
    %v209 = vpop.f32.mrb[0].mxu0
    %v210 = vadd.f32 0.0, %v209
    %v211 = vpop.f32.mrb[0].mxu0
    %v212 = vadd.f32 0.0, %v211
    %213 = vdwg.mxu0
    %214 = vmatprep.subr.bf16.mxu0 0
    %215 = vmatpush1.bf16.msra.mxu0 %v151
    %216 = vmatprep.subr.bf16.mxu0 0
    %217 = vmatpush1.bf16.msra.mxu0 %v154
    %218 = vmatprep.subr.bf16.mxu0 0
    %219 = vmatpush1.bf16.msra.mxu0 %v157
    %220 = vmatprep.subr.bf16.mxu0 0
    %221 = vmatpush1.bf16.msra.mxu0 0
    %222 = vmatprep.subr.bf16.mxu0 0
    %223 = vmatpush1.bf16.msra.mxu0 0
    %224 = vmatprep.subr.bf16.mxu0 0
    %225 = vmatpush1.bf16.msra.mxu0 0
    %226 = vmatprep.subr.bf16.mxu0 0
    %227 = vmatpush1.bf16.msra.mxu0 0
    %228 = vmatprep.subr.bf16.mxu0 0
    %229 = vmatpush1.bf16.msra.mxu0 0
    %230 = vmatprep.subr.bf16.mxu0 0
    %231 = vmatpush1.bf16.msra.mxu0 0
    %232 = vmatprep.subr.bf16.mxu0 0
    %233 = vmatpush1.bf16.msra.mxu0 0
    %234 = vmatprep.subr.bf16.mxu0 0
    %235 = vmatpush1.bf16.msra.mxu0 0
    %236 = vmatprep.subr.bf16.mxu0 0
    %237 = vmatpush1.bf16.msra.mxu0 0
    %238 = vmatprep.subr.bf16.mxu0 0
    %239 = vmatpush1.bf16.msra.mxu0 0
    %240 = vmatprep.subr.bf16.mxu0 0
    %241 = vmatpush1.bf16.msra.mxu0 0
    %242 = vmatprep.subr.bf16.mxu0 0
    %243 = vmatpush1.bf16.msra.mxu0 0
    %244 = vmatprep.subr.bf16.mxu0 0
    %245 = vmatpush1.bf16.msra.mxu0 0
    %246 = vmatprep.mubr.bf16.mxu0 0
    %247 = vmatmul.mubr.bf16.gmra.mrb[0].mxu0 %v169
    %v248 = vpop.f32.mrb[0].mxu0
    %v249 = vadd.f32 0.0, %v248
    %v250 = vpop.f32.mrb[0].mxu0
    %v251 = vpop.f32.mrb[0].mxu0
    %v252 = vadd.f32 0.0, %v251
    %v253 = vpop.f32.mrb[0].mxu0
    %254 = vdwg.mxu0
    %255 = vrot.lane.b32.xlu0 %v206, 1
    %v256 = vpop.permute.xlu0 %255
    %257 = vrot.lane.b32.xlu0 %v210, 1
    %v258 = vpop.permute.xlu0 %257
    %259 = vrot.lane.b32.xlu0 %v208, 1
    %v260 = vpop.permute.xlu0 %259
    %261 = vrot.lane.b32.xlu0 %v212, 1
    %v262 = vpop.permute.xlu0 %261
    %263 = vrot.lane.b32.xlu0 %v249, 1
    %v264 = vpop.permute.xlu0 %263
    %265 = vrot.lane.b32.xlu0 %v252, 1
    %v266 = vpop.permute.xlu0 %265
    %vm267 = vcmp.lt.s32.totalorder %v35, 1
    %v268 = vsel %vm267, %v260, %v264
    %v269 = vsel %vm267, %v262, %v266
    %v270 = vsel %vm267, %v256, %v260
    %v271 = vsel %vm267, %v258, %v262
    %v272 = vsel %vm267, %v264, %v256
    %v273 = vsel %vm267, %v266, %v258
    %v274 = vadd.f32 %v272, 0.0
    %v275 = vadd.f32 %v270, 0.0
    %v276 = vadd.f32 %v268, 0.0
    %v277 = vadd.f32 %v273, 0.0
    %v278 = vadd.f32 %v271, 0.0
    %v279 = vadd.f32 %v269, 0.0
    %v282 = vunpack.c.l.b16 %v27
    %v283 = vunpack.c.l.b16 %v28
    %v284 = vpack.c.b16 %v283, %v282
    %v286 = vsel %vm167, %v284, 0
    %288 = vmatprep.subr.bf16.mxu0 %v150
    %289 = vmatpush1.bf16.msra.mxu0 %v149
    %290 = vmatprep.subr.bf16.mxu0 %v153
    %291 = vmatpush1.bf16.msra.mxu0 %v152
    %292 = vmatprep.subr.bf16.mxu0 %v156
    %293 = vmatpush1.bf16.msra.mxu0 %v155
    %294 = vmatprep.subr.bf16.mxu0 0
    %295 = vmatpush1.bf16.msra.mxu0 0
    %296 = vmatprep.subr.bf16.mxu0 0
    %297 = vmatpush1.bf16.msra.mxu0 0
    %298 = vmatprep.subr.bf16.mxu0 0
    %299 = vmatpush1.bf16.msra.mxu0 0
    %300 = vmatprep.subr.bf16.mxu0 0
    %301 = vmatpush1.bf16.msra.mxu0 0
    %302 = vmatprep.subr.bf16.mxu0 0
    %303 = vmatpush1.bf16.msra.mxu0 0
    %304 = vmatprep.subr.bf16.mxu0 0
    %305 = vmatpush1.bf16.msra.mxu0 0
    %306 = vmatprep.subr.bf16.mxu0 0
    %307 = vmatpush1.bf16.msra.mxu0 0
    %308 = vmatprep.subr.bf16.mxu0 0
    %309 = vmatpush1.bf16.msra.mxu0 0
    %310 = vmatprep.subr.bf16.mxu0 0
    %311 = vmatpush1.bf16.msra.mxu0 0
    %312 = vmatprep.subr.bf16.mxu0 0
    %313 = vmatpush1.bf16.msra.mxu0 0
    %314 = vmatprep.subr.bf16.mxu0 0
    %315 = vmatpush1.bf16.msra.mxu0 0
    %316 = vmatprep.subr.bf16.mxu0 0
    %317 = vmatpush1.bf16.msra.mxu0 0
    %318 = vmatprep.subr.bf16.mxu0 0
    %319 = vmatpush1.bf16.msra.mxu0 0
    %320 = vmatprep.mubr.bf16.mxu0 0
    %321 = vmatmul.mubr.bf16.gmra.mrb[0].mxu0 %v286
    %v322 = vpop.f32.mrb[0].mxu0
    %v323 = vadd.f32 0.0, %v322
    %v324 = vpop.f32.mrb[0].mxu0
    %v325 = vadd.f32 0.0, %v324
    %v326 = vpop.f32.mrb[0].mxu0
    %v327 = vadd.f32 0.0, %v326
    %v328 = vpop.f32.mrb[0].mxu0
    %v329 = vadd.f32 0.0, %v328
    %330 = vdwg.mxu0
    %331 = vmatprep.subr.bf16.mxu0 0
    %332 = vmatpush1.bf16.msra.mxu0 %v151
    %333 = vmatprep.subr.bf16.mxu0 0
    %334 = vmatpush1.bf16.msra.mxu0 %v154
    %335 = vmatprep.subr.bf16.mxu0 0
    %336 = vmatpush1.bf16.msra.mxu0 %v157
    %337 = vmatprep.subr.bf16.mxu0 0
    %338 = vmatpush1.bf16.msra.mxu0 0
    %339 = vmatprep.subr.bf16.mxu0 0
    %340 = vmatpush1.bf16.msra.mxu0 0
    %341 = vmatprep.subr.bf16.mxu0 0
    %342 = vmatpush1.bf16.msra.mxu0 0
    %343 = vmatprep.subr.bf16.mxu0 0
    %344 = vmatpush1.bf16.msra.mxu0 0
    %345 = vmatprep.subr.bf16.mxu0 0
    %346 = vmatpush1.bf16.msra.mxu0 0
    %347 = vmatprep.subr.bf16.mxu0 0
    %348 = vmatpush1.bf16.msra.mxu0 0
    %349 = vmatprep.subr.bf16.mxu0 0
    %350 = vmatpush1.bf16.msra.mxu0 0
    %351 = vmatprep.subr.bf16.mxu0 0
    %352 = vmatpush1.bf16.msra.mxu0 0
    %353 = vmatprep.subr.bf16.mxu0 0
    %354 = vmatpush1.bf16.msra.mxu0 0
    %355 = vmatprep.subr.bf16.mxu0 0
    %356 = vmatpush1.bf16.msra.mxu0 0
    %357 = vmatprep.subr.bf16.mxu0 0
    %358 = vmatpush1.bf16.msra.mxu0 0
    %359 = vmatprep.subr.bf16.mxu0 0
    %360 = vmatpush1.bf16.msra.mxu0 0
    %361 = vmatprep.subr.bf16.mxu0 0
    %362 = vmatpush1.bf16.msra.mxu0 0
    %363 = vmatprep.mubr.bf16.mxu0 0
    %364 = vmatmul.mubr.bf16.gmra.mrb[0].mxu0 %v286
    %v365 = vpop.f32.mrb[0].mxu0
    %v366 = vadd.f32 0.0, %v365
    %v367 = vpop.f32.mrb[0].mxu0
    %v368 = vpop.f32.mrb[0].mxu0
    %v369 = vadd.f32 0.0, %v368
    %v370 = vpop.f32.mrb[0].mxu0
    %371 = vdwg.mxu0
    %v372 = vadd.f32 %v274, %v323
    %v373 = vadd.f32 %v275, %v325
    %v374 = vadd.f32 %v276, %v366
    %v375 = vadd.f32 %v277, %v327
    %v376 = vadd.f32 %v278, %v329
    %v377 = vadd.f32 %v279, %v369
    %v380 = vunpack.c.l.b16 %v30
    %v381 = vunpack.c.l.b16 %v31
    %v382 = vpack.c.b16 %v381, %v380
    %v384 = vsel %vm167, %v382, 0
    %386 = vmatprep.subr.bf16.mxu0 %v150
    %387 = vmatpush1.bf16.msra.mxu0 %v149
    %388 = vmatprep.subr.bf16.mxu0 %v153
    %389 = vmatpush1.bf16.msra.mxu0 %v152
    %390 = vmatprep.subr.bf16.mxu0 %v156
    %391 = vmatpush1.bf16.msra.mxu0 %v155
    %392 = vmatprep.subr.bf16.mxu0 0
    %393 = vmatpush1.bf16.msra.mxu0 0
    %394 = vmatprep.subr.bf16.mxu0 0
    %395 = vmatpush1.bf16.msra.mxu0 0
    %396 = vmatprep.subr.bf16.mxu0 0
    %397 = vmatpush1.bf16.msra.mxu0 0
    %398 = vmatprep.subr.bf16.mxu0 0
    %399 = vmatpush1.bf16.msra.mxu0 0
    %400 = vmatprep.subr.bf16.mxu0 0
    %401 = vmatpush1.bf16.msra.mxu0 0
    %402 = vmatprep.subr.bf16.mxu0 0
    %403 = vmatpush1.bf16.msra.mxu0 0
    %404 = vmatprep.subr.bf16.mxu0 0
    %405 = vmatpush1.bf16.msra.mxu0 0
    %406 = vmatprep.subr.bf16.mxu0 0
    %407 = vmatpush1.bf16.msra.mxu0 0
    %408 = vmatprep.subr.bf16.mxu0 0
    %409 = vmatpush1.bf16.msra.mxu0 0
    %410 = vmatprep.subr.bf16.mxu0 0
    %411 = vmatpush1.bf16.msra.mxu0 0
    %412 = vmatprep.subr.bf16.mxu0 0
    %413 = vmatpush1.bf16.msra.mxu0 0
    %414 = vmatprep.subr.bf16.mxu0 0
    %415 = vmatpush1.bf16.msra.mxu0 0
    %416 = vmatprep.subr.bf16.mxu0 0
    %417 = vmatpush1.bf16.msra.mxu0 0
    %418 = vmatprep.mubr.bf16.mxu0 0
    %419 = vmatmul.mubr.bf16.gmra.mrb[0].mxu0 %v384
    %v420 = vpop.f32.mrb[0].mxu0
    %v421 = vadd.f32 0.0, %v420
    %v422 = vpop.f32.mrb[0].mxu0
    %v423 = vadd.f32 0.0, %v422
    %v424 = vpop.f32.mrb[0].mxu0
    %v425 = vadd.f32 0.0, %v424
    %v426 = vpop.f32.mrb[0].mxu0
    %v427 = vadd.f32 0.0, %v426
    %428 = vdwg.mxu0
    %429 = vmatprep.subr.bf16.mxu0 0
    %430 = vmatpush1.bf16.msra.mxu0 %v151
    %431 = vmatprep.subr.bf16.mxu0 0
    %432 = vmatpush1.bf16.msra.mxu0 %v154
    %433 = vmatprep.subr.bf16.mxu0 0
    %434 = vmatpush1.bf16.msra.mxu0 %v157
    %435 = vmatprep.subr.bf16.mxu0 0
    %436 = vmatpush1.bf16.msra.mxu0 0
    %437 = vmatprep.subr.bf16.mxu0 0
    %438 = vmatpush1.bf16.msra.mxu0 0
    %439 = vmatprep.subr.bf16.mxu0 0
    %440 = vmatpush1.bf16.msra.mxu0 0
    %441 = vmatprep.subr.bf16.mxu0 0
    %442 = vmatpush1.bf16.msra.mxu0 0
    %443 = vmatprep.subr.bf16.mxu0 0
    %444 = vmatpush1.bf16.msra.mxu0 0
    %445 = vmatprep.subr.bf16.mxu0 0
    %446 = vmatpush1.bf16.msra.mxu0 0
    %447 = vmatprep.subr.bf16.mxu0 0
    %448 = vmatpush1.bf16.msra.mxu0 0
    %449 = vmatprep.subr.bf16.mxu0 0
    %450 = vmatpush1.bf16.msra.mxu0 0
    %451 = vmatprep.subr.bf16.mxu0 0
    %452 = vmatpush1.bf16.msra.mxu0 0
    %453 = vmatprep.subr.bf16.mxu0 0
    %454 = vmatpush1.bf16.msra.mxu0 0
    %455 = vmatprep.subr.bf16.mxu0 0
    %456 = vmatpush1.bf16.msra.mxu0 0
    %457 = vmatprep.subr.bf16.mxu0 0
    %458 = vmatpush1.bf16.msra.mxu0 0
    %459 = vmatprep.subr.bf16.mxu0 0
    %460 = vmatpush1.bf16.msra.mxu0 0
    %461 = vmatprep.mubr.bf16.mxu0 0
    %462 = vmatmul.mubr.bf16.gmra.mrb[0].mxu0 %v384
    %v463 = vpop.f32.mrb[0].mxu0
    %v464 = vadd.f32 0.0, %v463
    %v465 = vpop.f32.mrb[0].mxu0
    %v466 = vpop.f32.mrb[0].mxu0
    %v467 = vadd.f32 0.0, %v466
    %v468 = vpop.f32.mrb[0].mxu0
    %469 = vdwg.mxu0
    %470 = vrot.lane.b32.xlu0 %v421, 127
    %v471 = vpop.permute.xlu0 %470
    %472 = vrot.lane.b32.xlu0 %v425, 127
    %v473 = vpop.permute.xlu0 %472
    %474 = vrot.lane.b32.xlu0 %v423, 127
    %v475 = vpop.permute.xlu0 %474
    %476 = vrot.lane.b32.xlu0 %v427, 127
    %v477 = vpop.permute.xlu0 %476
    %478 = vrot.lane.b32.xlu0 %v464, 127
    %v479 = vpop.permute.xlu0 %478
    %480 = vrot.lane.b32.xlu0 %v467, 127
    %v481 = vpop.permute.xlu0 %480
    %vm482 = vcmp.lt.s32.totalorder %v35, 127
    %v483 = vsel %vm482, %v475, %v479
    %v484 = vsel %vm482, %v477, %v481
    %v485 = vsel %vm482, %v471, %v475
    %v486 = vsel %vm482, %v473, %v477
    %v487 = vsel %vm482, %v479, %v471
    %v488 = vsel %vm482, %v481, %v473
    %v489 = vadd.f32 %v372, %v485
    %v490 = vadd.f32 %v373, %v483
    %v491 = vadd.f32 %v374, %v487
    %v492 = vadd.f32 %v375, %v486
    %v493 = vadd.f32 %v376, %v484
    %v494 = vadd.f32 %v377, %v488
    %496 = vset.pattern.permute.xlu0 0
    %497 = vperm.xlu0 %496, %v32
    %v498 = vpop.permute.xlu0 %497
    %501 = vset.pattern.permute.xlu0 0
    %502 = vperm.xlu0 %501, %v33
    %v503 = vpop.permute.xlu0 %502
    %v505 = vadd.f32 %v489, %v498
    %v506 = vadd.f32 %v490, %v498
    %v507 = vadd.f32 %v491, %v498
    %v508 = vadd.f32 %v492, %v503
    %v509 = vadd.f32 %v493, %v503
    %v510 = vadd.f32 %v494, %v503
    %v511 = vmax.f32 %v505, 0.0
    %v512 = vmax.f32 %v506, 0.0
    %v513 = vmax.f32 %v507, 0.0
    %v514 = vmax.f32 %v508, 0.0
    %v515 = vmax.f32 %v509, 0.0
    %v516 = vmax.f32 %v510, 0.0
    %v517 = vsel %vm46, %v511, 0.0
    %v518 = vsel %vm47, %v512, 0.0
    %v519 = vsel %vm48, %v513, 0.0
    %v520 = vsel %vm46, %v514, 0.0
    %v521 = vsel %vm47, %v515, 0.0
    %v522 = vsel %vm48, %v516, 0.0
    %v523 = vpack.c.bf16 %v520, %v517
    %v524 = vpack.c.bf16 %v521, %v518
    %v525 = vpack.c.bf16 %v522, %v519
    %s526 = smul.u32 %s94, 16
    %v530 = vunpack.c.l.b16 %v523
    %v531 = vunpack.c.l.b16 %v524
    %v532 = vunpack.c.l.b16 %v525
    %v533 = vunpack.c.h.b16 %v523
    %v534 = vunpack.c.h.b16 %v524
    %v535 = vunpack.c.h.b16 %v525
    %v536 = vpack.c.b16 %v531, %v530
    %v537 = vpack.c.b16 %v532, %v532
    %v538 = vpack.c.b16 %v534, %v533
    %v539 = vpack.c.b16 %v535, %v535
    %s544 = sshra.s32 %s526, 3
    %s545 = sand.u32 %s526, 7
    %s546 = smul.u32 %s544, 3
    %s547 = smul.addr %s546, 4
    %s548 = scalar_lea.vmem %s4, %s547
    %549 = vst [vmem:[%s548] sm:$0xff] %v536
    %550 = vst [vmem:[%s548 + $0x8] sm:$0xf] %v537
    %551 = vst [vmem:[%s548 + $0xc] sm:$0xff] %v538
    %552 = vst [vmem:[%s548 + $0x14] sm:$0xf] %v539
  $region18: #{closed_call.31} parent=0 // loop_footer
    %s91 = sadd.s32 %s89, 1
  $region19: #{closed_call.31} parent=0 // loop_footer_branch
    %88 = sbr.rel target = $region15
  $region20: #{closed_call.31} parent=0 // loop_exit
    _
  // Predicated region
  $region21: #{closed_call.31} parent=0 // pred_check
    _
  $region22: #{closed_call.31} parent=0 // pred_check_branch
    %554 = sbr.rel (0) target = $region24
  $region23: #{closed_call.31} parent=0 // pred_region
    _
  $region24: #{closed_call.31} parent=0 // pred_fallthru
    _
  // Predicated region
  $region25: #{closed_call.31} parent=0 // pred_check
    _
  $region26: #{closed_call.31} parent=0 // pred_check_branch
    %556 = sbr.rel (0) target = $region28
  $region27: #{closed_call.31} parent=0 // pred_region
    _
  $region28: #{closed_call.31} parent=0 // pred_fallthru
    _

// kernel: closed_call.32
$region0: #{closed_call.32}
  #allocation0 [shape = 'u32[]', space=smem, size = 0x4, offset = 0x4, fixed_abs, tag = 'smem constant byte address 0x4 - core index']
  #allocation1 [shape = 'u32[144,128]{1,0:T(1,128)}', space=vmem, size = 0x12000, scoped, tag = 'internal scratch']
  #allocation2 [shape = 's32[1]{0}', space=sflag, size = 0x4, scoped, tag = 'scoped memory for closed_call.32']
  #allocation3 [shape = 'u8[512]{0}', space=smem, size = 0x200, scoped, tag = 'prefetched SMEM operand 0']
  %s0 = inlined_call_operand.vmem [shape: s32[2], index: 0, kind: input, shape index: {}]
  %s1 = inlined_call_operand.vmem [shape: bf16[1,896,384], index: 1, kind: input, shape index: {}]
  %s2 = inlined_call_operand.vmem [shape: bf16[1,896,384], index: 2, kind: input, shape index: {}]
  %s3 = inlined_call_operand.vmem [shape: bf16[3,16,48], index: 3, kind: input, shape index: {}]
  %s4 = inlined_call_operand.vmem [shape: f32[16,1], index: 4, kind: input, shape index: {}]
  %s5 = inlined_call_operand.vmem [shape: f32[16,1], index: 5, kind: input, shape index: {}]
  %s6 = inlined_call_operand.vmem [shape: f32[16,1], index: 6, kind: input, shape index: {}]
  %s7 = inlined_call_operand.vmem [shape: bf16[1,896,384], index: 7, kind: output, shape index: {}]
  %s8 = sld [smem:[#allocation0]]
  $region48: #{closed_call.32} parent=0
    _
  %s10 = ssub.s32 1, %s8
  %s11 = scalar_select 0, %s10, %s8
  %s12 = sshll.u32 %s0, 4
  %s13 = int_to_ptr.vmem [resolvable:$true] %s12
  %15 = dma.vmem_to_smem %s13, 16, [#allocation3], [#allocation2]
  %16 = dma.done [#allocation2], 16
  %17 = sfence
  // Predicated region
  $region2: #{closed_call.32} parent=0 // pred_check
    _
  $region3: #{closed_call.32} parent=0 // pred_check_branch
    %19 = sbr.rel (0) target = $region5
  $region4: #{closed_call.32} parent=0 // pred_region
    _
  $region5: #{closed_call.32} parent=0 // pred_fallthru
    _
  // Predicated region
  $region6: #{closed_call.32} parent=0 // pred_check
    _
  $region7: #{closed_call.32} parent=0 // pred_check_branch
    %21 = sbr.rel (0) target = $region9
  $region8: #{closed_call.32} parent=0 // pred_region
    _
  $region9: #{closed_call.32} parent=0 // pred_fallthru
    _
  // Predicated region
  $region10: #{closed_call.32} parent=0 // pred_check
    _
  $region11: #{closed_call.32} parent=0 // pred_check_branch
    %23 = sbr.rel (0) target = $region13
  $region12: #{closed_call.32} parent=0 // pred_region
    _
  $region13: #{closed_call.32} parent=0 // pred_fallthru
    _
  // Predicated region
  $region14: #{closed_call.32} parent=0 // pred_check
    _
  $region15: #{closed_call.32} parent=0 // pred_check_branch
    %25 = sbr.rel (0) target = $region17
  $region16: #{closed_call.32} parent=0 // pred_region
    _
  $region17: #{closed_call.32} parent=0 // pred_fallthru
    _
  // Predicated region
  $region18: #{closed_call.32} parent=0 // pred_check
    _
  $region19: #{closed_call.32} parent=0 // pred_check_branch
    %27 = sbr.rel (0) target = $region21
  $region20: #{closed_call.32} parent=0 // pred_region
    _
  $region21: #{closed_call.32} parent=0 // pred_fallthru
    _
  // Predicated region
  $region22: #{closed_call.32} parent=0 // pred_check
    _
  $region23: #{closed_call.32} parent=0 // pred_check_branch
    %29 = sbr.rel (0) target = $region25
  $region24: #{closed_call.32} parent=0 // pred_region
    _
  $region25: #{closed_call.32} parent=0 // pred_fallthru
    _
  %s31 = sld [smem:[#allocation3]]
  %s32 = sld [smem:[#allocation3 + $0x1]]
  %v33 = vld [vmem:[%s3] sm:$0xf]
  %v34 = vld [vmem:[%s3 + $0x4] sm:$0xf]
  %s35 = scalar_lea.vmem %s3, 8
  %v36 = vld [vmem:[%s35] sm:$0xf]
  %v37 = vld [vmem:[%s35 + $0x4] sm:$0xf]
  %s38 = scalar_lea.vmem %s3, 16
  %v39 = vld [vmem:[%s38] sm:$0xf]
  %v40 = vld [vmem:[%s38 + $0x4] sm:$0xf]
  %v41 = vld [vmem:[%s4] sm:$0xff]
  %v42 = vld [vmem:[%s4 + $0x8] sm:$0xff]
  %v43 = vlaneseq
  %v44 = vand.u32 %v43, 127
  %v45 = vadd.s32 %v44, 128
  %v46 = vadd.s32 %v44, 256
  %vm47 = vcmp.ge.s32.totalorder %v44, 4
  %vm48 = vcmp.ge.s32.totalorder %v45, 4
  %vm49 = vcmp.ge.s32.totalorder %v46, 4
  %s50 = sadd.s32 %s32, 4
  %v51 = vstv %s50
  %vm52 = vcmp.lt.s32.totalorder %v44, %v51
  %vm53 = vcmp.lt.s32.totalorder %v45, %v51
  %vm54 = vcmp.lt.s32.totalorder %v46, %v51
  %vm55 = vmand %vm47, %vm52
  %vm56 = vmand %vm48, %vm53
  %vm57 = vmand %vm49, %vm54
  %v58 = vsel %vm55, 1, 0
  %v59 = vsel %vm56, 1, 0
  %v60 = vsel %vm57, 1, 0
  %v61 = vcvt.s32.f32 %v58
  %v62 = vcvt.s32.f32 %v59
  %v63 = vcvt.s32.f32 %v60
  %64 = vst [vmem:[%s7] sm:$0xff] 0
  %65 = vst [vmem:[%s7 + $0x8] sm:$0xf] 0
  %66 = vst [vmem:[%s7 + $0xc] sm:$0xff] 0
  %67 = vst [vmem:[%s7 + $0x14] sm:$0xf] 0
  %68 = vst [vmem:[%s7 + $0x18] sm:$0xff] 0
  %69 = vst [vmem:[%s7 + $0x20] sm:$0xf] 0
  %70 = vst [vmem:[%s7 + $0x24] sm:$0xff] 0
  %71 = vst [vmem:[%s7 + $0x2c] sm:$0xf] 0
  %72 = vst [vmem:[%s7 + $0x30] sm:$0xff] 0
  %73 = vst [vmem:[%s7 + $0x38] sm:$0xf] 0
  %74 = vst [vmem:[%s7 + $0x3c] sm:$0xff] 0
  %75 = vst [vmem:[%s7 + $0x44] sm:$0xf] 0
  %76 = vst [vmem:[%s7 + $0x48] sm:$0xff] 0
  %77 = vst [vmem:[%s7 + $0x50] sm:$0xf] 0
  %78 = vst [vmem:[%s7 + $0x54] sm:$0xff] 0
  %79 = vst [vmem:[%s7 + $0x5c] sm:$0xf] 0
  %s80 = sadd.s32 %s31, 4
  %s81 = smul.u32 %s80, 16
  %s82 = sshra.s32 %s81, 3
  %s83 = sand.u32 %s81, 7
  %s84 = smul.u32 %s82, 3
  %s85 = smul.addr %s84, 4
  %s86 = scalar_lea.vmem %s7, %s85
  %87 = vst [vmem:[%s86] sm:$0xff] 0
  %88 = vst [vmem:[%s86 + $0x8] sm:$0xf] 0
  %89 = vst [vmem:[%s86 + $0xc] sm:$0xff] 0
  %90 = vst [vmem:[%s86 + $0x14] sm:$0xf] 0
  %91 = vst [vmem:[%s86 + $0x18] sm:$0xff] 0
  %92 = vst [vmem:[%s86 + $0x20] sm:$0xf] 0
  %93 = vst [vmem:[%s86 + $0x24] sm:$0xff] 0
  %94 = vst [vmem:[%s86 + $0x2c] sm:$0xf] 0
  %95 = vst [vmem:[%s86 + $0x30] sm:$0xff] 0
  %96 = vst [vmem:[%s86 + $0x38] sm:$0xf] 0
  %97 = vst [vmem:[%s86 + $0x3c] sm:$0xff] 0
  %98 = vst [vmem:[%s86 + $0x44] sm:$0xf] 0
  %99 = vst [vmem:[%s86 + $0x48] sm:$0xff] 0
  %100 = vst [vmem:[%s86 + $0x50] sm:$0xf] 0
  %101 = vst [vmem:[%s86 + $0x54] sm:$0xff] 0
  %102 = vst [vmem:[%s86 + $0x5c] sm:$0xf] 0
  // While loop
  $region26: #{closed_call.32} parent=0 // loop_pre_header
    _
  $region27: #{closed_call.32} parent=0 // loop_header
    %s104 = sphi 0, %s106
    %p105 = scmp.ge.s32.totalorder %s104, %s31
    %v109 = vphi 0.0, %v544
    %v110 = vphi 0.0, %v545
    %v111 = vphi 0.0, %v560
    %v112 = vphi 0.0, %v561
  $region28: #{closed_call.32} parent=0 // loop_header_branch
    %108 = sbr.rel (%p105) target = $region32
  $region29: #{closed_call.32} parent=0 // loop_body
    %s113 = sadd.s32 %s104, 4
    %s114 = sadd.s32 %s104, 3
    %s115 = smul.u32 %s114, 16
    %s116 = sshra.s32 %s115, 3
    %s117 = sand.u32 %s115, 7
    %s118 = smul.u32 %s116, 3
    %s119 = smul.addr %s118, 4
    %s120 = scalar_lea.vmem %s1, %s119
    %v121 = vld [vmem:[%s120] sm:$0xff]
    %v122 = vld [vmem:[%s120 + $0x8] sm:$0xf]
    %v123 = vld [vmem:[%s120 + $0xc] sm:$0xff]
    %v124 = vld [vmem:[%s120 + $0x14] sm:$0xf]
    %v125 = vld [vmem:[%s120 + $0x18] sm:$0xff]
    %v126 = vld [vmem:[%s120 + $0x20] sm:$0xf]
    %v127 = vld [vmem:[%s120 + $0x24] sm:$0xff]
    %v128 = vld [vmem:[%s120 + $0x2c] sm:$0xf]
    %v129 = vld [vmem:[%s120 + $0x30] sm:$0xff]
    %v130 = vld [vmem:[%s120 + $0x38] sm:$0xf]
    %v131 = vld [vmem:[%s120 + $0x3c] sm:$0xff]
    %v132 = vld [vmem:[%s120 + $0x44] sm:$0xf]
    %v135 = vunpack.c.l.b16 %v33
    %v136 = vunpack.c.l.b16 %v34
    %v137 = vpack.c.b16 %v136, %v135
    %v150 = vunpack.c.l.b16 %v121
    %v151 = vunpack.c.h.b16 %v121
    %v152 = vunpack.c.l.b16 %v122
    %v153 = vunpack.c.l.b16 %v123
    %v154 = vunpack.c.h.b16 %v123
    %v155 = vunpack.c.l.b16 %v124
    %v156 = vunpack.c.l.b16 %v125
    %v157 = vunpack.c.h.b16 %v125
    %v158 = vunpack.c.l.b16 %v126
    %v159 = vunpack.c.l.b16 %v127
    %v160 = vunpack.c.h.b16 %v127
    %v161 = vunpack.c.l.b16 %v128
    %v162 = vunpack.c.l.b16 %v129
    %v163 = vunpack.c.h.b16 %v129
    %v164 = vunpack.c.l.b16 %v130
    %v165 = vunpack.c.l.b16 %v131
    %v166 = vunpack.c.h.b16 %v131
    %v167 = vunpack.c.l.b16 %v132
    %v168 = vpack.c.b16 %v153, %v150
    %v169 = vpack.c.b16 %v154, %v151
    %v170 = vpack.c.b16 %v155, %v152
    %v171 = vpack.c.b16 %v159, %v156
    %v172 = vpack.c.b16 %v160, %v157
    %v173 = vpack.c.b16 %v161, %v158
    %v174 = vpack.c.b16 %v165, %v162
    %v175 = vpack.c.b16 %v166, %v163
    %v176 = vpack.c.b16 %v167, %v164
    %vm186 = vcmask 392192
    %v188 = vsel %vm186, %v137, 0
    %190 = vmatprep.subr.bf16.mxu0 %v169
    %191 = vmatpush1.bf16.msra.mxu0 %v168
    %192 = vmatprep.subr.bf16.mxu0 %v172
    %193 = vmatpush1.bf16.msra.mxu0 %v171
    %194 = vmatprep.subr.bf16.mxu0 %v175
    %195 = vmatpush1.bf16.msra.mxu0 %v174
    %196 = vmatprep.subr.bf16.mxu0 0
    %197 = vmatpush1.bf16.msra.mxu0 0
    %198 = vmatprep.subr.bf16.mxu0 0
    %199 = vmatpush1.bf16.msra.mxu0 0
    %200 = vmatprep.subr.bf16.mxu0 0
    %201 = vmatpush1.bf16.msra.mxu0 0
    %202 = vmatprep.subr.bf16.mxu0 0
    %203 = vmatpush1.bf16.msra.mxu0 0
    %204 = vmatprep.subr.bf16.mxu0 0
    %205 = vmatpush1.bf16.msra.mxu0 0
    %206 = vmatprep.subr.bf16.mxu0 0
    %207 = vmatpush1.bf16.msra.mxu0 0
    %208 = vmatprep.subr.bf16.mxu0 0
    %209 = vmatpush1.bf16.msra.mxu0 0
    %210 = vmatprep.subr.bf16.mxu0 0
    %211 = vmatpush1.bf16.msra.mxu0 0
    %212 = vmatprep.subr.bf16.mxu0 0
    %213 = vmatpush1.bf16.msra.mxu0 0
    %214 = vmatprep.subr.bf16.mxu0 0
    %215 = vmatpush1.bf16.msra.mxu0 0
    %216 = vmatprep.subr.bf16.mxu0 0
    %217 = vmatpush1.bf16.msra.mxu0 0
    %218 = vmatprep.subr.bf16.mxu0 0
    %219 = vmatpush1.bf16.msra.mxu0 0
    %220 = vmatprep.subr.bf16.mxu0 0
    %221 = vmatpush1.bf16.msra.mxu0 0
    %222 = vmatprep.mubr.bf16.mxu0 0
    %223 = vmatmul.mubr.bf16.gmra.mrb[0].mxu0 %v188
    %v224 = vpop.f32.mrb[0].mxu0
    %v225 = vadd.f32 0.0, %v224
    %v226 = vpop.f32.mrb[0].mxu0
    %v227 = vadd.f32 0.0, %v226
    %v228 = vpop.f32.mrb[0].mxu0
    %v229 = vadd.f32 0.0, %v228
    %v230 = vpop.f32.mrb[0].mxu0
    %v231 = vadd.f32 0.0, %v230
    %232 = vdwg.mxu0
    %233 = vmatprep.subr.bf16.mxu0 0
    %234 = vmatpush1.bf16.msra.mxu0 %v170
    %235 = vmatprep.subr.bf16.mxu0 0
    %236 = vmatpush1.bf16.msra.mxu0 %v173
    %237 = vmatprep.subr.bf16.mxu0 0
    %238 = vmatpush1.bf16.msra.mxu0 %v176
    %239 = vmatprep.subr.bf16.mxu0 0
    %240 = vmatpush1.bf16.msra.mxu0 0
    %241 = vmatprep.subr.bf16.mxu0 0
    %242 = vmatpush1.bf16.msra.mxu0 0
    %243 = vmatprep.subr.bf16.mxu0 0
    %244 = vmatpush1.bf16.msra.mxu0 0
    %245 = vmatprep.subr.bf16.mxu0 0
    %246 = vmatpush1.bf16.msra.mxu0 0
    %247 = vmatprep.subr.bf16.mxu0 0
    %248 = vmatpush1.bf16.msra.mxu0 0
    %249 = vmatprep.subr.bf16.mxu0 0
    %250 = vmatpush1.bf16.msra.mxu0 0
    %251 = vmatprep.subr.bf16.mxu0 0
    %252 = vmatpush1.bf16.msra.mxu0 0
    %253 = vmatprep.subr.bf16.mxu0 0
    %254 = vmatpush1.bf16.msra.mxu0 0
    %255 = vmatprep.subr.bf16.mxu0 0
    %256 = vmatpush1.bf16.msra.mxu0 0
    %257 = vmatprep.subr.bf16.mxu0 0
    %258 = vmatpush1.bf16.msra.mxu0 0
    %259 = vmatprep.subr.bf16.mxu0 0
    %260 = vmatpush1.bf16.msra.mxu0 0
    %261 = vmatprep.subr.bf16.mxu0 0
    %262 = vmatpush1.bf16.msra.mxu0 0
    %263 = vmatprep.subr.bf16.mxu0 0
    %264 = vmatpush1.bf16.msra.mxu0 0
    %265 = vmatprep.mubr.bf16.mxu0 0
    %266 = vmatmul.mubr.bf16.gmra.mrb[0].mxu0 %v188
    %v267 = vpop.f32.mrb[0].mxu0
    %v268 = vadd.f32 0.0, %v267
    %v269 = vpop.f32.mrb[0].mxu0
    %v270 = vpop.f32.mrb[0].mxu0
    %v271 = vadd.f32 0.0, %v270
    %v272 = vpop.f32.mrb[0].mxu0
    %273 = vdwg.mxu0
    %274 = vrot.lane.b32.xlu0 %v225, 1
    %v275 = vpop.permute.xlu0 %274
    %276 = vrot.lane.b32.xlu0 %v229, 1
    %v277 = vpop.permute.xlu0 %276
    %278 = vrot.lane.b32.xlu0 %v227, 1
    %v279 = vpop.permute.xlu0 %278
    %280 = vrot.lane.b32.xlu0 %v231, 1
    %v281 = vpop.permute.xlu0 %280
    %282 = vrot.lane.b32.xlu0 %v268, 1
    %v283 = vpop.permute.xlu0 %282
    %284 = vrot.lane.b32.xlu0 %v271, 1
    %v285 = vpop.permute.xlu0 %284
    %vm286 = vcmp.lt.s32.totalorder %v44, 1
    %v287 = vsel %vm286, %v279, %v283
    %v288 = vsel %vm286, %v281, %v285
    %v289 = vsel %vm286, %v275, %v279
    %v290 = vsel %vm286, %v277, %v281
    %v291 = vsel %vm286, %v283, %v275
    %v292 = vsel %vm286, %v285, %v277
    %v293 = vadd.f32 %v291, 0.0
    %v294 = vadd.f32 %v289, 0.0
    %v295 = vadd.f32 %v287, 0.0
    %v296 = vadd.f32 %v292, 0.0
    %v297 = vadd.f32 %v290, 0.0
    %v298 = vadd.f32 %v288, 0.0
    %v301 = vunpack.c.l.b16 %v36
    %v302 = vunpack.c.l.b16 %v37
    %v303 = vpack.c.b16 %v302, %v301
    %v305 = vsel %vm186, %v303, 0
    %307 = vmatprep.subr.bf16.mxu0 %v169
    %308 = vmatpush1.bf16.msra.mxu0 %v168
    %309 = vmatprep.subr.bf16.mxu0 %v172
    %310 = vmatpush1.bf16.msra.mxu0 %v171
    %311 = vmatprep.subr.bf16.mxu0 %v175
    %312 = vmatpush1.bf16.msra.mxu0 %v174
    %313 = vmatprep.subr.bf16.mxu0 0
    %314 = vmatpush1.bf16.msra.mxu0 0
    %315 = vmatprep.subr.bf16.mxu0 0
    %316 = vmatpush1.bf16.msra.mxu0 0
    %317 = vmatprep.subr.bf16.mxu0 0
    %318 = vmatpush1.bf16.msra.mxu0 0
    %319 = vmatprep.subr.bf16.mxu0 0
    %320 = vmatpush1.bf16.msra.mxu0 0
    %321 = vmatprep.subr.bf16.mxu0 0
    %322 = vmatpush1.bf16.msra.mxu0 0
    %323 = vmatprep.subr.bf16.mxu0 0
    %324 = vmatpush1.bf16.msra.mxu0 0
    %325 = vmatprep.subr.bf16.mxu0 0
    %326 = vmatpush1.bf16.msra.mxu0 0
    %327 = vmatprep.subr.bf16.mxu0 0
    %328 = vmatpush1.bf16.msra.mxu0 0
    %329 = vmatprep.subr.bf16.mxu0 0
    %330 = vmatpush1.bf16.msra.mxu0 0
    %331 = vmatprep.subr.bf16.mxu0 0
    %332 = vmatpush1.bf16.msra.mxu0 0
    %333 = vmatprep.subr.bf16.mxu0 0
    %334 = vmatpush1.bf16.msra.mxu0 0
    %335 = vmatprep.subr.bf16.mxu0 0
    %336 = vmatpush1.bf16.msra.mxu0 0
    %337 = vmatprep.subr.bf16.mxu0 0
    %338 = vmatpush1.bf16.msra.mxu0 0
    %339 = vmatprep.mubr.bf16.mxu0 0
    %340 = vmatmul.mubr.bf16.gmra.mrb[0].mxu0 %v305
    %v341 = vpop.f32.mrb[0].mxu0
    %v342 = vadd.f32 0.0, %v341
    %v343 = vpop.f32.mrb[0].mxu0
    %v344 = vadd.f32 0.0, %v343
    %v345 = vpop.f32.mrb[0].mxu0
    %v346 = vadd.f32 0.0, %v345
    %v347 = vpop.f32.mrb[0].mxu0
    %v348 = vadd.f32 0.0, %v347
    %349 = vdwg.mxu0
    %350 = vmatprep.subr.bf16.mxu0 0
    %351 = vmatpush1.bf16.msra.mxu0 %v170
    %352 = vmatprep.subr.bf16.mxu0 0
    %353 = vmatpush1.bf16.msra.mxu0 %v173
    %354 = vmatprep.subr.bf16.mxu0 0
    %355 = vmatpush1.bf16.msra.mxu0 %v176
    %356 = vmatprep.subr.bf16.mxu0 0
    %357 = vmatpush1.bf16.msra.mxu0 0
    %358 = vmatprep.subr.bf16.mxu0 0
    %359 = vmatpush1.bf16.msra.mxu0 0
    %360 = vmatprep.subr.bf16.mxu0 0
    %361 = vmatpush1.bf16.msra.mxu0 0
    %362 = vmatprep.subr.bf16.mxu0 0
    %363 = vmatpush1.bf16.msra.mxu0 0
    %364 = vmatprep.subr.bf16.mxu0 0
    %365 = vmatpush1.bf16.msra.mxu0 0
    %366 = vmatprep.subr.bf16.mxu0 0
    %367 = vmatpush1.bf16.msra.mxu0 0
    %368 = vmatprep.subr.bf16.mxu0 0
    %369 = vmatpush1.bf16.msra.mxu0 0
    %370 = vmatprep.subr.bf16.mxu0 0
    %371 = vmatpush1.bf16.msra.mxu0 0
    %372 = vmatprep.subr.bf16.mxu0 0
    %373 = vmatpush1.bf16.msra.mxu0 0
    %374 = vmatprep.subr.bf16.mxu0 0
    %375 = vmatpush1.bf16.msra.mxu0 0
    %376 = vmatprep.subr.bf16.mxu0 0
    %377 = vmatpush1.bf16.msra.mxu0 0
    %378 = vmatprep.subr.bf16.mxu0 0
    %379 = vmatpush1.bf16.msra.mxu0 0
    %380 = vmatprep.subr.bf16.mxu0 0
    %381 = vmatpush1.bf16.msra.mxu0 0
    %382 = vmatprep.mubr.bf16.mxu0 0
    %383 = vmatmul.mubr.bf16.gmra.mrb[0].mxu0 %v305
    %v384 = vpop.f32.mrb[0].mxu0
    %v385 = vadd.f32 0.0, %v384
    %v386 = vpop.f32.mrb[0].mxu0
    %v387 = vpop.f32.mrb[0].mxu0
    %v388 = vadd.f32 0.0, %v387
    %v389 = vpop.f32.mrb[0].mxu0
    %390 = vdwg.mxu0
    %v391 = vadd.f32 %v293, %v342
    %v392 = vadd.f32 %v294, %v344
    %v393 = vadd.f32 %v295, %v385
    %v394 = vadd.f32 %v296, %v346
    %v395 = vadd.f32 %v297, %v348
    %v396 = vadd.f32 %v298, %v388
    %v399 = vunpack.c.l.b16 %v39
    %v400 = vunpack.c.l.b16 %v40
    %v401 = vpack.c.b16 %v400, %v399
    %v403 = vsel %vm186, %v401, 0
    %405 = vmatprep.subr.bf16.mxu0 %v169
    %406 = vmatpush1.bf16.msra.mxu0 %v168
    %407 = vmatprep.subr.bf16.mxu0 %v172
    %408 = vmatpush1.bf16.msra.mxu0 %v171
    %409 = vmatprep.subr.bf16.mxu0 %v175
    %410 = vmatpush1.bf16.msra.mxu0 %v174
    %411 = vmatprep.subr.bf16.mxu0 0
    %412 = vmatpush1.bf16.msra.mxu0 0
    %413 = vmatprep.subr.bf16.mxu0 0
    %414 = vmatpush1.bf16.msra.mxu0 0
    %415 = vmatprep.subr.bf16.mxu0 0
    %416 = vmatpush1.bf16.msra.mxu0 0
    %417 = vmatprep.subr.bf16.mxu0 0
    %418 = vmatpush1.bf16.msra.mxu0 0
    %419 = vmatprep.subr.bf16.mxu0 0
    %420 = vmatpush1.bf16.msra.mxu0 0
    %421 = vmatprep.subr.bf16.mxu0 0
    %422 = vmatpush1.bf16.msra.mxu0 0
    %423 = vmatprep.subr.bf16.mxu0 0
    %424 = vmatpush1.bf16.msra.mxu0 0
    %425 = vmatprep.subr.bf16.mxu0 0
    %426 = vmatpush1.bf16.msra.mxu0 0
    %427 = vmatprep.subr.bf16.mxu0 0
    %428 = vmatpush1.bf16.msra.mxu0 0
    %429 = vmatprep.subr.bf16.mxu0 0
    %430 = vmatpush1.bf16.msra.mxu0 0
    %431 = vmatprep.subr.bf16.mxu0 0
    %432 = vmatpush1.bf16.msra.mxu0 0
    %433 = vmatprep.subr.bf16.mxu0 0
    %434 = vmatpush1.bf16.msra.mxu0 0
    %435 = vmatprep.subr.bf16.mxu0 0
    %436 = vmatpush1.bf16.msra.mxu0 0
    %437 = vmatprep.mubr.bf16.mxu0 0
    %438 = vmatmul.mubr.bf16.gmra.mrb[0].mxu0 %v403
    %v439 = vpop.f32.mrb[0].mxu0
    %v440 = vadd.f32 0.0, %v439
    %v441 = vpop.f32.mrb[0].mxu0
    %v442 = vadd.f32 0.0, %v441
    %v443 = vpop.f32.mrb[0].mxu0
    %v444 = vadd.f32 0.0, %v443
    %v445 = vpop.f32.mrb[0].mxu0
    %v446 = vadd.f32 0.0, %v445
    %447 = vdwg.mxu0
    %448 = vmatprep.subr.bf16.mxu0 0
    %449 = vmatpush1.bf16.msra.mxu0 %v170
    %450 = vmatprep.subr.bf16.mxu0 0
    %451 = vmatpush1.bf16.msra.mxu0 %v173
    %452 = vmatprep.subr.bf16.mxu0 0
    %453 = vmatpush1.bf16.msra.mxu0 %v176
    %454 = vmatprep.subr.bf16.mxu0 0
    %455 = vmatpush1.bf16.msra.mxu0 0
    %456 = vmatprep.subr.bf16.mxu0 0
    %457 = vmatpush1.bf16.msra.mxu0 0
    %458 = vmatprep.subr.bf16.mxu0 0
    %459 = vmatpush1.bf16.msra.mxu0 0
    %460 = vmatprep.subr.bf16.mxu0 0
    %461 = vmatpush1.bf16.msra.mxu0 0
    %462 = vmatprep.subr.bf16.mxu0 0
    %463 = vmatpush1.bf16.msra.mxu0 0
    %464 = vmatprep.subr.bf16.mxu0 0
    %465 = vmatpush1.bf16.msra.mxu0 0
    %466 = vmatprep.subr.bf16.mxu0 0
    %467 = vmatpush1.bf16.msra.mxu0 0
    %468 = vmatprep.subr.bf16.mxu0 0
    %469 = vmatpush1.bf16.msra.mxu0 0
    %470 = vmatprep.subr.bf16.mxu0 0
    %471 = vmatpush1.bf16.msra.mxu0 0
    %472 = vmatprep.subr.bf16.mxu0 0
    %473 = vmatpush1.bf16.msra.mxu0 0
    %474 = vmatprep.subr.bf16.mxu0 0
    %475 = vmatpush1.bf16.msra.mxu0 0
    %476 = vmatprep.subr.bf16.mxu0 0
    %477 = vmatpush1.bf16.msra.mxu0 0
    %478 = vmatprep.subr.bf16.mxu0 0
    %479 = vmatpush1.bf16.msra.mxu0 0
    %480 = vmatprep.mubr.bf16.mxu0 0
    %481 = vmatmul.mubr.bf16.gmra.mrb[0].mxu0 %v403
    %v482 = vpop.f32.mrb[0].mxu0
    %v483 = vadd.f32 0.0, %v482
    %v484 = vpop.f32.mrb[0].mxu0
    %v485 = vpop.f32.mrb[0].mxu0
    %v486 = vadd.f32 0.0, %v485
    %v487 = vpop.f32.mrb[0].mxu0
    %488 = vdwg.mxu0
    %489 = vrot.lane.b32.xlu0 %v440, 127
    %v490 = vpop.permute.xlu0 %489
    %491 = vrot.lane.b32.xlu0 %v444, 127
    %v492 = vpop.permute.xlu0 %491
    %493 = vrot.lane.b32.xlu0 %v442, 127
    %v494 = vpop.permute.xlu0 %493
    %495 = vrot.lane.b32.xlu0 %v446, 127
    %v496 = vpop.permute.xlu0 %495
    %497 = vrot.lane.b32.xlu0 %v483, 127
    %v498 = vpop.permute.xlu0 %497
    %499 = vrot.lane.b32.xlu0 %v486, 127
    %v500 = vpop.permute.xlu0 %499
    %vm501 = vcmp.lt.s32.totalorder %v44, 127
    %v502 = vsel %vm501, %v494, %v498
    %v503 = vsel %vm501, %v496, %v500
    %v504 = vsel %vm501, %v490, %v494
    %v505 = vsel %vm501, %v492, %v496
    %v506 = vsel %vm501, %v498, %v490
    %v507 = vsel %vm501, %v500, %v492
    %v508 = vadd.f32 %v391, %v504
    %v509 = vadd.f32 %v392, %v502
    %v510 = vadd.f32 %v393, %v506
    %v511 = vadd.f32 %v394, %v505
    %v512 = vadd.f32 %v395, %v503
    %v513 = vadd.f32 %v396, %v507
    %515 = vset.pattern.permute.xlu0 0
    %516 = vperm.xlu0 %515, %v41
    %v517 = vpop.permute.xlu0 %516
    %520 = vset.pattern.permute.xlu0 0
    %521 = vperm.xlu0 %520, %v42
    %v522 = vpop.permute.xlu0 %521
    %v524 = vadd.f32 %v508, %v517
    %v525 = vadd.f32 %v509, %v517
    %v526 = vadd.f32 %v510, %v517
    %v527 = vadd.f32 %v511, %v522
    %v528 = vadd.f32 %v512, %v522
    %v529 = vadd.f32 %v513, %v522
    %v530 = vmul.f32 %v524, %v61
    %v531 = vmul.f32 %v525, %v62
    %v532 = vmul.f32 %v526, %v63
    %v533 = vmul.f32 %v527, %v61
    %v534 = vmul.f32 %v528, %v62
    %v535 = vmul.f32 %v529, %v63
    %v536 = vadd.f32 %v530, %v531
    %v537 = vadd.f32 %v536, %v532
    %538 = vadd.xlane.f32.xlu0 %v537
    %v539 = vpop.xlane.xlu0 %538
    %v540 = vadd.f32 %v533, %v534
    %v541 = vadd.f32 %v540, %v535
    %542 = vadd.xlane.f32.xlu0 %v541
    %v543 = vpop.xlane.xlu0 %542
    %v544 = vadd.f32 %v109, %v539
    %v545 = vadd.f32 %v110, %v543
    %v546 = vmul.f32 %v530, %v530
    %v547 = vmul.f32 %v531, %v531
    %v548 = vmul.f32 %v532, %v532
    %v549 = vmul.f32 %v533, %v533
    %v550 = vmul.f32 %v534, %v534
    %v551 = vmul.f32 %v535, %v535
    %v552 = vadd.f32 %v546, %v547
    %v553 = vadd.f32 %v552, %v548
    %554 = vadd.xlane.f32.xlu0 %v553
    %v555 = vpop.xlane.xlu0 %554
    %v556 = vadd.f32 %v549, %v550
    %v557 = vadd.f32 %v556, %v551
    %558 = vadd.xlane.f32.xlu0 %v557
    %v559 = vpop.xlane.xlu0 %558
    %v560 = vadd.f32 %v111, %v555
    %v561 = vadd.f32 %v112, %v559
    %v562 = vpack.c.bf16 %v533, %v530
    %v563 = vpack.c.bf16 %v534, %v531
    %v564 = vpack.c.bf16 %v535, %v532
    %s565 = smul.u32 %s113, 16
    %v569 = vunpack.c.l.b16 %v562
    %v570 = vunpack.c.l.b16 %v563
    %v571 = vunpack.c.l.b16 %v564
    %v572 = vunpack.c.h.b16 %v562
    %v573 = vunpack.c.h.b16 %v563
    %v574 = vunpack.c.h.b16 %v564
    %v575 = vpack.c.b16 %v570, %v569
    %v576 = vpack.c.b16 %v571, %v571
    %v577 = vpack.c.b16 %v573, %v572
    %v578 = vpack.c.b16 %v574, %v574
    %s583 = sshra.s32 %s565, 3
    %s584 = sand.u32 %s565, 7
    %s585 = smul.u32 %s583, 3
    %s586 = smul.addr %s585, 4
    %s587 = scalar_lea.vmem %s7, %s586
    %588 = vst [vmem:[%s587] sm:$0xff] %v575
    %589 = vst [vmem:[%s587 + $0x8] sm:$0xf] %v576
    %590 = vst [vmem:[%s587 + $0xc] sm:$0xff] %v577
    %591 = vst [vmem:[%s587 + $0x14] sm:$0xf] %v578
  $region30: #{closed_call.32} parent=0 // loop_footer
    %s106 = sadd.s32 %s104, 1
  $region31: #{closed_call.32} parent=0 // loop_footer_branch
    %103 = sbr.rel target = $region27
  $region32: #{closed_call.32} parent=0 // loop_exit
    _
  %s592 = smul.u32 %s31, %s32
  %s593 = scvt.s32.f32 %s592
  %v594 = vstv %s593
  %v595 = vrcp.pop %v594
  %v596 = vmul.f32 %v109, %v595
  %v597 = vmul.f32 %v110, %v595
  %v598 = vmul.f32 %v111, %v595
  %v599 = vmul.f32 %v112, %v595
  %v600 = vmul.f32 %v596, %v596
  %v601 = vmul.f32 %v597, %v597
  %v602 = vsub.f32 %v598, %v600
  %v603 = vsub.f32 %v599, %v601
  %v604 = vadd.f32 %v602, 1e-05
  %v605 = vadd.f32 %v603, 1e-05
  %v606 = vrsqrt.pop %v604
  %v607 = vrsqrt.pop %v605
  %v608 = vld [vmem:[%s5] sm:$0xff]
  %v609 = vld [vmem:[%s5 + $0x8] sm:$0xff]
  %v610 = vmul.f32 %v608, %v606
  %v611 = vmul.f32 %v609, %v607
  %v612 = vld [vmem:[%s6] sm:$0xff]
  %v613 = vld [vmem:[%s6 + $0x8] sm:$0xff]
  %v614 = vmul.f32 %v596, %v610
  %v615 = vmul.f32 %v597, %v611
  %v616 = vsub.f32 %v612, %v614
  %v617 = vsub.f32 %v613, %v615
  // While loop
  $region33: #{closed_call.32} parent=0 // loop_pre_header
    _
  $region34: #{closed_call.32} parent=0 // loop_header
    %s619 = sphi 0, %s621
    %p620 = scmp.ge.s32.totalorder %s619, %s31
  $region35: #{closed_call.32} parent=0 // loop_header_branch
    %623 = sbr.rel (%p620) target = $region39
  $region36: #{closed_call.32} parent=0 // loop_body
    %s624 = sadd.s32 %s619, 4
    %s625 = smul.u32 %s624, 16
    %s626 = sshra.s32 %s625, 3
    %s627 = sand.u32 %s625, 7
    %s628 = smul.u32 %s626, 3
    %s629 = smul.addr %s628, 4
    %s630 = scalar_lea.vmem %s7, %s629
    %v631 = vld [vmem:[%s630] sm:$0xff]
    %v632 = vld [vmem:[%s630 + $0x8] sm:$0xf]
    %v633 = vld [vmem:[%s630 + $0xc] sm:$0xff]
    %v634 = vld [vmem:[%s630 + $0x14] sm:$0xf]
    %v635 = vunpack.c.l.bf16 %v631
    %v636 = vunpack.c.h.bf16 %v631
    %v637 = vunpack.c.l.bf16 %v632
    %v638 = vunpack.c.l.bf16 %v633
    %v639 = vunpack.c.h.bf16 %v633
    %v640 = vunpack.c.l.bf16 %v634
    %s641 = smul.addr %s628, 4
    %s642 = scalar_lea.vmem %s2, %s641
    %v643 = vld [vmem:[%s642] sm:$0xff]
    %v644 = vld [vmem:[%s642 + $0x8] sm:$0xf]
    %v645 = vld [vmem:[%s642 + $0xc] sm:$0xff]
    %v646 = vld [vmem:[%s642 + $0x14] sm:$0xf]
    %v647 = vunpack.c.l.bf16 %v643
    %v648 = vunpack.c.h.bf16 %v643
    %v649 = vunpack.c.l.bf16 %v644
    %v650 = vunpack.c.l.bf16 %v645
    %v651 = vunpack.c.h.bf16 %v645
    %v652 = vunpack.c.l.bf16 %v646
    %654 = vset.pattern.permute.xlu0 0
    %655 = vperm.xlu0 %654, %v610
    %v656 = vpop.permute.xlu0 %655
    %659 = vset.pattern.permute.xlu0 0
    %660 = vperm.xlu0 %659, %v611
    %v661 = vpop.permute.xlu0 %660
    %v663 = vmul.f32 %v635, %v656
    %v664 = vmul.f32 %v636, %v656
    %v665 = vmul.f32 %v637, %v656
    %v666 = vmul.f32 %v638, %v661
    %v667 = vmul.f32 %v639, %v661
    %v668 = vmul.f32 %v640, %v661
    %670 = vset.pattern.permute.xlu0 0
    %671 = vperm.xlu0 %670, %v616
    %v672 = vpop.permute.xlu0 %671
    %675 = vset.pattern.permute.xlu0 0
    %676 = vperm.xlu0 %675, %v617
    %v677 = vpop.permute.xlu0 %676
    %v679 = vadd.f32 %v663, %v672
    %v680 = vadd.f32 %v664, %v672
    %v681 = vadd.f32 %v665, %v672
    %v682 = vadd.f32 %v666, %v677
    %v683 = vadd.f32 %v667, %v677
    %v684 = vadd.f32 %v668, %v677
    %v685 = vadd.f32 %v679, %v647
    %v686 = vadd.f32 %v680, %v648
    %v687 = vadd.f32 %v681, %v649
    %v688 = vadd.f32 %v682, %v650
    %v689 = vadd.f32 %v683, %v651
    %v690 = vadd.f32 %v684, %v652
    %v691 = vmax.f32 %v685, 0.0
    %v692 = vmax.f32 %v686, 0.0
    %v693 = vmax.f32 %v687, 0.0
    %v694 = vmax.f32 %v688, 0.0
    %v695 = vmax.f32 %v689, 0.0
    %v696 = vmax.f32 %v690, 0.0
    %v697 = vsel %vm55, %v691, 0.0
    %v698 = vsel %vm56, %v692, 0.0
    %v699 = vsel %vm57, %v693, 0.0
    %v700 = vsel %vm55, %v694, 0.0
    %v701 = vsel %vm56, %v695, 0.0
    %v702 = vsel %vm57, %v696, 0.0
    %v703 = vpack.c.bf16 %v700, %v697
    %v704 = vpack.c.bf16 %v701, %v698
    %v705 = vpack.c.bf16 %v702, %v699
    %v709 = vunpack.c.l.b16 %v703
    %v710 = vunpack.c.l.b16 %v704
    %v711 = vunpack.c.l.b16 %v705
    %v712 = vunpack.c.h.b16 %v703
    %v713 = vunpack.c.h.b16 %v704
    %v714 = vunpack.c.h.b16 %v705
    %v715 = vpack.c.b16 %v710, %v709
    %v716 = vpack.c.b16 %v711, %v711
    %v717 = vpack.c.b16 %v713, %v712
    %v718 = vpack.c.b16 %v714, %v714
    %723 = vst [vmem:[%s630] sm:$0xff] %v715
    %724 = vst [vmem:[%s630 + $0x8] sm:$0xf] %v716
    %725 = vst [vmem:[%s630 + $0xc] sm:$0xff] %v717
    %726 = vst [vmem:[%s630 + $0x14] sm:$0xf] %v718
  $region37: #{closed_call.32} parent=0 // loop_footer
    %s621 = sadd.s32 %s619, 1
  $region38: #{closed_call.32} parent=0 // loop_footer_branch
    %618 = sbr.rel target = $region34
  $region39: #{closed_call.32} parent=0 // loop_exit
    _
  // Predicated region
  $region40: #{closed_call.32} parent=0 // pred_check
    _
  $region41: #{closed_call.32} parent=0 // pred_check_branch
    %728 = sbr.rel (0) target = $region43
  $region42: #{closed_call.32} parent=0 // pred_region
    _
  $region43: #{closed_call.32} parent=0 // pred_fallthru
    _
  // Predicated region
  $region44: #{closed_call.32} parent=0 // pred_check
    _
  $region45: #{closed_call.32} parent=0 // pred_check_branch
    %730 = sbr.rel (0) target = $region47
  $region46: #{closed_call.32} parent=0 // pred_region
    _
  $region47: #{closed_call.32} parent=0 // pred_fallthru
    _

// kernel: closed_call.33
$region0: #{closed_call.33}
  #allocation0 [shape = 'u32[]', space=smem, size = 0x4, offset = 0x4, fixed_abs, tag = 'smem constant byte address 0x4 - core index']
  #allocation1 [shape = 'u32[144,128]{1,0:T(1,128)}', space=vmem, size = 0x12000, scoped, tag = 'internal scratch']
  #allocation2 [shape = 's32[1]{0}', space=sflag, size = 0x4, scoped, tag = 'scoped memory for closed_call.33']
  #allocation3 [shape = 'u8[512]{0}', space=smem, size = 0x200, scoped, tag = 'prefetched SMEM operand 0']
  %s0 = inlined_call_operand.vmem [shape: s32[2], index: 0, kind: input, shape index: {}]
  %s1 = inlined_call_operand.vmem [shape: bf16[1,896,384], index: 1, kind: input, shape index: {}]
  %s2 = inlined_call_operand.vmem [shape: bf16[3,16,48], index: 2, kind: input, shape index: {}]
  %s3 = inlined_call_operand.vmem [shape: f32[16,1], index: 3, kind: input, shape index: {}]
  %s4 = inlined_call_operand.vmem [shape: bf16[1,896,384], index: 4, kind: output, shape index: {}]
  %s5 = sld [smem:[#allocation0]]
  $region29: #{closed_call.33} parent=0
    _
  %s7 = ssub.s32 1, %s5
  %s8 = scalar_select 0, %s7, %s5
  %s9 = sshll.u32 %s0, 4
  %s10 = int_to_ptr.vmem [resolvable:$true] %s9
  %12 = dma.vmem_to_smem %s10, 16, [#allocation3], [#allocation2]
  %13 = dma.done [#allocation2], 16
  %14 = sfence
  // Predicated region
  $region2: #{closed_call.33} parent=0 // pred_check
    _
  $region3: #{closed_call.33} parent=0 // pred_check_branch
    %16 = sbr.rel (0) target = $region5
  $region4: #{closed_call.33} parent=0 // pred_region
    _
  $region5: #{closed_call.33} parent=0 // pred_fallthru
    _
  // Predicated region
  $region6: #{closed_call.33} parent=0 // pred_check
    _
  $region7: #{closed_call.33} parent=0 // pred_check_branch
    %18 = sbr.rel (0) target = $region9
  $region8: #{closed_call.33} parent=0 // pred_region
    _
  $region9: #{closed_call.33} parent=0 // pred_fallthru
    _
  // Predicated region
  $region10: #{closed_call.33} parent=0 // pred_check
    _
  $region11: #{closed_call.33} parent=0 // pred_check_branch
    %20 = sbr.rel (0) target = $region13
  $region12: #{closed_call.33} parent=0 // pred_region
    _
  $region13: #{closed_call.33} parent=0 // pred_fallthru
    _
  %s22 = sld [smem:[#allocation3]]
  %s23 = sld [smem:[#allocation3 + $0x1]]
  %v24 = vld [vmem:[%s2] sm:$0xf]
  %v25 = vld [vmem:[%s2 + $0x4] sm:$0xf]
  %s26 = scalar_lea.vmem %s2, 8
  %v27 = vld [vmem:[%s26] sm:$0xf]
  %v28 = vld [vmem:[%s26 + $0x4] sm:$0xf]
  %s29 = scalar_lea.vmem %s2, 16
  %v30 = vld [vmem:[%s29] sm:$0xf]
  %v31 = vld [vmem:[%s29 + $0x4] sm:$0xf]
  %v32 = vld [vmem:[%s3] sm:$0xff]
  %v33 = vld [vmem:[%s3 + $0x8] sm:$0xff]
  %v34 = vlaneseq
  %v35 = vand.u32 %v34, 127
  %v36 = vadd.s32 %v35, 128
  %v37 = vadd.s32 %v35, 256
  %vm38 = vcmp.ge.s32.totalorder %v35, 4
  %vm39 = vcmp.ge.s32.totalorder %v36, 4
  %vm40 = vcmp.ge.s32.totalorder %v37, 4
  %s41 = sadd.s32 %s23, 4
  %v42 = vstv %s41
  %vm43 = vcmp.lt.s32.totalorder %v35, %v42
  %vm44 = vcmp.lt.s32.totalorder %v36, %v42
  %vm45 = vcmp.lt.s32.totalorder %v37, %v42
  %vm46 = vmand %vm38, %vm43
  %vm47 = vmand %vm39, %vm44
  %vm48 = vmand %vm40, %vm45
  %49 = vst [vmem:[%s4] sm:$0xff] 0
  %50 = vst [vmem:[%s4 + $0x8] sm:$0xf] 0
  %51 = vst [vmem:[%s4 + $0xc] sm:$0xff] 0
  %52 = vst [vmem:[%s4 + $0x14] sm:$0xf] 0
  %53 = vst [vmem:[%s4 + $0x18] sm:$0xff] 0
  %54 = vst [vmem:[%s4 + $0x20] sm:$0xf] 0
  %55 = vst [vmem:[%s4 + $0x24] sm:$0xff] 0
  %56 = vst [vmem:[%s4 + $0x2c] sm:$0xf] 0
  %57 = vst [vmem:[%s4 + $0x30] sm:$0xff] 0
  %58 = vst [vmem:[%s4 + $0x38] sm:$0xf] 0
  %59 = vst [vmem:[%s4 + $0x3c] sm:$0xff] 0
  %60 = vst [vmem:[%s4 + $0x44] sm:$0xf] 0
  %61 = vst [vmem:[%s4 + $0x48] sm:$0xff] 0
  %62 = vst [vmem:[%s4 + $0x50] sm:$0xf] 0
  %63 = vst [vmem:[%s4 + $0x54] sm:$0xff] 0
  %64 = vst [vmem:[%s4 + $0x5c] sm:$0xf] 0
  %s65 = sadd.s32 %s22, 4
  %s66 = smul.u32 %s65, 16
  %s67 = sshra.s32 %s66, 3
  %s68 = sand.u32 %s66, 7
  %s69 = smul.u32 %s67, 3
  %s70 = smul.addr %s69, 4
  %s71 = scalar_lea.vmem %s4, %s70
  %72 = vst [vmem:[%s71] sm:$0xff] 0
  %73 = vst [vmem:[%s71 + $0x8] sm:$0xf] 0
  %74 = vst [vmem:[%s71 + $0xc] sm:$0xff] 0
  %75 = vst [vmem:[%s71 + $0x14] sm:$0xf] 0
  %76 = vst [vmem:[%s71 + $0x18] sm:$0xff] 0
  %77 = vst [vmem:[%s71 + $0x20] sm:$0xf] 0
  %78 = vst [vmem:[%s71 + $0x24] sm:$0xff] 0
  %79 = vst [vmem:[%s71 + $0x2c] sm:$0xf] 0
  %80 = vst [vmem:[%s71 + $0x30] sm:$0xff] 0
  %81 = vst [vmem:[%s71 + $0x38] sm:$0xf] 0
  %82 = vst [vmem:[%s71 + $0x3c] sm:$0xff] 0
  %83 = vst [vmem:[%s71 + $0x44] sm:$0xf] 0
  %84 = vst [vmem:[%s71 + $0x48] sm:$0xff] 0
  %85 = vst [vmem:[%s71 + $0x50] sm:$0xf] 0
  %86 = vst [vmem:[%s71 + $0x54] sm:$0xff] 0
  %87 = vst [vmem:[%s71 + $0x5c] sm:$0xf] 0
  // While loop
  $region14: #{closed_call.33} parent=0 // loop_pre_header
    _
  $region15: #{closed_call.33} parent=0 // loop_header
    %s89 = sphi 0, %s91
    %p90 = scmp.ge.s32.totalorder %s89, %s22
  $region16: #{closed_call.33} parent=0 // loop_header_branch
    %93 = sbr.rel (%p90) target = $region20
  $region17: #{closed_call.33} parent=0 // loop_body
    %s94 = sadd.s32 %s89, 4
    %s95 = smul.u32 %s94, 16
    %s96 = sshra.s32 %s95, 3
    %s97 = sand.u32 %s95, 7
    %s98 = smul.u32 %s96, 3
    %s99 = smul.addr %s98, 4
    %s100 = scalar_lea.vmem %s1, %s99
    %v101 = vld [vmem:[%s100] sm:$0xff]
    %v102 = vld [vmem:[%s100 + $0x8] sm:$0xf]
    %v103 = vld [vmem:[%s100 + $0xc] sm:$0xff]
    %v104 = vld [vmem:[%s100 + $0x14] sm:$0xf]
    %v105 = vld [vmem:[%s100 + $0x18] sm:$0xff]
    %v106 = vld [vmem:[%s100 + $0x20] sm:$0xf]
    %v107 = vld [vmem:[%s100 + $0x24] sm:$0xff]
    %v108 = vld [vmem:[%s100 + $0x2c] sm:$0xf]
    %v109 = vld [vmem:[%s100 + $0x30] sm:$0xff]
    %v110 = vld [vmem:[%s100 + $0x38] sm:$0xf]
    %v111 = vld [vmem:[%s100 + $0x3c] sm:$0xff]
    %v112 = vld [vmem:[%s100 + $0x44] sm:$0xf]
    %v115 = vunpack.c.l.b16 %v27
    %v116 = vunpack.c.l.b16 %v28
    %v117 = vpack.c.b16 %v116, %v115
    %v130 = vunpack.c.l.b16 %v101
    %v131 = vunpack.c.h.b16 %v101
    %v132 = vunpack.c.l.b16 %v102
    %v133 = vunpack.c.l.b16 %v103
    %v134 = vunpack.c.h.b16 %v103
    %v135 = vunpack.c.l.b16 %v104
    %v136 = vunpack.c.l.b16 %v105
    %v137 = vunpack.c.h.b16 %v105
    %v138 = vunpack.c.l.b16 %v106
    %v139 = vunpack.c.l.b16 %v107
    %v140 = vunpack.c.h.b16 %v107
    %v141 = vunpack.c.l.b16 %v108
    %v142 = vunpack.c.l.b16 %v109
    %v143 = vunpack.c.h.b16 %v109
    %v144 = vunpack.c.l.b16 %v110
    %v145 = vunpack.c.l.b16 %v111
    %v146 = vunpack.c.h.b16 %v111
    %v147 = vunpack.c.l.b16 %v112
    %v148 = vpack.c.b16 %v133, %v130
    %v149 = vpack.c.b16 %v134, %v131
    %v150 = vpack.c.b16 %v135, %v132
    %v151 = vpack.c.b16 %v139, %v136
    %v152 = vpack.c.b16 %v140, %v137
    %v153 = vpack.c.b16 %v141, %v138
    %v154 = vpack.c.b16 %v145, %v142
    %v155 = vpack.c.b16 %v146, %v143
    %v156 = vpack.c.b16 %v147, %v144
    %vm166 = vcmask 392192
    %v168 = vsel %vm166, %v117, 0
    %170 = vmatprep.subr.bf16.mxu0 %v149
    %171 = vmatpush1.bf16.msra.mxu0 %v148
    %172 = vmatprep.subr.bf16.mxu0 %v152
    %173 = vmatpush1.bf16.msra.mxu0 %v151
    %174 = vmatprep.subr.bf16.mxu0 %v155
    %175 = vmatpush1.bf16.msra.mxu0 %v154
    %176 = vmatprep.subr.bf16.mxu0 0
    %177 = vmatpush1.bf16.msra.mxu0 0
    %178 = vmatprep.subr.bf16.mxu0 0
    %179 = vmatpush1.bf16.msra.mxu0 0
    %180 = vmatprep.subr.bf16.mxu0 0
    %181 = vmatpush1.bf16.msra.mxu0 0
    %182 = vmatprep.subr.bf16.mxu0 0
    %183 = vmatpush1.bf16.msra.mxu0 0
    %184 = vmatprep.subr.bf16.mxu0 0
    %185 = vmatpush1.bf16.msra.mxu0 0
    %186 = vmatprep.subr.bf16.mxu0 0
    %187 = vmatpush1.bf16.msra.mxu0 0
    %188 = vmatprep.subr.bf16.mxu0 0
    %189 = vmatpush1.bf16.msra.mxu0 0
    %190 = vmatprep.subr.bf16.mxu0 0
    %191 = vmatpush1.bf16.msra.mxu0 0
    %192 = vmatprep.subr.bf16.mxu0 0
    %193 = vmatpush1.bf16.msra.mxu0 0
    %194 = vmatprep.subr.bf16.mxu0 0
    %195 = vmatpush1.bf16.msra.mxu0 0
    %196 = vmatprep.subr.bf16.mxu0 0
    %197 = vmatpush1.bf16.msra.mxu0 0
    %198 = vmatprep.subr.bf16.mxu0 0
    %199 = vmatpush1.bf16.msra.mxu0 0
    %200 = vmatprep.subr.bf16.mxu0 0
    %201 = vmatpush1.bf16.msra.mxu0 0
    %202 = vmatprep.mubr.bf16.mxu0 0
    %203 = vmatmul.mubr.bf16.gmra.mrb[0].mxu0 %v168
    %v204 = vpop.f32.mrb[0].mxu0
    %v205 = vadd.f32 0.0, %v204
    %v206 = vpop.f32.mrb[0].mxu0
    %v207 = vadd.f32 0.0, %v206
    %v208 = vpop.f32.mrb[0].mxu0
    %v209 = vadd.f32 0.0, %v208
    %v210 = vpop.f32.mrb[0].mxu0
    %v211 = vadd.f32 0.0, %v210
    %212 = vdwg.mxu0
    %213 = vmatprep.subr.bf16.mxu0 0
    %214 = vmatpush1.bf16.msra.mxu0 %v150
    %215 = vmatprep.subr.bf16.mxu0 0
    %216 = vmatpush1.bf16.msra.mxu0 %v153
    %217 = vmatprep.subr.bf16.mxu0 0
    %218 = vmatpush1.bf16.msra.mxu0 %v156
    %219 = vmatprep.subr.bf16.mxu0 0
    %220 = vmatpush1.bf16.msra.mxu0 0
    %221 = vmatprep.subr.bf16.mxu0 0
    %222 = vmatpush1.bf16.msra.mxu0 0
    %223 = vmatprep.subr.bf16.mxu0 0
    %224 = vmatpush1.bf16.msra.mxu0 0
    %225 = vmatprep.subr.bf16.mxu0 0
    %226 = vmatpush1.bf16.msra.mxu0 0
    %227 = vmatprep.subr.bf16.mxu0 0
    %228 = vmatpush1.bf16.msra.mxu0 0
    %229 = vmatprep.subr.bf16.mxu0 0
    %230 = vmatpush1.bf16.msra.mxu0 0
    %231 = vmatprep.subr.bf16.mxu0 0
    %232 = vmatpush1.bf16.msra.mxu0 0
    %233 = vmatprep.subr.bf16.mxu0 0
    %234 = vmatpush1.bf16.msra.mxu0 0
    %235 = vmatprep.subr.bf16.mxu0 0
    %236 = vmatpush1.bf16.msra.mxu0 0
    %237 = vmatprep.subr.bf16.mxu0 0
    %238 = vmatpush1.bf16.msra.mxu0 0
    %239 = vmatprep.subr.bf16.mxu0 0
    %240 = vmatpush1.bf16.msra.mxu0 0
    %241 = vmatprep.subr.bf16.mxu0 0
    %242 = vmatpush1.bf16.msra.mxu0 0
    %243 = vmatprep.subr.bf16.mxu0 0
    %244 = vmatpush1.bf16.msra.mxu0 0
    %245 = vmatprep.mubr.bf16.mxu0 0
    %246 = vmatmul.mubr.bf16.gmra.mrb[0].mxu0 %v168
    %v247 = vpop.f32.mrb[0].mxu0
    %v248 = vadd.f32 0.0, %v247
    %v249 = vpop.f32.mrb[0].mxu0
    %v250 = vpop.f32.mrb[0].mxu0
    %v251 = vadd.f32 0.0, %v250
    %v252 = vpop.f32.mrb[0].mxu0
    %253 = vdwg.mxu0
    %254 = vrot.lane.b32.xlu0 %v205, 127
    %v255 = vpop.permute.xlu0 %254
    %256 = vrot.lane.b32.xlu0 %v209, 127
    %v257 = vpop.permute.xlu0 %256
    %258 = vrot.lane.b32.xlu0 %v207, 127
    %v259 = vpop.permute.xlu0 %258
    %260 = vrot.lane.b32.xlu0 %v211, 127
    %v261 = vpop.permute.xlu0 %260
    %262 = vrot.lane.b32.xlu0 %v248, 127
    %v263 = vpop.permute.xlu0 %262
    %264 = vrot.lane.b32.xlu0 %v251, 127
    %v265 = vpop.permute.xlu0 %264
    %vm266 = vcmp.lt.s32.totalorder %v35, 127
    %v267 = vsel %vm266, %v259, %v263
    %v268 = vsel %vm266, %v261, %v265
    %v269 = vsel %vm266, %v255, %v259
    %v270 = vsel %vm266, %v257, %v261
    %v271 = vsel %vm266, %v263, %v255
    %v272 = vsel %vm266, %v265, %v257
    %v275 = vunpack.c.l.b16 %v24
    %v276 = vunpack.c.l.b16 %v25
    %v277 = vpack.c.b16 %v276, %v275
    %v279 = vsel %vm166, %v277, 0
    %281 = vmatprep.subr.bf16.mxu0 %v149
    %282 = vmatpush1.bf16.msra.mxu0 %v148
    %283 = vmatprep.subr.bf16.mxu0 %v152
    %284 = vmatpush1.bf16.msra.mxu0 %v151
    %285 = vmatprep.subr.bf16.mxu0 %v155
    %286 = vmatpush1.bf16.msra.mxu0 %v154
    %287 = vmatprep.subr.bf16.mxu0 0
    %288 = vmatpush1.bf16.msra.mxu0 0
    %289 = vmatprep.subr.bf16.mxu0 0
    %290 = vmatpush1.bf16.msra.mxu0 0
    %291 = vmatprep.subr.bf16.mxu0 0
    %292 = vmatpush1.bf16.msra.mxu0 0
    %293 = vmatprep.subr.bf16.mxu0 0
    %294 = vmatpush1.bf16.msra.mxu0 0
    %295 = vmatprep.subr.bf16.mxu0 0
    %296 = vmatpush1.bf16.msra.mxu0 0
    %297 = vmatprep.subr.bf16.mxu0 0
    %298 = vmatpush1.bf16.msra.mxu0 0
    %299 = vmatprep.subr.bf16.mxu0 0
    %300 = vmatpush1.bf16.msra.mxu0 0
    %301 = vmatprep.subr.bf16.mxu0 0
    %302 = vmatpush1.bf16.msra.mxu0 0
    %303 = vmatprep.subr.bf16.mxu0 0
    %304 = vmatpush1.bf16.msra.mxu0 0
    %305 = vmatprep.subr.bf16.mxu0 0
    %306 = vmatpush1.bf16.msra.mxu0 0
    %307 = vmatprep.subr.bf16.mxu0 0
    %308 = vmatpush1.bf16.msra.mxu0 0
    %309 = vmatprep.subr.bf16.mxu0 0
    %310 = vmatpush1.bf16.msra.mxu0 0
    %311 = vmatprep.subr.bf16.mxu0 0
    %312 = vmatpush1.bf16.msra.mxu0 0
    %313 = vmatprep.mubr.bf16.mxu0 0
    %314 = vmatmul.mubr.bf16.gmra.mrb[0].mxu0 %v279
    %v315 = vpop.f32.mrb[0].mxu0
    %v316 = vadd.f32 %v269, %v315
    %v317 = vpop.f32.mrb[0].mxu0
    %v318 = vadd.f32 %v267, %v317
    %v319 = vpop.f32.mrb[0].mxu0
    %v320 = vadd.f32 %v270, %v319
    %v321 = vpop.f32.mrb[0].mxu0
    %v322 = vadd.f32 %v268, %v321
    %323 = vdwg.mxu0
    %324 = vmatprep.subr.bf16.mxu0 0
    %325 = vmatpush1.bf16.msra.mxu0 %v150
    %326 = vmatprep.subr.bf16.mxu0 0
    %327 = vmatpush1.bf16.msra.mxu0 %v153
    %328 = vmatprep.subr.bf16.mxu0 0
    %329 = vmatpush1.bf16.msra.mxu0 %v156
    %330 = vmatprep.subr.bf16.mxu0 0
    %331 = vmatpush1.bf16.msra.mxu0 0
    %332 = vmatprep.subr.bf16.mxu0 0
    %333 = vmatpush1.bf16.msra.mxu0 0
    %334 = vmatprep.subr.bf16.mxu0 0
    %335 = vmatpush1.bf16.msra.mxu0 0
    %336 = vmatprep.subr.bf16.mxu0 0
    %337 = vmatpush1.bf16.msra.mxu0 0
    %338 = vmatprep.subr.bf16.mxu0 0
    %339 = vmatpush1.bf16.msra.mxu0 0
    %340 = vmatprep.subr.bf16.mxu0 0
    %341 = vmatpush1.bf16.msra.mxu0 0
    %342 = vmatprep.subr.bf16.mxu0 0
    %343 = vmatpush1.bf16.msra.mxu0 0
    %344 = vmatprep.subr.bf16.mxu0 0
    %345 = vmatpush1.bf16.msra.mxu0 0
    %346 = vmatprep.subr.bf16.mxu0 0
    %347 = vmatpush1.bf16.msra.mxu0 0
    %348 = vmatprep.subr.bf16.mxu0 0
    %349 = vmatpush1.bf16.msra.mxu0 0
    %350 = vmatprep.subr.bf16.mxu0 0
    %351 = vmatpush1.bf16.msra.mxu0 0
    %352 = vmatprep.subr.bf16.mxu0 0
    %353 = vmatpush1.bf16.msra.mxu0 0
    %354 = vmatprep.subr.bf16.mxu0 0
    %355 = vmatpush1.bf16.msra.mxu0 0
    %356 = vmatprep.mubr.bf16.mxu0 0
    %357 = vmatmul.mubr.bf16.gmra.mrb[0].mxu0 %v279
    %v358 = vpop.f32.mrb[0].mxu0
    %v359 = vadd.f32 %v271, %v358
    %v360 = vpop.f32.mrb[0].mxu0
    %v361 = vpop.f32.mrb[0].mxu0
    %v362 = vadd.f32 %v272, %v361
    %v363 = vpop.f32.mrb[0].mxu0
    %364 = vdwg.mxu0
    %v367 = vunpack.c.l.b16 %v30
    %v368 = vunpack.c.l.b16 %v31
    %v369 = vpack.c.b16 %v368, %v367
    %v371 = vsel %vm166, %v369, 0
    %373 = vmatprep.subr.bf16.mxu0 %v149
    %374 = vmatpush1.bf16.msra.mxu0 %v148
    %375 = vmatprep.subr.bf16.mxu0 %v152
    %376 = vmatpush1.bf16.msra.mxu0 %v151
    %377 = vmatprep.subr.bf16.mxu0 %v155
    %378 = vmatpush1.bf16.msra.mxu0 %v154
    %379 = vmatprep.subr.bf16.mxu0 0
    %380 = vmatpush1.bf16.msra.mxu0 0
    %381 = vmatprep.subr.bf16.mxu0 0
    %382 = vmatpush1.bf16.msra.mxu0 0
    %383 = vmatprep.subr.bf16.mxu0 0
    %384 = vmatpush1.bf16.msra.mxu0 0
    %385 = vmatprep.subr.bf16.mxu0 0
    %386 = vmatpush1.bf16.msra.mxu0 0
    %387 = vmatprep.subr.bf16.mxu0 0
    %388 = vmatpush1.bf16.msra.mxu0 0
    %389 = vmatprep.subr.bf16.mxu0 0
    %390 = vmatpush1.bf16.msra.mxu0 0
    %391 = vmatprep.subr.bf16.mxu0 0
    %392 = vmatpush1.bf16.msra.mxu0 0
    %393 = vmatprep.subr.bf16.mxu0 0
    %394 = vmatpush1.bf16.msra.mxu0 0
    %395 = vmatprep.subr.bf16.mxu0 0
    %396 = vmatpush1.bf16.msra.mxu0 0
    %397 = vmatprep.subr.bf16.mxu0 0
    %398 = vmatpush1.bf16.msra.mxu0 0
    %399 = vmatprep.subr.bf16.mxu0 0
    %400 = vmatpush1.bf16.msra.mxu0 0
    %401 = vmatprep.subr.bf16.mxu0 0
    %402 = vmatpush1.bf16.msra.mxu0 0
    %403 = vmatprep.subr.bf16.mxu0 0
    %404 = vmatpush1.bf16.msra.mxu0 0
    %405 = vmatprep.mubr.bf16.mxu0 0
    %406 = vmatmul.mubr.bf16.gmra.mrb[0].mxu0 %v371
    %v407 = vpop.f32.mrb[0].mxu0
    %v408 = vadd.f32 0.0, %v407
    %v409 = vpop.f32.mrb[0].mxu0
    %v410 = vadd.f32 0.0, %v409
    %v411 = vpop.f32.mrb[0].mxu0
    %v412 = vadd.f32 0.0, %v411
    %v413 = vpop.f32.mrb[0].mxu0
    %v414 = vadd.f32 0.0, %v413
    %415 = vdwg.mxu0
    %416 = vmatprep.subr.bf16.mxu0 0
    %417 = vmatpush1.bf16.msra.mxu0 %v150
    %418 = vmatprep.subr.bf16.mxu0 0
    %419 = vmatpush1.bf16.msra.mxu0 %v153
    %420 = vmatprep.subr.bf16.mxu0 0
    %421 = vmatpush1.bf16.msra.mxu0 %v156
    %422 = vmatprep.subr.bf16.mxu0 0
    %423 = vmatpush1.bf16.msra.mxu0 0
    %424 = vmatprep.subr.bf16.mxu0 0
    %425 = vmatpush1.bf16.msra.mxu0 0
    %426 = vmatprep.subr.bf16.mxu0 0
    %427 = vmatpush1.bf16.msra.mxu0 0
    %428 = vmatprep.subr.bf16.mxu0 0
    %429 = vmatpush1.bf16.msra.mxu0 0
    %430 = vmatprep.subr.bf16.mxu0 0
    %431 = vmatpush1.bf16.msra.mxu0 0
    %432 = vmatprep.subr.bf16.mxu0 0
    %433 = vmatpush1.bf16.msra.mxu0 0
    %434 = vmatprep.subr.bf16.mxu0 0
    %435 = vmatpush1.bf16.msra.mxu0 0
    %436 = vmatprep.subr.bf16.mxu0 0
    %437 = vmatpush1.bf16.msra.mxu0 0
    %438 = vmatprep.subr.bf16.mxu0 0
    %439 = vmatpush1.bf16.msra.mxu0 0
    %440 = vmatprep.subr.bf16.mxu0 0
    %441 = vmatpush1.bf16.msra.mxu0 0
    %442 = vmatprep.subr.bf16.mxu0 0
    %443 = vmatpush1.bf16.msra.mxu0 0
    %444 = vmatprep.subr.bf16.mxu0 0
    %445 = vmatpush1.bf16.msra.mxu0 0
    %446 = vmatprep.subr.bf16.mxu0 0
    %447 = vmatpush1.bf16.msra.mxu0 0
    %448 = vmatprep.mubr.bf16.mxu0 0
    %449 = vmatmul.mubr.bf16.gmra.mrb[0].mxu0 %v371
    %v450 = vpop.f32.mrb[0].mxu0
    %v451 = vadd.f32 0.0, %v450
    %v452 = vpop.f32.mrb[0].mxu0
    %v453 = vpop.f32.mrb[0].mxu0
    %v454 = vadd.f32 0.0, %v453
    %v455 = vpop.f32.mrb[0].mxu0
    %456 = vdwg.mxu0
    %457 = vrot.lane.b32.xlu0 %v408, 126
    %v458 = vpop.permute.xlu0 %457
    %459 = vrot.lane.b32.xlu0 %v412, 126
    %v460 = vpop.permute.xlu0 %459
    %461 = vrot.lane.b32.xlu0 %v410, 126
    %v462 = vpop.permute.xlu0 %461
    %463 = vrot.lane.b32.xlu0 %v414, 126
    %v464 = vpop.permute.xlu0 %463
    %465 = vrot.lane.b32.xlu0 %v451, 126
    %v466 = vpop.permute.xlu0 %465
    %467 = vrot.lane.b32.xlu0 %v454, 126
    %v468 = vpop.permute.xlu0 %467
    %vm469 = vcmp.lt.s32.totalorder %v35, 126
    %v470 = vsel %vm469, %v462, %v466
    %v471 = vsel %vm469, %v464, %v468
    %v472 = vsel %vm469, %v458, %v462
    %v473 = vsel %vm469, %v460, %v464
    %v474 = vsel %vm469, %v466, %v458
    %v475 = vsel %vm469, %v468, %v460
    %v476 = vadd.f32 %v316, %v472
    %v477 = vadd.f32 %v318, %v470
    %v478 = vadd.f32 %v359, %v474
    %v479 = vadd.f32 %v320, %v473
    %v480 = vadd.f32 %v322, %v471
    %v481 = vadd.f32 %v362, %v475
    %483 = vset.pattern.permute.xlu0 0
    %484 = vperm.xlu0 %483, %v32
    %v485 = vpop.permute.xlu0 %484
    %488 = vset.pattern.permute.xlu0 0
    %489 = vperm.xlu0 %488, %v33
    %v490 = vpop.permute.xlu0 %489
    %v492 = vadd.f32 %v476, %v485
    %v493 = vadd.f32 %v477, %v485
    %v494 = vadd.f32 %v478, %v485
    %v495 = vadd.f32 %v479, %v490
    %v496 = vadd.f32 %v480, %v490
    %v497 = vadd.f32 %v481, %v490
    %v498 = vmax.f32 %v492, 0.0
    %v499 = vmax.f32 %v493, 0.0
    %v500 = vmax.f32 %v494, 0.0
    %v501 = vmax.f32 %v495, 0.0
    %v502 = vmax.f32 %v496, 0.0
    %v503 = vmax.f32 %v497, 0.0
    %v504 = vsel %vm46, %v498, 0.0
    %v505 = vsel %vm47, %v499, 0.0
    %v506 = vsel %vm48, %v500, 0.0
    %v507 = vsel %vm46, %v501, 0.0
    %v508 = vsel %vm47, %v502, 0.0
    %v509 = vsel %vm48, %v503, 0.0
    %v510 = vpack.c.bf16 %v507, %v504
    %v511 = vpack.c.bf16 %v508, %v505
    %v512 = vpack.c.bf16 %v509, %v506
    %v516 = vunpack.c.l.b16 %v510
    %v517 = vunpack.c.l.b16 %v511
    %v518 = vunpack.c.l.b16 %v512
    %v519 = vunpack.c.h.b16 %v510
    %v520 = vunpack.c.h.b16 %v511
    %v521 = vunpack.c.h.b16 %v512
    %v522 = vpack.c.b16 %v517, %v516
    %v523 = vpack.c.b16 %v518, %v518
    %v524 = vpack.c.b16 %v520, %v519
    %v525 = vpack.c.b16 %v521, %v521
    %s530 = smul.addr %s98, 4
    %s531 = scalar_lea.vmem %s4, %s530
    %532 = vst [vmem:[%s531] sm:$0xff] %v522
    %533 = vst [vmem:[%s531 + $0x8] sm:$0xf] %v523
    %534 = vst [vmem:[%s531 + $0xc] sm:$0xff] %v524
    %535 = vst [vmem:[%s531 + $0x14] sm:$0xf] %v525
  $region18: #{closed_call.33} parent=0 // loop_footer
    %s91 = sadd.s32 %s89, 1
  $region19: #{closed_call.33} parent=0 // loop_footer_branch
    %88 = sbr.rel target = $region15
  $region20: #{closed_call.33} parent=0 // loop_exit
    _
  // Predicated region
  $region21: #{closed_call.33} parent=0 // pred_check
    _
  $region22: #{closed_call.33} parent=0 // pred_check_branch
    %537 = sbr.rel (0) target = $region24
  $region23: #{closed_call.33} parent=0 // pred_region
    _
  $region24: #{closed_call.33} parent=0 // pred_fallthru
    _
  // Predicated region
  $region25: #{closed_call.33} parent=0 // pred_check
    _
  $region26: #{closed_call.33} parent=0 // pred_check_branch
    %539 = sbr.rel (0) target = $region28
  $region27: #{closed_call.33} parent=0 // pred_region
    _
  $region28: #{closed_call.33} parent=0 // pred_fallthru
    _

// kernel: audio_vae_forward.10
$region0: #{audio_vae_forward.10}
  #allocation0 [shape = 'u32[]', space=smem, size = 0x4, offset = 0x4, fixed_abs, tag = 'smem constant byte address 0x4 - core index']
  #allocation1 [shape = 'u32[144,128]{1,0:T(1,128)}', space=vmem, size = 0x12000, scoped, tag = 'internal scratch']
  %s0 = inlined_call_operand.vmem [shape: f32[1,100], index: 0, kind: input, shape index: {}]
  %s1 = inlined_call_operand.vmem [shape: f32[1,100], index: 1, kind: input, shape index: {}]
  %s2 = inlined_call_operand.vmem [shape: f32[1,100], index: 2, kind: input, shape index: {}]
  %s3 = inlined_call_operand.vmem [shape: f32[1,100], index: 3, kind: output, shape index: {}]
  %s4 = sld [smem:[#allocation0]]
  $region22: #{audio_vae_forward.10} parent=0
    _
  %s6 = ssub.s32 1, %s4
  %s7 = scalar_select 0, %s6, %s4
  // Predicated region
  $region2: #{audio_vae_forward.10} parent=0 // pred_check
    _
  $region3: #{audio_vae_forward.10} parent=0 // pred_check_branch
    %9 = sbr.rel (0) target = $region5
  $region4: #{audio_vae_forward.10} parent=0 // pred_region
    _
  $region5: #{audio_vae_forward.10} parent=0 // pred_fallthru
    _
  // Predicated region
  $region6: #{audio_vae_forward.10} parent=0 // pred_check
    _
  $region7: #{audio_vae_forward.10} parent=0 // pred_check_branch
    %11 = sbr.rel (0) target = $region9
  $region8: #{audio_vae_forward.10} parent=0 // pred_region
    _
  $region9: #{audio_vae_forward.10} parent=0 // pred_fallthru
    _
  // Predicated region
  $region10: #{audio_vae_forward.10} parent=0 // pred_check
    _
  $region11: #{audio_vae_forward.10} parent=0 // pred_check_branch
    %13 = sbr.rel (0) target = $region13
  $region12: #{audio_vae_forward.10} parent=0 // pred_region
    _
  $region13: #{audio_vae_forward.10} parent=0 // pred_fallthru
    _
  %v14 = vld [vmem:[%s0] sm:$0x1]
  %v15 = vld [vmem:[%s2] sm:$0x1]
  %v16 = vld [vmem:[%s1] sm:$0x1]
  %v17 = vmul.f32 %v16, 0.5
  %v18 = vmul.f32 %v17, 1.442695
  %v19 = vpow.pop %v18
  %v20 = vmul.f32 %v15, %v19
  %v21 = vadd.f32 %v14, %v20
  %vm22 = vcmask 811008
  %23 = vst.msk [vmem:[%s3] sm:$0x1] %vm22, %v21
  // Predicated region
  $region14: #{audio_vae_forward.10} parent=0 // pred_check
    _
  $region15: #{audio_vae_forward.10} parent=0 // pred_check_branch
    %25 = sbr.rel (0) target = $region17
  $region16: #{audio_vae_forward.10} parent=0 // pred_region
    _
  $region17: #{audio_vae_forward.10} parent=0 // pred_fallthru
    _
  // Predicated region
  $region18: #{audio_vae_forward.10} parent=0 // pred_check
    _
  $region19: #{audio_vae_forward.10} parent=0 // pred_check_branch
    %27 = sbr.rel (0) target = $region21
  $region20: #{audio_vae_forward.10} parent=0 // pred_region
    _
  $region21: #{audio_vae_forward.10} parent=0 // pred_fallthru
    _

// kernel: audio_vae_forward.9
$region0: #{audio_vae_forward.9}
  #allocation0 [shape = 'u32[]', space=smem, size = 0x4, offset = 0x4, fixed_abs, tag = 'smem constant byte address 0x4 - core index']
  #allocation1 [shape = 'u32[144,128]{1,0:T(1,128)}', space=vmem, size = 0x12000, scoped, tag = 'internal scratch']
  #allocation2 [shape = 'f32[1,200]{1,0:T(1,128)}', space=vmem, size = 0x400, scoped, tag = 'scratch operand']
  %s0 = inlined_call_operand.vmem [shape: f32[1,16896], index: 0, kind: input, shape index: {}]
  %s1 = inlined_call_operand.vmem [shape: f32[16896,200], index: 1, kind: input, shape index: {}]
  %s2 = inlined_call_operand.vmem [shape: f32[1,200], index: 2, kind: input, shape index: {}]
  %s3 = inlined_call_operand.vmem [shape: f32[1,200], index: 3, kind: output, shape index: {}]
  %s4 = sld [smem:[#allocation0]]
  $region53: #{audio_vae_forward.9} parent=0
    _
  %s6 = ssub.s32 1, %s4
  %s7 = scalar_select 0, %s6, %s4
  loop: start=0, step=1, limit=14
  $region2: #{audio_vae_forward.9} parent=0 // loop_pre_header
    _
  $region3: #{audio_vae_forward.9} parent=0 // loop_header
    %s9 = sphi 0, %s13
    %p10 = scmp.ge.s32.totalorder %s9, 14
    %s19 = sphi 0, %s21
    %s22 = sphi 0, %s19
    %s23 = sphi 0, %s22
    %s39 = sphi 0, %s23
    %s45 = sphi 0, %s47
    %s48 = sphi 0, %s45
    %s49 = sphi 0, %s48
    %s65 = sphi 0, %s49
    %s69 = sphi 0, %s69
    %s71 = sphi 0, %s69
    %s72 = sphi 0, %s71
    %s86 = sphi 0, %s72
    %s90 = sphi 0, %s90
    %s92 = sphi 0, %s90
    %s93 = sphi 0, %s92
    %s107 = sphi 0, %s93
  $region4: #{audio_vae_forward.9} parent=0 // loop_header_branch
    %12 = sbr.rel (%p10) target = $region8
  $region5: #{audio_vae_forward.9} parent=0 // loop_body
    %s14 = ssub.s32 %s9, 1
    %s15 = ssub.s32 %s9, 2
    %s16 = sadd.s32 %s9, 1
    %s17 = ssub.s32 %s9, %s16
    %p18 = scmp.eq.s32.totalorder %s17, 0
    %s20 = sadd.s32 %s19, 1
    %s21 = scalar_select %p18, %s19, %s20
    %p24 = pneg %p18
    %p25 = scmp.eq.s32.totalorder %s9, 11
    %p26 = por %p24, %p25
    %p27 = scmp.ne.s32.totalorder %s19, %s22
    %p28 = scmp.eq.s32.totalorder %s9, 0
    %p29 = por %p27, %p28
    %p30 = scmp.ne.s32.totalorder %s19, %s22
    %p31 = scmp.eq.s32.totalorder %s14, 11
    %p32 = por %p30, %p31
    %p33 = scmp.ne.s32.totalorder %s22, %s23
    %p34 = scmp.eq.s32.totalorder %s14, 0
    %p35 = por %p33, %p34
    %p36 = scmp.ne.s32.totalorder %s22, %s23
    %p37 = scmp.eq.s32.totalorder %s15, 11
    %p38 = por %p36, %p37
    %p40 = scmp.ne.s32.totalorder %s23, %s39
    %p41 = scmp.eq.s32.totalorder %s15, 0
    %p42 = por %p40, %p41
    %s43 = ssub.s32 %s9, %s16
    %p44 = scmp.eq.s32.totalorder %s43, 0
    %s46 = sadd.s32 %s45, 1
    %s47 = scalar_select %p44, %s45, %s46
    %p50 = pneg %p44
    %p51 = scmp.eq.s32.totalorder %s9, 11
    %p52 = por %p50, %p51
    %p53 = scmp.ne.s32.totalorder %s45, %s48
    %p54 = scmp.eq.s32.totalorder %s9, 0
    %p55 = por %p53, %p54
    %p56 = scmp.ne.s32.totalorder %s45, %s48
    %p57 = scmp.eq.s32.totalorder %s14, 11
    %p58 = por %p56, %p57
    %p59 = scmp.ne.s32.totalorder %s48, %s49
    %p60 = scmp.eq.s32.totalorder %s14, 0
    %p61 = por %p59, %p60
    %p62 = scmp.ne.s32.totalorder %s48, %s49
    %p63 = scmp.eq.s32.totalorder %s15, 11
    %p64 = por %p62, %p63
    %p66 = scmp.ne.s32.totalorder %s49, %s65
    %p67 = scmp.eq.s32.totalorder %s15, 0
    %p68 = por %p66, %p67
    %s70 = sadd.s32 %s69, 1
    %p73 = scmp.eq.s32.totalorder %s9, 11
    %p74 = scmp.ne.s32.totalorder %s69, %s71
    %p75 = scmp.eq.s32.totalorder %s9, 0
    %p76 = por %p74, %p75
    %p77 = scmp.ne.s32.totalorder %s69, %s71
    %p78 = scmp.eq.s32.totalorder %s14, 11
    %p79 = por %p77, %p78
    %p80 = scmp.ne.s32.totalorder %s71, %s72
    %p81 = scmp.eq.s32.totalorder %s14, 0
    %p82 = por %p80, %p81
    %p83 = scmp.ne.s32.totalorder %s71, %s72
    %p84 = scmp.eq.s32.totalorder %s15, 11
    %p85 = por %p83, %p84
    %p87 = scmp.ne.s32.totalorder %s72, %s86
    %p88 = scmp.eq.s32.totalorder %s15, 0
    %p89 = por %p87, %p88
    %s91 = sadd.s32 %s90, 1
    %p94 = scmp.eq.s32.totalorder %s9, 11
    %p95 = scmp.ne.s32.totalorder %s90, %s92
    %p96 = scmp.eq.s32.totalorder %s9, 0
    %p97 = por %p95, %p96
    %p98 = scmp.ne.s32.totalorder %s90, %s92
    %p99 = scmp.eq.s32.totalorder %s14, 11
    %p100 = por %p98, %p99
    %p101 = scmp.ne.s32.totalorder %s92, %s93
    %p102 = scmp.eq.s32.totalorder %s14, 0
    %p103 = por %p101, %p102
    %p104 = scmp.ne.s32.totalorder %s92, %s93
    %p105 = scmp.eq.s32.totalorder %s15, 11
    %p106 = por %p104, %p105
    %p108 = scmp.ne.s32.totalorder %s93, %s107
    %p109 = scmp.eq.s32.totalorder %s15, 0
    %p110 = por %p108, %p109
    %p111 = scmp.le.s32.totalorder 1, %s9
    %p112 = scmp.lt.s32.totalorder %s9, 13
    %p113 = pnand %p111, %p112
    %p114 = pneg %p113
    // Predicated region
    $region9: #{audio_vae_forward.9} parent=5 // pred_check
      _
    $region10: #{audio_vae_forward.9} parent=5 // pred_check_branch
      %116 = sbr.rel (%p113) target = $region12
    $region11: #{audio_vae_forward.9} parent=5 // pred_region
      %s117 = ssub.s32 %s9, 1
      // Predicated region
      $region13: #{audio_vae_forward.9} parent=11 // pred_check
        %p118 = pneg %p82
      $region14: #{audio_vae_forward.9} parent=11 // pred_check_branch
        %120 = sbr.rel (%p118) target = $region16
      $region15: #{audio_vae_forward.9} parent=11 // pred_region
        _
      $region16: #{audio_vae_forward.9} parent=11 // pred_fallthru
        _
    $region12: #{audio_vae_forward.9} parent=5 // pred_fallthru
      _
    %p121 = scmp.lt.s32.totalorder %s9, 12
    // Predicated region
    $region17: #{audio_vae_forward.9} parent=5 // pred_check
      %p122 = pneg %p121
    $region18: #{audio_vae_forward.9} parent=5 // pred_check_branch
      %124 = sbr.rel (%p122) target = $region20
    $region19: #{audio_vae_forward.9} parent=5 // pred_region
      // Predicated region
      $region21: #{audio_vae_forward.9} parent=19 // pred_check
        %p125 = pneg %p29
      $region22: #{audio_vae_forward.9} parent=19 // pred_check_branch
        %127 = sbr.rel (%p125) target = $region24
      $region23: #{audio_vae_forward.9} parent=19 // pred_region
        %s128 = smul.u32 11, %s9
        %p129 = scmp.lt.s32.totalorder %s128, 131
        %s130 = scalar_select %p129, %s128, 131
        %s131 = scalar_lea.vmem %s0, %s130
        %s132 = smul.u32 11, %s9
      $region24: #{audio_vae_forward.9} parent=19 // pred_fallthru
        _
      // Predicated region
      $region25: #{audio_vae_forward.9} parent=19 // pred_check
        %p133 = pneg %p55
      $region26: #{audio_vae_forward.9} parent=19 // pred_check_branch
        %135 = sbr.rel (%p133) target = $region28
      $region27: #{audio_vae_forward.9} parent=19 // pred_region
        %s136 = smul.u32 176, %s9
        %p137 = scmp.lt.s32.totalorder %s136, 2111
        %s138 = scalar_select %p137, %s136, 2111
        %s139 = smul.addr %s138, 2
        %s140 = smul.addr %s139, 8
        %s141 = scalar_lea.vmem %s1, %s140
        %s142 = smul.u32 176, %s9
      $region28: #{audio_vae_forward.9} parent=19 // pred_fallthru
        _
    $region20: #{audio_vae_forward.9} parent=5 // pred_fallthru
      _
    %p143 = scmp.le.s32.totalorder 1, %s9
    %p144 = scmp.lt.s32.totalorder %s9, 13
    %p145 = pnand %p143, %p144
    %p146 = pneg %p145
    // Predicated region
    $region29: #{audio_vae_forward.9} parent=5 // pred_check
      _
    $region30: #{audio_vae_forward.9} parent=5 // pred_check_branch
      %148 = sbr.rel (%p145) target = $region32
    $region31: #{audio_vae_forward.9} parent=5 // pred_region
      %s149 = ssub.s32 %s9, 1
      %s150 = smul.u32 11, %s14
      %p151 = scmp.lt.s32.totalorder %s150, 131
      %s152 = scalar_select %p151, %s150, 131
      %s153 = scalar_lea.vmem %s0, %s152
      %p154 = pneg %p35
      %p155 = pneg %p32
      %s156 = smul.u32 176, %s14
      %p157 = scmp.lt.s32.totalorder %s156, 2111
      %s158 = scalar_select %p157, %s156, 2111
      %s159 = smul.addr %s158, 2
      %s160 = smul.addr %s159, 8
      %s161 = scalar_lea.vmem %s1, %s160
      %p162 = pneg %p61
      %p163 = pneg %p58
      %p164 = pneg %p82
      %p165 = pneg %p79
      %p166 = pneg %p103
      %p167 = pneg %p100
      %s168 = smul.u32 11, %s14
      %p169 = scmp.lt.s32.totalorder %s168, 131
      %s170 = scalar_select %p169, %s168, 131
      %s171 = scalar_lea.vmem %s0, %s170
      %s172 = smul.u32 11, %s14
      %s173 = smul.u32 176, %s14
      %p174 = scmp.lt.s32.totalorder %s173, 2111
      %s175 = scalar_select %p174, %s173, 2111
      %s176 = smul.addr %s175, 2
      %s177 = smul.addr %s176, 8
      %s178 = scalar_lea.vmem %s1, %s177
      %s179 = smul.u32 176, %s14
      %p180 = scmp.eq.s32.totalorder %s14, 0
      // Predicated region
      $region33: #{audio_vae_forward.9} parent=31 // pred_check
        %p181 = pneg %p180
      $region34: #{audio_vae_forward.9} parent=31 // pred_check_branch
        %183 = sbr.rel (%p181) target = $region36
      $region35: #{audio_vae_forward.9} parent=31 // pred_region
        %v184 = vlaneseq
        %vm185 = vcmp.ge.s32.totalorder %v184, 0
        %vm186 = vcmp.lt.s32.totalorder %v184, 200
        %vm187 = vmand %vm185, %vm186
        %188 = vst.msk [vmem:[#allocation2] sm:$0x3] %vm187, 0.0
      $region36: #{audio_vae_forward.9} parent=31 // pred_fallthru
        _
      %v189 = vld [vmem:[#allocation2] sm:$0x3]
      %v190 = vld [vmem:[%s171] sm:$0xff]
      %v191 = vld [vmem:[%s171 + $0x8] sm:$0x7]
      %v192 = vld [vmem:[%s178] sm:$0xff]
      %v193 = vld [vmem:[%s178 + $0x8] sm:$0xff]
      %v194 = vld [vmem:[%s178 + $0x10] sm:$0xff]
      %v195 = vld [vmem:[%s178 + $0x18] sm:$0xff]
      %v196 = vld [vmem:[%s178 + $0x20] sm:$0xff]
      %v197 = vld [vmem:[%s178 + $0x28] sm:$0xff]
      %v198 = vld [vmem:[%s178 + $0x30] sm:$0xff]
      %v199 = vld [vmem:[%s178 + $0x38] sm:$0xff]
      %v200 = vld [vmem:[%s178 + $0x40] sm:$0xff]
      %v201 = vld [vmem:[%s178 + $0x48] sm:$0xff]
      %v202 = vld [vmem:[%s178 + $0x50] sm:$0xff]
      %v203 = vld [vmem:[%s178 + $0x58] sm:$0xff]
      %v204 = vld [vmem:[%s178 + $0x60] sm:$0xff]
      %v205 = vld [vmem:[%s178 + $0x68] sm:$0xff]
      %v206 = vld [vmem:[%s178 + $0x70] sm:$0xff]
      %v207 = vld [vmem:[%s178 + $0x78] sm:$0xff]
      %v208 = vld [vmem:[%s178 + $0x80] sm:$0xff]
      %v209 = vld [vmem:[%s178 + $0x88] sm:$0xff]
      %v210 = vld [vmem:[%s178 + $0x90] sm:$0xff]
      %v211 = vld [vmem:[%s178 + $0x98] sm:$0xff]
      %v212 = vld [vmem:[%s178 + $0xa0] sm:$0xff]
      %v213 = vld [vmem:[%s178 + $0xa8] sm:$0xff]
      %v214 = vld [vmem:[%s178 + $0xb0] sm:$0xff]
      %v215 = vld [vmem:[%s178 + $0xb8] sm:$0xff]
      %v216 = vld [vmem:[%s178 + $0xc0] sm:$0xff]
      %v217 = vld [vmem:[%s178 + $0xc8] sm:$0xff]
      %v218 = vld [vmem:[%s178 + $0xd0] sm:$0xff]
      %v219 = vld [vmem:[%s178 + $0xd8] sm:$0xff]
      %v220 = vld [vmem:[%s178 + $0xe0] sm:$0xff]
      %v221 = vld [vmem:[%s178 + $0xe8] sm:$0xff]
      %v222 = vld [vmem:[%s178 + $0xf0] sm:$0xff]
      %v223 = vld [vmem:[%s178 + $0xf8] sm:$0xff]
      %v224 = vld [vmem:[%s178 + $0x100] sm:$0xff]
      %v225 = vld [vmem:[%s178 + $0x108] sm:$0xff]
      %v226 = vld [vmem:[%s178 + $0x110] sm:$0xff]
      %v227 = vld [vmem:[%s178 + $0x118] sm:$0xff]
      %v228 = vld [vmem:[%s178 + $0x120] sm:$0xff]
      %v229 = vld [vmem:[%s178 + $0x128] sm:$0xff]
      %v230 = vld [vmem:[%s178 + $0x130] sm:$0xff]
      %v231 = vld [vmem:[%s178 + $0x138] sm:$0xff]
      %v232 = vld [vmem:[%s178 + $0x140] sm:$0xff]
      %v233 = vld [vmem:[%s178 + $0x148] sm:$0xff]
      %v234 = vld [vmem:[%s178 + $0x150] sm:$0xff]
      %v235 = vld [vmem:[%s178 + $0x158] sm:$0xff]
      %v236 = vld [vmem:[%s178 + $0x160] sm:$0xff]
      %v237 = vld [vmem:[%s178 + $0x168] sm:$0xff]
      %v238 = vld [vmem:[%s178 + $0x170] sm:$0xff]
      %v239 = vld [vmem:[%s178 + $0x178] sm:$0xff]
      %v240 = vld [vmem:[%s178 + $0x180] sm:$0xff]
      %v241 = vld [vmem:[%s178 + $0x188] sm:$0xff]
      %v242 = vld [vmem:[%s178 + $0x190] sm:$0xff]
      %v243 = vld [vmem:[%s178 + $0x198] sm:$0xff]
      %v244 = vld [vmem:[%s178 + $0x1a0] sm:$0xff]
      %v245 = vld [vmem:[%s178 + $0x1a8] sm:$0xff]
      %v246 = vld [vmem:[%s178 + $0x1b0] sm:$0xff]
      %v247 = vld [vmem:[%s178 + $0x1b8] sm:$0xff]
      %v248 = vld [vmem:[%s178 + $0x1c0] sm:$0xff]
      %v249 = vld [vmem:[%s178 + $0x1c8] sm:$0xff]
      %v250 = vld [vmem:[%s178 + $0x1d0] sm:$0xff]
      %v251 = vld [vmem:[%s178 + $0x1d8] sm:$0xff]
      %v252 = vld [vmem:[%s178 + $0x1e0] sm:$0xff]
      %v253 = vld [vmem:[%s178 + $0x1e8] sm:$0xff]
      %v254 = vld [vmem:[%s178 + $0x1f0] sm:$0xff]
      %v255 = vld [vmem:[%s178 + $0x1f8] sm:$0xff]
      %v256 = vld [vmem:[%s178 + $0x200] sm:$0xff]
      %v257 = vld [vmem:[%s178 + $0x208] sm:$0xff]
      %v258 = vld [vmem:[%s178 + $0x210] sm:$0xff]
      %v259 = vld [vmem:[%s178 + $0x218] sm:$0xff]
      %v260 = vld [vmem:[%s178 + $0x220] sm:$0xff]
      %v261 = vld [vmem:[%s178 + $0x228] sm:$0xff]
      %v262 = vld [vmem:[%s178 + $0x230] sm:$0xff]
      %v263 = vld [vmem:[%s178 + $0x238] sm:$0xff]
      %v264 = vld [vmem:[%s178 + $0x240] sm:$0xff]
      %v265 = vld [vmem:[%s178 + $0x248] sm:$0xff]
      %v266 = vld [vmem:[%s178 + $0x250] sm:$0xff]
      %v267 = vld [vmem:[%s178 + $0x258] sm:$0xff]
      %v268 = vld [vmem:[%s178 + $0x260] sm:$0xff]
      %v269 = vld [vmem:[%s178 + $0x268] sm:$0xff]
      %v270 = vld [vmem:[%s178 + $0x270] sm:$0xff]
      %v271 = vld [vmem:[%s178 + $0x278] sm:$0xff]
      %v272 = vld [vmem:[%s178 + $0x280] sm:$0xff]
      %v273 = vld [vmem:[%s178 + $0x288] sm:$0xff]
      %v274 = vld [vmem:[%s178 + $0x290] sm:$0xff]
      %v275 = vld [vmem:[%s178 + $0x298] sm:$0xff]
      %v276 = vld [vmem:[%s178 + $0x2a0] sm:$0xff]
      %v277 = vld [vmem:[%s178 + $0x2a8] sm:$0xff]
      %v278 = vld [vmem:[%s178 + $0x2b0] sm:$0xff]
      %v279 = vld [vmem:[%s178 + $0x2b8] sm:$0xff]
      %v280 = vld [vmem:[%s178 + $0x2c0] sm:$0xff]
      %v281 = vld [vmem:[%s178 + $0x2c8] sm:$0xff]
      %v282 = vld [vmem:[%s178 + $0x2d0] sm:$0xff]
      %v283 = vld [vmem:[%s178 + $0x2d8] sm:$0xff]
      %v284 = vld [vmem:[%s178 + $0x2e0] sm:$0xff]
      %v285 = vld [vmem:[%s178 + $0x2e8] sm:$0xff]
      %v286 = vld [vmem:[%s178 + $0x2f0] sm:$0xff]
      %v287 = vld [vmem:[%s178 + $0x2f8] sm:$0xff]
      %v288 = vld [vmem:[%s178 + $0x300] sm:$0xff]
      %v289 = vld [vmem:[%s178 + $0x308] sm:$0xff]
      %v290 = vld [vmem:[%s178 + $0x310] sm:$0xff]
      %v291 = vld [vmem:[%s178 + $0x318] sm:$0xff]
      %v292 = vld [vmem:[%s178 + $0x320] sm:$0xff]
      %v293 = vld [vmem:[%s178 + $0x328] sm:$0xff]
      %v294 = vld [vmem:[%s178 + $0x330] sm:$0xff]
      %v295 = vld [vmem:[%s178 + $0x338] sm:$0xff]
      %v296 = vld [vmem:[%s178 + $0x340] sm:$0xff]
      %v297 = vld [vmem:[%s178 + $0x348] sm:$0xff]
      %v298 = vld [vmem:[%s178 + $0x350] sm:$0xff]
      %v299 = vld [vmem:[%s178 + $0x358] sm:$0xff]
      %v300 = vld [vmem:[%s178 + $0x360] sm:$0xff]
      %v301 = vld [vmem:[%s178 + $0x368] sm:$0xff]
      %v302 = vld [vmem:[%s178 + $0x370] sm:$0xff]
      %v303 = vld [vmem:[%s178 + $0x378] sm:$0xff]
      %v304 = vld [vmem:[%s178 + $0x380] sm:$0xff]
      %v305 = vld [vmem:[%s178 + $0x388] sm:$0xff]
      %v306 = vld [vmem:[%s178 + $0x390] sm:$0xff]
      %v307 = vld [vmem:[%s178 + $0x398] sm:$0xff]
      %v308 = vld [vmem:[%s178 + $0x3a0] sm:$0xff]
      %v309 = vld [vmem:[%s178 + $0x3a8] sm:$0xff]
      %v310 = vld [vmem:[%s178 + $0x3b0] sm:$0xff]
      %v311 = vld [vmem:[%s178 + $0x3b8] sm:$0xff]
      %v312 = vld [vmem:[%s178 + $0x3c0] sm:$0xff]
      %v313 = vld [vmem:[%s178 + $0x3c8] sm:$0xff]
      %v314 = vld [vmem:[%s178 + $0x3d0] sm:$0xff]
      %v315 = vld [vmem:[%s178 + $0x3d8] sm:$0xff]
      %v316 = vld [vmem:[%s178 + $0x3e0] sm:$0xff]
      %v317 = vld [vmem:[%s178 + $0x3e8] sm:$0xff]
      %v318 = vld [vmem:[%s178 + $0x3f0] sm:$0xff]
      %v319 = vld [vmem:[%s178 + $0x3f8] sm:$0xff]
      %v320 = vld [vmem:[%s178 + $0x400] sm:$0xff]
      %v321 = vld [vmem:[%s178 + $0x408] sm:$0xff]
      %v322 = vld [vmem:[%s178 + $0x410] sm:$0xff]
      %v323 = vld [vmem:[%s178 + $0x418] sm:$0xff]
      %v324 = vld [vmem:[%s178 + $0x420] sm:$0xff]
      %v325 = vld [vmem:[%s178 + $0x428] sm:$0xff]
      %v326 = vld [vmem:[%s178 + $0x430] sm:$0xff]
      %v327 = vld [vmem:[%s178 + $0x438] sm:$0xff]
      %v328 = vld [vmem:[%s178 + $0x440] sm:$0xff]
      %v329 = vld [vmem:[%s178 + $0x448] sm:$0xff]
      %v330 = vld [vmem:[%s178 + $0x450] sm:$0xff]
      %v331 = vld [vmem:[%s178 + $0x458] sm:$0xff]
      %v332 = vld [vmem:[%s178 + $0x460] sm:$0xff]
      %v333 = vld [vmem:[%s178 + $0x468] sm:$0xff]
      %v334 = vld [vmem:[%s178 + $0x470] sm:$0xff]
      %v335 = vld [vmem:[%s178 + $0x478] sm:$0xff]
      %v336 = vld [vmem:[%s178 + $0x480] sm:$0xff]
      %v337 = vld [vmem:[%s178 + $0x488] sm:$0xff]
      %v338 = vld [vmem:[%s178 + $0x490] sm:$0xff]
      %v339 = vld [vmem:[%s178 + $0x498] sm:$0xff]
      %v340 = vld [vmem:[%s178 + $0x4a0] sm:$0xff]
      %v341 = vld [vmem:[%s178 + $0x4a8] sm:$0xff]
      %v342 = vld [vmem:[%s178 + $0x4b0] sm:$0xff]
      %v343 = vld [vmem:[%s178 + $0x4b8] sm:$0xff]
      %v344 = vld [vmem:[%s178 + $0x4c0] sm:$0xff]
      %v345 = vld [vmem:[%s178 + $0x4c8] sm:$0xff]
      %v346 = vld [vmem:[%s178 + $0x4d0] sm:$0xff]
      %v347 = vld [vmem:[%s178 + $0x4d8] sm:$0xff]
      %v348 = vld [vmem:[%s178 + $0x4e0] sm:$0xff]
      %v349 = vld [vmem:[%s178 + $0x4e8] sm:$0xff]
      %v350 = vld [vmem:[%s178 + $0x4f0] sm:$0xff]
      %v351 = vld [vmem:[%s178 + $0x4f8] sm:$0xff]
      %v352 = vld [vmem:[%s178 + $0x500] sm:$0xff]
      %v353 = vld [vmem:[%s178 + $0x508] sm:$0xff]
      %v354 = vld [vmem:[%s178 + $0x510] sm:$0xff]
      %v355 = vld [vmem:[%s178 + $0x518] sm:$0xff]
      %v356 = vld [vmem:[%s178 + $0x520] sm:$0xff]
      %v357 = vld [vmem:[%s178 + $0x528] sm:$0xff]
      %v358 = vld [vmem:[%s178 + $0x530] sm:$0xff]
      %v359 = vld [vmem:[%s178 + $0x538] sm:$0xff]
      %v360 = vld [vmem:[%s178 + $0x540] sm:$0xff]
      %v361 = vld [vmem:[%s178 + $0x548] sm:$0xff]
      %v362 = vld [vmem:[%s178 + $0x550] sm:$0xff]
      %v363 = vld [vmem:[%s178 + $0x558] sm:$0xff]
      %v364 = vld [vmem:[%s178 + $0x560] sm:$0xff]
      %v365 = vld [vmem:[%s178 + $0x568] sm:$0xff]
      %v366 = vld [vmem:[%s178 + $0x570] sm:$0xff]
      %v367 = vld [vmem:[%s178 + $0x578] sm:$0xff]
      %v368 = vld [vmem:[%s178 + $0x580] sm:$0xff]
      %v369 = vld [vmem:[%s178 + $0x588] sm:$0xff]
      %v370 = vld [vmem:[%s178 + $0x590] sm:$0xff]
      %v371 = vld [vmem:[%s178 + $0x598] sm:$0xff]
      %v372 = vld [vmem:[%s178 + $0x5a0] sm:$0xff]
      %v373 = vld [vmem:[%s178 + $0x5a8] sm:$0xff]
      %v374 = vld [vmem:[%s178 + $0x5b0] sm:$0xff]
      %v375 = vld [vmem:[%s178 + $0x5b8] sm:$0xff]
      %v376 = vld [vmem:[%s178 + $0x5c0] sm:$0xff]
      %v377 = vld [vmem:[%s178 + $0x5c8] sm:$0xff]
      %v378 = vld [vmem:[%s178 + $0x5d0] sm:$0xff]
      %v379 = vld [vmem:[%s178 + $0x5d8] sm:$0xff]
      %v380 = vld [vmem:[%s178 + $0x5e0] sm:$0xff]
      %v381 = vld [vmem:[%s178 + $0x5e8] sm:$0xff]
      %v382 = vld [vmem:[%s178 + $0x5f0] sm:$0xff]
      %v383 = vld [vmem:[%s178 + $0x5f8] sm:$0xff]
      %v384 = vld [vmem:[%s178 + $0x600] sm:$0xff]
      %v385 = vld [vmem:[%s178 + $0x608] sm:$0xff]
      %v386 = vld [vmem:[%s178 + $0x610] sm:$0xff]
      %v387 = vld [vmem:[%s178 + $0x618] sm:$0xff]
      %v388 = vld [vmem:[%s178 + $0x620] sm:$0xff]
      %v389 = vld [vmem:[%s178 + $0x628] sm:$0xff]
      %v390 = vld [vmem:[%s178 + $0x630] sm:$0xff]
      %v391 = vld [vmem:[%s178 + $0x638] sm:$0xff]
      %v392 = vld [vmem:[%s178 + $0x640] sm:$0xff]
      %v393 = vld [vmem:[%s178 + $0x648] sm:$0xff]
      %v394 = vld [vmem:[%s178 + $0x650] sm:$0xff]
      %v395 = vld [vmem:[%s178 + $0x658] sm:$0xff]
      %v396 = vld [vmem:[%s178 + $0x660] sm:$0xff]
      %v397 = vld [vmem:[%s178 + $0x668] sm:$0xff]
      %v398 = vld [vmem:[%s178 + $0x670] sm:$0xff]
      %v399 = vld [vmem:[%s178 + $0x678] sm:$0xff]
      %v400 = vld [vmem:[%s178 + $0x680] sm:$0xff]
      %v401 = vld [vmem:[%s178 + $0x688] sm:$0xff]
      %v402 = vld [vmem:[%s178 + $0x690] sm:$0xff]
      %v403 = vld [vmem:[%s178 + $0x698] sm:$0xff]
      %v404 = vld [vmem:[%s178 + $0x6a0] sm:$0xff]
      %v405 = vld [vmem:[%s178 + $0x6a8] sm:$0xff]
      %v406 = vld [vmem:[%s178 + $0x6b0] sm:$0xff]
      %v407 = vld [vmem:[%s178 + $0x6b8] sm:$0xff]
      %v408 = vld [vmem:[%s178 + $0x6c0] sm:$0xff]
      %v409 = vld [vmem:[%s178 + $0x6c8] sm:$0xff]
      %v410 = vld [vmem:[%s178 + $0x6d0] sm:$0xff]
      %v411 = vld [vmem:[%s178 + $0x6d8] sm:$0xff]
      %v412 = vld [vmem:[%s178 + $0x6e0] sm:$0xff]
      %v413 = vld [vmem:[%s178 + $0x6e8] sm:$0xff]
      %v414 = vld [vmem:[%s178 + $0x6f0] sm:$0xff]
      %v415 = vld [vmem:[%s178 + $0x6f8] sm:$0xff]
      %v416 = vld [vmem:[%s178 + $0x700] sm:$0xff]
      %v417 = vld [vmem:[%s178 + $0x708] sm:$0xff]
      %v418 = vld [vmem:[%s178 + $0x710] sm:$0xff]
      %v419 = vld [vmem:[%s178 + $0x718] sm:$0xff]
      %v420 = vld [vmem:[%s178 + $0x720] sm:$0xff]
      %v421 = vld [vmem:[%s178 + $0x728] sm:$0xff]
      %v422 = vld [vmem:[%s178 + $0x730] sm:$0xff]
      %v423 = vld [vmem:[%s178 + $0x738] sm:$0xff]
      %v424 = vld [vmem:[%s178 + $0x740] sm:$0xff]
      %v425 = vld [vmem:[%s178 + $0x748] sm:$0xff]
      %v426 = vld [vmem:[%s178 + $0x750] sm:$0xff]
      %v427 = vld [vmem:[%s178 + $0x758] sm:$0xff]
      %v428 = vld [vmem:[%s178 + $0x760] sm:$0xff]
      %v429 = vld [vmem:[%s178 + $0x768] sm:$0xff]
      %v430 = vld [vmem:[%s178 + $0x770] sm:$0xff]
      %v431 = vld [vmem:[%s178 + $0x778] sm:$0xff]
      %v432 = vld [vmem:[%s178 + $0x780] sm:$0xff]
      %v433 = vld [vmem:[%s178 + $0x788] sm:$0xff]
      %v434 = vld [vmem:[%s178 + $0x790] sm:$0xff]
      %v435 = vld [vmem:[%s178 + $0x798] sm:$0xff]
      %v436 = vld [vmem:[%s178 + $0x7a0] sm:$0xff]
      %v437 = vld [vmem:[%s178 + $0x7a8] sm:$0xff]
      %v438 = vld [vmem:[%s178 + $0x7b0] sm:$0xff]
      %v439 = vld [vmem:[%s178 + $0x7b8] sm:$0xff]
      %v440 = vld [vmem:[%s178 + $0x7c0] sm:$0xff]
      %v441 = vld [vmem:[%s178 + $0x7c8] sm:$0xff]
      %v442 = vld [vmem:[%s178 + $0x7d0] sm:$0xff]
      %v443 = vld [vmem:[%s178 + $0x7d8] sm:$0xff]
      %v444 = vld [vmem:[%s178 + $0x7e0] sm:$0xff]
      %v445 = vld [vmem:[%s178 + $0x7e8] sm:$0xff]
      %v446 = vld [vmem:[%s178 + $0x7f0] sm:$0xff]
      %v447 = vld [vmem:[%s178 + $0x7f8] sm:$0xff]
      %v448 = vld [vmem:[%s178 + $0x800] sm:$0xff]
      %v449 = vld [vmem:[%s178 + $0x808] sm:$0xff]
      %v450 = vld [vmem:[%s178 + $0x810] sm:$0xff]
      %v451 = vld [vmem:[%s178 + $0x818] sm:$0xff]
      %v452 = vld [vmem:[%s178 + $0x820] sm:$0xff]
      %v453 = vld [vmem:[%s178 + $0x828] sm:$0xff]
      %v454 = vld [vmem:[%s178 + $0x830] sm:$0xff]
      %v455 = vld [vmem:[%s178 + $0x838] sm:$0xff]
      %v456 = vld [vmem:[%s178 + $0x840] sm:$0xff]
      %v457 = vld [vmem:[%s178 + $0x848] sm:$0xff]
      %v458 = vld [vmem:[%s178 + $0x850] sm:$0xff]
      %v459 = vld [vmem:[%s178 + $0x858] sm:$0xff]
      %v460 = vld [vmem:[%s178 + $0x860] sm:$0xff]
      %v461 = vld [vmem:[%s178 + $0x868] sm:$0xff]
      %v462 = vld [vmem:[%s178 + $0x870] sm:$0xff]
      %v463 = vld [vmem:[%s178 + $0x878] sm:$0xff]
      %v464 = vld [vmem:[%s178 + $0x880] sm:$0xff]
      %v465 = vld [vmem:[%s178 + $0x888] sm:$0xff]
      %v466 = vld [vmem:[%s178 + $0x890] sm:$0xff]
      %v467 = vld [vmem:[%s178 + $0x898] sm:$0xff]
      %v468 = vld [vmem:[%s178 + $0x8a0] sm:$0xff]
      %v469 = vld [vmem:[%s178 + $0x8a8] sm:$0xff]
      %v470 = vld [vmem:[%s178 + $0x8b0] sm:$0xff]
      %v471 = vld [vmem:[%s178 + $0x8b8] sm:$0xff]
      %v472 = vld [vmem:[%s178 + $0x8c0] sm:$0xff]
      %v473 = vld [vmem:[%s178 + $0x8c8] sm:$0xff]
      %v474 = vld [vmem:[%s178 + $0x8d0] sm:$0xff]
      %v475 = vld [vmem:[%s178 + $0x8d8] sm:$0xff]
      %v476 = vld [vmem:[%s178 + $0x8e0] sm:$0xff]
      %v477 = vld [vmem:[%s178 + $0x8e8] sm:$0xff]
      %v478 = vld [vmem:[%s178 + $0x8f0] sm:$0xff]
      %v479 = vld [vmem:[%s178 + $0x8f8] sm:$0xff]
      %v480 = vld [vmem:[%s178 + $0x900] sm:$0xff]
      %v481 = vld [vmem:[%s178 + $0x908] sm:$0xff]
      %v482 = vld [vmem:[%s178 + $0x910] sm:$0xff]
      %v483 = vld [vmem:[%s178 + $0x918] sm:$0xff]
      %v484 = vld [vmem:[%s178 + $0x920] sm:$0xff]
      %v485 = vld [vmem:[%s178 + $0x928] sm:$0xff]
      %v486 = vld [vmem:[%s178 + $0x930] sm:$0xff]
      %v487 = vld [vmem:[%s178 + $0x938] sm:$0xff]
      %v488 = vld [vmem:[%s178 + $0x940] sm:$0xff]
      %v489 = vld [vmem:[%s178 + $0x948] sm:$0xff]
      %v490 = vld [vmem:[%s178 + $0x950] sm:$0xff]
      %v491 = vld [vmem:[%s178 + $0x958] sm:$0xff]
      %v492 = vld [vmem:[%s178 + $0x960] sm:$0xff]
      %v493 = vld [vmem:[%s178 + $0x968] sm:$0xff]
      %v494 = vld [vmem:[%s178 + $0x970] sm:$0xff]
      %v495 = vld [vmem:[%s178 + $0x978] sm:$0xff]
      %v496 = vld [vmem:[%s178 + $0x980] sm:$0xff]
      %v497 = vld [vmem:[%s178 + $0x988] sm:$0xff]
      %v498 = vld [vmem:[%s178 + $0x990] sm:$0xff]
      %v499 = vld [vmem:[%s178 + $0x998] sm:$0xff]
      %v500 = vld [vmem:[%s178 + $0x9a0] sm:$0xff]
      %v501 = vld [vmem:[%s178 + $0x9a8] sm:$0xff]
      %v502 = vld [vmem:[%s178 + $0x9b0] sm:$0xff]
      %v503 = vld [vmem:[%s178 + $0x9b8] sm:$0xff]
      %v504 = vld [vmem:[%s178 + $0x9c0] sm:$0xff]
      %v505 = vld [vmem:[%s178 + $0x9c8] sm:$0xff]
      %v506 = vld [vmem:[%s178 + $0x9d0] sm:$0xff]
      %v507 = vld [vmem:[%s178 + $0x9d8] sm:$0xff]
      %v508 = vld [vmem:[%s178 + $0x9e0] sm:$0xff]
      %v509 = vld [vmem:[%s178 + $0x9e8] sm:$0xff]
      %v510 = vld [vmem:[%s178 + $0x9f0] sm:$0xff]
      %v511 = vld [vmem:[%s178 + $0x9f8] sm:$0xff]
      %v512 = vld [vmem:[%s178 + $0xa00] sm:$0xff]
      %v513 = vld [vmem:[%s178 + $0xa08] sm:$0xff]
      %v514 = vld [vmem:[%s178 + $0xa10] sm:$0xff]
      %v515 = vld [vmem:[%s178 + $0xa18] sm:$0xff]
      %v516 = vld [vmem:[%s178 + $0xa20] sm:$0xff]
      %v517 = vld [vmem:[%s178 + $0xa28] sm:$0xff]
      %v518 = vld [vmem:[%s178 + $0xa30] sm:$0xff]
      %v519 = vld [vmem:[%s178 + $0xa38] sm:$0xff]
      %v520 = vld [vmem:[%s178 + $0xa40] sm:$0xff]
      %v521 = vld [vmem:[%s178 + $0xa48] sm:$0xff]
      %v522 = vld [vmem:[%s178 + $0xa50] sm:$0xff]
      %v523 = vld [vmem:[%s178 + $0xa58] sm:$0xff]
      %v524 = vld [vmem:[%s178 + $0xa60] sm:$0xff]
      %v525 = vld [vmem:[%s178 + $0xa68] sm:$0xff]
      %v526 = vld [vmem:[%s178 + $0xa70] sm:$0xff]
      %v527 = vld [vmem:[%s178 + $0xa78] sm:$0xff]
      %v528 = vld [vmem:[%s178 + $0xa80] sm:$0xff]
      %v529 = vld [vmem:[%s178 + $0xa88] sm:$0xff]
      %v530 = vld [vmem:[%s178 + $0xa90] sm:$0xff]
      %v531 = vld [vmem:[%s178 + $0xa98] sm:$0xff]
      %v532 = vld [vmem:[%s178 + $0xaa0] sm:$0xff]
      %v533 = vld [vmem:[%s178 + $0xaa8] sm:$0xff]
      %v534 = vld [vmem:[%s178 + $0xab0] sm:$0xff]
      %v535 = vld [vmem:[%s178 + $0xab8] sm:$0xff]
      %v536 = vld [vmem:[%s178 + $0xac0] sm:$0xff]
      %v537 = vld [vmem:[%s178 + $0xac8] sm:$0xff]
      %v538 = vld [vmem:[%s178 + $0xad0] sm:$0xff]
      %v539 = vld [vmem:[%s178 + $0xad8] sm:$0xff]
      %v540 = vld [vmem:[%s178 + $0xae0] sm:$0xff]
      %v541 = vld [vmem:[%s178 + $0xae8] sm:$0xff]
      %v542 = vld [vmem:[%s178 + $0xaf0] sm:$0xff]
      %v543 = vld [vmem:[%s178 + $0xaf8] sm:$0xff]
      %v546 = vlaneseq
      %v547 = vshrl.u32 %v546, 7
      %v548 = vsub.s32 0, %v547
      %v549 = vrot.slane %v190, %v548
      %v550 = vlaneseq
      %v551 = vshrl.u32 %v550, 7
      %v552 = vsub.s32 1, %v551
      %v553 = vrot.slane %v190, %v552
      %v554 = vlaneseq
      %v555 = vshrl.u32 %v554, 7
      %v556 = vsub.s32 2, %v555
      %v557 = vrot.slane %v190, %v556
      %v558 = vlaneseq
      %v559 = vshrl.u32 %v558, 7
      %v560 = vsub.s32 3, %v559
      %v561 = vrot.slane %v190, %v560
      %v562 = vlaneseq
      %v563 = vshrl.u32 %v562, 7
      %v564 = vsub.s32 4, %v563
      %v565 = vrot.slane %v190, %v564
      %v566 = vlaneseq
      %v567 = vshrl.u32 %v566, 7
      %v568 = vsub.s32 5, %v567
      %v569 = vrot.slane %v190, %v568
      %v570 = vlaneseq
      %v571 = vshrl.u32 %v570, 7
      %v572 = vsub.s32 6, %v571
      %v573 = vrot.slane %v190, %v572
      %v574 = vlaneseq
      %v575 = vshrl.u32 %v574, 7
      %v576 = vsub.s32 7, %v575
      %v577 = vrot.slane %v190, %v576
      %v578 = vlaneseq
      %v579 = vshrl.u32 %v578, 7
      %v580 = vsub.s32 0, %v579
      %v581 = vrot.slane %v191, %v580
      %v582 = vlaneseq
      %v583 = vshrl.u32 %v582, 7
      %v584 = vsub.s32 1, %v583
      %v585 = vrot.slane %v191, %v584
      %v586 = vlaneseq
      %v587 = vshrl.u32 %v586, 7
      %v588 = vsub.s32 2, %v587
      %v589 = vrot.slane %v191, %v588
      %601 = vmatprep.subr.mxu0 %v193
      %602 = vmatpush1.msra.mxu0 %v192
      %603 = vmatprep.subr.mxu0 %v195
      %604 = vmatpush1.msra.mxu0 %v194
      %605 = vmatprep.subr.mxu0 %v197
      %606 = vmatpush1.msra.mxu0 %v196
      %607 = vmatprep.subr.mxu0 %v199
      %608 = vmatpush1.msra.mxu0 %v198
      %609 = vmatprep.subr.mxu0 %v201
      %610 = vmatpush1.msra.mxu0 %v200
      %611 = vmatprep.subr.mxu0 %v203
      %612 = vmatpush1.msra.mxu0 %v202
      %613 = vmatprep.subr.mxu0 %v205
      %614 = vmatpush1.msra.mxu0 %v204
      %615 = vmatprep.subr.mxu0 %v207
      %616 = vmatpush1.msra.mxu0 %v206
      %617 = vmatprep.subr.mxu0 %v209
      %618 = vmatpush1.msra.mxu0 %v208
      %619 = vmatprep.subr.mxu0 %v211
      %620 = vmatpush1.msra.mxu0 %v210
      %621 = vmatprep.subr.mxu0 %v213
      %622 = vmatpush1.msra.mxu0 %v212
      %623 = vmatprep.subr.mxu0 %v215
      %624 = vmatpush1.msra.mxu0 %v214
      %625 = vmatprep.subr.mxu0 %v217
      %626 = vmatpush1.msra.mxu0 %v216
      %627 = vmatprep.subr.mxu0 %v219
      %628 = vmatpush1.msra.mxu0 %v218
      %629 = vmatprep.subr.mxu0 %v221
      %630 = vmatpush1.msra.mxu0 %v220
      %631 = vmatprep.subr.mxu0 %v223
      %632 = vmatpush1.msra.mxu0 %v222
      %633 = vmatprep.subr.mxu0 %v225
      %634 = vmatpush1.msra.mxu0 %v224
      %635 = vmatprep.subr.mxu0 %v227
      %636 = vmatpush1.msra.mxu0 %v226
      %637 = vmatprep.subr.mxu0 %v229
      %638 = vmatpush1.msra.mxu0 %v228
      %639 = vmatprep.subr.mxu0 %v231
      %640 = vmatpush1.msra.mxu0 %v230
      %641 = vmatprep.subr.mxu0 %v233
      %642 = vmatpush1.msra.mxu0 %v232
      %643 = vmatprep.subr.mxu0 %v235
      %644 = vmatpush1.msra.mxu0 %v234
      %645 = vmatprep.subr.mxu0 %v237
      %646 = vmatpush1.msra.mxu0 %v236
      %647 = vmatprep.subr.mxu0 %v239
      %648 = vmatpush1.msra.mxu0 %v238
      %649 = vmatprep.subr.mxu0 %v241
      %650 = vmatpush1.msra.mxu0 %v240
      %651 = vmatprep.subr.mxu0 %v243
      %652 = vmatpush1.msra.mxu0 %v242
      %653 = vmatprep.subr.mxu0 %v245
      %654 = vmatpush1.msra.mxu0 %v244
      %655 = vmatprep.subr.mxu0 %v247
      %656 = vmatpush1.msra.mxu0 %v246
      %657 = vmatprep.subr.mxu0 %v249
      %658 = vmatpush1.msra.mxu0 %v248
      %659 = vmatprep.subr.mxu0 %v251
      %660 = vmatpush1.msra.mxu0 %v250
      %661 = vmatprep.subr.mxu0 %v253
      %662 = vmatpush1.msra.mxu0 %v252
      %663 = vmatprep.subr.mxu0 %v255
      %664 = vmatpush1.msra.mxu0 %v254
      %665 = vmatprep.mubr.f32.mxu0 %v553
      %666 = vmatmul.mubr.f32.gmra.mrb[0].mxu0 %v549
      %v667 = vpop.f32.mrb[0].mxu0
      %v668 = vadd.f32 0.0, %v667
      %v669 = vpop.f32.mrb[0].mxu0
      %v670 = vadd.f32 0.0, %v669
      %671 = vdwg.mxu0
      %672 = vmatprep.subr.mxu0 %v257
      %673 = vmatpush1.msra.mxu0 %v256
      %674 = vmatprep.subr.mxu0 %v259
      %675 = vmatpush1.msra.mxu0 %v258
      %676 = vmatprep.subr.mxu0 %v261
      %677 = vmatpush1.msra.mxu0 %v260
      %678 = vmatprep.subr.mxu0 %v263
      %679 = vmatpush1.msra.mxu0 %v262
      %680 = vmatprep.subr.mxu0 %v265
      %681 = vmatpush1.msra.mxu0 %v264
      %682 = vmatprep.subr.mxu0 %v267
      %683 = vmatpush1.msra.mxu0 %v266
      %684 = vmatprep.subr.mxu0 %v269
      %685 = vmatpush1.msra.mxu0 %v268
      %686 = vmatprep.subr.mxu0 %v271
      %687 = vmatpush1.msra.mxu0 %v270
      %688 = vmatprep.subr.mxu0 %v273
      %689 = vmatpush1.msra.mxu0 %v272
      %690 = vmatprep.subr.mxu0 %v275
      %691 = vmatpush1.msra.mxu0 %v274
      %692 = vmatprep.subr.mxu0 %v277
      %693 = vmatpush1.msra.mxu0 %v276
      %694 = vmatprep.subr.mxu0 %v279
      %695 = vmatpush1.msra.mxu0 %v278
      %696 = vmatprep.subr.mxu0 %v281
      %697 = vmatpush1.msra.mxu0 %v280
      %698 = vmatprep.subr.mxu0 %v283
      %699 = vmatpush1.msra.mxu0 %v282
      %700 = vmatprep.subr.mxu0 %v285
      %701 = vmatpush1.msra.mxu0 %v284
      %702 = vmatprep.subr.mxu0 %v287
      %703 = vmatpush1.msra.mxu0 %v286
      %704 = vmatprep.subr.mxu0 %v289
      %705 = vmatpush1.msra.mxu0 %v288
      %706 = vmatprep.subr.mxu0 %v291
      %707 = vmatpush1.msra.mxu0 %v290
      %708 = vmatprep.subr.mxu0 %v293
      %709 = vmatpush1.msra.mxu0 %v292
      %710 = vmatprep.subr.mxu0 %v295
      %711 = vmatpush1.msra.mxu0 %v294
      %712 = vmatprep.subr.mxu0 %v297
      %713 = vmatpush1.msra.mxu0 %v296
      %714 = vmatprep.subr.mxu0 %v299
      %715 = vmatpush1.msra.mxu0 %v298
      %716 = vmatprep.subr.mxu0 %v301
      %717 = vmatpush1.msra.mxu0 %v300
      %718 = vmatprep.subr.mxu0 %v303
      %719 = vmatpush1.msra.mxu0 %v302
      %720 = vmatprep.subr.mxu0 %v305
      %721 = vmatpush1.msra.mxu0 %v304
      %722 = vmatprep.subr.mxu0 %v307
      %723 = vmatpush1.msra.mxu0 %v306
      %724 = vmatprep.subr.mxu0 %v309
      %725 = vmatpush1.msra.mxu0 %v308
      %726 = vmatprep.subr.mxu0 %v311
      %727 = vmatpush1.msra.mxu0 %v310
      %728 = vmatprep.subr.mxu0 %v313
      %729 = vmatpush1.msra.mxu0 %v312
      %730 = vmatprep.subr.mxu0 %v315
      %731 = vmatpush1.msra.mxu0 %v314
      %732 = vmatprep.subr.mxu0 %v317
      %733 = vmatpush1.msra.mxu0 %v316
      %734 = vmatprep.subr.mxu0 %v319
      %735 = vmatpush1.msra.mxu0 %v318
      %736 = vmatprep.mubr.f32.mxu0 %v561
      %737 = vmatmul.mubr.f32.gmra.mrb[0].mxu0 %v557
      %v738 = vpop.f32.mrb[0].mxu0
      %v739 = vadd.f32 %v668, %v738
      %v740 = vpop.f32.mrb[0].mxu0
      %v741 = vadd.f32 %v670, %v740
      %742 = vdwg.mxu0
      %743 = vmatprep.subr.mxu0 %v321
      %744 = vmatpush1.msra.mxu0 %v320
      %745 = vmatprep.subr.mxu0 %v323
      %746 = vmatpush1.msra.mxu0 %v322
      %747 = vmatprep.subr.mxu0 %v325
      %748 = vmatpush1.msra.mxu0 %v324
      %749 = vmatprep.subr.mxu0 %v327
      %750 = vmatpush1.msra.mxu0 %v326
      %751 = vmatprep.subr.mxu0 %v329
      %752 = vmatpush1.msra.mxu0 %v328
      %753 = vmatprep.subr.mxu0 %v331
      %754 = vmatpush1.msra.mxu0 %v330
      %755 = vmatprep.subr.mxu0 %v333
      %756 = vmatpush1.msra.mxu0 %v332
      %757 = vmatprep.subr.mxu0 %v335
      %758 = vmatpush1.msra.mxu0 %v334
      %759 = vmatprep.subr.mxu0 %v337
      %760 = vmatpush1.msra.mxu0 %v336
      %761 = vmatprep.subr.mxu0 %v339
      %762 = vmatpush1.msra.mxu0 %v338
      %763 = vmatprep.subr.mxu0 %v341
      %764 = vmatpush1.msra.mxu0 %v340
      %765 = vmatprep.subr.mxu0 %v343
      %766 = vmatpush1.msra.mxu0 %v342
      %767 = vmatprep.subr.mxu0 %v345
      %768 = vmatpush1.msra.mxu0 %v344
      %769 = vmatprep.subr.mxu0 %v347
      %770 = vmatpush1.msra.mxu0 %v346
      %771 = vmatprep.subr.mxu0 %v349
      %772 = vmatpush1.msra.mxu0 %v348
      %773 = vmatprep.subr.mxu0 %v351
      %774 = vmatpush1.msra.mxu0 %v350
      %775 = vmatprep.subr.mxu0 %v353
      %776 = vmatpush1.msra.mxu0 %v352
      %777 = vmatprep.subr.mxu0 %v355
      %778 = vmatpush1.msra.mxu0 %v354
      %779 = vmatprep.subr.mxu0 %v357
      %780 = vmatpush1.msra.mxu0 %v356
      %781 = vmatprep.subr.mxu0 %v359
      %782 = vmatpush1.msra.mxu0 %v358
      %783 = vmatprep.subr.mxu0 %v361
      %784 = vmatpush1.msra.mxu0 %v360
      %785 = vmatprep.subr.mxu0 %v363
      %786 = vmatpush1.msra.mxu0 %v362
      %787 = vmatprep.subr.mxu0 %v365
      %788 = vmatpush1.msra.mxu0 %v364
      %789 = vmatprep.subr.mxu0 %v367
      %790 = vmatpush1.msra.mxu0 %v366
      %791 = vmatprep.subr.mxu0 %v369
      %792 = vmatpush1.msra.mxu0 %v368
      %793 = vmatprep.subr.mxu0 %v371
      %794 = vmatpush1.msra.mxu0 %v370
      %795 = vmatprep.subr.mxu0 %v373
      %796 = vmatpush1.msra.mxu0 %v372
      %797 = vmatprep.subr.mxu0 %v375
      %798 = vmatpush1.msra.mxu0 %v374
      %799 = vmatprep.subr.mxu0 %v377
      %800 = vmatpush1.msra.mxu0 %v376
      %801 = vmatprep.subr.mxu0 %v379
      %802 = vmatpush1.msra.mxu0 %v378
      %803 = vmatprep.subr.mxu0 %v381
      %804 = vmatpush1.msra.mxu0 %v380
      %805 = vmatprep.subr.mxu0 %v383
      %806 = vmatpush1.msra.mxu0 %v382
      %807 = vmatprep.mubr.f32.mxu0 %v569
      %808 = vmatmul.mubr.f32.gmra.mrb[0].mxu0 %v565
      %v809 = vpop.f32.mrb[0].mxu0
      %v810 = vadd.f32 %v739, %v809
      %v811 = vpop.f32.mrb[0].mxu0
      %v812 = vadd.f32 %v741, %v811
      %813 = vdwg.mxu0
      %814 = vmatprep.subr.mxu0 %v385
      %815 = vmatpush1.msra.mxu0 %v384
      %816 = vmatprep.subr.mxu0 %v387
      %817 = vmatpush1.msra.mxu0 %v386
      %818 = vmatprep.subr.mxu0 %v389
      %819 = vmatpush1.msra.mxu0 %v388
      %820 = vmatprep.subr.mxu0 %v391
      %821 = vmatpush1.msra.mxu0 %v390
      %822 = vmatprep.subr.mxu0 %v393
      %823 = vmatpush1.msra.mxu0 %v392
      %824 = vmatprep.subr.mxu0 %v395
      %825 = vmatpush1.msra.mxu0 %v394
      %826 = vmatprep.subr.mxu0 %v397
      %827 = vmatpush1.msra.mxu0 %v396
      %828 = vmatprep.subr.mxu0 %v399
      %829 = vmatpush1.msra.mxu0 %v398
      %830 = vmatprep.subr.mxu0 %v401
      %831 = vmatpush1.msra.mxu0 %v400
      %832 = vmatprep.subr.mxu0 %v403
      %833 = vmatpush1.msra.mxu0 %v402
      %834 = vmatprep.subr.mxu0 %v405
      %835 = vmatpush1.msra.mxu0 %v404
      %836 = vmatprep.subr.mxu0 %v407
      %837 = vmatpush1.msra.mxu0 %v406
      %838 = vmatprep.subr.mxu0 %v409
      %839 = vmatpush1.msra.mxu0 %v408
      %840 = vmatprep.subr.mxu0 %v411
      %841 = vmatpush1.msra.mxu0 %v410
      %842 = vmatprep.subr.mxu0 %v413
      %843 = vmatpush1.msra.mxu0 %v412
      %844 = vmatprep.subr.mxu0 %v415
      %845 = vmatpush1.msra.mxu0 %v414
      %846 = vmatprep.subr.mxu0 %v417
      %847 = vmatpush1.msra.mxu0 %v416
      %848 = vmatprep.subr.mxu0 %v419
      %849 = vmatpush1.msra.mxu0 %v418
      %850 = vmatprep.subr.mxu0 %v421
      %851 = vmatpush1.msra.mxu0 %v420
      %852 = vmatprep.subr.mxu0 %v423
      %853 = vmatpush1.msra.mxu0 %v422
      %854 = vmatprep.subr.mxu0 %v425
      %855 = vmatpush1.msra.mxu0 %v424
      %856 = vmatprep.subr.mxu0 %v427
      %857 = vmatpush1.msra.mxu0 %v426
      %858 = vmatprep.subr.mxu0 %v429
      %859 = vmatpush1.msra.mxu0 %v428
      %860 = vmatprep.subr.mxu0 %v431
      %861 = vmatpush1.msra.mxu0 %v430
      %862 = vmatprep.subr.mxu0 %v433
      %863 = vmatpush1.msra.mxu0 %v432
      %864 = vmatprep.subr.mxu0 %v435
      %865 = vmatpush1.msra.mxu0 %v434
      %866 = vmatprep.subr.mxu0 %v437
      %867 = vmatpush1.msra.mxu0 %v436
      %868 = vmatprep.subr.mxu0 %v439
      %869 = vmatpush1.msra.mxu0 %v438
      %870 = vmatprep.subr.mxu0 %v441
      %871 = vmatpush1.msra.mxu0 %v440
      %872 = vmatprep.subr.mxu0 %v443
      %873 = vmatpush1.msra.mxu0 %v442
      %874 = vmatprep.subr.mxu0 %v445
      %875 = vmatpush1.msra.mxu0 %v444
      %876 = vmatprep.subr.mxu0 %v447
      %877 = vmatpush1.msra.mxu0 %v446
      %878 = vmatprep.mubr.f32.mxu0 %v577
      %879 = vmatmul.mubr.f32.gmra.mrb[0].mxu0 %v573
      %v880 = vpop.f32.mrb[0].mxu0
      %v881 = vadd.f32 %v810, %v880
      %v882 = vpop.f32.mrb[0].mxu0
      %v883 = vadd.f32 %v812, %v882
      %884 = vdwg.mxu0
      %885 = vmatprep.subr.mxu0 %v449
      %886 = vmatpush1.msra.mxu0 %v448
      %887 = vmatprep.subr.mxu0 %v451
      %888 = vmatpush1.msra.mxu0 %v450
      %889 = vmatprep.subr.mxu0 %v453
      %890 = vmatpush1.msra.mxu0 %v452
      %891 = vmatprep.subr.mxu0 %v455
      %892 = vmatpush1.msra.mxu0 %v454
      %893 = vmatprep.subr.mxu0 %v457
      %894 = vmatpush1.msra.mxu0 %v456
      %895 = vmatprep.subr.mxu0 %v459
      %896 = vmatpush1.msra.mxu0 %v458
      %897 = vmatprep.subr.mxu0 %v461
      %898 = vmatpush1.msra.mxu0 %v460
      %899 = vmatprep.subr.mxu0 %v463
      %900 = vmatpush1.msra.mxu0 %v462
      %901 = vmatprep.subr.mxu0 %v465
      %902 = vmatpush1.msra.mxu0 %v464
      %903 = vmatprep.subr.mxu0 %v467
      %904 = vmatpush1.msra.mxu0 %v466
      %905 = vmatprep.subr.mxu0 %v469
      %906 = vmatpush1.msra.mxu0 %v468
      %907 = vmatprep.subr.mxu0 %v471
      %908 = vmatpush1.msra.mxu0 %v470
      %909 = vmatprep.subr.mxu0 %v473
      %910 = vmatpush1.msra.mxu0 %v472
      %911 = vmatprep.subr.mxu0 %v475
      %912 = vmatpush1.msra.mxu0 %v474
      %913 = vmatprep.subr.mxu0 %v477
      %914 = vmatpush1.msra.mxu0 %v476
      %915 = vmatprep.subr.mxu0 %v479
      %916 = vmatpush1.msra.mxu0 %v478
      %917 = vmatprep.subr.mxu0 %v481
      %918 = vmatpush1.msra.mxu0 %v480
      %919 = vmatprep.subr.mxu0 %v483
      %920 = vmatpush1.msra.mxu0 %v482
      %921 = vmatprep.subr.mxu0 %v485
      %922 = vmatpush1.msra.mxu0 %v484
      %923 = vmatprep.subr.mxu0 %v487
      %924 = vmatpush1.msra.mxu0 %v486
      %925 = vmatprep.subr.mxu0 %v489
      %926 = vmatpush1.msra.mxu0 %v488
      %927 = vmatprep.subr.mxu0 %v491
      %928 = vmatpush1.msra.mxu0 %v490
      %929 = vmatprep.subr.mxu0 %v493
      %930 = vmatpush1.msra.mxu0 %v492
      %931 = vmatprep.subr.mxu0 %v495
      %932 = vmatpush1.msra.mxu0 %v494
      %933 = vmatprep.subr.mxu0 %v497
      %934 = vmatpush1.msra.mxu0 %v496
      %935 = vmatprep.subr.mxu0 %v499
      %936 = vmatpush1.msra.mxu0 %v498
      %937 = vmatprep.subr.mxu0 %v501
      %938 = vmatpush1.msra.mxu0 %v500
      %939 = vmatprep.subr.mxu0 %v503
      %940 = vmatpush1.msra.mxu0 %v502
      %941 = vmatprep.subr.mxu0 %v505
      %942 = vmatpush1.msra.mxu0 %v504
      %943 = vmatprep.subr.mxu0 %v507
      %944 = vmatpush1.msra.mxu0 %v506
      %945 = vmatprep.subr.mxu0 %v509
      %946 = vmatpush1.msra.mxu0 %v508
      %947 = vmatprep.subr.mxu0 %v511
      %948 = vmatpush1.msra.mxu0 %v510
      %949 = vmatprep.mubr.f32.mxu0 %v585
      %950 = vmatmul.mubr.f32.gmra.mrb[0].mxu0 %v581
      %v951 = vpop.f32.mrb[0].mxu0
      %v952 = vadd.f32 %v881, %v951
      %v953 = vpop.f32.mrb[0].mxu0
      %v954 = vadd.f32 %v883, %v953
      %955 = vdwg.mxu0
      %956 = vmatprep.subr.mxu0 %v513
      %957 = vmatpush1.msra.mxu0 %v512
      %958 = vmatprep.subr.mxu0 %v515
      %959 = vmatpush1.msra.mxu0 %v514
      %960 = vmatprep.subr.mxu0 %v517
      %961 = vmatpush1.msra.mxu0 %v516
      %962 = vmatprep.subr.mxu0 %v519
      %963 = vmatpush1.msra.mxu0 %v518
      %964 = vmatprep.subr.mxu0 %v521
      %965 = vmatpush1.msra.mxu0 %v520
      %966 = vmatprep.subr.mxu0 %v523
      %967 = vmatpush1.msra.mxu0 %v522
      %968 = vmatprep.subr.mxu0 %v525
      %969 = vmatpush1.msra.mxu0 %v524
      %970 = vmatprep.subr.mxu0 %v527
      %971 = vmatpush1.msra.mxu0 %v526
      %972 = vmatprep.subr.mxu0 %v529
      %973 = vmatpush1.msra.mxu0 %v528
      %974 = vmatprep.subr.mxu0 %v531
      %975 = vmatpush1.msra.mxu0 %v530
      %976 = vmatprep.subr.mxu0 %v533
      %977 = vmatpush1.msra.mxu0 %v532
      %978 = vmatprep.subr.mxu0 %v535
      %979 = vmatpush1.msra.mxu0 %v534
      %980 = vmatprep.subr.mxu0 %v537
      %981 = vmatpush1.msra.mxu0 %v536
      %982 = vmatprep.subr.mxu0 %v539
      %983 = vmatpush1.msra.mxu0 %v538
      %984 = vmatprep.subr.mxu0 %v541
      %985 = vmatpush1.msra.mxu0 %v540
      %986 = vmatprep.subr.mxu0 %v543
      %987 = vmatpush1.msra.mxu0 %v542
      %988 = vmatprep.subr.mxu0 0.0
      %989 = vmatpush1.msra.mxu0 0.0
      %990 = vmatprep.subr.mxu0 0.0
      %991 = vmatpush1.msra.mxu0 0.0
      %992 = vmatprep.subr.mxu0 0.0
      %993 = vmatpush1.msra.mxu0 0.0
      %994 = vmatprep.subr.mxu0 0.0
      %995 = vmatpush1.msra.mxu0 0.0
      %996 = vmatprep.subr.mxu0 0.0
      %997 = vmatpush1.msra.mxu0 0.0
      %998 = vmatprep.subr.mxu0 0.0
      %999 = vmatpush1.msra.mxu0 0.0
      %1000 = vmatprep.subr.mxu0 0.0
      %1001 = vmatpush1.msra.mxu0 0.0
      %1002 = vmatprep.subr.mxu0 0.0
      %1003 = vmatpush1.msra.mxu0 0.0
      %1004 = vmatprep.subr.mxu0 0.0
      %1005 = vmatpush1.msra.mxu0 0.0
      %1006 = vmatprep.subr.mxu0 0.0
      %1007 = vmatpush1.msra.mxu0 0.0
      %1008 = vmatprep.subr.mxu0 0.0
      %1009 = vmatpush1.msra.mxu0 0.0
      %1010 = vmatprep.subr.mxu0 0.0
      %1011 = vmatpush1.msra.mxu0 0.0
      %1012 = vmatprep.subr.mxu0 0.0
      %1013 = vmatpush1.msra.mxu0 0.0
      %1014 = vmatprep.subr.mxu0 0.0
      %1015 = vmatpush1.msra.mxu0 0.0
      %1016 = vmatprep.subr.mxu0 0.0
      %1017 = vmatpush1.msra.mxu0 0.0
      %1018 = vmatprep.subr.mxu0 0.0
      %1019 = vmatpush1.msra.mxu0 0.0
      %1020 = vmatprep.mubr.f32.mxu0 0.0
      %1021 = vmatmul.mubr.f32.gmra.mrb[0].mxu0 %v589
      %v1022 = vpop.f32.mrb[0].mxu0
      %v1023 = vadd.f32 %v952, %v1022
      %v1024 = vpop.f32.mrb[0].mxu0
      %v1025 = vadd.f32 %v954, %v1024
      %1026 = vdwg.mxu0
      %v1029 = vcombine.low %v1023, %v1025
      %v1031 = vunpack.c.l.s4 1966171168
      %v1032 = vunpack.c.0.s8 %v1031
      %v1033 = vlaneseq
      %v1034 = vshrl.u32 %v1033, 7
      %v1035 = vsub.s32 %v1032, %v1034
      %v1036 = vrot.slane %v1029, %v1035
      %v1038 = vunpack.c.l.s4 1966171168
      %v1039 = vunpack.c.0.s8 %v1038
      %v1040 = vlaneseq
      %v1041 = vshrl.u32 %v1040, 7
      %v1042 = vsub.s32 %v1039, %v1041
      %v1043 = vrot.slane %v1036, %v1042
      %v1045 = vadd.f32 %v189, %v1043
      %v1046 = vlaneseq
      %vm1047 = vcmp.ge.s32.totalorder %v1046, 0
      %vm1048 = vcmp.lt.s32.totalorder %v1046, 200
      %vm1049 = vmand %vm1047, %vm1048
      %1050 = vst.msk [vmem:[#allocation2] sm:$0x3] %vm1049, %v1045
      %p1051 = scmp.eq.s32.totalorder %s14, 11
      // Predicated region
      $region37: #{audio_vae_forward.9} parent=31 // pred_check
        %p1052 = pneg %p1051
      $region38: #{audio_vae_forward.9} parent=31 // pred_check_branch
        %1054 = sbr.rel (%p1052) target = $region40
      $region39: #{audio_vae_forward.9} parent=31 // pred_region
        %v1055 = vld [vmem:[#allocation2] sm:$0x3]
        %v1056 = vld [vmem:[%s2] sm:$0x3]
        %v1057 = vadd.f32 %v1055, %v1056
        %1058 = vst.msk [vmem:[%s3] sm:$0x3] %vm1049, %v1057
      $region40: #{audio_vae_forward.9} parent=31 // pred_fallthru
        _
      // Predicated region
      $region41: #{audio_vae_forward.9} parent=31 // pred_check
        %p1059 = pneg %p100
      $region42: #{audio_vae_forward.9} parent=31 // pred_check_branch
        %1061 = sbr.rel (%p1059) target = $region44
      $region43: #{audio_vae_forward.9} parent=31 // pred_region
        _
      $region44: #{audio_vae_forward.9} parent=31 // pred_fallthru
        _
      // Predicated region
      $region45: #{audio_vae_forward.9} parent=31 // pred_check
        %p1062 = pneg %p100
      $region46: #{audio_vae_forward.9} parent=31 // pred_check_branch
        %1064 = sbr.rel (%p1062) target = $region48
      $region47: #{audio_vae_forward.9} parent=31 // pred_region
        _
      $region48: #{audio_vae_forward.9} parent=31 // pred_fallthru
        _
    $region32: #{audio_vae_forward.9} parent=5 // pred_fallthru
      _
    %p1065 = scmp.le.s32.totalorder 2, %s9
    // Predicated region
    $region49: #{audio_vae_forward.9} parent=5 // pred_check
      %p1066 = pneg %p1065
    $region50: #{audio_vae_forward.9} parent=5 // pred_check_branch
      %1068 = sbr.rel (%p1066) target = $region52
    $region51: #{audio_vae_forward.9} parent=5 // pred_region
      %s1069 = ssub.s32 %s9, 2
    $region52: #{audio_vae_forward.9} parent=5 // pred_fallthru
      _
  $region6: #{audio_vae_forward.9} parent=0 // loop_footer
    %s13 = sadd.s32 1, %s9
  $region7: #{audio_vae_forward.9} parent=0 // loop_footer_branch
    %8 = sbr.rel target = $region3
  $region8: #{audio_vae_forward.9} parent=0 // loop_exit
    _

// kernel: audio_vae_forward.11
$region0: #{audio_vae_forward.11}
  #allocation0 [shape = 'u32[]', space=smem, size = 0x4, offset = 0x4, fixed_abs, tag = 'smem constant byte address 0x4 - core index']
  #allocation1 [shape = 'u32[144,128]{1,0:T(1,128)}', space=vmem, size = 0x12000, scoped, tag = 'internal scratch']
  %s0 = inlined_call_operand.vmem [shape: f32[1,100], index: 0, kind: input, shape index: {}]
  %s1 = inlined_call_operand.hbm [shape: f32[100,16896], index: 1, kind: input, shape index: {}]
  %s2 = inlined_call_operand.vmem [shape: f32[1,16896], index: 2, kind: input, shape index: {}]
  %s3 = inlined_call_operand.vmem [shape: f32[1,16896], index: 3, kind: output, shape index: {}]
  %s4 = sld [smem:[#allocation0]]
  $region49: #{audio_vae_forward.11} parent=0
    _
  %s6 = ssub.s32 1, %s4
  %s7 = scalar_select 0, %s6, %s4
  $region1: #{audio_vae_forward.11} parent=0
    #allocation2 [shape = 'u8[1171456]{0}', space=vmem, size = 0x11e000, scoped, tag = 'input window, operand 1']
    #allocation3 [shape = 's32[2]{0}', space=sflag, size = 0x8, scoped, tag = 'scoped memory for audio_vae_forward.11']
    %8 = vsyncpa [#allocation3], 0
    %s9 = scalar_lea.sflag [#allocation3], 1
    %10 = vsyncpa %s9, 0
    loop: start=0, step=1, limit=14
    $region2: #{audio_vae_forward.11} parent=1 // loop_pre_header
      _
    $region3: #{audio_vae_forward.11} parent=1 // loop_header
      %s12 = sphi 0, %s16
      %p13 = scmp.ge.s32.totalorder %s12, 14
      %s20 = sphi 0, %s20
      %s22 = sphi 0, %s20
      %s23 = sphi 0, %s22
      %s37 = sphi 0, %s23
      %s43 = sphi 0, %s45
      %s46 = sphi 0, %s43
      %s47 = sphi 0, %s46
      %s63 = sphi 0, %s47
      %s69 = sphi 0, %s71
      %s72 = sphi 0, %s69
      %s73 = sphi 0, %s72
      %s89 = sphi 0, %s73
      %s95 = sphi 0, %s97
      %s98 = sphi 0, %s95
      %s99 = sphi 0, %s98
      %s115 = sphi 0, %s99
    $region4: #{audio_vae_forward.11} parent=1 // loop_header_branch
      %15 = sbr.rel (%p13) target = $region8
    $region5: #{audio_vae_forward.11} parent=1 // loop_body
      %s17 = ssub.s32 %s12, 1
      %s18 = ssub.s32 %s12, 2
      %s19 = sadd.s32 %s12, 1
      %s21 = sadd.s32 %s20, 1
      %p24 = scmp.eq.s32.totalorder %s12, 11
      %p25 = scmp.ne.s32.totalorder %s20, %s22
      %p26 = scmp.eq.s32.totalorder %s12, 0
      %p27 = por %p25, %p26
      %p28 = scmp.ne.s32.totalorder %s20, %s22
      %p29 = scmp.eq.s32.totalorder %s17, 11
      %p30 = por %p28, %p29
      %p31 = scmp.ne.s32.totalorder %s22, %s23
      %p32 = scmp.eq.s32.totalorder %s17, 0
      %p33 = por %p31, %p32
      %p34 = scmp.ne.s32.totalorder %s22, %s23
      %p35 = scmp.eq.s32.totalorder %s18, 11
      %p36 = por %p34, %p35
      %p38 = scmp.ne.s32.totalorder %s23, %s37
      %p39 = scmp.eq.s32.totalorder %s18, 0
      %p40 = por %p38, %p39
      %s41 = ssub.s32 %s12, %s19
      %p42 = scmp.eq.s32.totalorder %s41, 0
      %s44 = sadd.s32 %s43, 1
      %s45 = scalar_select %p42, %s43, %s44
      %p48 = pneg %p42
      %p49 = scmp.eq.s32.totalorder %s12, 11
      %p50 = por %p48, %p49
      %p51 = scmp.ne.s32.totalorder %s43, %s46
      %p52 = scmp.eq.s32.totalorder %s12, 0
      %p53 = por %p51, %p52
      %p54 = scmp.ne.s32.totalorder %s43, %s46
      %p55 = scmp.eq.s32.totalorder %s17, 11
      %p56 = por %p54, %p55
      %p57 = scmp.ne.s32.totalorder %s46, %s47
      %p58 = scmp.eq.s32.totalorder %s17, 0
      %p59 = por %p57, %p58
      %p60 = scmp.ne.s32.totalorder %s46, %s47
      %p61 = scmp.eq.s32.totalorder %s18, 11
      %p62 = por %p60, %p61
      %p64 = scmp.ne.s32.totalorder %s47, %s63
      %p65 = scmp.eq.s32.totalorder %s18, 0
      %p66 = por %p64, %p65
      %s67 = ssub.s32 %s12, %s19
      %p68 = scmp.eq.s32.totalorder %s67, 0
      %s70 = sadd.s32 %s69, 1
      %s71 = scalar_select %p68, %s69, %s70
      %p74 = pneg %p68
      %p75 = scmp.eq.s32.totalorder %s12, 11
      %p76 = por %p74, %p75
      %p77 = scmp.ne.s32.totalorder %s69, %s72
      %p78 = scmp.eq.s32.totalorder %s12, 0
      %p79 = por %p77, %p78
      %p80 = scmp.ne.s32.totalorder %s69, %s72
      %p81 = scmp.eq.s32.totalorder %s17, 11
      %p82 = por %p80, %p81
      %p83 = scmp.ne.s32.totalorder %s72, %s73
      %p84 = scmp.eq.s32.totalorder %s17, 0
      %p85 = por %p83, %p84
      %p86 = scmp.ne.s32.totalorder %s72, %s73
      %p87 = scmp.eq.s32.totalorder %s18, 11
      %p88 = por %p86, %p87
      %p90 = scmp.ne.s32.totalorder %s73, %s89
      %p91 = scmp.eq.s32.totalorder %s18, 0
      %p92 = por %p90, %p91
      %s93 = ssub.s32 %s12, %s19
      %p94 = scmp.eq.s32.totalorder %s93, 0
      %s96 = sadd.s32 %s95, 1
      %s97 = scalar_select %p94, %s95, %s96
      %p100 = pneg %p94
      %p101 = scmp.eq.s32.totalorder %s12, 11
      %p102 = por %p100, %p101
      %p103 = scmp.ne.s32.totalorder %s95, %s98
      %p104 = scmp.eq.s32.totalorder %s12, 0
      %p105 = por %p103, %p104
      %p106 = scmp.ne.s32.totalorder %s95, %s98
      %p107 = scmp.eq.s32.totalorder %s17, 11
      %p108 = por %p106, %p107
      %p109 = scmp.ne.s32.totalorder %s98, %s99
      %p110 = scmp.eq.s32.totalorder %s17, 0
      %p111 = por %p109, %p110
      %p112 = scmp.ne.s32.totalorder %s98, %s99
      %p113 = scmp.eq.s32.totalorder %s18, 11
      %p114 = por %p112, %p113
      %p116 = scmp.ne.s32.totalorder %s99, %s115
      %p117 = scmp.eq.s32.totalorder %s18, 0
      %p118 = por %p116, %p117
      %p119 = scmp.le.s32.totalorder 1, %s12
      %p120 = scmp.lt.s32.totalorder %s12, 13
      %p121 = pnand %p119, %p120
      %p122 = pneg %p121
      // Predicated region
      $region9: #{audio_vae_forward.11} parent=5 // pred_check
        _
      $region10: #{audio_vae_forward.11} parent=5 // pred_check_branch
        %124 = sbr.rel (%p121) target = $region12
      $region11: #{audio_vae_forward.11} parent=5 // pred_region
        %s125 = ssub.s32 %s12, 1
        // Predicated region
        $region13: #{audio_vae_forward.11} parent=11 // pred_check
          %p126 = pneg %p33
        $region14: #{audio_vae_forward.11} parent=11 // pred_check_branch
          %128 = sbr.rel (%p126) target = $region16
        $region15: #{audio_vae_forward.11} parent=11 // pred_region
          _
        $region16: #{audio_vae_forward.11} parent=11 // pred_fallthru
          _
      $region12: #{audio_vae_forward.11} parent=5 // pred_fallthru
        _
      %p129 = scmp.lt.s32.totalorder %s12, 12
      // Predicated region
      $region17: #{audio_vae_forward.11} parent=5 // pred_check
        %p130 = pneg %p129
      $region18: #{audio_vae_forward.11} parent=5 // pred_check_branch
        %132 = sbr.rel (%p130) target = $region20
      $region19: #{audio_vae_forward.11} parent=5 // pred_region
        // Predicated region
        $region21: #{audio_vae_forward.11} parent=19 // pred_check
          %p133 = pneg %p53
        $region22: #{audio_vae_forward.11} parent=19 // pred_check_branch
          %135 = sbr.rel (%p133) target = $region24
        $region23: #{audio_vae_forward.11} parent=19 // pred_region
          %s136 = sand.u32 %s43, 1
          %s137 = scalar_lea.sflag [#allocation3], %s136
          %s138 = sand.u32 %s43, 1
          %s139 = smul.addr %s138, 1144
          %s140 = scalar_lea.vmem [#allocation2], %s139
          %s141 = smul.u32 11, %s12
          %s143 = ssub.s32 18304, 18304
          %144 = vsyncadd %s137, %s143
          %s145 = smul.addr %s141, 128
          %s146 = scalar_lea.hbm %s1, %s145
          %s147 = sshll.u32 %s140, 4
          %s148 = int_to_ptr.vmem [resolvable:$true] %s147
          %153 = dma.hbm_to_vmem [thread:$0]  %s146, 18304, %s148, %s137, 16896, 1408, 88
        $region24: #{audio_vae_forward.11} parent=19 // pred_fallthru
          _
        // Predicated region
        $region25: #{audio_vae_forward.11} parent=19 // pred_check
          %p154 = pneg %p79
        $region26: #{audio_vae_forward.11} parent=19 // pred_check_branch
          %156 = sbr.rel (%p154) target = $region28
        $region27: #{audio_vae_forward.11} parent=19 // pred_region
          %s157 = smul.u32 11, %s12
          %p158 = scmp.lt.s32.totalorder %s157, 131
          %s159 = scalar_select %p158, %s157, 131
          %s160 = scalar_lea.vmem %s2, %s159
          %s161 = smul.u32 11, %s12
        $region28: #{audio_vae_forward.11} parent=19 // pred_fallthru
          _
      $region20: #{audio_vae_forward.11} parent=5 // pred_fallthru
        _
      %p162 = scmp.le.s32.totalorder 1, %s12
      %p163 = scmp.lt.s32.totalorder %s12, 13
      %p164 = pnand %p162, %p163
      %p165 = pneg %p164
      // Predicated region
      $region29: #{audio_vae_forward.11} parent=5 // pred_check
        _
      $region30: #{audio_vae_forward.11} parent=5 // pred_check_branch
        %167 = sbr.rel (%p164) target = $region32
      $region31: #{audio_vae_forward.11} parent=5 // pred_region
        %s168 = ssub.s32 %s12, 1
        %s169 = sand.u32 %s46, 1
        %s170 = scalar_lea.sflag [#allocation3], %s169
        %s171 = sand.u32 %s46, 1
        %s172 = smul.addr %s171, 1144
        %s173 = scalar_lea.vmem [#allocation2], %s172
        // Predicated region
        $region33: #{audio_vae_forward.11} parent=31 // pred_check
          %p174 = pneg %p59
        $region34: #{audio_vae_forward.11} parent=31 // pred_check_branch
          %176 = sbr.rel (%p174) target = $region36
        $region35: #{audio_vae_forward.11} parent=31 // pred_region
          %177 = dma.done %s170, 18304
        $region36: #{audio_vae_forward.11} parent=31 // pred_fallthru
          _
        %p178 = pneg %p33
        %p179 = pneg %p30
        %s180 = sand.u32 %s46, 1
        %s181 = scalar_lea.sflag [#allocation3], %s180
        %s182 = sand.u32 %s46, 1
        %s183 = smul.addr %s182, 1144
        %s184 = scalar_lea.vmem [#allocation2], %s183
        %p185 = pneg %p59
        %p186 = pneg %p56
        %s187 = smul.u32 11, %s17
        %p188 = scmp.lt.s32.totalorder %s187, 131
        %s189 = scalar_select %p188, %s187, 131
        %s190 = scalar_lea.vmem %s2, %s189
        %p191 = pneg %p85
        %p192 = pneg %p82
        %p193 = pneg %p111
        %p194 = pneg %p108
        %s195 = smul.u32 11, %s17
        %p196 = scmp.lt.s32.totalorder %s195, 131
        %s197 = scalar_select %p196, %s195, 131
        %s198 = scalar_lea.vmem %s3, %s197
        %s199 = smul.u32 11, %s17
        %s200 = smul.u32 11, %s17
        %p201 = scmp.lt.s32.totalorder %s200, 131
        %s202 = scalar_select %p201, %s200, 131
        %s203 = scalar_lea.vmem %s2, %s202
        %s204 = smul.u32 11, %s17
        %s205 = smul.u32 11, %s17
        %p206 = scmp.lt.s32.totalorder %s205, 131
        %s207 = scalar_select %p206, %s205, 131
        %s208 = scalar_lea.vmem %s3, %s207
        %s209 = smul.u32 11, %s17
        %v210 = vld [vmem:[%s0] sm:$0x1]
        %v211 = vld [vmem:[%s173] sm:$0xff]
        %v212 = vld [vmem:[%s173 + $0x8] sm:$0xff]
        %v213 = vld [vmem:[%s173 + $0x10] sm:$0xff]
        %v214 = vld [vmem:[%s173 + $0x18] sm:$0xff]
        %v215 = vld [vmem:[%s173 + $0x20] sm:$0xff]
        %v216 = vld [vmem:[%s173 + $0x28] sm:$0xff]
        %v217 = vld [vmem:[%s173 + $0x30] sm:$0xff]
        %v218 = vld [vmem:[%s173 + $0x38] sm:$0xff]
        %v219 = vld [vmem:[%s173 + $0x40] sm:$0xff]
        %v220 = vld [vmem:[%s173 + $0x48] sm:$0xff]
        %v221 = vld [vmem:[%s173 + $0x50] sm:$0xff]
        %v222 = vld [vmem:[%s173 + $0x58] sm:$0xff]
        %v223 = vld [vmem:[%s173 + $0x60] sm:$0xff]
        %v224 = vld [vmem:[%s173 + $0x68] sm:$0xff]
        %v225 = vld [vmem:[%s173 + $0x70] sm:$0xff]
        %v226 = vld [vmem:[%s173 + $0x78] sm:$0xff]
        %v227 = vld [vmem:[%s173 + $0x80] sm:$0xff]
        %v228 = vld [vmem:[%s173 + $0x88] sm:$0xff]
        %v229 = vld [vmem:[%s173 + $0x90] sm:$0xff]
        %v230 = vld [vmem:[%s173 + $0x98] sm:$0xff]
        %v231 = vld [vmem:[%s173 + $0xa0] sm:$0xff]
        %v232 = vld [vmem:[%s173 + $0xa8] sm:$0xff]
        %v233 = vld [vmem:[%s173 + $0xb0] sm:$0xff]
        %v234 = vld [vmem:[%s173 + $0xb8] sm:$0xff]
        %v235 = vld [vmem:[%s173 + $0xc0] sm:$0xff]
        %v236 = vld [vmem:[%s173 + $0xc8] sm:$0xff]
        %v237 = vld [vmem:[%s173 + $0xd0] sm:$0xff]
        %v238 = vld [vmem:[%s173 + $0xd8] sm:$0xff]
        %v239 = vld [vmem:[%s173 + $0xe0] sm:$0xff]
        %v240 = vld [vmem:[%s173 + $0xe8] sm:$0xff]
        %v241 = vld [vmem:[%s173 + $0xf0] sm:$0xff]
        %v242 = vld [vmem:[%s173 + $0xf8] sm:$0xff]
        %v243 = vld [vmem:[%s173 + $0x100] sm:$0xff]
        %v244 = vld [vmem:[%s173 + $0x108] sm:$0xff]
        %v245 = vld [vmem:[%s173 + $0x110] sm:$0xff]
        %v246 = vld [vmem:[%s173 + $0x118] sm:$0xff]
        %v247 = vld [vmem:[%s173 + $0x120] sm:$0xff]
        %v248 = vld [vmem:[%s173 + $0x128] sm:$0xff]
        %v249 = vld [vmem:[%s173 + $0x130] sm:$0xff]
        %v250 = vld [vmem:[%s173 + $0x138] sm:$0xff]
        %v251 = vld [vmem:[%s173 + $0x140] sm:$0xff]
        %v252 = vld [vmem:[%s173 + $0x148] sm:$0xff]
        %v253 = vld [vmem:[%s173 + $0x150] sm:$0xff]
        %v254 = vld [vmem:[%s173 + $0x158] sm:$0xff]
        %v255 = vld [vmem:[%s173 + $0x160] sm:$0xff]
        %v256 = vld [vmem:[%s173 + $0x168] sm:$0xff]
        %v257 = vld [vmem:[%s173 + $0x170] sm:$0xff]
        %v258 = vld [vmem:[%s173 + $0x178] sm:$0xff]
        %v259 = vld [vmem:[%s173 + $0x180] sm:$0xff]
        %v260 = vld [vmem:[%s173 + $0x188] sm:$0xff]
        %v261 = vld [vmem:[%s173 + $0x190] sm:$0xff]
        %v262 = vld [vmem:[%s173 + $0x198] sm:$0xff]
        %v263 = vld [vmem:[%s173 + $0x1a0] sm:$0xff]
        %v264 = vld [vmem:[%s173 + $0x1a8] sm:$0xff]
        %v265 = vld [vmem:[%s173 + $0x1b0] sm:$0xff]
        %v266 = vld [vmem:[%s173 + $0x1b8] sm:$0xff]
        %v267 = vld [vmem:[%s173 + $0x1c0] sm:$0xff]
        %v268 = vld [vmem:[%s173 + $0x1c8] sm:$0xff]
        %v269 = vld [vmem:[%s173 + $0x1d0] sm:$0xff]
        %v270 = vld [vmem:[%s173 + $0x1d8] sm:$0xff]
        %v271 = vld [vmem:[%s173 + $0x1e0] sm:$0xff]
        %v272 = vld [vmem:[%s173 + $0x1e8] sm:$0xff]
        %v273 = vld [vmem:[%s173 + $0x1f0] sm:$0xff]
        %v274 = vld [vmem:[%s173 + $0x1f8] sm:$0xff]
        %v275 = vld [vmem:[%s173 + $0x200] sm:$0xff]
        %v276 = vld [vmem:[%s173 + $0x208] sm:$0xff]
        %v277 = vld [vmem:[%s173 + $0x210] sm:$0xff]
        %v278 = vld [vmem:[%s173 + $0x218] sm:$0xff]
        %v279 = vld [vmem:[%s173 + $0x220] sm:$0xff]
        %v280 = vld [vmem:[%s173 + $0x228] sm:$0xff]
        %v281 = vld [vmem:[%s173 + $0x230] sm:$0xff]
        %v282 = vld [vmem:[%s173 + $0x238] sm:$0xff]
        %v283 = vld [vmem:[%s173 + $0x240] sm:$0xff]
        %v284 = vld [vmem:[%s173 + $0x248] sm:$0xff]
        %v285 = vld [vmem:[%s173 + $0x250] sm:$0xff]
        %v286 = vld [vmem:[%s173 + $0x258] sm:$0xff]
        %v287 = vld [vmem:[%s173 + $0x260] sm:$0xff]
        %v288 = vld [vmem:[%s173 + $0x268] sm:$0xff]
        %v289 = vld [vmem:[%s173 + $0x270] sm:$0xff]
        %v290 = vld [vmem:[%s173 + $0x278] sm:$0xff]
        %v291 = vld [vmem:[%s173 + $0x280] sm:$0xff]
        %v292 = vld [vmem:[%s173 + $0x288] sm:$0xff]
        %v293 = vld [vmem:[%s173 + $0x290] sm:$0xff]
        %v294 = vld [vmem:[%s173 + $0x298] sm:$0xff]
        %v295 = vld [vmem:[%s173 + $0x2a0] sm:$0xff]
        %v296 = vld [vmem:[%s173 + $0x2a8] sm:$0xff]
        %v297 = vld [vmem:[%s173 + $0x2b0] sm:$0xff]
        %v298 = vld [vmem:[%s173 + $0x2b8] sm:$0xff]
        %v299 = vld [vmem:[%s173 + $0x2c0] sm:$0xff]
        %v300 = vld [vmem:[%s173 + $0x2c8] sm:$0xff]
        %v301 = vld [vmem:[%s173 + $0x2d0] sm:$0xff]
        %v302 = vld [vmem:[%s173 + $0x2d8] sm:$0xff]
        %v303 = vld [vmem:[%s173 + $0x2e0] sm:$0xff]
        %v304 = vld [vmem:[%s173 + $0x2e8] sm:$0xff]
        %v305 = vld [vmem:[%s173 + $0x2f0] sm:$0xff]
        %v306 = vld [vmem:[%s173 + $0x2f8] sm:$0xff]
        %v307 = vld [vmem:[%s173 + $0x300] sm:$0xff]
        %v308 = vld [vmem:[%s173 + $0x308] sm:$0xff]
        %v309 = vld [vmem:[%s173 + $0x310] sm:$0xff]
        %v310 = vld [vmem:[%s173 + $0x318] sm:$0xff]
        %v311 = vld [vmem:[%s173 + $0x320] sm:$0xff]
        %v312 = vld [vmem:[%s173 + $0x328] sm:$0xff]
        %v313 = vld [vmem:[%s173 + $0x330] sm:$0xff]
        %v314 = vld [vmem:[%s173 + $0x338] sm:$0xff]
        %v315 = vld [vmem:[%s173 + $0x340] sm:$0xff]
        %v316 = vld [vmem:[%s173 + $0x348] sm:$0xff]
        %v317 = vld [vmem:[%s173 + $0x350] sm:$0xff]
        %v318 = vld [vmem:[%s173 + $0x358] sm:$0xff]
        %v319 = vld [vmem:[%s173 + $0x360] sm:$0xff]
        %v320 = vld [vmem:[%s173 + $0x368] sm:$0xff]
        %v321 = vld [vmem:[%s173 + $0x370] sm:$0xff]
        %v322 = vld [vmem:[%s173 + $0x378] sm:$0xff]
        %v323 = vld [vmem:[%s173 + $0x380] sm:$0xff]
        %v324 = vld [vmem:[%s173 + $0x388] sm:$0xff]
        %v325 = vld [vmem:[%s173 + $0x390] sm:$0xff]
        %v326 = vld [vmem:[%s173 + $0x398] sm:$0xff]
        %v327 = vld [vmem:[%s173 + $0x3a0] sm:$0xff]
        %v328 = vld [vmem:[%s173 + $0x3a8] sm:$0xff]
        %v329 = vld [vmem:[%s173 + $0x3b0] sm:$0xff]
        %v330 = vld [vmem:[%s173 + $0x3b8] sm:$0xff]
        %v331 = vld [vmem:[%s173 + $0x3c0] sm:$0xff]
        %v332 = vld [vmem:[%s173 + $0x3c8] sm:$0xff]
        %v333 = vld [vmem:[%s173 + $0x3d0] sm:$0xff]
        %v334 = vld [vmem:[%s173 + $0x3d8] sm:$0xff]
        %v335 = vld [vmem:[%s173 + $0x3e0] sm:$0xff]
        %v336 = vld [vmem:[%s173 + $0x3e8] sm:$0xff]
        %v337 = vld [vmem:[%s173 + $0x3f0] sm:$0xff]
        %v338 = vld [vmem:[%s173 + $0x3f8] sm:$0xff]
        %v339 = vld [vmem:[%s173 + $0x400] sm:$0xff]
        %v340 = vld [vmem:[%s173 + $0x408] sm:$0xff]
        %v341 = vld [vmem:[%s173 + $0x410] sm:$0xff]
        %v342 = vld [vmem:[%s173 + $0x418] sm:$0xff]
        %v343 = vld [vmem:[%s173 + $0x420] sm:$0xf]
        %v344 = vld [vmem:[%s173 + $0x428] sm:$0xf]
        %v345 = vld [vmem:[%s173 + $0x430] sm:$0xf]
        %v346 = vld [vmem:[%s173 + $0x438] sm:$0xf]
        %v347 = vld [vmem:[%s173 + $0x440] sm:$0xf]
        %v348 = vld [vmem:[%s173 + $0x448] sm:$0xf]
        %v349 = vld [vmem:[%s173 + $0x450] sm:$0xf]
        %v350 = vld [vmem:[%s173 + $0x458] sm:$0xf]
        %v351 = vld [vmem:[%s173 + $0x460] sm:$0xf]
        %v352 = vld [vmem:[%s173 + $0x468] sm:$0xf]
        %v353 = vld [vmem:[%s173 + $0x470] sm:$0xf]
        %v354 = vld [vmem:[%s203] sm:$0xff]
        %v355 = vld [vmem:[%s203 + $0x8] sm:$0x7]
        %v358 = vlaneseq
        %v359 = vshrl.u32 %v358, 7
        %v360 = vsub.s32 0, %v359
        %v361 = vrot.slane %v354, %v360
        %v362 = vlaneseq
        %v363 = vshrl.u32 %v362, 7
        %v364 = vsub.s32 1, %v363
        %v365 = vrot.slane %v354, %v364
        %v366 = vlaneseq
        %v367 = vshrl.u32 %v366, 7
        %v368 = vsub.s32 2, %v367
        %v369 = vrot.slane %v354, %v368
        %v370 = vlaneseq
        %v371 = vshrl.u32 %v370, 7
        %v372 = vsub.s32 3, %v371
        %v373 = vrot.slane %v354, %v372
        %v374 = vlaneseq
        %v375 = vshrl.u32 %v374, 7
        %v376 = vsub.s32 4, %v375
        %v377 = vrot.slane %v354, %v376
        %v378 = vlaneseq
        %v379 = vshrl.u32 %v378, 7
        %v380 = vsub.s32 5, %v379
        %v381 = vrot.slane %v354, %v380
        %v382 = vlaneseq
        %v383 = vshrl.u32 %v382, 7
        %v384 = vsub.s32 6, %v383
        %v385 = vrot.slane %v354, %v384
        %v386 = vlaneseq
        %v387 = vshrl.u32 %v386, 7
        %v388 = vsub.s32 7, %v387
        %v389 = vrot.slane %v354, %v388
        %v390 = vlaneseq
        %v391 = vshrl.u32 %v390, 7
        %v392 = vsub.s32 0, %v391
        %v393 = vrot.slane %v355, %v392
        %v394 = vlaneseq
        %v395 = vshrl.u32 %v394, 7
        %v396 = vsub.s32 1, %v395
        %v397 = vrot.slane %v355, %v396
        %v398 = vlaneseq
        %v399 = vshrl.u32 %v398, 7
        %v400 = vsub.s32 2, %v399
        %v401 = vrot.slane %v355, %v400
        %vm413 = vcmask 818176
        %v415 = vsel %vm413, %v210, 0
        %vm417 = vcmask 1043456
        %v419 = vsel %vm417, %v343, 0
        %v422 = vsel %vm417, %v344, 0
        %v425 = vsel %vm417, %v345, 0
        %v428 = vsel %vm417, %v346, 0
        %v431 = vsel %vm417, %v347, 0
        %v434 = vsel %vm417, %v348, 0
        %v437 = vsel %vm417, %v349, 0
        %v440 = vsel %vm417, %v350, 0
        %v443 = vsel %vm417, %v351, 0
        %v446 = vsel %vm417, %v352, 0
        %v449 = vsel %vm417, %v353, 0
        %451 = vmatprep.subr.mxu0 %v212
        %452 = vmatpush1.msra.mxu0 %v211
        %453 = vmatprep.subr.mxu0 %v223
        %454 = vmatpush1.msra.mxu0 %v222
        %455 = vmatprep.subr.mxu0 %v234
        %456 = vmatpush1.msra.mxu0 %v233
        %457 = vmatprep.subr.mxu0 %v245
        %458 = vmatpush1.msra.mxu0 %v244
        %459 = vmatprep.subr.mxu0 %v256
        %460 = vmatpush1.msra.mxu0 %v255
        %461 = vmatprep.subr.mxu0 %v267
        %462 = vmatpush1.msra.mxu0 %v266
        %463 = vmatprep.subr.mxu0 %v278
        %464 = vmatpush1.msra.mxu0 %v277
        %465 = vmatprep.subr.mxu0 %v289
        %466 = vmatpush1.msra.mxu0 %v288
        %467 = vmatprep.subr.mxu0 %v300
        %468 = vmatpush1.msra.mxu0 %v299
        %469 = vmatprep.subr.mxu0 %v311
        %470 = vmatpush1.msra.mxu0 %v310
        %471 = vmatprep.subr.mxu0 %v322
        %472 = vmatpush1.msra.mxu0 %v321
        %473 = vmatprep.subr.mxu0 %v333
        %474 = vmatpush1.msra.mxu0 %v332
        %475 = vmatprep.subr.mxu0 %v422
        %476 = vmatpush1.msra.mxu0 %v419
        %477 = vmatprep.subr.mxu0 0.0
        %478 = vmatpush1.msra.mxu0 0.0
        %479 = vmatprep.subr.mxu0 0.0
        %480 = vmatpush1.msra.mxu0 0.0
        %481 = vmatprep.subr.mxu0 0.0
        %482 = vmatpush1.msra.mxu0 0.0
        %483 = vmatprep.subr.mxu0 0.0
        %484 = vmatpush1.msra.mxu0 0.0
        %485 = vmatprep.subr.mxu0 0.0
        %486 = vmatpush1.msra.mxu0 0.0
        %487 = vmatprep.subr.mxu0 0.0
        %488 = vmatpush1.msra.mxu0 0.0
        %489 = vmatprep.subr.mxu0 0.0
        %490 = vmatpush1.msra.mxu0 0.0
        %491 = vmatprep.subr.mxu0 0.0
        %492 = vmatpush1.msra.mxu0 0.0
        %493 = vmatprep.subr.mxu0 0.0
        %494 = vmatpush1.msra.mxu0 0.0
        %495 = vmatprep.subr.mxu0 0.0
        %496 = vmatpush1.msra.mxu0 0.0
        %497 = vmatprep.subr.mxu0 0.0
        %498 = vmatpush1.msra.mxu0 0.0
        %499 = vmatprep.subr.mxu0 0.0
        %500 = vmatpush1.msra.mxu0 0.0
        %501 = vmatprep.subr.mxu0 0.0
        %502 = vmatpush1.msra.mxu0 0.0
        %503 = vmatprep.subr.mxu0 0.0
        %504 = vmatpush1.msra.mxu0 0.0
        %505 = vmatprep.subr.mxu0 0.0
        %506 = vmatpush1.msra.mxu0 0.0
        %507 = vmatprep.subr.mxu0 0.0
        %508 = vmatpush1.msra.mxu0 0.0
        %509 = vmatprep.subr.mxu0 0.0
        %510 = vmatpush1.msra.mxu0 0.0
        %511 = vmatprep.subr.mxu0 0.0
        %512 = vmatpush1.msra.mxu0 0.0
        %513 = vmatprep.subr.mxu0 0.0
        %514 = vmatpush1.msra.mxu0 0.0
        %515 = vmatprep.mubr.f32.mxu0 0.0
        %516 = vmatmul.mubr.f32.gmra.mrb[0].mxu0 %v415
        %v517 = vpop.f32.mrb[0].mxu0
        %v518 = vadd.f32 %v361, %v517
        %v519 = vpop.f32.mrb[0].mxu0
        %v520 = vadd.f32 %v365, %v519
        %521 = vdwg.mxu0
        %522 = vmatprep.subr.mxu0 %v214
        %523 = vmatpush1.msra.mxu0 %v213
        %524 = vmatprep.subr.mxu0 %v225
        %525 = vmatpush1.msra.mxu0 %v224
        %526 = vmatprep.subr.mxu0 %v236
        %527 = vmatpush1.msra.mxu0 %v235
        %528 = vmatprep.subr.mxu0 %v247
        %529 = vmatpush1.msra.mxu0 %v246
        %530 = vmatprep.subr.mxu0 %v258
        %531 = vmatpush1.msra.mxu0 %v257
        %532 = vmatprep.subr.mxu0 %v269
        %533 = vmatpush1.msra.mxu0 %v268
        %534 = vmatprep.subr.mxu0 %v280
        %535 = vmatpush1.msra.mxu0 %v279
        %536 = vmatprep.subr.mxu0 %v291
        %537 = vmatpush1.msra.mxu0 %v290
        %538 = vmatprep.subr.mxu0 %v302
        %539 = vmatpush1.msra.mxu0 %v301
        %540 = vmatprep.subr.mxu0 %v313
        %541 = vmatpush1.msra.mxu0 %v312
        %542 = vmatprep.subr.mxu0 %v324
        %543 = vmatpush1.msra.mxu0 %v323
        %544 = vmatprep.subr.mxu0 %v335
        %545 = vmatpush1.msra.mxu0 %v334
        %546 = vmatprep.subr.mxu0 %v428
        %547 = vmatpush1.msra.mxu0 %v425
        %548 = vmatprep.subr.mxu0 0.0
        %549 = vmatpush1.msra.mxu0 0.0
        %550 = vmatprep.subr.mxu0 0.0
        %551 = vmatpush1.msra.mxu0 0.0
        %552 = vmatprep.subr.mxu0 0.0
        %553 = vmatpush1.msra.mxu0 0.0
        %554 = vmatprep.subr.mxu0 0.0
        %555 = vmatpush1.msra.mxu0 0.0
        %556 = vmatprep.subr.mxu0 0.0
        %557 = vmatpush1.msra.mxu0 0.0
        %558 = vmatprep.subr.mxu0 0.0
        %559 = vmatpush1.msra.mxu0 0.0
        %560 = vmatprep.subr.mxu0 0.0
        %561 = vmatpush1.msra.mxu0 0.0
        %562 = vmatprep.subr.mxu0 0.0
        %563 = vmatpush1.msra.mxu0 0.0
        %564 = vmatprep.subr.mxu0 0.0
        %565 = vmatpush1.msra.mxu0 0.0
        %566 = vmatprep.subr.mxu0 0.0
        %567 = vmatpush1.msra.mxu0 0.0
        %568 = vmatprep.subr.mxu0 0.0
        %569 = vmatpush1.msra.mxu0 0.0
        %570 = vmatprep.subr.mxu0 0.0
        %571 = vmatpush1.msra.mxu0 0.0
        %572 = vmatprep.subr.mxu0 0.0
        %573 = vmatpush1.msra.mxu0 0.0
        %574 = vmatprep.subr.mxu0 0.0
        %575 = vmatpush1.msra.mxu0 0.0
        %576 = vmatprep.subr.mxu0 0.0
        %577 = vmatpush1.msra.mxu0 0.0
        %578 = vmatprep.subr.mxu0 0.0
        %579 = vmatpush1.msra.mxu0 0.0
        %580 = vmatprep.subr.mxu0 0.0
        %581 = vmatpush1.msra.mxu0 0.0
        %582 = vmatprep.subr.mxu0 0.0
        %583 = vmatpush1.msra.mxu0 0.0
        %584 = vmatprep.subr.mxu0 0.0
        %585 = vmatpush1.msra.mxu0 0.0
        %586 = vmatprep.mubr.f32.mxu0 0.0
        %587 = vmatmul.mubr.f32.gmra.mrb[0].mxu0 %v415
        %v588 = vpop.f32.mrb[0].mxu0
        %v589 = vadd.f32 %v369, %v588
        %v590 = vpop.f32.mrb[0].mxu0
        %v591 = vadd.f32 %v373, %v590
        %592 = vdwg.mxu0
        %593 = vmatprep.subr.mxu0 %v216
        %594 = vmatpush1.msra.mxu0 %v215
        %595 = vmatprep.subr.mxu0 %v227
        %596 = vmatpush1.msra.mxu0 %v226
        %597 = vmatprep.subr.mxu0 %v238
        %598 = vmatpush1.msra.mxu0 %v237
        %599 = vmatprep.subr.mxu0 %v249
        %600 = vmatpush1.msra.mxu0 %v248
        %601 = vmatprep.subr.mxu0 %v260
        %602 = vmatpush1.msra.mxu0 %v259
        %603 = vmatprep.subr.mxu0 %v271
        %604 = vmatpush1.msra.mxu0 %v270
        %605 = vmatprep.subr.mxu0 %v282
        %606 = vmatpush1.msra.mxu0 %v281
        %607 = vmatprep.subr.mxu0 %v293
        %608 = vmatpush1.msra.mxu0 %v292
        %609 = vmatprep.subr.mxu0 %v304
        %610 = vmatpush1.msra.mxu0 %v303
        %611 = vmatprep.subr.mxu0 %v315
        %612 = vmatpush1.msra.mxu0 %v314
        %613 = vmatprep.subr.mxu0 %v326
        %614 = vmatpush1.msra.mxu0 %v325
        %615 = vmatprep.subr.mxu0 %v337
        %616 = vmatpush1.msra.mxu0 %v336
        %617 = vmatprep.subr.mxu0 %v434
        %618 = vmatpush1.msra.mxu0 %v431
        %619 = vmatprep.subr.mxu0 0.0
        %620 = vmatpush1.msra.mxu0 0.0
        %621 = vmatprep.subr.mxu0 0.0
        %622 = vmatpush1.msra.mxu0 0.0
        %623 = vmatprep.subr.mxu0 0.0
        %624 = vmatpush1.msra.mxu0 0.0
        %625 = vmatprep.subr.mxu0 0.0
        %626 = vmatpush1.msra.mxu0 0.0
        %627 = vmatprep.subr.mxu0 0.0
        %628 = vmatpush1.msra.mxu0 0.0
        %629 = vmatprep.subr.mxu0 0.0
        %630 = vmatpush1.msra.mxu0 0.0
        %631 = vmatprep.subr.mxu0 0.0
        %632 = vmatpush1.msra.mxu0 0.0
        %633 = vmatprep.subr.mxu0 0.0
        %634 = vmatpush1.msra.mxu0 0.0
        %635 = vmatprep.subr.mxu0 0.0
        %636 = vmatpush1.msra.mxu0 0.0
        %637 = vmatprep.subr.mxu0 0.0
        %638 = vmatpush1.msra.mxu0 0.0
        %639 = vmatprep.subr.mxu0 0.0
        %640 = vmatpush1.msra.mxu0 0.0
        %641 = vmatprep.subr.mxu0 0.0
        %642 = vmatpush1.msra.mxu0 0.0
        %643 = vmatprep.subr.mxu0 0.0
        %644 = vmatpush1.msra.mxu0 0.0
        %645 = vmatprep.subr.mxu0 0.0
        %646 = vmatpush1.msra.mxu0 0.0
        %647 = vmatprep.subr.mxu0 0.0
        %648 = vmatpush1.msra.mxu0 0.0
        %649 = vmatprep.subr.mxu0 0.0
        %650 = vmatpush1.msra.mxu0 0.0
        %651 = vmatprep.subr.mxu0 0.0
        %652 = vmatpush1.msra.mxu0 0.0
        %653 = vmatprep.subr.mxu0 0.0
        %654 = vmatpush1.msra.mxu0 0.0
        %655 = vmatprep.subr.mxu0 0.0
        %656 = vmatpush1.msra.mxu0 0.0
        %657 = vmatprep.mubr.f32.mxu0 0.0
        %658 = vmatmul.mubr.f32.gmra.mrb[0].mxu0 %v415
        %v659 = vpop.f32.mrb[0].mxu0
        %v660 = vadd.f32 %v377, %v659
        %v661 = vpop.f32.mrb[0].mxu0
        %v662 = vadd.f32 %v381, %v661
        %663 = vdwg.mxu0
        %664 = vmatprep.subr.mxu0 %v218
        %665 = vmatpush1.msra.mxu0 %v217
        %666 = vmatprep.subr.mxu0 %v229
        %667 = vmatpush1.msra.mxu0 %v228
        %668 = vmatprep.subr.mxu0 %v240
        %669 = vmatpush1.msra.mxu0 %v239
        %670 = vmatprep.subr.mxu0 %v251
        %671 = vmatpush1.msra.mxu0 %v250
        %672 = vmatprep.subr.mxu0 %v262
        %673 = vmatpush1.msra.mxu0 %v261
        %674 = vmatprep.subr.mxu0 %v273
        %675 = vmatpush1.msra.mxu0 %v272
        %676 = vmatprep.subr.mxu0 %v284
        %677 = vmatpush1.msra.mxu0 %v283
        %678 = vmatprep.subr.mxu0 %v295
        %679 = vmatpush1.msra.mxu0 %v294
        %680 = vmatprep.subr.mxu0 %v306
        %681 = vmatpush1.msra.mxu0 %v305
        %682 = vmatprep.subr.mxu0 %v317
        %683 = vmatpush1.msra.mxu0 %v316
        %684 = vmatprep.subr.mxu0 %v328
        %685 = vmatpush1.msra.mxu0 %v327
        %686 = vmatprep.subr.mxu0 %v339
        %687 = vmatpush1.msra.mxu0 %v338
        %688 = vmatprep.subr.mxu0 %v440
        %689 = vmatpush1.msra.mxu0 %v437
        %690 = vmatprep.subr.mxu0 0.0
        %691 = vmatpush1.msra.mxu0 0.0
        %692 = vmatprep.subr.mxu0 0.0
        %693 = vmatpush1.msra.mxu0 0.0
        %694 = vmatprep.subr.mxu0 0.0
        %695 = vmatpush1.msra.mxu0 0.0
        %696 = vmatprep.subr.mxu0 0.0
        %697 = vmatpush1.msra.mxu0 0.0
        %698 = vmatprep.subr.mxu0 0.0
        %699 = vmatpush1.msra.mxu0 0.0
        %700 = vmatprep.subr.mxu0 0.0
        %701 = vmatpush1.msra.mxu0 0.0
        %702 = vmatprep.subr.mxu0 0.0
        %703 = vmatpush1.msra.mxu0 0.0
        %704 = vmatprep.subr.mxu0 0.0
        %705 = vmatpush1.msra.mxu0 0.0
        %706 = vmatprep.subr.mxu0 0.0
        %707 = vmatpush1.msra.mxu0 0.0
        %708 = vmatprep.subr.mxu0 0.0
        %709 = vmatpush1.msra.mxu0 0.0
        %710 = vmatprep.subr.mxu0 0.0
        %711 = vmatpush1.msra.mxu0 0.0
        %712 = vmatprep.subr.mxu0 0.0
        %713 = vmatpush1.msra.mxu0 0.0
        %714 = vmatprep.subr.mxu0 0.0
        %715 = vmatpush1.msra.mxu0 0.0
        %716 = vmatprep.subr.mxu0 0.0
        %717 = vmatpush1.msra.mxu0 0.0
        %718 = vmatprep.subr.mxu0 0.0
        %719 = vmatpush1.msra.mxu0 0.0
        %720 = vmatprep.subr.mxu0 0.0
        %721 = vmatpush1.msra.mxu0 0.0
        %722 = vmatprep.subr.mxu0 0.0
        %723 = vmatpush1.msra.mxu0 0.0
        %724 = vmatprep.subr.mxu0 0.0
        %725 = vmatpush1.msra.mxu0 0.0
        %726 = vmatprep.subr.mxu0 0.0
        %727 = vmatpush1.msra.mxu0 0.0
        %728 = vmatprep.mubr.f32.mxu0 0.0
        %729 = vmatmul.mubr.f32.gmra.mrb[0].mxu0 %v415
        %v730 = vpop.f32.mrb[0].mxu0
        %v731 = vadd.f32 %v385, %v730
        %v732 = vpop.f32.mrb[0].mxu0
        %v733 = vadd.f32 %v389, %v732
        %734 = vdwg.mxu0
        %735 = vmatprep.subr.mxu0 %v220
        %736 = vmatpush1.msra.mxu0 %v219
        %737 = vmatprep.subr.mxu0 %v231
        %738 = vmatpush1.msra.mxu0 %v230
        %739 = vmatprep.subr.mxu0 %v242
        %740 = vmatpush1.msra.mxu0 %v241
        %741 = vmatprep.subr.mxu0 %v253
        %742 = vmatpush1.msra.mxu0 %v252
        %743 = vmatprep.subr.mxu0 %v264
        %744 = vmatpush1.msra.mxu0 %v263
        %745 = vmatprep.subr.mxu0 %v275
        %746 = vmatpush1.msra.mxu0 %v274
        %747 = vmatprep.subr.mxu0 %v286
        %748 = vmatpush1.msra.mxu0 %v285
        %749 = vmatprep.subr.mxu0 %v297
        %750 = vmatpush1.msra.mxu0 %v296
        %751 = vmatprep.subr.mxu0 %v308
        %752 = vmatpush1.msra.mxu0 %v307
        %753 = vmatprep.subr.mxu0 %v319
        %754 = vmatpush1.msra.mxu0 %v318
        %755 = vmatprep.subr.mxu0 %v330
        %756 = vmatpush1.msra.mxu0 %v329
        %757 = vmatprep.subr.mxu0 %v341
        %758 = vmatpush1.msra.mxu0 %v340
        %759 = vmatprep.subr.mxu0 %v446
        %760 = vmatpush1.msra.mxu0 %v443
        %761 = vmatprep.subr.mxu0 0.0
        %762 = vmatpush1.msra.mxu0 0.0
        %763 = vmatprep.subr.mxu0 0.0
        %764 = vmatpush1.msra.mxu0 0.0
        %765 = vmatprep.subr.mxu0 0.0
        %766 = vmatpush1.msra.mxu0 0.0
        %767 = vmatprep.subr.mxu0 0.0
        %768 = vmatpush1.msra.mxu0 0.0
        %769 = vmatprep.subr.mxu0 0.0
        %770 = vmatpush1.msra.mxu0 0.0
        %771 = vmatprep.subr.mxu0 0.0
        %772 = vmatpush1.msra.mxu0 0.0
        %773 = vmatprep.subr.mxu0 0.0
        %774 = vmatpush1.msra.mxu0 0.0
        %775 = vmatprep.subr.mxu0 0.0
        %776 = vmatpush1.msra.mxu0 0.0
        %777 = vmatprep.subr.mxu0 0.0
        %778 = vmatpush1.msra.mxu0 0.0
        %779 = vmatprep.subr.mxu0 0.0
        %780 = vmatpush1.msra.mxu0 0.0
        %781 = vmatprep.subr.mxu0 0.0
        %782 = vmatpush1.msra.mxu0 0.0
        %783 = vmatprep.subr.mxu0 0.0
        %784 = vmatpush1.msra.mxu0 0.0
        %785 = vmatprep.subr.mxu0 0.0
        %786 = vmatpush1.msra.mxu0 0.0
        %787 = vmatprep.subr.mxu0 0.0
        %788 = vmatpush1.msra.mxu0 0.0
        %789 = vmatprep.subr.mxu0 0.0
        %790 = vmatpush1.msra.mxu0 0.0
        %791 = vmatprep.subr.mxu0 0.0
        %792 = vmatpush1.msra.mxu0 0.0
        %793 = vmatprep.subr.mxu0 0.0
        %794 = vmatpush1.msra.mxu0 0.0
        %795 = vmatprep.subr.mxu0 0.0
        %796 = vmatpush1.msra.mxu0 0.0
        %797 = vmatprep.subr.mxu0 0.0
        %798 = vmatpush1.msra.mxu0 0.0
        %799 = vmatprep.mubr.f32.mxu0 0.0
        %800 = vmatmul.mubr.f32.gmra.mrb[0].mxu0 %v415
        %v801 = vpop.f32.mrb[0].mxu0
        %v802 = vadd.f32 %v393, %v801
        %v803 = vpop.f32.mrb[0].mxu0
        %v804 = vadd.f32 %v397, %v803
        %805 = vdwg.mxu0
        %806 = vmatprep.subr.mxu0 0.0
        %807 = vmatpush1.msra.mxu0 %v221
        %808 = vmatprep.subr.mxu0 0.0
        %809 = vmatpush1.msra.mxu0 %v232
        %810 = vmatprep.subr.mxu0 0.0
        %811 = vmatpush1.msra.mxu0 %v243
        %812 = vmatprep.subr.mxu0 0.0
        %813 = vmatpush1.msra.mxu0 %v254
        %814 = vmatprep.subr.mxu0 0.0
        %815 = vmatpush1.msra.mxu0 %v265
        %816 = vmatprep.subr.mxu0 0.0
        %817 = vmatpush1.msra.mxu0 %v276
        %818 = vmatprep.subr.mxu0 0.0
        %819 = vmatpush1.msra.mxu0 %v287
        %820 = vmatprep.subr.mxu0 0.0
        %821 = vmatpush1.msra.mxu0 %v298
        %822 = vmatprep.subr.mxu0 0.0
        %823 = vmatpush1.msra.mxu0 %v309
        %824 = vmatprep.subr.mxu0 0.0
        %825 = vmatpush1.msra.mxu0 %v320
        %826 = vmatprep.subr.mxu0 0.0
        %827 = vmatpush1.msra.mxu0 %v331
        %828 = vmatprep.subr.mxu0 0.0
        %829 = vmatpush1.msra.mxu0 %v342
        %830 = vmatprep.subr.mxu0 0.0
        %831 = vmatpush1.msra.mxu0 %v449
        %832 = vmatprep.subr.mxu0 0.0
        %833 = vmatpush1.msra.mxu0 0.0
        %834 = vmatprep.subr.mxu0 0.0
        %835 = vmatpush1.msra.mxu0 0.0
        %836 = vmatprep.subr.mxu0 0.0
        %837 = vmatpush1.msra.mxu0 0.0
        %838 = vmatprep.subr.mxu0 0.0
        %839 = vmatpush1.msra.mxu0 0.0
        %840 = vmatprep.subr.mxu0 0.0
        %841 = vmatpush1.msra.mxu0 0.0
        %842 = vmatprep.subr.mxu0 0.0
        %843 = vmatpush1.msra.mxu0 0.0
        %844 = vmatprep.subr.mxu0 0.0
        %845 = vmatpush1.msra.mxu0 0.0
        %846 = vmatprep.subr.mxu0 0.0
        %847 = vmatpush1.msra.mxu0 0.0
        %848 = vmatprep.subr.mxu0 0.0
        %849 = vmatpush1.msra.mxu0 0.0
        %850 = vmatprep.subr.mxu0 0.0
        %851 = vmatpush1.msra.mxu0 0.0
        %852 = vmatprep.subr.mxu0 0.0
        %853 = vmatpush1.msra.mxu0 0.0
        %854 = vmatprep.subr.mxu0 0.0
        %855 = vmatpush1.msra.mxu0 0.0
        %856 = vmatprep.subr.mxu0 0.0
        %857 = vmatpush1.msra.mxu0 0.0
        %858 = vmatprep.subr.mxu0 0.0
        %859 = vmatpush1.msra.mxu0 0.0
        %860 = vmatprep.subr.mxu0 0.0
        %861 = vmatpush1.msra.mxu0 0.0
        %862 = vmatprep.subr.mxu0 0.0
        %863 = vmatpush1.msra.mxu0 0.0
        %864 = vmatprep.subr.mxu0 0.0
        %865 = vmatpush1.msra.mxu0 0.0
        %866 = vmatprep.subr.mxu0 0.0
        %867 = vmatpush1.msra.mxu0 0.0
        %868 = vmatprep.subr.mxu0 0.0
        %869 = vmatpush1.msra.mxu0 0.0
        %870 = vmatprep.mubr.f32.mxu0 0.0
        %871 = vmatmul.mubr.f32.gmra.mrb[0].mxu0 %v415
        %v872 = vpop.f32.mrb[0].mxu0
        %v873 = vadd.f32 %v401, %v872
        %v874 = vpop.f32.mrb[0].mxu0
        %875 = vdwg.mxu0
        %v876 = vmax.f32 %v518, 0.0
        %v877 = vmax.f32 %v520, 0.0
        %v878 = vmax.f32 %v589, 0.0
        %v879 = vmax.f32 %v591, 0.0
        %v880 = vmax.f32 %v660, 0.0
        %v881 = vmax.f32 %v662, 0.0
        %v882 = vmax.f32 %v731, 0.0
        %v883 = vmax.f32 %v733, 0.0
        %v884 = vmax.f32 %v802, 0.0
        %v885 = vmax.f32 %v804, 0.0
        %v886 = vmax.f32 %v873, 0.0
        %v898 = vcombine.low %v876, %v877
        %v899 = vcombine.low %v878, %v879
        %v900 = vcombine.low %v880, %v881
        %v901 = vcombine.low %v882, %v883
        %v903 = vunpack.c.l.s4 1966171168
        %v904 = vunpack.c.0.s8 %v903
        %v905 = vlaneseq
        %v906 = vshrl.u32 %v905, 7
        %v907 = vsub.s32 %v904, %v906
        %v908 = vrot.slane %v898, %v907
        %v910 = vunpack.c.l.s4 1966171168
        %v911 = vunpack.c.0.s8 %v910
        %v912 = vlaneseq
        %v913 = vshrl.u32 %v912, 7
        %v914 = vsub.s32 %v911, %v913
        %v915 = vrot.slane %v899, %v914
        %v917 = vunpack.c.l.s4 1966171168
        %v918 = vunpack.c.0.s8 %v917
        %v919 = vlaneseq
        %v920 = vshrl.u32 %v919, 7
        %v921 = vsub.s32 %v918, %v920
        %v922 = vrot.slane %v900, %v921
        %v924 = vunpack.c.l.s4 1966171168
        %v925 = vunpack.c.0.s8 %v924
        %v926 = vlaneseq
        %v927 = vshrl.u32 %v926, 7
        %v928 = vsub.s32 %v925, %v927
        %v929 = vrot.slane %v901, %v928
        %v930 = vcombine.low %v908, %v915
        %v931 = vcombine.low %v922, %v929
        %v933 = vunpack.c.l.s4 1966171168
        %v934 = vunpack.c.0.s8 %v933
        %v935 = vlaneseq
        %v936 = vshrl.u32 %v935, 7
        %v937 = vsub.s32 %v934, %v936
        %v938 = vrot.slane %v930, %v937
        %v940 = vunpack.c.l.s4 1966171168
        %v941 = vunpack.c.0.s8 %v940
        %v942 = vlaneseq
        %v943 = vshrl.u32 %v942, 7
        %v944 = vsub.s32 %v941, %v943
        %v945 = vrot.slane %v931, %v944
        %v946 = vcombine.low %v938, %v945
        %v947 = vcombine.low %v884, %v885
        %v949 = vunpack.c.l.s4 1966171168
        %v950 = vunpack.c.0.s8 %v949
        %v951 = vlaneseq
        %v952 = vshrl.u32 %v951, 7
        %v953 = vsub.s32 %v950, %v952
        %v954 = vrot.slane %v947, %v953
        %v956 = vunpack.c.l.s4 1966171168
        %v957 = vunpack.c.0.s8 %v956
        %v958 = vlaneseq
        %v959 = vshrl.u32 %v958, 7
        %v960 = vsub.s32 %v957, %v959
        %v961 = vrot.slane %v886, %v960
        %v962 = vcombine.low %v954, %v961
        %v964 = vunpack.c.l.s4 1966171168
        %v965 = vunpack.c.0.s8 %v964
        %v966 = vlaneseq
        %v967 = vshrl.u32 %v966, 7
        %v968 = vsub.s32 %v965, %v967
        %v969 = vrot.slane %v962, %v968
        %972 = vst [vmem:[%s208] sm:$0xff] %v946
        %v973 = vlaneseq
        %vm974 = vcmp.ge.s32.totalorder %v973, 0
        %vm975 = vcmp.lt.s32.totalorder %v973, 384
        %vm976 = vmand %vm974, %vm975
        %977 = vst.msk [vmem:[%s208 + $0x8] sm:$0x7] %vm976, %v969
        %s978 = smul.u32 11, %s17
        %p979 = scmp.lt.s32.totalorder %s978, 131
        %s980 = scalar_select %p979, %s978, 131
        %s981 = scalar_lea.vmem %s3, %s980
        // Predicated region
        $region37: #{audio_vae_forward.11} parent=31 // pred_check
          %p982 = pneg %p108
        $region38: #{audio_vae_forward.11} parent=31 // pred_check_branch
          %984 = sbr.rel (%p982) target = $region40
        $region39: #{audio_vae_forward.11} parent=31 // pred_region
          %s985 = smul.u32 11, %s17
        $region40: #{audio_vae_forward.11} parent=31 // pred_fallthru
          _
      $region32: #{audio_vae_forward.11} parent=5 // pred_fallthru
        _
      %p986 = scmp.le.s32.totalorder 2, %s12
      // Predicated region
      $region41: #{audio_vae_forward.11} parent=5 // pred_check
        %p987 = pneg %p986
      $region42: #{audio_vae_forward.11} parent=5 // pred_check_branch
        %989 = sbr.rel (%p987) target = $region44
      $region43: #{audio_vae_forward.11} parent=5 // pred_region
        %s990 = ssub.s32 %s12, 2
        // Predicated region
        $region45: #{audio_vae_forward.11} parent=43 // pred_check
          %p991 = pneg %p114
        $region46: #{audio_vae_forward.11} parent=43 // pred_check_branch
          %993 = sbr.rel (%p991) target = $region48
        $region47: #{audio_vae_forward.11} parent=43 // pred_region
          %s994 = smul.u32 11, %s18
          %p995 = scmp.lt.s32.totalorder %s994, 131
          %s996 = scalar_select %p995, %s994, 131
          %s997 = scalar_lea.vmem %s3, %s996
        $region48: #{audio_vae_forward.11} parent=43 // pred_fallthru
          _
      $region44: #{audio_vae_forward.11} parent=5 // pred_fallthru
        _
    $region6: #{audio_vae_forward.11} parent=1 // loop_footer
      %s16 = sadd.s32 1, %s12
    $region7: #{audio_vae_forward.11} parent=1 // loop_footer_branch
      %11 = sbr.rel target = $region3
    $region8: #{audio_vae_forward.11} parent=1 // loop_exit
      _
    %998 = vsyncpa [#allocation3], 1
    %s999 = scalar_lea.sflag [#allocation3], 1
    %1000 = vsyncpa %s999, 1

// kernel: closed_call.34
$region0: #{closed_call.34}
  #allocation0 [shape = 'u32[]', space=smem, size = 0x4, offset = 0x4, fixed_abs, tag = 'smem constant byte address 0x4 - core index']
  #allocation1 [shape = 'u32[144,128]{1,0:T(1,128)}', space=vmem, size = 0x12000, scoped, tag = 'internal scratch']
  #allocation2 [shape = 's32[1]{0}', space=sflag, size = 0x4, scoped, tag = 'scoped memory for closed_call.34']
  #allocation3 [shape = 'u8[512]{0}', space=smem, size = 0x200, scoped, tag = 'prefetched SMEM operand 0']
  %s0 = inlined_call_operand.vmem [shape: s32[2], index: 0, kind: input, shape index: {}]
  %s1 = inlined_call_operand.vmem [shape: bf16[1,896,384], index: 1, kind: input, shape index: {}]
  %s2 = inlined_call_operand.vmem [shape: bf16[3,16,48], index: 2, kind: input, shape index: {}]
  %s3 = inlined_call_operand.vmem [shape: f32[16,1], index: 3, kind: input, shape index: {}]
  %s4 = inlined_call_operand.vmem [shape: bf16[1,896,384], index: 4, kind: output, shape index: {}]
  %s5 = sld [smem:[#allocation0]]
  $region29: #{closed_call.34} parent=0
    _
  %s7 = ssub.s32 1, %s5
  %s8 = scalar_select 0, %s7, %s5
  %s9 = sshll.u32 %s0, 4
  %s10 = int_to_ptr.vmem [resolvable:$true] %s9
  %12 = dma.vmem_to_smem %s10, 16, [#allocation3], [#allocation2]
  %13 = dma.done [#allocation2], 16
  %14 = sfence
  // Predicated region
  $region2: #{closed_call.34} parent=0 // pred_check
    _
  $region3: #{closed_call.34} parent=0 // pred_check_branch
    %16 = sbr.rel (0) target = $region5
  $region4: #{closed_call.34} parent=0 // pred_region
    _
  $region5: #{closed_call.34} parent=0 // pred_fallthru
    _
  // Predicated region
  $region6: #{closed_call.34} parent=0 // pred_check
    _
  $region7: #{closed_call.34} parent=0 // pred_check_branch
    %18 = sbr.rel (0) target = $region9
  $region8: #{closed_call.34} parent=0 // pred_region
    _
  $region9: #{closed_call.34} parent=0 // pred_fallthru
    _
  // Predicated region
  $region10: #{closed_call.34} parent=0 // pred_check
    _
  $region11: #{closed_call.34} parent=0 // pred_check_branch
    %20 = sbr.rel (0) target = $region13
  $region12: #{closed_call.34} parent=0 // pred_region
    _
  $region13: #{closed_call.34} parent=0 // pred_fallthru
    _
  %s22 = sld [smem:[#allocation3]]
  %s23 = sld [smem:[#allocation3 + $0x1]]
  %v24 = vld [vmem:[%s2] sm:$0xf]
  %v25 = vld [vmem:[%s2 + $0x4] sm:$0xf]
  %s26 = scalar_lea.vmem %s2, 8
  %v27 = vld [vmem:[%s26] sm:$0xf]
  %v28 = vld [vmem:[%s26 + $0x4] sm:$0xf]
  %s29 = scalar_lea.vmem %s2, 16
  %v30 = vld [vmem:[%s29] sm:$0xf]
  %v31 = vld [vmem:[%s29 + $0x4] sm:$0xf]
  %v32 = vld [vmem:[%s3] sm:$0xff]
  %v33 = vld [vmem:[%s3 + $0x8] sm:$0xff]
  %v34 = vlaneseq
  %v35 = vand.u32 %v34, 127
  %v36 = vadd.s32 %v35, 128
  %v37 = vadd.s32 %v35, 256
  %vm38 = vcmp.ge.s32.totalorder %v35, 4
  %vm39 = vcmp.ge.s32.totalorder %v36, 4
  %vm40 = vcmp.ge.s32.totalorder %v37, 4
  %s41 = sadd.s32 %s23, 4
  %v42 = vstv %s41
  %vm43 = vcmp.lt.s32.totalorder %v35, %v42
  %vm44 = vcmp.lt.s32.totalorder %v36, %v42
  %vm45 = vcmp.lt.s32.totalorder %v37, %v42
  %vm46 = vmand %vm38, %vm43
  %vm47 = vmand %vm39, %vm44
  %vm48 = vmand %vm40, %vm45
  %49 = vst [vmem:[%s4] sm:$0xff] 0
  %50 = vst [vmem:[%s4 + $0x8] sm:$0xf] 0
  %51 = vst [vmem:[%s4 + $0xc] sm:$0xff] 0
  %52 = vst [vmem:[%s4 + $0x14] sm:$0xf] 0
  %53 = vst [vmem:[%s4 + $0x18] sm:$0xff] 0
  %54 = vst [vmem:[%s4 + $0x20] sm:$0xf] 0
  %55 = vst [vmem:[%s4 + $0x24] sm:$0xff] 0
  %56 = vst [vmem:[%s4 + $0x2c] sm:$0xf] 0
  %57 = vst [vmem:[%s4 + $0x30] sm:$0xff] 0
  %58 = vst [vmem:[%s4 + $0x38] sm:$0xf] 0
  %59 = vst [vmem:[%s4 + $0x3c] sm:$0xff] 0
  %60 = vst [vmem:[%s4 + $0x44] sm:$0xf] 0
  %61 = vst [vmem:[%s4 + $0x48] sm:$0xff] 0
  %62 = vst [vmem:[%s4 + $0x50] sm:$0xf] 0
  %63 = vst [vmem:[%s4 + $0x54] sm:$0xff] 0
  %64 = vst [vmem:[%s4 + $0x5c] sm:$0xf] 0
  %s65 = sadd.s32 %s22, 4
  %s66 = smul.u32 %s65, 16
  %s67 = sshra.s32 %s66, 3
  %s68 = sand.u32 %s66, 7
  %s69 = smul.u32 %s67, 3
  %s70 = smul.addr %s69, 4
  %s71 = scalar_lea.vmem %s4, %s70
  %72 = vst [vmem:[%s71] sm:$0xff] 0
  %73 = vst [vmem:[%s71 + $0x8] sm:$0xf] 0
  %74 = vst [vmem:[%s71 + $0xc] sm:$0xff] 0
  %75 = vst [vmem:[%s71 + $0x14] sm:$0xf] 0
  %76 = vst [vmem:[%s71 + $0x18] sm:$0xff] 0
  %77 = vst [vmem:[%s71 + $0x20] sm:$0xf] 0
  %78 = vst [vmem:[%s71 + $0x24] sm:$0xff] 0
  %79 = vst [vmem:[%s71 + $0x2c] sm:$0xf] 0
  %80 = vst [vmem:[%s71 + $0x30] sm:$0xff] 0
  %81 = vst [vmem:[%s71 + $0x38] sm:$0xf] 0
  %82 = vst [vmem:[%s71 + $0x3c] sm:$0xff] 0
  %83 = vst [vmem:[%s71 + $0x44] sm:$0xf] 0
  %84 = vst [vmem:[%s71 + $0x48] sm:$0xff] 0
  %85 = vst [vmem:[%s71 + $0x50] sm:$0xf] 0
  %86 = vst [vmem:[%s71 + $0x54] sm:$0xff] 0
  %87 = vst [vmem:[%s71 + $0x5c] sm:$0xf] 0
  // While loop
  $region14: #{closed_call.34} parent=0 // loop_pre_header
    _
  $region15: #{closed_call.34} parent=0 // loop_header
    %s89 = sphi 0, %s91
    %p90 = scmp.ge.s32.totalorder %s89, %s22
  $region16: #{closed_call.34} parent=0 // loop_header_branch
    %93 = sbr.rel (%p90) target = $region20
  $region17: #{closed_call.34} parent=0 // loop_body
    %s94 = sadd.s32 %s89, 4
    %s95 = sadd.s32 %s89, 2
    %s96 = smul.u32 %s95, 16
    %s97 = sshra.s32 %s96, 3
    %s98 = sand.u32 %s96, 7
    %s99 = smul.u32 %s97, 3
    %s100 = smul.addr %s99, 4
    %s101 = scalar_lea.vmem %s1, %s100
    %v102 = vld [vmem:[%s101] sm:$0xff]
    %v103 = vld [vmem:[%s101 + $0x8] sm:$0xf]
    %v104 = vld [vmem:[%s101 + $0xc] sm:$0xff]
    %v105 = vld [vmem:[%s101 + $0x14] sm:$0xf]
    %v106 = vld [vmem:[%s101 + $0x18] sm:$0xff]
    %v107 = vld [vmem:[%s101 + $0x20] sm:$0xf]
    %v108 = vld [vmem:[%s101 + $0x24] sm:$0xff]
    %v109 = vld [vmem:[%s101 + $0x2c] sm:$0xf]
    %v110 = vld [vmem:[%s101 + $0x30] sm:$0xff]
    %v111 = vld [vmem:[%s101 + $0x38] sm:$0xf]
    %v112 = vld [vmem:[%s101 + $0x3c] sm:$0xff]
    %v113 = vld [vmem:[%s101 + $0x44] sm:$0xf]
    %v116 = vunpack.c.l.b16 %v24
    %v117 = vunpack.c.l.b16 %v25
    %v118 = vpack.c.b16 %v117, %v116
    %v131 = vunpack.c.l.b16 %v102
    %v132 = vunpack.c.h.b16 %v102
    %v133 = vunpack.c.l.b16 %v103
    %v134 = vunpack.c.l.b16 %v104
    %v135 = vunpack.c.h.b16 %v104
    %v136 = vunpack.c.l.b16 %v105
    %v137 = vunpack.c.l.b16 %v106
    %v138 = vunpack.c.h.b16 %v106
    %v139 = vunpack.c.l.b16 %v107
    %v140 = vunpack.c.l.b16 %v108
    %v141 = vunpack.c.h.b16 %v108
    %v142 = vunpack.c.l.b16 %v109
    %v143 = vunpack.c.l.b16 %v110
    %v144 = vunpack.c.h.b16 %v110
    %v145 = vunpack.c.l.b16 %v111
    %v146 = vunpack.c.l.b16 %v112
    %v147 = vunpack.c.h.b16 %v112
    %v148 = vunpack.c.l.b16 %v113
    %v149 = vpack.c.b16 %v134, %v131
    %v150 = vpack.c.b16 %v135, %v132
    %v151 = vpack.c.b16 %v136, %v133
    %v152 = vpack.c.b16 %v140, %v137
    %v153 = vpack.c.b16 %v141, %v138
    %v154 = vpack.c.b16 %v142, %v139
    %v155 = vpack.c.b16 %v146, %v143
    %v156 = vpack.c.b16 %v147, %v144
    %v157 = vpack.c.b16 %v148, %v145
    %vm167 = vcmask 392192
    %v169 = vsel %vm167, %v118, 0
    %171 = vmatprep.subr.bf16.mxu0 %v150
    %172 = vmatpush1.bf16.msra.mxu0 %v149
    %173 = vmatprep.subr.bf16.mxu0 %v153
    %174 = vmatpush1.bf16.msra.mxu0 %v152
    %175 = vmatprep.subr.bf16.mxu0 %v156
    %176 = vmatpush1.bf16.msra.mxu0 %v155
    %177 = vmatprep.subr.bf16.mxu0 0
    %178 = vmatpush1.bf16.msra.mxu0 0
    %179 = vmatprep.subr.bf16.mxu0 0
    %180 = vmatpush1.bf16.msra.mxu0 0
    %181 = vmatprep.subr.bf16.mxu0 0
    %182 = vmatpush1.bf16.msra.mxu0 0
    %183 = vmatprep.subr.bf16.mxu0 0
    %184 = vmatpush1.bf16.msra.mxu0 0
    %185 = vmatprep.subr.bf16.mxu0 0
    %186 = vmatpush1.bf16.msra.mxu0 0
    %187 = vmatprep.subr.bf16.mxu0 0
    %188 = vmatpush1.bf16.msra.mxu0 0
    %189 = vmatprep.subr.bf16.mxu0 0
    %190 = vmatpush1.bf16.msra.mxu0 0
    %191 = vmatprep.subr.bf16.mxu0 0
    %192 = vmatpush1.bf16.msra.mxu0 0
    %193 = vmatprep.subr.bf16.mxu0 0
    %194 = vmatpush1.bf16.msra.mxu0 0
    %195 = vmatprep.subr.bf16.mxu0 0
    %196 = vmatpush1.bf16.msra.mxu0 0
    %197 = vmatprep.subr.bf16.mxu0 0
    %198 = vmatpush1.bf16.msra.mxu0 0
    %199 = vmatprep.subr.bf16.mxu0 0
    %200 = vmatpush1.bf16.msra.mxu0 0
    %201 = vmatprep.subr.bf16.mxu0 0
    %202 = vmatpush1.bf16.msra.mxu0 0
    %203 = vmatprep.mubr.bf16.mxu0 0
    %204 = vmatmul.mubr.bf16.gmra.mrb[0].mxu0 %v169
    %v205 = vpop.f32.mrb[0].mxu0
    %v206 = vadd.f32 0.0, %v205
    %v207 = vpop.f32.mrb[0].mxu0
    %v208 = vadd.f32 0.0, %v207
    %v209 = vpop.f32.mrb[0].mxu0
    %v210 = vadd.f32 0.0, %v209
    %v211 = vpop.f32.mrb[0].mxu0
    %v212 = vadd.f32 0.0, %v211
    %213 = vdwg.mxu0
    %214 = vmatprep.subr.bf16.mxu0 0
    %215 = vmatpush1.bf16.msra.mxu0 %v151
    %216 = vmatprep.subr.bf16.mxu0 0
    %217 = vmatpush1.bf16.msra.mxu0 %v154
    %218 = vmatprep.subr.bf16.mxu0 0
    %219 = vmatpush1.bf16.msra.mxu0 %v157
    %220 = vmatprep.subr.bf16.mxu0 0
    %221 = vmatpush1.bf16.msra.mxu0 0
    %222 = vmatprep.subr.bf16.mxu0 0
    %223 = vmatpush1.bf16.msra.mxu0 0
    %224 = vmatprep.subr.bf16.mxu0 0
    %225 = vmatpush1.bf16.msra.mxu0 0
    %226 = vmatprep.subr.bf16.mxu0 0
    %227 = vmatpush1.bf16.msra.mxu0 0
    %228 = vmatprep.subr.bf16.mxu0 0
    %229 = vmatpush1.bf16.msra.mxu0 0
    %230 = vmatprep.subr.bf16.mxu0 0
    %231 = vmatpush1.bf16.msra.mxu0 0
    %232 = vmatprep.subr.bf16.mxu0 0
    %233 = vmatpush1.bf16.msra.mxu0 0
    %234 = vmatprep.subr.bf16.mxu0 0
    %235 = vmatpush1.bf16.msra.mxu0 0
    %236 = vmatprep.subr.bf16.mxu0 0
    %237 = vmatpush1.bf16.msra.mxu0 0
    %238 = vmatprep.subr.bf16.mxu0 0
    %239 = vmatpush1.bf16.msra.mxu0 0
    %240 = vmatprep.subr.bf16.mxu0 0
    %241 = vmatpush1.bf16.msra.mxu0 0
    %242 = vmatprep.subr.bf16.mxu0 0
    %243 = vmatpush1.bf16.msra.mxu0 0
    %244 = vmatprep.subr.bf16.mxu0 0
    %245 = vmatpush1.bf16.msra.mxu0 0
    %246 = vmatprep.mubr.bf16.mxu0 0
    %247 = vmatmul.mubr.bf16.gmra.mrb[0].mxu0 %v169
    %v248 = vpop.f32.mrb[0].mxu0
    %v249 = vadd.f32 0.0, %v248
    %v250 = vpop.f32.mrb[0].mxu0
    %v251 = vpop.f32.mrb[0].mxu0
    %v252 = vadd.f32 0.0, %v251
    %v253 = vpop.f32.mrb[0].mxu0
    %254 = vdwg.mxu0
    %255 = vrot.lane.b32.xlu0 %v206, 2
    %v256 = vpop.permute.xlu0 %255
    %257 = vrot.lane.b32.xlu0 %v210, 2
    %v258 = vpop.permute.xlu0 %257
    %259 = vrot.lane.b32.xlu0 %v208, 2
    %v260 = vpop.permute.xlu0 %259
    %261 = vrot.lane.b32.xlu0 %v212, 2
    %v262 = vpop.permute.xlu0 %261
    %263 = vrot.lane.b32.xlu0 %v249, 2
    %v264 = vpop.permute.xlu0 %263
    %265 = vrot.lane.b32.xlu0 %v252, 2
    %v266 = vpop.permute.xlu0 %265
    %vm267 = vcmp.lt.s32.totalorder %v35, 2
    %v268 = vsel %vm267, %v260, %v264
    %v269 = vsel %vm267, %v262, %v266
    %v270 = vsel %vm267, %v256, %v260
    %v271 = vsel %vm267, %v258, %v262
    %v272 = vsel %vm267, %v264, %v256
    %v273 = vsel %vm267, %v266, %v258
    %v274 = vadd.f32 %v272, 0.0
    %v275 = vadd.f32 %v270, 0.0
    %v276 = vadd.f32 %v268, 0.0
    %v277 = vadd.f32 %v273, 0.0
    %v278 = vadd.f32 %v271, 0.0
    %v279 = vadd.f32 %v269, 0.0
    %v282 = vunpack.c.l.b16 %v27
    %v283 = vunpack.c.l.b16 %v28
    %v284 = vpack.c.b16 %v283, %v282
    %v286 = vsel %vm167, %v284, 0
    %288 = vmatprep.subr.bf16.mxu0 %v150
    %289 = vmatpush1.bf16.msra.mxu0 %v149
    %290 = vmatprep.subr.bf16.mxu0 %v153
    %291 = vmatpush1.bf16.msra.mxu0 %v152
    %292 = vmatprep.subr.bf16.mxu0 %v156
    %293 = vmatpush1.bf16.msra.mxu0 %v155
    %294 = vmatprep.subr.bf16.mxu0 0
    %295 = vmatpush1.bf16.msra.mxu0 0
    %296 = vmatprep.subr.bf16.mxu0 0
    %297 = vmatpush1.bf16.msra.mxu0 0
    %298 = vmatprep.subr.bf16.mxu0 0
    %299 = vmatpush1.bf16.msra.mxu0 0
    %300 = vmatprep.subr.bf16.mxu0 0
    %301 = vmatpush1.bf16.msra.mxu0 0
    %302 = vmatprep.subr.bf16.mxu0 0
    %303 = vmatpush1.bf16.msra.mxu0 0
    %304 = vmatprep.subr.bf16.mxu0 0
    %305 = vmatpush1.bf16.msra.mxu0 0
    %306 = vmatprep.subr.bf16.mxu0 0
    %307 = vmatpush1.bf16.msra.mxu0 0
    %308 = vmatprep.subr.bf16.mxu0 0
    %309 = vmatpush1.bf16.msra.mxu0 0
    %310 = vmatprep.subr.bf16.mxu0 0
    %311 = vmatpush1.bf16.msra.mxu0 0
    %312 = vmatprep.subr.bf16.mxu0 0
    %313 = vmatpush1.bf16.msra.mxu0 0
    %314 = vmatprep.subr.bf16.mxu0 0
    %315 = vmatpush1.bf16.msra.mxu0 0
    %316 = vmatprep.subr.bf16.mxu0 0
    %317 = vmatpush1.bf16.msra.mxu0 0
    %318 = vmatprep.subr.bf16.mxu0 0
    %319 = vmatpush1.bf16.msra.mxu0 0
    %320 = vmatprep.mubr.bf16.mxu0 0
    %321 = vmatmul.mubr.bf16.gmra.mrb[0].mxu0 %v286
    %v322 = vpop.f32.mrb[0].mxu0
    %v323 = vadd.f32 0.0, %v322
    %v324 = vpop.f32.mrb[0].mxu0
    %v325 = vadd.f32 0.0, %v324
    %v326 = vpop.f32.mrb[0].mxu0
    %v327 = vadd.f32 0.0, %v326
    %v328 = vpop.f32.mrb[0].mxu0
    %v329 = vadd.f32 0.0, %v328
    %330 = vdwg.mxu0
    %331 = vmatprep.subr.bf16.mxu0 0
    %332 = vmatpush1.bf16.msra.mxu0 %v151
    %333 = vmatprep.subr.bf16.mxu0 0
    %334 = vmatpush1.bf16.msra.mxu0 %v154
    %335 = vmatprep.subr.bf16.mxu0 0
    %336 = vmatpush1.bf16.msra.mxu0 %v157
    %337 = vmatprep.subr.bf16.mxu0 0
    %338 = vmatpush1.bf16.msra.mxu0 0
    %339 = vmatprep.subr.bf16.mxu0 0
    %340 = vmatpush1.bf16.msra.mxu0 0
    %341 = vmatprep.subr.bf16.mxu0 0
    %342 = vmatpush1.bf16.msra.mxu0 0
    %343 = vmatprep.subr.bf16.mxu0 0
    %344 = vmatpush1.bf16.msra.mxu0 0
    %345 = vmatprep.subr.bf16.mxu0 0
    %346 = vmatpush1.bf16.msra.mxu0 0
    %347 = vmatprep.subr.bf16.mxu0 0
    %348 = vmatpush1.bf16.msra.mxu0 0
    %349 = vmatprep.subr.bf16.mxu0 0
    %350 = vmatpush1.bf16.msra.mxu0 0
    %351 = vmatprep.subr.bf16.mxu0 0
    %352 = vmatpush1.bf16.msra.mxu0 0
    %353 = vmatprep.subr.bf16.mxu0 0
    %354 = vmatpush1.bf16.msra.mxu0 0
    %355 = vmatprep.subr.bf16.mxu0 0
    %356 = vmatpush1.bf16.msra.mxu0 0
    %357 = vmatprep.subr.bf16.mxu0 0
    %358 = vmatpush1.bf16.msra.mxu0 0
    %359 = vmatprep.subr.bf16.mxu0 0
    %360 = vmatpush1.bf16.msra.mxu0 0
    %361 = vmatprep.subr.bf16.mxu0 0
    %362 = vmatpush1.bf16.msra.mxu0 0
    %363 = vmatprep.mubr.bf16.mxu0 0
    %364 = vmatmul.mubr.bf16.gmra.mrb[0].mxu0 %v286
    %v365 = vpop.f32.mrb[0].mxu0
    %v366 = vadd.f32 0.0, %v365
    %v367 = vpop.f32.mrb[0].mxu0
    %v368 = vpop.f32.mrb[0].mxu0
    %v369 = vadd.f32 0.0, %v368
    %v370 = vpop.f32.mrb[0].mxu0
    %371 = vdwg.mxu0
    %372 = vrot.lane.b32.xlu0 %v323, 1
    %v373 = vpop.permute.xlu0 %372
    %374 = vrot.lane.b32.xlu0 %v327, 1
    %v375 = vpop.permute.xlu0 %374
    %376 = vrot.lane.b32.xlu0 %v325, 1
    %v377 = vpop.permute.xlu0 %376
    %378 = vrot.lane.b32.xlu0 %v329, 1
    %v379 = vpop.permute.xlu0 %378
    %380 = vrot.lane.b32.xlu0 %v366, 1
    %v381 = vpop.permute.xlu0 %380
    %382 = vrot.lane.b32.xlu0 %v369, 1
    %v383 = vpop.permute.xlu0 %382
    %vm384 = vcmp.lt.s32.totalorder %v35, 1
    %v385 = vsel %vm384, %v377, %v381
    %v386 = vsel %vm384, %v379, %v383
    %v387 = vsel %vm384, %v373, %v377
    %v388 = vsel %vm384, %v375, %v379
    %v389 = vsel %vm384, %v381, %v373
    %v390 = vsel %vm384, %v383, %v375
    %v391 = vadd.f32 %v274, %v389
    %v392 = vadd.f32 %v275, %v387
    %v393 = vadd.f32 %v276, %v385
    %v394 = vadd.f32 %v277, %v390
    %v395 = vadd.f32 %v278, %v388
    %v396 = vadd.f32 %v279, %v386
    %v399 = vunpack.c.l.b16 %v30
    %v400 = vunpack.c.l.b16 %v31
    %v401 = vpack.c.b16 %v400, %v399
    %v403 = vsel %vm167, %v401, 0
    %405 = vmatprep.subr.bf16.mxu0 %v150
    %406 = vmatpush1.bf16.msra.mxu0 %v149
    %407 = vmatprep.subr.bf16.mxu0 %v153
    %408 = vmatpush1.bf16.msra.mxu0 %v152
    %409 = vmatprep.subr.bf16.mxu0 %v156
    %410 = vmatpush1.bf16.msra.mxu0 %v155
    %411 = vmatprep.subr.bf16.mxu0 0
    %412 = vmatpush1.bf16.msra.mxu0 0
    %413 = vmatprep.subr.bf16.mxu0 0
    %414 = vmatpush1.bf16.msra.mxu0 0
    %415 = vmatprep.subr.bf16.mxu0 0
    %416 = vmatpush1.bf16.msra.mxu0 0
    %417 = vmatprep.subr.bf16.mxu0 0
    %418 = vmatpush1.bf16.msra.mxu0 0
    %419 = vmatprep.subr.bf16.mxu0 0
    %420 = vmatpush1.bf16.msra.mxu0 0
    %421 = vmatprep.subr.bf16.mxu0 0
    %422 = vmatpush1.bf16.msra.mxu0 0
    %423 = vmatprep.subr.bf16.mxu0 0
    %424 = vmatpush1.bf16.msra.mxu0 0
    %425 = vmatprep.subr.bf16.mxu0 0
    %426 = vmatpush1.bf16.msra.mxu0 0
    %427 = vmatprep.subr.bf16.mxu0 0
    %428 = vmatpush1.bf16.msra.mxu0 0
    %429 = vmatprep.subr.bf16.mxu0 0
    %430 = vmatpush1.bf16.msra.mxu0 0
    %431 = vmatprep.subr.bf16.mxu0 0
    %432 = vmatpush1.bf16.msra.mxu0 0
    %433 = vmatprep.subr.bf16.mxu0 0
    %434 = vmatpush1.bf16.msra.mxu0 0
    %435 = vmatprep.subr.bf16.mxu0 0
    %436 = vmatpush1.bf16.msra.mxu0 0
    %437 = vmatprep.mubr.bf16.mxu0 0
    %438 = vmatmul.mubr.bf16.gmra.mrb[0].mxu0 %v403
    %v439 = vpop.f32.mrb[0].mxu0
    %v440 = vadd.f32 0.0, %v439
    %v441 = vpop.f32.mrb[0].mxu0
    %v442 = vadd.f32 0.0, %v441
    %v443 = vpop.f32.mrb[0].mxu0
    %v444 = vadd.f32 0.0, %v443
    %v445 = vpop.f32.mrb[0].mxu0
    %v446 = vadd.f32 0.0, %v445
    %447 = vdwg.mxu0
    %448 = vmatprep.subr.bf16.mxu0 0
    %449 = vmatpush1.bf16.msra.mxu0 %v151
    %450 = vmatprep.subr.bf16.mxu0 0
    %451 = vmatpush1.bf16.msra.mxu0 %v154
    %452 = vmatprep.subr.bf16.mxu0 0
    %453 = vmatpush1.bf16.msra.mxu0 %v157
    %454 = vmatprep.subr.bf16.mxu0 0
    %455 = vmatpush1.bf16.msra.mxu0 0
    %456 = vmatprep.subr.bf16.mxu0 0
    %457 = vmatpush1.bf16.msra.mxu0 0
    %458 = vmatprep.subr.bf16.mxu0 0
    %459 = vmatpush1.bf16.msra.mxu0 0
    %460 = vmatprep.subr.bf16.mxu0 0
    %461 = vmatpush1.bf16.msra.mxu0 0
    %462 = vmatprep.subr.bf16.mxu0 0
    %463 = vmatpush1.bf16.msra.mxu0 0
    %464 = vmatprep.subr.bf16.mxu0 0
    %465 = vmatpush1.bf16.msra.mxu0 0
    %466 = vmatprep.subr.bf16.mxu0 0
    %467 = vmatpush1.bf16.msra.mxu0 0
    %468 = vmatprep.subr.bf16.mxu0 0
    %469 = vmatpush1.bf16.msra.mxu0 0
    %470 = vmatprep.subr.bf16.mxu0 0
    %471 = vmatpush1.bf16.msra.mxu0 0
    %472 = vmatprep.subr.bf16.mxu0 0
    %473 = vmatpush1.bf16.msra.mxu0 0
    %474 = vmatprep.subr.bf16.mxu0 0
    %475 = vmatpush1.bf16.msra.mxu0 0
    %476 = vmatprep.subr.bf16.mxu0 0
    %477 = vmatpush1.bf16.msra.mxu0 0
    %478 = vmatprep.subr.bf16.mxu0 0
    %479 = vmatpush1.bf16.msra.mxu0 0
    %480 = vmatprep.mubr.bf16.mxu0 0
    %481 = vmatmul.mubr.bf16.gmra.mrb[0].mxu0 %v403
    %v482 = vpop.f32.mrb[0].mxu0
    %v483 = vadd.f32 0.0, %v482
    %v484 = vpop.f32.mrb[0].mxu0
    %v485 = vpop.f32.mrb[0].mxu0
    %v486 = vadd.f32 0.0, %v485
    %v487 = vpop.f32.mrb[0].mxu0
    %488 = vdwg.mxu0
    %v489 = vadd.f32 %v391, %v440
    %v490 = vadd.f32 %v392, %v442
    %v491 = vadd.f32 %v393, %v483
    %v492 = vadd.f32 %v394, %v444
    %v493 = vadd.f32 %v395, %v446
    %v494 = vadd.f32 %v396, %v486
    %496 = vset.pattern.permute.xlu0 0
    %497 = vperm.xlu0 %496, %v32
    %v498 = vpop.permute.xlu0 %497
    %501 = vset.pattern.permute.xlu0 0
    %502 = vperm.xlu0 %501, %v33
    %v503 = vpop.permute.xlu0 %502
    %v505 = vadd.f32 %v489, %v498
    %v506 = vadd.f32 %v490, %v498
    %v507 = vadd.f32 %v491, %v498
    %v508 = vadd.f32 %v492, %v503
    %v509 = vadd.f32 %v493, %v503
    %v510 = vadd.f32 %v494, %v503
    %v511 = vmax.f32 %v505, 0.0
    %v512 = vmax.f32 %v506, 0.0
    %v513 = vmax.f32 %v507, 0.0
    %v514 = vmax.f32 %v508, 0.0
    %v515 = vmax.f32 %v509, 0.0
    %v516 = vmax.f32 %v510, 0.0
    %v517 = vsel %vm46, %v511, 0.0
    %v518 = vsel %vm47, %v512, 0.0
    %v519 = vsel %vm48, %v513, 0.0
    %v520 = vsel %vm46, %v514, 0.0
    %v521 = vsel %vm47, %v515, 0.0
    %v522 = vsel %vm48, %v516, 0.0
    %v523 = vpack.c.bf16 %v520, %v517
    %v524 = vpack.c.bf16 %v521, %v518
    %v525 = vpack.c.bf16 %v522, %v519
    %s526 = smul.u32 %s94, 16
    %v530 = vunpack.c.l.b16 %v523
    %v531 = vunpack.c.l.b16 %v524
    %v532 = vunpack.c.l.b16 %v525
    %v533 = vunpack.c.h.b16 %v523
    %v534 = vunpack.c.h.b16 %v524
    %v535 = vunpack.c.h.b16 %v525
    %v536 = vpack.c.b16 %v531, %v530
    %v537 = vpack.c.b16 %v532, %v532
    %v538 = vpack.c.b16 %v534, %v533
    %v539 = vpack.c.b16 %v535, %v535
    %s544 = sshra.s32 %s526, 3
    %s545 = sand.u32 %s526, 7
    %s546 = smul.u32 %s544, 3
    %s547 = smul.addr %s546, 4
    %s548 = scalar_lea.vmem %s4, %s547
    %549 = vst [vmem:[%s548] sm:$0xff] %v536
    %550 = vst [vmem:[%s548 + $0x8] sm:$0xf] %v537
    %551 = vst [vmem:[%s548 + $0xc] sm:$0xff] %v538
    %552 = vst [vmem:[%s548 + $0x14] sm:$0xf] %v539
  $region18: #{closed_call.34} parent=0 // loop_footer
    %s91 = sadd.s32 %s89, 1
  $region19: #{closed_call.34} parent=0 // loop_footer_branch
    %88 = sbr.rel target = $region15
  $region20: #{closed_call.34} parent=0 // loop_exit
    _
  // Predicated region
  $region21: #{closed_call.34} parent=0 // pred_check
    _
  $region22: #{closed_call.34} parent=0 // pred_check_branch
    %554 = sbr.rel (0) target = $region24
  $region23: #{closed_call.34} parent=0 // pred_region
    _
  $region24: #{closed_call.34} parent=0 // pred_fallthru
    _
  // Predicated region
  $region25: #{closed_call.34} parent=0 // pred_check
    _
  $region26: #{closed_call.34} parent=0 // pred_check_branch
    %556 = sbr.rel (0) target = $region28
  $region27: #{closed_call.34} parent=0 // pred_region
    _
  $region28: #{closed_call.34} parent=0 // pred_fallthru
    _

// kernel: closed_call.37
$region0: #{closed_call.37}
  #allocation0 [shape = 'u32[]', space=smem, size = 0x4, offset = 0x4, fixed_abs, tag = 'smem constant byte address 0x4 - core index']
  #allocation1 [shape = 'u32[144,128]{1,0:T(1,128)}', space=vmem, size = 0x12000, scoped, tag = 'internal scratch']
  #allocation2 [shape = 's32[1]{0}', space=sflag, size = 0x4, scoped, tag = 'scoped memory for closed_call.37']
  #allocation3 [shape = 'u8[512]{0}', space=smem, size = 0x200, scoped, tag = 'prefetched SMEM operand 0']
  %s0 = inlined_call_operand.vmem [shape: s32[2], index: 0, kind: input, shape index: {}]
  %s1 = inlined_call_operand.vmem [shape: bf16[1,2176,512], index: 1, kind: input, shape index: {}]
  %s2 = inlined_call_operand.vmem [shape: bf16[5,16,80], index: 2, kind: input, shape index: {}]
  %s3 = inlined_call_operand.vmem [shape: f32[16,1], index: 3, kind: input, shape index: {}]
  %s4 = inlined_call_operand.vmem [shape: bf16[1,2176,512], index: 4, kind: output, shape index: {}]
  %s5 = sld [smem:[#allocation0]]
  $region29: #{closed_call.37} parent=0
    _
  %s7 = ssub.s32 1, %s5
  %s8 = scalar_select 0, %s7, %s5
  %s9 = sshll.u32 %s0, 4
  %s10 = int_to_ptr.vmem [resolvable:$true] %s9
  %12 = dma.vmem_to_smem %s10, 16, [#allocation3], [#allocation2]
  %13 = dma.done [#allocation2], 16
  %14 = sfence
  // Predicated region
  $region2: #{closed_call.37} parent=0 // pred_check
    _
  $region3: #{closed_call.37} parent=0 // pred_check_branch
    %16 = sbr.rel (0) target = $region5
  $region4: #{closed_call.37} parent=0 // pred_region
    _
  $region5: #{closed_call.37} parent=0 // pred_fallthru
    _
  // Predicated region
  $region6: #{closed_call.37} parent=0 // pred_check
    _
  $region7: #{closed_call.37} parent=0 // pred_check_branch
    %18 = sbr.rel (0) target = $region9
  $region8: #{closed_call.37} parent=0 // pred_region
    _
  $region9: #{closed_call.37} parent=0 // pred_fallthru
    _
  // Predicated region
  $region10: #{closed_call.37} parent=0 // pred_check
    _
  $region11: #{closed_call.37} parent=0 // pred_check_branch
    %20 = sbr.rel (0) target = $region13
  $region12: #{closed_call.37} parent=0 // pred_region
    _
  $region13: #{closed_call.37} parent=0 // pred_fallthru
    _
  %s22 = sld [smem:[#allocation3]]
  %s23 = sld [smem:[#allocation3 + $0x1]]
  %v24 = vld [vmem:[%s2] sm:$0xf]
  %v25 = vld [vmem:[%s2 + $0x4] sm:$0xf]
  %s26 = scalar_lea.vmem %s2, 8
  %v27 = vld [vmem:[%s26] sm:$0xf]
  %v28 = vld [vmem:[%s26 + $0x4] sm:$0xf]
  %s29 = scalar_lea.vmem %s2, 16
  %v30 = vld [vmem:[%s29] sm:$0xf]
  %v31 = vld [vmem:[%s29 + $0x4] sm:$0xf]
  %s32 = scalar_lea.vmem %s2, 24
  %v33 = vld [vmem:[%s32] sm:$0xf]
  %v34 = vld [vmem:[%s32 + $0x4] sm:$0xf]
  %s35 = scalar_lea.vmem %s2, 32
  %v36 = vld [vmem:[%s35] sm:$0xf]
  %v37 = vld [vmem:[%s35 + $0x4] sm:$0xf]
  %v38 = vld [vmem:[%s3] sm:$0xff]
  %v39 = vld [vmem:[%s3 + $0x8] sm:$0xff]
  %v40 = vlaneseq
  %v41 = vand.u32 %v40, 127
  %v42 = vadd.s32 %v41, 128
  %v43 = vadd.s32 %v41, 256
  %v44 = vadd.s32 %v41, 384
  %vm45 = vcmp.ge.s32.totalorder %v41, 4
  %vm46 = vcmp.ge.s32.totalorder %v42, 4
  %vm47 = vcmp.ge.s32.totalorder %v43, 4
  %vm48 = vcmp.ge.s32.totalorder %v44, 4
  %s49 = sadd.s32 %s23, 4
  %v50 = vstv %s49
  %vm51 = vcmp.lt.s32.totalorder %v41, %v50
  %vm52 = vcmp.lt.s32.totalorder %v42, %v50
  %vm53 = vcmp.lt.s32.totalorder %v43, %v50
  %vm54 = vcmp.lt.s32.totalorder %v44, %v50
  %vm55 = vmand %vm45, %vm51
  %vm56 = vmand %vm46, %vm52
  %vm57 = vmand %vm47, %vm53
  %vm58 = vmand %vm48, %vm54
  %59 = vst [vmem:[%s4] sm:$0xff] 0
  %60 = vst [vmem:[%s4 + $0x8] sm:$0xff] 0
  %61 = vst [vmem:[%s4 + $0x10] sm:$0xff] 0
  %62 = vst [vmem:[%s4 + $0x18] sm:$0xff] 0
  %63 = vst [vmem:[%s4 + $0x20] sm:$0xff] 0
  %64 = vst [vmem:[%s4 + $0x28] sm:$0xff] 0
  %65 = vst [vmem:[%s4 + $0x30] sm:$0xff] 0
  %66 = vst [vmem:[%s4 + $0x38] sm:$0xff] 0
  %67 = vst [vmem:[%s4 + $0x40] sm:$0xff] 0
  %68 = vst [vmem:[%s4 + $0x48] sm:$0xff] 0
  %69 = vst [vmem:[%s4 + $0x50] sm:$0xff] 0
  %70 = vst [vmem:[%s4 + $0x58] sm:$0xff] 0
  %71 = vst [vmem:[%s4 + $0x60] sm:$0xff] 0
  %72 = vst [vmem:[%s4 + $0x68] sm:$0xff] 0
  %73 = vst [vmem:[%s4 + $0x70] sm:$0xff] 0
  %74 = vst [vmem:[%s4 + $0x78] sm:$0xff] 0
  %s75 = sadd.s32 %s22, 4
  %s76 = smul.u32 %s75, 16
  %s77 = sshra.s32 %s76, 3
  %s78 = sand.u32 %s76, 7
  %s79 = smul.u32 %s77, 4
  %s80 = smul.addr %s79, 4
  %s81 = scalar_lea.vmem %s4, %s80
  %82 = vst [vmem:[%s81] sm:$0xff] 0
  %83 = vst [vmem:[%s81 + $0x8] sm:$0xff] 0
  %84 = vst [vmem:[%s81 + $0x10] sm:$0xff] 0
  %85 = vst [vmem:[%s81 + $0x18] sm:$0xff] 0
  %86 = vst [vmem:[%s81 + $0x20] sm:$0xff] 0
  %87 = vst [vmem:[%s81 + $0x28] sm:$0xff] 0
  %88 = vst [vmem:[%s81 + $0x30] sm:$0xff] 0
  %89 = vst [vmem:[%s81 + $0x38] sm:$0xff] 0
  %90 = vst [vmem:[%s81 + $0x40] sm:$0xff] 0
  %91 = vst [vmem:[%s81 + $0x48] sm:$0xff] 0
  %92 = vst [vmem:[%s81 + $0x50] sm:$0xff] 0
  %93 = vst [vmem:[%s81 + $0x58] sm:$0xff] 0
  %94 = vst [vmem:[%s81 + $0x60] sm:$0xff] 0
  %95 = vst [vmem:[%s81 + $0x68] sm:$0xff] 0
  %96 = vst [vmem:[%s81 + $0x70] sm:$0xff] 0
  %97 = vst [vmem:[%s81 + $0x78] sm:$0xff] 0
  // While loop
  $region14: #{closed_call.37} parent=0 // loop_pre_header
    _
  $region15: #{closed_call.37} parent=0 // loop_header
    %s99 = sphi 0, %s101
    %p100 = scmp.ge.s32.totalorder %s99, %s22
  $region16: #{closed_call.37} parent=0 // loop_header_branch
    %103 = sbr.rel (%p100) target = $region20
  $region17: #{closed_call.37} parent=0 // loop_body
    %s104 = sadd.s32 %s99, 4
    %s105 = smul.u32 %s99, 16
    %s106 = sshra.s32 %s105, 3
    %s107 = sand.u32 %s105, 7
    %s108 = smul.u32 %s106, 4
    %s109 = smul.addr %s108, 4
    %s110 = scalar_lea.vmem %s1, %s109
    %v111 = vld [vmem:[%s110] sm:$0xff]
    %v112 = vld [vmem:[%s110 + $0x8] sm:$0xff]
    %v113 = vld [vmem:[%s110 + $0x10] sm:$0xff]
    %v114 = vld [vmem:[%s110 + $0x18] sm:$0xff]
    %v115 = vld [vmem:[%s110 + $0x20] sm:$0xff]
    %v116 = vld [vmem:[%s110 + $0x28] sm:$0xff]
    %v117 = vld [vmem:[%s110 + $0x30] sm:$0xff]
    %v118 = vld [vmem:[%s110 + $0x38] sm:$0xff]
    %v119 = vld [vmem:[%s110 + $0x40] sm:$0xff]
    %v120 = vld [vmem:[%s110 + $0x48] sm:$0xff]
    %v121 = vld [vmem:[%s110 + $0x50] sm:$0xff]
    %v122 = vld [vmem:[%s110 + $0x58] sm:$0xff]
    %v123 = vld [vmem:[%s110 + $0x60] sm:$0xff]
    %v124 = vld [vmem:[%s110 + $0x68] sm:$0xff]
    %v125 = vld [vmem:[%s110 + $0x70] sm:$0xff]
    %v126 = vld [vmem:[%s110 + $0x78] sm:$0xff]
    %v127 = vld [vmem:[%s110 + $0x80] sm:$0xff]
    %v128 = vld [vmem:[%s110 + $0x88] sm:$0xff]
    %v129 = vld [vmem:[%s110 + $0x90] sm:$0xff]
    %v130 = vld [vmem:[%s110 + $0x98] sm:$0xff]
    %v133 = vunpack.c.l.b16 %v24
    %v134 = vunpack.c.l.b16 %v25
    %v135 = vpack.c.b16 %v134, %v133
    %v156 = vunpack.c.l.b16 %v111
    %v157 = vunpack.c.h.b16 %v111
    %v158 = vunpack.c.l.b16 %v112
    %v159 = vunpack.c.h.b16 %v112
    %v160 = vunpack.c.l.b16 %v113
    %v161 = vunpack.c.h.b16 %v113
    %v162 = vunpack.c.l.b16 %v114
    %v163 = vunpack.c.h.b16 %v114
    %v164 = vunpack.c.l.b16 %v115
    %v165 = vunpack.c.h.b16 %v115
    %v166 = vunpack.c.l.b16 %v116
    %v167 = vunpack.c.h.b16 %v116
    %v168 = vunpack.c.l.b16 %v117
    %v169 = vunpack.c.h.b16 %v117
    %v170 = vunpack.c.l.b16 %v118
    %v171 = vunpack.c.h.b16 %v118
    %v172 = vunpack.c.l.b16 %v119
    %v173 = vunpack.c.h.b16 %v119
    %v174 = vunpack.c.l.b16 %v120
    %v175 = vunpack.c.h.b16 %v120
    %v176 = vunpack.c.l.b16 %v121
    %v177 = vunpack.c.h.b16 %v121
    %v178 = vunpack.c.l.b16 %v122
    %v179 = vunpack.c.h.b16 %v122
    %v180 = vunpack.c.l.b16 %v123
    %v181 = vunpack.c.h.b16 %v123
    %v182 = vunpack.c.l.b16 %v124
    %v183 = vunpack.c.h.b16 %v124
    %v184 = vunpack.c.l.b16 %v125
    %v185 = vunpack.c.h.b16 %v125
    %v186 = vunpack.c.l.b16 %v126
    %v187 = vunpack.c.h.b16 %v126
    %v188 = vunpack.c.l.b16 %v127
    %v189 = vunpack.c.h.b16 %v127
    %v190 = vunpack.c.l.b16 %v128
    %v191 = vunpack.c.h.b16 %v128
    %v192 = vunpack.c.l.b16 %v129
    %v193 = vunpack.c.h.b16 %v129
    %v194 = vunpack.c.l.b16 %v130
    %v195 = vunpack.c.h.b16 %v130
    %v196 = vpack.c.b16 %v160, %v156
    %v197 = vpack.c.b16 %v161, %v157
    %v198 = vpack.c.b16 %v162, %v158
    %v199 = vpack.c.b16 %v163, %v159
    %v200 = vpack.c.b16 %v168, %v164
    %v201 = vpack.c.b16 %v169, %v165
    %v202 = vpack.c.b16 %v170, %v166
    %v203 = vpack.c.b16 %v171, %v167
    %v204 = vpack.c.b16 %v176, %v172
    %v205 = vpack.c.b16 %v177, %v173
    %v206 = vpack.c.b16 %v178, %v174
    %v207 = vpack.c.b16 %v179, %v175
    %v208 = vpack.c.b16 %v184, %v180
    %v209 = vpack.c.b16 %v185, %v181
    %v210 = vpack.c.b16 %v186, %v182
    %v211 = vpack.c.b16 %v187, %v183
    %v212 = vpack.c.b16 %v192, %v188
    %v213 = vpack.c.b16 %v193, %v189
    %v214 = vpack.c.b16 %v194, %v190
    %v215 = vpack.c.b16 %v195, %v191
    %vm236 = vcmask 654336
    %v238 = vsel %vm236, %v135, 0
    %240 = vmatprep.subr.bf16.mxu0 %v197
    %241 = vmatpush1.bf16.msra.mxu0 %v196
    %242 = vmatprep.subr.bf16.mxu0 %v201
    %243 = vmatpush1.bf16.msra.mxu0 %v200
    %244 = vmatprep.subr.bf16.mxu0 %v205
    %245 = vmatpush1.bf16.msra.mxu0 %v204
    %246 = vmatprep.subr.bf16.mxu0 %v209
    %247 = vmatpush1.bf16.msra.mxu0 %v208
    %248 = vmatprep.subr.bf16.mxu0 %v213
    %249 = vmatpush1.bf16.msra.mxu0 %v212
    %250 = vmatprep.subr.bf16.mxu0 0
    %251 = vmatpush1.bf16.msra.mxu0 0
    %252 = vmatprep.subr.bf16.mxu0 0
    %253 = vmatpush1.bf16.msra.mxu0 0
    %254 = vmatprep.subr.bf16.mxu0 0
    %255 = vmatpush1.bf16.msra.mxu0 0
    %256 = vmatprep.subr.bf16.mxu0 0
    %257 = vmatpush1.bf16.msra.mxu0 0
    %258 = vmatprep.subr.bf16.mxu0 0
    %259 = vmatpush1.bf16.msra.mxu0 0
    %260 = vmatprep.subr.bf16.mxu0 0
    %261 = vmatpush1.bf16.msra.mxu0 0
    %262 = vmatprep.subr.bf16.mxu0 0
    %263 = vmatpush1.bf16.msra.mxu0 0
    %264 = vmatprep.subr.bf16.mxu0 0
    %265 = vmatpush1.bf16.msra.mxu0 0
    %266 = vmatprep.subr.bf16.mxu0 0
    %267 = vmatpush1.bf16.msra.mxu0 0
    %268 = vmatprep.subr.bf16.mxu0 0
    %269 = vmatpush1.bf16.msra.mxu0 0
    %270 = vmatprep.subr.bf16.mxu0 0
    %271 = vmatpush1.bf16.msra.mxu0 0
    %272 = vmatprep.mubr.bf16.mxu0 0
    %273 = vmatmul.mubr.bf16.gmra.mrb[0].mxu0 %v238
    %v274 = vpop.f32.mrb[0].mxu0
    %v275 = vadd.f32 0.0, %v274
    %v276 = vpop.f32.mrb[0].mxu0
    %v277 = vadd.f32 0.0, %v276
    %v278 = vpop.f32.mrb[0].mxu0
    %v279 = vadd.f32 0.0, %v278
    %v280 = vpop.f32.mrb[0].mxu0
    %v281 = vadd.f32 0.0, %v280
    %282 = vdwg.mxu0
    %283 = vmatprep.subr.bf16.mxu0 %v199
    %284 = vmatpush1.bf16.msra.mxu0 %v198
    %285 = vmatprep.subr.bf16.mxu0 %v203
    %286 = vmatpush1.bf16.msra.mxu0 %v202
    %287 = vmatprep.subr.bf16.mxu0 %v207
    %288 = vmatpush1.bf16.msra.mxu0 %v206
    %289 = vmatprep.subr.bf16.mxu0 %v211
    %290 = vmatpush1.bf16.msra.mxu0 %v210
    %291 = vmatprep.subr.bf16.mxu0 %v215
    %292 = vmatpush1.bf16.msra.mxu0 %v214
    %293 = vmatprep.subr.bf16.mxu0 0
    %294 = vmatpush1.bf16.msra.mxu0 0
    %295 = vmatprep.subr.bf16.mxu0 0
    %296 = vmatpush1.bf16.msra.mxu0 0
    %297 = vmatprep.subr.bf16.mxu0 0
    %298 = vmatpush1.bf16.msra.mxu0 0
    %299 = vmatprep.subr.bf16.mxu0 0
    %300 = vmatpush1.bf16.msra.mxu0 0
    %301 = vmatprep.subr.bf16.mxu0 0
    %302 = vmatpush1.bf16.msra.mxu0 0
    %303 = vmatprep.subr.bf16.mxu0 0
    %304 = vmatpush1.bf16.msra.mxu0 0
    %305 = vmatprep.subr.bf16.mxu0 0
    %306 = vmatpush1.bf16.msra.mxu0 0
    %307 = vmatprep.subr.bf16.mxu0 0
    %308 = vmatpush1.bf16.msra.mxu0 0
    %309 = vmatprep.subr.bf16.mxu0 0
    %310 = vmatpush1.bf16.msra.mxu0 0
    %311 = vmatprep.subr.bf16.mxu0 0
    %312 = vmatpush1.bf16.msra.mxu0 0
    %313 = vmatprep.subr.bf16.mxu0 0
    %314 = vmatpush1.bf16.msra.mxu0 0
    %315 = vmatprep.mubr.bf16.mxu0 0
    %316 = vmatmul.mubr.bf16.gmra.mrb[0].mxu0 %v238
    %v317 = vpop.f32.mrb[0].mxu0
    %v318 = vadd.f32 0.0, %v317
    %v319 = vpop.f32.mrb[0].mxu0
    %v320 = vadd.f32 0.0, %v319
    %v321 = vpop.f32.mrb[0].mxu0
    %v322 = vadd.f32 0.0, %v321
    %v323 = vpop.f32.mrb[0].mxu0
    %v324 = vadd.f32 0.0, %v323
    %325 = vdwg.mxu0
    %326 = vrot.lane.b32.xlu0 %v275, 4
    %v327 = vpop.permute.xlu0 %326
    %328 = vrot.lane.b32.xlu0 %v279, 4
    %v329 = vpop.permute.xlu0 %328
    %330 = vrot.lane.b32.xlu0 %v277, 4
    %v331 = vpop.permute.xlu0 %330
    %332 = vrot.lane.b32.xlu0 %v281, 4
    %v333 = vpop.permute.xlu0 %332
    %334 = vrot.lane.b32.xlu0 %v318, 4
    %v335 = vpop.permute.xlu0 %334
    %336 = vrot.lane.b32.xlu0 %v322, 4
    %v337 = vpop.permute.xlu0 %336
    %338 = vrot.lane.b32.xlu0 %v320, 4
    %v339 = vpop.permute.xlu0 %338
    %340 = vrot.lane.b32.xlu0 %v324, 4
    %v341 = vpop.permute.xlu0 %340
    %vm342 = vcmp.lt.s32.totalorder %v41, 4
    %v343 = vsel %vm342, %v335, %v339
    %v344 = vsel %vm342, %v337, %v341
    %v345 = vsel %vm342, %v331, %v335
    %v346 = vsel %vm342, %v333, %v337
    %v347 = vsel %vm342, %v327, %v331
    %v348 = vsel %vm342, %v329, %v333
    %v349 = vsel %vm342, %v339, %v327
    %v350 = vsel %vm342, %v341, %v329
    %v351 = vadd.f32 %v349, 0.0
    %v352 = vadd.f32 %v347, 0.0
    %v353 = vadd.f32 %v345, 0.0
    %v354 = vadd.f32 %v343, 0.0
    %v355 = vadd.f32 %v350, 0.0
    %v356 = vadd.f32 %v348, 0.0
    %v357 = vadd.f32 %v346, 0.0
    %v358 = vadd.f32 %v344, 0.0
    %v361 = vunpack.c.l.b16 %v27
    %v362 = vunpack.c.l.b16 %v28
    %v363 = vpack.c.b16 %v362, %v361
    %v365 = vsel %vm236, %v363, 0
    %367 = vmatprep.subr.bf16.mxu0 %v197
    %368 = vmatpush1.bf16.msra.mxu0 %v196
    %369 = vmatprep.subr.bf16.mxu0 %v201
    %370 = vmatpush1.bf16.msra.mxu0 %v200
    %371 = vmatprep.subr.bf16.mxu0 %v205
    %372 = vmatpush1.bf16.msra.mxu0 %v204
    %373 = vmatprep.subr.bf16.mxu0 %v209
    %374 = vmatpush1.bf16.msra.mxu0 %v208
    %375 = vmatprep.subr.bf16.mxu0 %v213
    %376 = vmatpush1.bf16.msra.mxu0 %v212
    %377 = vmatprep.subr.bf16.mxu0 0
    %378 = vmatpush1.bf16.msra.mxu0 0
    %379 = vmatprep.subr.bf16.mxu0 0
    %380 = vmatpush1.bf16.msra.mxu0 0
    %381 = vmatprep.subr.bf16.mxu0 0
    %382 = vmatpush1.bf16.msra.mxu0 0
    %383 = vmatprep.subr.bf16.mxu0 0
    %384 = vmatpush1.bf16.msra.mxu0 0
    %385 = vmatprep.subr.bf16.mxu0 0
    %386 = vmatpush1.bf16.msra.mxu0 0
    %387 = vmatprep.subr.bf16.mxu0 0
    %388 = vmatpush1.bf16.msra.mxu0 0
    %389 = vmatprep.subr.bf16.mxu0 0
    %390 = vmatpush1.bf16.msra.mxu0 0
    %391 = vmatprep.subr.bf16.mxu0 0
    %392 = vmatpush1.bf16.msra.mxu0 0
    %393 = vmatprep.subr.bf16.mxu0 0
    %394 = vmatpush1.bf16.msra.mxu0 0
    %395 = vmatprep.subr.bf16.mxu0 0
    %396 = vmatpush1.bf16.msra.mxu0 0
    %397 = vmatprep.subr.bf16.mxu0 0
    %398 = vmatpush1.bf16.msra.mxu0 0
    %399 = vmatprep.mubr.bf16.mxu0 0
    %400 = vmatmul.mubr.bf16.gmra.mrb[0].mxu0 %v365
    %v401 = vpop.f32.mrb[0].mxu0
    %v402 = vadd.f32 0.0, %v401
    %v403 = vpop.f32.mrb[0].mxu0
    %v404 = vadd.f32 0.0, %v403
    %v405 = vpop.f32.mrb[0].mxu0
    %v406 = vadd.f32 0.0, %v405
    %v407 = vpop.f32.mrb[0].mxu0
    %v408 = vadd.f32 0.0, %v407
    %409 = vdwg.mxu0
    %410 = vmatprep.subr.bf16.mxu0 %v199
    %411 = vmatpush1.bf16.msra.mxu0 %v198
    %412 = vmatprep.subr.bf16.mxu0 %v203
    %413 = vmatpush1.bf16.msra.mxu0 %v202
    %414 = vmatprep.subr.bf16.mxu0 %v207
    %415 = vmatpush1.bf16.msra.mxu0 %v206
    %416 = vmatprep.subr.bf16.mxu0 %v211
    %417 = vmatpush1.bf16.msra.mxu0 %v210
    %418 = vmatprep.subr.bf16.mxu0 %v215
    %419 = vmatpush1.bf16.msra.mxu0 %v214
    %420 = vmatprep.subr.bf16.mxu0 0
    %421 = vmatpush1.bf16.msra.mxu0 0
    %422 = vmatprep.subr.bf16.mxu0 0
    %423 = vmatpush1.bf16.msra.mxu0 0
    %424 = vmatprep.subr.bf16.mxu0 0
    %425 = vmatpush1.bf16.msra.mxu0 0
    %426 = vmatprep.subr.bf16.mxu0 0
    %427 = vmatpush1.bf16.msra.mxu0 0
    %428 = vmatprep.subr.bf16.mxu0 0
    %429 = vmatpush1.bf16.msra.mxu0 0
    %430 = vmatprep.subr.bf16.mxu0 0
    %431 = vmatpush1.bf16.msra.mxu0 0
    %432 = vmatprep.subr.bf16.mxu0 0
    %433 = vmatpush1.bf16.msra.mxu0 0
    %434 = vmatprep.subr.bf16.mxu0 0
    %435 = vmatpush1.bf16.msra.mxu0 0
    %436 = vmatprep.subr.bf16.mxu0 0
    %437 = vmatpush1.bf16.msra.mxu0 0
    %438 = vmatprep.subr.bf16.mxu0 0
    %439 = vmatpush1.bf16.msra.mxu0 0
    %440 = vmatprep.subr.bf16.mxu0 0
    %441 = vmatpush1.bf16.msra.mxu0 0
    %442 = vmatprep.mubr.bf16.mxu0 0
    %443 = vmatmul.mubr.bf16.gmra.mrb[0].mxu0 %v365
    %v444 = vpop.f32.mrb[0].mxu0
    %v445 = vadd.f32 0.0, %v444
    %v446 = vpop.f32.mrb[0].mxu0
    %v447 = vadd.f32 0.0, %v446
    %v448 = vpop.f32.mrb[0].mxu0
    %v449 = vadd.f32 0.0, %v448
    %v450 = vpop.f32.mrb[0].mxu0
    %v451 = vadd.f32 0.0, %v450
    %452 = vdwg.mxu0
    %453 = vrot.lane.b32.xlu0 %v402, 3
    %v454 = vpop.permute.xlu0 %453
    %455 = vrot.lane.b32.xlu0 %v406, 3
    %v456 = vpop.permute.xlu0 %455
    %457 = vrot.lane.b32.xlu0 %v404, 3
    %v458 = vpop.permute.xlu0 %457
    %459 = vrot.lane.b32.xlu0 %v408, 3
    %v460 = vpop.permute.xlu0 %459
    %461 = vrot.lane.b32.xlu0 %v445, 3
    %v462 = vpop.permute.xlu0 %461
    %463 = vrot.lane.b32.xlu0 %v449, 3
    %v464 = vpop.permute.xlu0 %463
    %465 = vrot.lane.b32.xlu0 %v447, 3
    %v466 = vpop.permute.xlu0 %465
    %467 = vrot.lane.b32.xlu0 %v451, 3
    %v468 = vpop.permute.xlu0 %467
    %vm469 = vcmp.lt.s32.totalorder %v41, 3
    %v470 = vsel %vm469, %v462, %v466
    %v471 = vsel %vm469, %v464, %v468
    %v472 = vsel %vm469, %v458, %v462
    %v473 = vsel %vm469, %v460, %v464
    %v474 = vsel %vm469, %v454, %v458
    %v475 = vsel %vm469, %v456, %v460
    %v476 = vsel %vm469, %v466, %v454
    %v477 = vsel %vm469, %v468, %v456
    %v478 = vadd.f32 %v351, %v476
    %v479 = vadd.f32 %v352, %v474
    %v480 = vadd.f32 %v353, %v472
    %v481 = vadd.f32 %v354, %v470
    %v482 = vadd.f32 %v355, %v477
    %v483 = vadd.f32 %v356, %v475
    %v484 = vadd.f32 %v357, %v473
    %v485 = vadd.f32 %v358, %v471
    %v488 = vunpack.c.l.b16 %v30
    %v489 = vunpack.c.l.b16 %v31
    %v490 = vpack.c.b16 %v489, %v488
    %v492 = vsel %vm236, %v490, 0
    %494 = vmatprep.subr.bf16.mxu0 %v197
    %495 = vmatpush1.bf16.msra.mxu0 %v196
    %496 = vmatprep.subr.bf16.mxu0 %v201
    %497 = vmatpush1.bf16.msra.mxu0 %v200
    %498 = vmatprep.subr.bf16.mxu0 %v205
    %499 = vmatpush1.bf16.msra.mxu0 %v204
    %500 = vmatprep.subr.bf16.mxu0 %v209
    %501 = vmatpush1.bf16.msra.mxu0 %v208
    %502 = vmatprep.subr.bf16.mxu0 %v213
    %503 = vmatpush1.bf16.msra.mxu0 %v212
    %504 = vmatprep.subr.bf16.mxu0 0
    %505 = vmatpush1.bf16.msra.mxu0 0
    %506 = vmatprep.subr.bf16.mxu0 0
    %507 = vmatpush1.bf16.msra.mxu0 0
    %508 = vmatprep.subr.bf16.mxu0 0
    %509 = vmatpush1.bf16.msra.mxu0 0
    %510 = vmatprep.subr.bf16.mxu0 0
    %511 = vmatpush1.bf16.msra.mxu0 0
    %512 = vmatprep.subr.bf16.mxu0 0
    %513 = vmatpush1.bf16.msra.mxu0 0
    %514 = vmatprep.subr.bf16.mxu0 0
    %515 = vmatpush1.bf16.msra.mxu0 0
    %516 = vmatprep.subr.bf16.mxu0 0
    %517 = vmatpush1.bf16.msra.mxu0 0
    %518 = vmatprep.subr.bf16.mxu0 0
    %519 = vmatpush1.bf16.msra.mxu0 0
    %520 = vmatprep.subr.bf16.mxu0 0
    %521 = vmatpush1.bf16.msra.mxu0 0
    %522 = vmatprep.subr.bf16.mxu0 0
    %523 = vmatpush1.bf16.msra.mxu0 0
    %524 = vmatprep.subr.bf16.mxu0 0
    %525 = vmatpush1.bf16.msra.mxu0 0
    %526 = vmatprep.mubr.bf16.mxu0 0
    %527 = vmatmul.mubr.bf16.gmra.mrb[0].mxu0 %v492
    %v528 = vpop.f32.mrb[0].mxu0
    %v529 = vadd.f32 0.0, %v528
    %v530 = vpop.f32.mrb[0].mxu0
    %v531 = vadd.f32 0.0, %v530
    %v532 = vpop.f32.mrb[0].mxu0
    %v533 = vadd.f32 0.0, %v532
    %v534 = vpop.f32.mrb[0].mxu0
    %v535 = vadd.f32 0.0, %v534
    %536 = vdwg.mxu0
    %537 = vmatprep.subr.bf16.mxu0 %v199
    %538 = vmatpush1.bf16.msra.mxu0 %v198
    %539 = vmatprep.subr.bf16.mxu0 %v203
    %540 = vmatpush1.bf16.msra.mxu0 %v202
    %541 = vmatprep.subr.bf16.mxu0 %v207
    %542 = vmatpush1.bf16.msra.mxu0 %v206
    %543 = vmatprep.subr.bf16.mxu0 %v211
    %544 = vmatpush1.bf16.msra.mxu0 %v210
    %545 = vmatprep.subr.bf16.mxu0 %v215
    %546 = vmatpush1.bf16.msra.mxu0 %v214
    %547 = vmatprep.subr.bf16.mxu0 0
    %548 = vmatpush1.bf16.msra.mxu0 0
    %549 = vmatprep.subr.bf16.mxu0 0
    %550 = vmatpush1.bf16.msra.mxu0 0
    %551 = vmatprep.subr.bf16.mxu0 0
    %552 = vmatpush1.bf16.msra.mxu0 0
    %553 = vmatprep.subr.bf16.mxu0 0
    %554 = vmatpush1.bf16.msra.mxu0 0
    %555 = vmatprep.subr.bf16.mxu0 0
    %556 = vmatpush1.bf16.msra.mxu0 0
    %557 = vmatprep.subr.bf16.mxu0 0
    %558 = vmatpush1.bf16.msra.mxu0 0
    %559 = vmatprep.subr.bf16.mxu0 0
    %560 = vmatpush1.bf16.msra.mxu0 0
    %561 = vmatprep.subr.bf16.mxu0 0
    %562 = vmatpush1.bf16.msra.mxu0 0
    %563 = vmatprep.subr.bf16.mxu0 0
    %564 = vmatpush1.bf16.msra.mxu0 0
    %565 = vmatprep.subr.bf16.mxu0 0
    %566 = vmatpush1.bf16.msra.mxu0 0
    %567 = vmatprep.subr.bf16.mxu0 0
    %568 = vmatpush1.bf16.msra.mxu0 0
    %569 = vmatprep.mubr.bf16.mxu0 0
    %570 = vmatmul.mubr.bf16.gmra.mrb[0].mxu0 %v492
    %v571 = vpop.f32.mrb[0].mxu0
    %v572 = vadd.f32 0.0, %v571
    %v573 = vpop.f32.mrb[0].mxu0
    %v574 = vadd.f32 0.0, %v573
    %v575 = vpop.f32.mrb[0].mxu0
    %v576 = vadd.f32 0.0, %v575
    %v577 = vpop.f32.mrb[0].mxu0
    %v578 = vadd.f32 0.0, %v577
    %579 = vdwg.mxu0
    %580 = vrot.lane.b32.xlu0 %v529, 2
    %v581 = vpop.permute.xlu0 %580
    %582 = vrot.lane.b32.xlu0 %v533, 2
    %v583 = vpop.permute.xlu0 %582
    %584 = vrot.lane.b32.xlu0 %v531, 2
    %v585 = vpop.permute.xlu0 %584
    %586 = vrot.lane.b32.xlu0 %v535, 2
    %v587 = vpop.permute.xlu0 %586
    %588 = vrot.lane.b32.xlu0 %v572, 2
    %v589 = vpop.permute.xlu0 %588
    %590 = vrot.lane.b32.xlu0 %v576, 2
    %v591 = vpop.permute.xlu0 %590
    %592 = vrot.lane.b32.xlu0 %v574, 2
    %v593 = vpop.permute.xlu0 %592
    %594 = vrot.lane.b32.xlu0 %v578, 2
    %v595 = vpop.permute.xlu0 %594
    %vm596 = vcmp.lt.s32.totalorder %v41, 2
    %v597 = vsel %vm596, %v589, %v593
    %v598 = vsel %vm596, %v591, %v595
    %v599 = vsel %vm596, %v585, %v589
    %v600 = vsel %vm596, %v587, %v591
    %v601 = vsel %vm596, %v581, %v585
    %v602 = vsel %vm596, %v583, %v587
    %v603 = vsel %vm596, %v593, %v581
    %v604 = vsel %vm596, %v595, %v583
    %v605 = vadd.f32 %v478, %v603
    %v606 = vadd.f32 %v479, %v601
    %v607 = vadd.f32 %v480, %v599
    %v608 = vadd.f32 %v481, %v597
    %v609 = vadd.f32 %v482, %v604
    %v610 = vadd.f32 %v483, %v602
    %v611 = vadd.f32 %v484, %v600
    %v612 = vadd.f32 %v485, %v598
    %v615 = vunpack.c.l.b16 %v33
    %v616 = vunpack.c.l.b16 %v34
    %v617 = vpack.c.b16 %v616, %v615
    %v619 = vsel %vm236, %v617, 0
    %621 = vmatprep.subr.bf16.mxu0 %v197
    %622 = vmatpush1.bf16.msra.mxu0 %v196
    %623 = vmatprep.subr.bf16.mxu0 %v201
    %624 = vmatpush1.bf16.msra.mxu0 %v200
    %625 = vmatprep.subr.bf16.mxu0 %v205
    %626 = vmatpush1.bf16.msra.mxu0 %v204
    %627 = vmatprep.subr.bf16.mxu0 %v209
    %628 = vmatpush1.bf16.msra.mxu0 %v208
    %629 = vmatprep.subr.bf16.mxu0 %v213
    %630 = vmatpush1.bf16.msra.mxu0 %v212
    %631 = vmatprep.subr.bf16.mxu0 0
    %632 = vmatpush1.bf16.msra.mxu0 0
    %633 = vmatprep.subr.bf16.mxu0 0
    %634 = vmatpush1.bf16.msra.mxu0 0
    %635 = vmatprep.subr.bf16.mxu0 0
    %636 = vmatpush1.bf16.msra.mxu0 0
    %637 = vmatprep.subr.bf16.mxu0 0
    %638 = vmatpush1.bf16.msra.mxu0 0
    %639 = vmatprep.subr.bf16.mxu0 0
    %640 = vmatpush1.bf16.msra.mxu0 0
    %641 = vmatprep.subr.bf16.mxu0 0
    %642 = vmatpush1.bf16.msra.mxu0 0
    %643 = vmatprep.subr.bf16.mxu0 0
    %644 = vmatpush1.bf16.msra.mxu0 0
    %645 = vmatprep.subr.bf16.mxu0 0
    %646 = vmatpush1.bf16.msra.mxu0 0
    %647 = vmatprep.subr.bf16.mxu0 0
    %648 = vmatpush1.bf16.msra.mxu0 0
    %649 = vmatprep.subr.bf16.mxu0 0
    %650 = vmatpush1.bf16.msra.mxu0 0
    %651 = vmatprep.subr.bf16.mxu0 0
    %652 = vmatpush1.bf16.msra.mxu0 0
    %653 = vmatprep.mubr.bf16.mxu0 0
    %654 = vmatmul.mubr.bf16.gmra.mrb[0].mxu0 %v619
    %v655 = vpop.f32.mrb[0].mxu0
    %v656 = vadd.f32 0.0, %v655
    %v657 = vpop.f32.mrb[0].mxu0
    %v658 = vadd.f32 0.0, %v657
    %v659 = vpop.f32.mrb[0].mxu0
    %v660 = vadd.f32 0.0, %v659
    %v661 = vpop.f32.mrb[0].mxu0
    %v662 = vadd.f32 0.0, %v661
    %663 = vdwg.mxu0
    %664 = vmatprep.subr.bf16.mxu0 %v199
    %665 = vmatpush1.bf16.msra.mxu0 %v198
    %666 = vmatprep.subr.bf16.mxu0 %v203
    %667 = vmatpush1.bf16.msra.mxu0 %v202
    %668 = vmatprep.subr.bf16.mxu0 %v207
    %669 = vmatpush1.bf16.msra.mxu0 %v206
    %670 = vmatprep.subr.bf16.mxu0 %v211
    %671 = vmatpush1.bf16.msra.mxu0 %v210
    %672 = vmatprep.subr.bf16.mxu0 %v215
    %673 = vmatpush1.bf16.msra.mxu0 %v214
    %674 = vmatprep.subr.bf16.mxu0 0
    %675 = vmatpush1.bf16.msra.mxu0 0
    %676 = vmatprep.subr.bf16.mxu0 0
    %677 = vmatpush1.bf16.msra.mxu0 0
    %678 = vmatprep.subr.bf16.mxu0 0
    %679 = vmatpush1.bf16.msra.mxu0 0
    %680 = vmatprep.subr.bf16.mxu0 0
    %681 = vmatpush1.bf16.msra.mxu0 0
    %682 = vmatprep.subr.bf16.mxu0 0
    %683 = vmatpush1.bf16.msra.mxu0 0
    %684 = vmatprep.subr.bf16.mxu0 0
    %685 = vmatpush1.bf16.msra.mxu0 0
    %686 = vmatprep.subr.bf16.mxu0 0
    %687 = vmatpush1.bf16.msra.mxu0 0
    %688 = vmatprep.subr.bf16.mxu0 0
    %689 = vmatpush1.bf16.msra.mxu0 0
    %690 = vmatprep.subr.bf16.mxu0 0
    %691 = vmatpush1.bf16.msra.mxu0 0
    %692 = vmatprep.subr.bf16.mxu0 0
    %693 = vmatpush1.bf16.msra.mxu0 0
    %694 = vmatprep.subr.bf16.mxu0 0
    %695 = vmatpush1.bf16.msra.mxu0 0
    %696 = vmatprep.mubr.bf16.mxu0 0
    %697 = vmatmul.mubr.bf16.gmra.mrb[0].mxu0 %v619
    %v698 = vpop.f32.mrb[0].mxu0
    %v699 = vadd.f32 0.0, %v698
    %v700 = vpop.f32.mrb[0].mxu0
    %v701 = vadd.f32 0.0, %v700
    %v702 = vpop.f32.mrb[0].mxu0
    %v703 = vadd.f32 0.0, %v702
    %v704 = vpop.f32.mrb[0].mxu0
    %v705 = vadd.f32 0.0, %v704
    %706 = vdwg.mxu0
    %707 = vrot.lane.b32.xlu0 %v656, 1
    %v708 = vpop.permute.xlu0 %707
    %709 = vrot.lane.b32.xlu0 %v660, 1
    %v710 = vpop.permute.xlu0 %709
    %711 = vrot.lane.b32.xlu0 %v658, 1
    %v712 = vpop.permute.xlu0 %711
    %713 = vrot.lane.b32.xlu0 %v662, 1
    %v714 = vpop.permute.xlu0 %713
    %715 = vrot.lane.b32.xlu0 %v699, 1
    %v716 = vpop.permute.xlu0 %715
    %717 = vrot.lane.b32.xlu0 %v703, 1
    %v718 = vpop.permute.xlu0 %717
    %719 = vrot.lane.b32.xlu0 %v701, 1
    %v720 = vpop.permute.xlu0 %719
    %721 = vrot.lane.b32.xlu0 %v705, 1
    %v722 = vpop.permute.xlu0 %721
    %vm723 = vcmp.lt.s32.totalorder %v41, 1
    %v724 = vsel %vm723, %v716, %v720
    %v725 = vsel %vm723, %v718, %v722
    %v726 = vsel %vm723, %v712, %v716
    %v727 = vsel %vm723, %v714, %v718
    %v728 = vsel %vm723, %v708, %v712
    %v729 = vsel %vm723, %v710, %v714
    %v730 = vsel %vm723, %v720, %v708
    %v731 = vsel %vm723, %v722, %v710
    %v732 = vadd.f32 %v605, %v730
    %v733 = vadd.f32 %v606, %v728
    %v734 = vadd.f32 %v607, %v726
    %v735 = vadd.f32 %v608, %v724
    %v736 = vadd.f32 %v609, %v731
    %v737 = vadd.f32 %v610, %v729
    %v738 = vadd.f32 %v611, %v727
    %v739 = vadd.f32 %v612, %v725
    %v742 = vunpack.c.l.b16 %v36
    %v743 = vunpack.c.l.b16 %v37
    %v744 = vpack.c.b16 %v743, %v742
    %v746 = vsel %vm236, %v744, 0
    %748 = vmatprep.subr.bf16.mxu0 %v197
    %749 = vmatpush1.bf16.msra.mxu0 %v196
    %750 = vmatprep.subr.bf16.mxu0 %v201
    %751 = vmatpush1.bf16.msra.mxu0 %v200
    %752 = vmatprep.subr.bf16.mxu0 %v205
    %753 = vmatpush1.bf16.msra.mxu0 %v204
    %754 = vmatprep.subr.bf16.mxu0 %v209
    %755 = vmatpush1.bf16.msra.mxu0 %v208
    %756 = vmatprep.subr.bf16.mxu0 %v213
    %757 = vmatpush1.bf16.msra.mxu0 %v212
    %758 = vmatprep.subr.bf16.mxu0 0
    %759 = vmatpush1.bf16.msra.mxu0 0
    %760 = vmatprep.subr.bf16.mxu0 0
    %761 = vmatpush1.bf16.msra.mxu0 0
    %762 = vmatprep.subr.bf16.mxu0 0
    %763 = vmatpush1.bf16.msra.mxu0 0
    %764 = vmatprep.subr.bf16.mxu0 0
    %765 = vmatpush1.bf16.msra.mxu0 0
    %766 = vmatprep.subr.bf16.mxu0 0
    %767 = vmatpush1.bf16.msra.mxu0 0
    %768 = vmatprep.subr.bf16.mxu0 0
    %769 = vmatpush1.bf16.msra.mxu0 0
    %770 = vmatprep.subr.bf16.mxu0 0
    %771 = vmatpush1.bf16.msra.mxu0 0
    %772 = vmatprep.subr.bf16.mxu0 0
    %773 = vmatpush1.bf16.msra.mxu0 0
    %774 = vmatprep.subr.bf16.mxu0 0
    %775 = vmatpush1.bf16.msra.mxu0 0
    %776 = vmatprep.subr.bf16.mxu0 0
    %777 = vmatpush1.bf16.msra.mxu0 0
    %778 = vmatprep.subr.bf16.mxu0 0
    %779 = vmatpush1.bf16.msra.mxu0 0
    %780 = vmatprep.mubr.bf16.mxu0 0
    %781 = vmatmul.mubr.bf16.gmra.mrb[0].mxu0 %v746
    %v782 = vpop.f32.mrb[0].mxu0
    %v783 = vadd.f32 0.0, %v782
    %v784 = vpop.f32.mrb[0].mxu0
    %v785 = vadd.f32 0.0, %v784
    %v786 = vpop.f32.mrb[0].mxu0
    %v787 = vadd.f32 0.0, %v786
    %v788 = vpop.f32.mrb[0].mxu0
    %v789 = vadd.f32 0.0, %v788
    %790 = vdwg.mxu0
    %791 = vmatprep.subr.bf16.mxu0 %v199
    %792 = vmatpush1.bf16.msra.mxu0 %v198
    %793 = vmatprep.subr.bf16.mxu0 %v203
    %794 = vmatpush1.bf16.msra.mxu0 %v202
    %795 = vmatprep.subr.bf16.mxu0 %v207
    %796 = vmatpush1.bf16.msra.mxu0 %v206
    %797 = vmatprep.subr.bf16.mxu0 %v211
    %798 = vmatpush1.bf16.msra.mxu0 %v210
    %799 = vmatprep.subr.bf16.mxu0 %v215
    %800 = vmatpush1.bf16.msra.mxu0 %v214
    %801 = vmatprep.subr.bf16.mxu0 0
    %802 = vmatpush1.bf16.msra.mxu0 0
    %803 = vmatprep.subr.bf16.mxu0 0
    %804 = vmatpush1.bf16.msra.mxu0 0
    %805 = vmatprep.subr.bf16.mxu0 0
    %806 = vmatpush1.bf16.msra.mxu0 0
    %807 = vmatprep.subr.bf16.mxu0 0
    %808 = vmatpush1.bf16.msra.mxu0 0
    %809 = vmatprep.subr.bf16.mxu0 0
    %810 = vmatpush1.bf16.msra.mxu0 0
    %811 = vmatprep.subr.bf16.mxu0 0
    %812 = vmatpush1.bf16.msra.mxu0 0
    %813 = vmatprep.subr.bf16.mxu0 0
    %814 = vmatpush1.bf16.msra.mxu0 0
    %815 = vmatprep.subr.bf16.mxu0 0
    %816 = vmatpush1.bf16.msra.mxu0 0
    %817 = vmatprep.subr.bf16.mxu0 0
    %818 = vmatpush1.bf16.msra.mxu0 0
    %819 = vmatprep.subr.bf16.mxu0 0
    %820 = vmatpush1.bf16.msra.mxu0 0
    %821 = vmatprep.subr.bf16.mxu0 0
    %822 = vmatpush1.bf16.msra.mxu0 0
    %823 = vmatprep.mubr.bf16.mxu0 0
    %824 = vmatmul.mubr.bf16.gmra.mrb[0].mxu0 %v746
    %v825 = vpop.f32.mrb[0].mxu0
    %v826 = vadd.f32 0.0, %v825
    %v827 = vpop.f32.mrb[0].mxu0
    %v828 = vadd.f32 0.0, %v827
    %v829 = vpop.f32.mrb[0].mxu0
    %v830 = vadd.f32 0.0, %v829
    %v831 = vpop.f32.mrb[0].mxu0
    %v832 = vadd.f32 0.0, %v831
    %833 = vdwg.mxu0
    %v834 = vadd.f32 %v732, %v783
    %v835 = vadd.f32 %v733, %v785
    %v836 = vadd.f32 %v734, %v826
    %v837 = vadd.f32 %v735, %v828
    %v838 = vadd.f32 %v736, %v787
    %v839 = vadd.f32 %v737, %v789
    %v840 = vadd.f32 %v738, %v830
    %v841 = vadd.f32 %v739, %v832
    %843 = vset.pattern.permute.xlu0 0
    %844 = vperm.xlu0 %843, %v38
    %v845 = vpop.permute.xlu0 %844
    %848 = vset.pattern.permute.xlu0 0
    %849 = vperm.xlu0 %848, %v39
    %v850 = vpop.permute.xlu0 %849
    %v852 = vadd.f32 %v834, %v845
    %v853 = vadd.f32 %v835, %v845
    %v854 = vadd.f32 %v836, %v845
    %v855 = vadd.f32 %v837, %v845
    %v856 = vadd.f32 %v838, %v850
    %v857 = vadd.f32 %v839, %v850
    %v858 = vadd.f32 %v840, %v850
    %v859 = vadd.f32 %v841, %v850
    %v860 = vmax.f32 %v852, 0.0
    %v861 = vmax.f32 %v853, 0.0
    %v862 = vmax.f32 %v854, 0.0
    %v863 = vmax.f32 %v855, 0.0
    %v864 = vmax.f32 %v856, 0.0
    %v865 = vmax.f32 %v857, 0.0
    %v866 = vmax.f32 %v858, 0.0
    %v867 = vmax.f32 %v859, 0.0
    %v868 = vsel %vm55, %v860, 0.0
    %v869 = vsel %vm56, %v861, 0.0
    %v870 = vsel %vm57, %v862, 0.0
    %v871 = vsel %vm58, %v863, 0.0
    %v872 = vsel %vm55, %v864, 0.0
    %v873 = vsel %vm56, %v865, 0.0
    %v874 = vsel %vm57, %v866, 0.0
    %v875 = vsel %vm58, %v867, 0.0
    %v876 = vpack.c.bf16 %v872, %v868
    %v877 = vpack.c.bf16 %v873, %v869
    %v878 = vpack.c.bf16 %v874, %v870
    %v879 = vpack.c.bf16 %v875, %v871
    %s880 = smul.u32 %s104, 16
    %v885 = vunpack.c.l.b16 %v876
    %v886 = vunpack.c.l.b16 %v877
    %v887 = vunpack.c.l.b16 %v878
    %v888 = vunpack.c.l.b16 %v879
    %v889 = vunpack.c.h.b16 %v876
    %v890 = vunpack.c.h.b16 %v877
    %v891 = vunpack.c.h.b16 %v878
    %v892 = vunpack.c.h.b16 %v879
    %v893 = vpack.c.b16 %v886, %v885
    %v894 = vpack.c.b16 %v888, %v887
    %v895 = vpack.c.b16 %v890, %v889
    %v896 = vpack.c.b16 %v892, %v891
    %s901 = sshra.s32 %s880, 3
    %s902 = sand.u32 %s880, 7
    %s903 = smul.u32 %s901, 4
    %s904 = smul.addr %s903, 4
    %s905 = scalar_lea.vmem %s4, %s904
    %906 = vst [vmem:[%s905] sm:$0xff] %v893
    %907 = vst [vmem:[%s905 + $0x8] sm:$0xff] %v894
    %908 = vst [vmem:[%s905 + $0x10] sm:$0xff] %v895
    %909 = vst [vmem:[%s905 + $0x18] sm:$0xff] %v896
  $region18: #{closed_call.37} parent=0 // loop_footer
    %s101 = sadd.s32 %s99, 1
  $region19: #{closed_call.37} parent=0 // loop_footer_branch
    %98 = sbr.rel target = $region15
  $region20: #{closed_call.37} parent=0 // loop_exit
    _
  // Predicated region
  $region21: #{closed_call.37} parent=0 // pred_check
    _
  $region22: #{closed_call.37} parent=0 // pred_check_branch
    %911 = sbr.rel (0) target = $region24
  $region23: #{closed_call.37} parent=0 // pred_region
    _
  $region24: #{closed_call.37} parent=0 // pred_fallthru
    _
  // Predicated region
  $region25: #{closed_call.37} parent=0 // pred_check
    _
  $region26: #{closed_call.37} parent=0 // pred_check_branch
    %913 = sbr.rel (0) target = $region28
  $region27: #{closed_call.37} parent=0 // pred_region
    _
  $region28: #{closed_call.37} parent=0 // pred_fallthru
    _

// kernel: audio_vae_forward.13
$region0: #{audio_vae_forward.13}
  #allocation0 [shape = 'u32[]', space=smem, size = 0x4, offset = 0x4, fixed_abs, tag = 'smem constant byte address 0x4 - core index']
  #allocation1 [shape = 'u32[144,128]{1,0:T(1,128)}', space=vmem, size = 0x12000, scoped, tag = 'internal scratch']
  #allocation2 [shape = 's32[1]{0}', space=sflag, size = 0x4, scoped, tag = 'scoped memory for audio_vae_forward.13']
  #allocation3 [shape = 'u8[512]{0}', space=smem, size = 0x200, scoped, tag = 'prefetched SMEM operand 0']
  %s0 = inlined_call_operand.vmem [shape: s32[2], index: 0, kind: input, shape index: {}]
  %s1 = inlined_call_operand.vmem [shape: bf16[1,2176,512], index: 1, kind: input, shape index: {}]
  %s2 = inlined_call_operand.vmem [shape: bf16[3,16,48], index: 2, kind: input, shape index: {}]
  %s3 = inlined_call_operand.vmem [shape: f32[16,1], index: 3, kind: input, shape index: {}]
  %s4 = inlined_call_operand.vmem [shape: bf16[1,2176,512], index: 4, kind: output, shape index: {}]
  %s5 = sld [smem:[#allocation0]]
  $region29: #{audio_vae_forward.13} parent=0
    _
  %s7 = ssub.s32 1, %s5
  %s8 = scalar_select 0, %s7, %s5
  %s9 = sshll.u32 %s0, 4
  %s10 = int_to_ptr.vmem [resolvable:$true] %s9
  %12 = dma.vmem_to_smem %s10, 16, [#allocation3], [#allocation2]
  %13 = dma.done [#allocation2], 16
  %14 = sfence
  // Predicated region
  $region2: #{audio_vae_forward.13} parent=0 // pred_check
    _
  $region3: #{audio_vae_forward.13} parent=0 // pred_check_branch
    %16 = sbr.rel (0) target = $region5
  $region4: #{audio_vae_forward.13} parent=0 // pred_region
    _
  $region5: #{audio_vae_forward.13} parent=0 // pred_fallthru
    _
  // Predicated region
  $region6: #{audio_vae_forward.13} parent=0 // pred_check
    _
  $region7: #{audio_vae_forward.13} parent=0 // pred_check_branch
    %18 = sbr.rel (0) target = $region9
  $region8: #{audio_vae_forward.13} parent=0 // pred_region
    _
  $region9: #{audio_vae_forward.13} parent=0 // pred_fallthru
    _
  // Predicated region
  $region10: #{audio_vae_forward.13} parent=0 // pred_check
    _
  $region11: #{audio_vae_forward.13} parent=0 // pred_check_branch
    %20 = sbr.rel (0) target = $region13
  $region12: #{audio_vae_forward.13} parent=0 // pred_region
    _
  $region13: #{audio_vae_forward.13} parent=0 // pred_fallthru
    _
  %s22 = sld [smem:[#allocation3]]
  %s23 = sld [smem:[#allocation3 + $0x1]]
  %v24 = vld [vmem:[%s2] sm:$0xf]
  %v25 = vld [vmem:[%s2 + $0x4] sm:$0xf]
  %s26 = scalar_lea.vmem %s2, 8
  %v27 = vld [vmem:[%s26] sm:$0xf]
  %v28 = vld [vmem:[%s26 + $0x4] sm:$0xf]
  %s29 = scalar_lea.vmem %s2, 16
  %v30 = vld [vmem:[%s29] sm:$0xf]
  %v31 = vld [vmem:[%s29 + $0x4] sm:$0xf]
  %v32 = vld [vmem:[%s3] sm:$0xff]
  %v33 = vld [vmem:[%s3 + $0x8] sm:$0xff]
  %v34 = vlaneseq
  %v35 = vand.u32 %v34, 127
  %v36 = vadd.s32 %v35, 128
  %v37 = vadd.s32 %v35, 256
  %v38 = vadd.s32 %v35, 384
  %vm39 = vcmp.ge.s32.totalorder %v35, 4
  %vm40 = vcmp.ge.s32.totalorder %v36, 4
  %vm41 = vcmp.ge.s32.totalorder %v37, 4
  %vm42 = vcmp.ge.s32.totalorder %v38, 4
  %s43 = sadd.s32 %s23, 4
  %v44 = vstv %s43
  %vm45 = vcmp.lt.s32.totalorder %v35, %v44
  %vm46 = vcmp.lt.s32.totalorder %v36, %v44
  %vm47 = vcmp.lt.s32.totalorder %v37, %v44
  %vm48 = vcmp.lt.s32.totalorder %v38, %v44
  %vm49 = vmand %vm39, %vm45
  %vm50 = vmand %vm40, %vm46
  %vm51 = vmand %vm41, %vm47
  %vm52 = vmand %vm42, %vm48
  %53 = vst [vmem:[%s4] sm:$0xff] 0
  %54 = vst [vmem:[%s4 + $0x8] sm:$0xff] 0
  %55 = vst [vmem:[%s4 + $0x10] sm:$0xff] 0
  %56 = vst [vmem:[%s4 + $0x18] sm:$0xff] 0
  %57 = vst [vmem:[%s4 + $0x20] sm:$0xff] 0
  %58 = vst [vmem:[%s4 + $0x28] sm:$0xff] 0
  %59 = vst [vmem:[%s4 + $0x30] sm:$0xff] 0
  %60 = vst [vmem:[%s4 + $0x38] sm:$0xff] 0
  %61 = vst [vmem:[%s4 + $0x40] sm:$0xff] 0
  %62 = vst [vmem:[%s4 + $0x48] sm:$0xff] 0
  %63 = vst [vmem:[%s4 + $0x50] sm:$0xff] 0
  %64 = vst [vmem:[%s4 + $0x58] sm:$0xff] 0
  %65 = vst [vmem:[%s4 + $0x60] sm:$0xff] 0
  %66 = vst [vmem:[%s4 + $0x68] sm:$0xff] 0
  %67 = vst [vmem:[%s4 + $0x70] sm:$0xff] 0
  %68 = vst [vmem:[%s4 + $0x78] sm:$0xff] 0
  %s69 = sadd.s32 %s22, 4
  %s70 = smul.u32 %s69, 16
  %s71 = sshra.s32 %s70, 3
  %s72 = sand.u32 %s70, 7
  %s73 = smul.u32 %s71, 4
  %s74 = smul.addr %s73, 4
  %s75 = scalar_lea.vmem %s4, %s74
  %76 = vst [vmem:[%s75] sm:$0xff] 0
  %77 = vst [vmem:[%s75 + $0x8] sm:$0xff] 0
  %78 = vst [vmem:[%s75 + $0x10] sm:$0xff] 0
  %79 = vst [vmem:[%s75 + $0x18] sm:$0xff] 0
  %80 = vst [vmem:[%s75 + $0x20] sm:$0xff] 0
  %81 = vst [vmem:[%s75 + $0x28] sm:$0xff] 0
  %82 = vst [vmem:[%s75 + $0x30] sm:$0xff] 0
  %83 = vst [vmem:[%s75 + $0x38] sm:$0xff] 0
  %84 = vst [vmem:[%s75 + $0x40] sm:$0xff] 0
  %85 = vst [vmem:[%s75 + $0x48] sm:$0xff] 0
  %86 = vst [vmem:[%s75 + $0x50] sm:$0xff] 0
  %87 = vst [vmem:[%s75 + $0x58] sm:$0xff] 0
  %88 = vst [vmem:[%s75 + $0x60] sm:$0xff] 0
  %89 = vst [vmem:[%s75 + $0x68] sm:$0xff] 0
  %90 = vst [vmem:[%s75 + $0x70] sm:$0xff] 0
  %91 = vst [vmem:[%s75 + $0x78] sm:$0xff] 0
  // While loop
  $region14: #{audio_vae_forward.13} parent=0 // loop_pre_header
    _
  $region15: #{audio_vae_forward.13} parent=0 // loop_header
    %s93 = sphi 0, %s95
    %p94 = scmp.ge.s32.totalorder %s93, %s22
  $region16: #{audio_vae_forward.13} parent=0 // loop_header_branch
    %97 = sbr.rel (%p94) target = $region20
  $region17: #{audio_vae_forward.13} parent=0 // loop_body
    %s98 = sadd.s32 %s93, 4
    %s99 = sadd.s32 %s93, 2
    %s100 = smul.u32 %s99, 16
    %s101 = sshra.s32 %s100, 3
    %s102 = sand.u32 %s100, 7
    %s103 = smul.u32 %s101, 4
    %s104 = smul.addr %s103, 4
    %s105 = scalar_lea.vmem %s1, %s104
    %v106 = vld [vmem:[%s105] sm:$0xff]
    %v107 = vld [vmem:[%s105 + $0x8] sm:$0xff]
    %v108 = vld [vmem:[%s105 + $0x10] sm:$0xff]
    %v109 = vld [vmem:[%s105 + $0x18] sm:$0xff]
    %v110 = vld [vmem:[%s105 + $0x20] sm:$0xff]
    %v111 = vld [vmem:[%s105 + $0x28] sm:$0xff]
    %v112 = vld [vmem:[%s105 + $0x30] sm:$0xff]
    %v113 = vld [vmem:[%s105 + $0x38] sm:$0xff]
    %v114 = vld [vmem:[%s105 + $0x40] sm:$0xff]
    %v115 = vld [vmem:[%s105 + $0x48] sm:$0xff]
    %v116 = vld [vmem:[%s105 + $0x50] sm:$0xff]
    %v117 = vld [vmem:[%s105 + $0x58] sm:$0xff]
    %v120 = vunpack.c.l.b16 %v24
    %v121 = vunpack.c.l.b16 %v25
    %v122 = vpack.c.b16 %v121, %v120
    %v135 = vunpack.c.l.b16 %v106
    %v136 = vunpack.c.h.b16 %v106
    %v137 = vunpack.c.l.b16 %v107
    %v138 = vunpack.c.h.b16 %v107
    %v139 = vunpack.c.l.b16 %v108
    %v140 = vunpack.c.h.b16 %v108
    %v141 = vunpack.c.l.b16 %v109
    %v142 = vunpack.c.h.b16 %v109
    %v143 = vunpack.c.l.b16 %v110
    %v144 = vunpack.c.h.b16 %v110
    %v145 = vunpack.c.l.b16 %v111
    %v146 = vunpack.c.h.b16 %v111
    %v147 = vunpack.c.l.b16 %v112
    %v148 = vunpack.c.h.b16 %v112
    %v149 = vunpack.c.l.b16 %v113
    %v150 = vunpack.c.h.b16 %v113
    %v151 = vunpack.c.l.b16 %v114
    %v152 = vunpack.c.h.b16 %v114
    %v153 = vunpack.c.l.b16 %v115
    %v154 = vunpack.c.h.b16 %v115
    %v155 = vunpack.c.l.b16 %v116
    %v156 = vunpack.c.h.b16 %v116
    %v157 = vunpack.c.l.b16 %v117
    %v158 = vunpack.c.h.b16 %v117
    %v159 = vpack.c.b16 %v139, %v135
    %v160 = vpack.c.b16 %v140, %v136
    %v161 = vpack.c.b16 %v141, %v137
    %v162 = vpack.c.b16 %v142, %v138
    %v163 = vpack.c.b16 %v147, %v143
    %v164 = vpack.c.b16 %v148, %v144
    %v165 = vpack.c.b16 %v149, %v145
    %v166 = vpack.c.b16 %v150, %v146
    %v167 = vpack.c.b16 %v155, %v151
    %v168 = vpack.c.b16 %v156, %v152
    %v169 = vpack.c.b16 %v157, %v153
    %v170 = vpack.c.b16 %v158, %v154
    %vm183 = vcmask 392192
    %v185 = vsel %vm183, %v122, 0
    %187 = vmatprep.subr.bf16.mxu0 %v160
    %188 = vmatpush1.bf16.msra.mxu0 %v159
    %189 = vmatprep.subr.bf16.mxu0 %v164
    %190 = vmatpush1.bf16.msra.mxu0 %v163
    %191 = vmatprep.subr.bf16.mxu0 %v168
    %192 = vmatpush1.bf16.msra.mxu0 %v167
    %193 = vmatprep.subr.bf16.mxu0 0
    %194 = vmatpush1.bf16.msra.mxu0 0
    %195 = vmatprep.subr.bf16.mxu0 0
    %196 = vmatpush1.bf16.msra.mxu0 0
    %197 = vmatprep.subr.bf16.mxu0 0
    %198 = vmatpush1.bf16.msra.mxu0 0
    %199 = vmatprep.subr.bf16.mxu0 0
    %200 = vmatpush1.bf16.msra.mxu0 0
    %201 = vmatprep.subr.bf16.mxu0 0
    %202 = vmatpush1.bf16.msra.mxu0 0
    %203 = vmatprep.subr.bf16.mxu0 0
    %204 = vmatpush1.bf16.msra.mxu0 0
    %205 = vmatprep.subr.bf16.mxu0 0
    %206 = vmatpush1.bf16.msra.mxu0 0
    %207 = vmatprep.subr.bf16.mxu0 0
    %208 = vmatpush1.bf16.msra.mxu0 0
    %209 = vmatprep.subr.bf16.mxu0 0
    %210 = vmatpush1.bf16.msra.mxu0 0
    %211 = vmatprep.subr.bf16.mxu0 0
    %212 = vmatpush1.bf16.msra.mxu0 0
    %213 = vmatprep.subr.bf16.mxu0 0
    %214 = vmatpush1.bf16.msra.mxu0 0
    %215 = vmatprep.subr.bf16.mxu0 0
    %216 = vmatpush1.bf16.msra.mxu0 0
    %217 = vmatprep.subr.bf16.mxu0 0
    %218 = vmatpush1.bf16.msra.mxu0 0
    %219 = vmatprep.mubr.bf16.mxu0 0
    %220 = vmatmul.mubr.bf16.gmra.mrb[0].mxu0 %v185
    %v221 = vpop.f32.mrb[0].mxu0
    %v222 = vadd.f32 0.0, %v221
    %v223 = vpop.f32.mrb[0].mxu0
    %v224 = vadd.f32 0.0, %v223
    %v225 = vpop.f32.mrb[0].mxu0
    %v226 = vadd.f32 0.0, %v225
    %v227 = vpop.f32.mrb[0].mxu0
    %v228 = vadd.f32 0.0, %v227
    %229 = vdwg.mxu0
    %230 = vmatprep.subr.bf16.mxu0 %v162
    %231 = vmatpush1.bf16.msra.mxu0 %v161
    %232 = vmatprep.subr.bf16.mxu0 %v166
    %233 = vmatpush1.bf16.msra.mxu0 %v165
    %234 = vmatprep.subr.bf16.mxu0 %v170
    %235 = vmatpush1.bf16.msra.mxu0 %v169
    %236 = vmatprep.subr.bf16.mxu0 0
    %237 = vmatpush1.bf16.msra.mxu0 0
    %238 = vmatprep.subr.bf16.mxu0 0
    %239 = vmatpush1.bf16.msra.mxu0 0
    %240 = vmatprep.subr.bf16.mxu0 0
    %241 = vmatpush1.bf16.msra.mxu0 0
    %242 = vmatprep.subr.bf16.mxu0 0
    %243 = vmatpush1.bf16.msra.mxu0 0
    %244 = vmatprep.subr.bf16.mxu0 0
    %245 = vmatpush1.bf16.msra.mxu0 0
    %246 = vmatprep.subr.bf16.mxu0 0
    %247 = vmatpush1.bf16.msra.mxu0 0
    %248 = vmatprep.subr.bf16.mxu0 0
    %249 = vmatpush1.bf16.msra.mxu0 0
    %250 = vmatprep.subr.bf16.mxu0 0
    %251 = vmatpush1.bf16.msra.mxu0 0
    %252 = vmatprep.subr.bf16.mxu0 0
    %253 = vmatpush1.bf16.msra.mxu0 0
    %254 = vmatprep.subr.bf16.mxu0 0
    %255 = vmatpush1.bf16.msra.mxu0 0
    %256 = vmatprep.subr.bf16.mxu0 0
    %257 = vmatpush1.bf16.msra.mxu0 0
    %258 = vmatprep.subr.bf16.mxu0 0
    %259 = vmatpush1.bf16.msra.mxu0 0
    %260 = vmatprep.subr.bf16.mxu0 0
    %261 = vmatpush1.bf16.msra.mxu0 0
    %262 = vmatprep.mubr.bf16.mxu0 0
    %263 = vmatmul.mubr.bf16.gmra.mrb[0].mxu0 %v185
    %v264 = vpop.f32.mrb[0].mxu0
    %v265 = vadd.f32 0.0, %v264
    %v266 = vpop.f32.mrb[0].mxu0
    %v267 = vadd.f32 0.0, %v266
    %v268 = vpop.f32.mrb[0].mxu0
    %v269 = vadd.f32 0.0, %v268
    %v270 = vpop.f32.mrb[0].mxu0
    %v271 = vadd.f32 0.0, %v270
    %272 = vdwg.mxu0
    %273 = vrot.lane.b32.xlu0 %v222, 2
    %v274 = vpop.permute.xlu0 %273
    %275 = vrot.lane.b32.xlu0 %v226, 2
    %v276 = vpop.permute.xlu0 %275
    %277 = vrot.lane.b32.xlu0 %v224, 2
    %v278 = vpop.permute.xlu0 %277
    %279 = vrot.lane.b32.xlu0 %v228, 2
    %v280 = vpop.permute.xlu0 %279
    %281 = vrot.lane.b32.xlu0 %v265, 2
    %v282 = vpop.permute.xlu0 %281
    %283 = vrot.lane.b32.xlu0 %v269, 2
    %v284 = vpop.permute.xlu0 %283
    %285 = vrot.lane.b32.xlu0 %v267, 2
    %v286 = vpop.permute.xlu0 %285
    %287 = vrot.lane.b32.xlu0 %v271, 2
    %v288 = vpop.permute.xlu0 %287
    %vm289 = vcmp.lt.s32.totalorder %v35, 2
    %v290 = vsel %vm289, %v282, %v286
    %v291 = vsel %vm289, %v284, %v288
    %v292 = vsel %vm289, %v278, %v282
    %v293 = vsel %vm289, %v280, %v284
    %v294 = vsel %vm289, %v274, %v278
    %v295 = vsel %vm289, %v276, %v280
    %v296 = vsel %vm289, %v286, %v274
    %v297 = vsel %vm289, %v288, %v276
    %v298 = vadd.f32 %v296, 0.0
    %v299 = vadd.f32 %v294, 0.0
    %v300 = vadd.f32 %v292, 0.0
    %v301 = vadd.f32 %v290, 0.0
    %v302 = vadd.f32 %v297, 0.0
    %v303 = vadd.f32 %v295, 0.0
    %v304 = vadd.f32 %v293, 0.0
    %v305 = vadd.f32 %v291, 0.0
    %v308 = vunpack.c.l.b16 %v27
    %v309 = vunpack.c.l.b16 %v28
    %v310 = vpack.c.b16 %v309, %v308
    %v312 = vsel %vm183, %v310, 0
    %314 = vmatprep.subr.bf16.mxu0 %v160
    %315 = vmatpush1.bf16.msra.mxu0 %v159
    %316 = vmatprep.subr.bf16.mxu0 %v164
    %317 = vmatpush1.bf16.msra.mxu0 %v163
    %318 = vmatprep.subr.bf16.mxu0 %v168
    %319 = vmatpush1.bf16.msra.mxu0 %v167
    %320 = vmatprep.subr.bf16.mxu0 0
    %321 = vmatpush1.bf16.msra.mxu0 0
    %322 = vmatprep.subr.bf16.mxu0 0
    %323 = vmatpush1.bf16.msra.mxu0 0
    %324 = vmatprep.subr.bf16.mxu0 0
    %325 = vmatpush1.bf16.msra.mxu0 0
    %326 = vmatprep.subr.bf16.mxu0 0
    %327 = vmatpush1.bf16.msra.mxu0 0
    %328 = vmatprep.subr.bf16.mxu0 0
    %329 = vmatpush1.bf16.msra.mxu0 0
    %330 = vmatprep.subr.bf16.mxu0 0
    %331 = vmatpush1.bf16.msra.mxu0 0
    %332 = vmatprep.subr.bf16.mxu0 0
    %333 = vmatpush1.bf16.msra.mxu0 0
    %334 = vmatprep.subr.bf16.mxu0 0
    %335 = vmatpush1.bf16.msra.mxu0 0
    %336 = vmatprep.subr.bf16.mxu0 0
    %337 = vmatpush1.bf16.msra.mxu0 0
    %338 = vmatprep.subr.bf16.mxu0 0
    %339 = vmatpush1.bf16.msra.mxu0 0
    %340 = vmatprep.subr.bf16.mxu0 0
    %341 = vmatpush1.bf16.msra.mxu0 0
    %342 = vmatprep.subr.bf16.mxu0 0
    %343 = vmatpush1.bf16.msra.mxu0 0
    %344 = vmatprep.subr.bf16.mxu0 0
    %345 = vmatpush1.bf16.msra.mxu0 0
    %346 = vmatprep.mubr.bf16.mxu0 0
    %347 = vmatmul.mubr.bf16.gmra.mrb[0].mxu0 %v312
    %v348 = vpop.f32.mrb[0].mxu0
    %v349 = vadd.f32 0.0, %v348
    %v350 = vpop.f32.mrb[0].mxu0
    %v351 = vadd.f32 0.0, %v350
    %v352 = vpop.f32.mrb[0].mxu0
    %v353 = vadd.f32 0.0, %v352
    %v354 = vpop.f32.mrb[0].mxu0
    %v355 = vadd.f32 0.0, %v354
    %356 = vdwg.mxu0
    %357 = vmatprep.subr.bf16.mxu0 %v162
    %358 = vmatpush1.bf16.msra.mxu0 %v161
    %359 = vmatprep.subr.bf16.mxu0 %v166
    %360 = vmatpush1.bf16.msra.mxu0 %v165
    %361 = vmatprep.subr.bf16.mxu0 %v170
    %362 = vmatpush1.bf16.msra.mxu0 %v169
    %363 = vmatprep.subr.bf16.mxu0 0
    %364 = vmatpush1.bf16.msra.mxu0 0
    %365 = vmatprep.subr.bf16.mxu0 0
    %366 = vmatpush1.bf16.msra.mxu0 0
    %367 = vmatprep.subr.bf16.mxu0 0
    %368 = vmatpush1.bf16.msra.mxu0 0
    %369 = vmatprep.subr.bf16.mxu0 0
    %370 = vmatpush1.bf16.msra.mxu0 0
    %371 = vmatprep.subr.bf16.mxu0 0
    %372 = vmatpush1.bf16.msra.mxu0 0
    %373 = vmatprep.subr.bf16.mxu0 0
    %374 = vmatpush1.bf16.msra.mxu0 0
    %375 = vmatprep.subr.bf16.mxu0 0
    %376 = vmatpush1.bf16.msra.mxu0 0
    %377 = vmatprep.subr.bf16.mxu0 0
    %378 = vmatpush1.bf16.msra.mxu0 0
    %379 = vmatprep.subr.bf16.mxu0 0
    %380 = vmatpush1.bf16.msra.mxu0 0
    %381 = vmatprep.subr.bf16.mxu0 0
    %382 = vmatpush1.bf16.msra.mxu0 0
    %383 = vmatprep.subr.bf16.mxu0 0
    %384 = vmatpush1.bf16.msra.mxu0 0
    %385 = vmatprep.subr.bf16.mxu0 0
    %386 = vmatpush1.bf16.msra.mxu0 0
    %387 = vmatprep.subr.bf16.mxu0 0
    %388 = vmatpush1.bf16.msra.mxu0 0
    %389 = vmatprep.mubr.bf16.mxu0 0
    %390 = vmatmul.mubr.bf16.gmra.mrb[0].mxu0 %v312
    %v391 = vpop.f32.mrb[0].mxu0
    %v392 = vadd.f32 0.0, %v391
    %v393 = vpop.f32.mrb[0].mxu0
    %v394 = vadd.f32 0.0, %v393
    %v395 = vpop.f32.mrb[0].mxu0
    %v396 = vadd.f32 0.0, %v395
    %v397 = vpop.f32.mrb[0].mxu0
    %v398 = vadd.f32 0.0, %v397
    %399 = vdwg.mxu0
    %400 = vrot.lane.b32.xlu0 %v349, 1
    %v401 = vpop.permute.xlu0 %400
    %402 = vrot.lane.b32.xlu0 %v353, 1
    %v403 = vpop.permute.xlu0 %402
    %404 = vrot.lane.b32.xlu0 %v351, 1
    %v405 = vpop.permute.xlu0 %404
    %406 = vrot.lane.b32.xlu0 %v355, 1
    %v407 = vpop.permute.xlu0 %406
    %408 = vrot.lane.b32.xlu0 %v392, 1
    %v409 = vpop.permute.xlu0 %408
    %410 = vrot.lane.b32.xlu0 %v396, 1
    %v411 = vpop.permute.xlu0 %410
    %412 = vrot.lane.b32.xlu0 %v394, 1
    %v413 = vpop.permute.xlu0 %412
    %414 = vrot.lane.b32.xlu0 %v398, 1
    %v415 = vpop.permute.xlu0 %414
    %vm416 = vcmp.lt.s32.totalorder %v35, 1
    %v417 = vsel %vm416, %v409, %v413
    %v418 = vsel %vm416, %v411, %v415
    %v419 = vsel %vm416, %v405, %v409
    %v420 = vsel %vm416, %v407, %v411
    %v421 = vsel %vm416, %v401, %v405
    %v422 = vsel %vm416, %v403, %v407
    %v423 = vsel %vm416, %v413, %v401
    %v424 = vsel %vm416, %v415, %v403
    %v425 = vadd.f32 %v298, %v423
    %v426 = vadd.f32 %v299, %v421
    %v427 = vadd.f32 %v300, %v419
    %v428 = vadd.f32 %v301, %v417
    %v429 = vadd.f32 %v302, %v424
    %v430 = vadd.f32 %v303, %v422
    %v431 = vadd.f32 %v304, %v420
    %v432 = vadd.f32 %v305, %v418
    %v435 = vunpack.c.l.b16 %v30
    %v436 = vunpack.c.l.b16 %v31
    %v437 = vpack.c.b16 %v436, %v435
    %v439 = vsel %vm183, %v437, 0
    %441 = vmatprep.subr.bf16.mxu0 %v160
    %442 = vmatpush1.bf16.msra.mxu0 %v159
    %443 = vmatprep.subr.bf16.mxu0 %v164
    %444 = vmatpush1.bf16.msra.mxu0 %v163
    %445 = vmatprep.subr.bf16.mxu0 %v168
    %446 = vmatpush1.bf16.msra.mxu0 %v167
    %447 = vmatprep.subr.bf16.mxu0 0
    %448 = vmatpush1.bf16.msra.mxu0 0
    %449 = vmatprep.subr.bf16.mxu0 0
    %450 = vmatpush1.bf16.msra.mxu0 0
    %451 = vmatprep.subr.bf16.mxu0 0
    %452 = vmatpush1.bf16.msra.mxu0 0
    %453 = vmatprep.subr.bf16.mxu0 0
    %454 = vmatpush1.bf16.msra.mxu0 0
    %455 = vmatprep.subr.bf16.mxu0 0
    %456 = vmatpush1.bf16.msra.mxu0 0
    %457 = vmatprep.subr.bf16.mxu0 0
    %458 = vmatpush1.bf16.msra.mxu0 0
    %459 = vmatprep.subr.bf16.mxu0 0
    %460 = vmatpush1.bf16.msra.mxu0 0
    %461 = vmatprep.subr.bf16.mxu0 0
    %462 = vmatpush1.bf16.msra.mxu0 0
    %463 = vmatprep.subr.bf16.mxu0 0
    %464 = vmatpush1.bf16.msra.mxu0 0
    %465 = vmatprep.subr.bf16.mxu0 0
    %466 = vmatpush1.bf16.msra.mxu0 0
    %467 = vmatprep.subr.bf16.mxu0 0
    %468 = vmatpush1.bf16.msra.mxu0 0
    %469 = vmatprep.subr.bf16.mxu0 0
    %470 = vmatpush1.bf16.msra.mxu0 0
    %471 = vmatprep.subr.bf16.mxu0 0
    %472 = vmatpush1.bf16.msra.mxu0 0
    %473 = vmatprep.mubr.bf16.mxu0 0
    %474 = vmatmul.mubr.bf16.gmra.mrb[0].mxu0 %v439
    %v475 = vpop.f32.mrb[0].mxu0
    %v476 = vadd.f32 0.0, %v475
    %v477 = vpop.f32.mrb[0].mxu0
    %v478 = vadd.f32 0.0, %v477
    %v479 = vpop.f32.mrb[0].mxu0
    %v480 = vadd.f32 0.0, %v479
    %v481 = vpop.f32.mrb[0].mxu0
    %v482 = vadd.f32 0.0, %v481
    %483 = vdwg.mxu0
    %484 = vmatprep.subr.bf16.mxu0 %v162
    %485 = vmatpush1.bf16.msra.mxu0 %v161
    %486 = vmatprep.subr.bf16.mxu0 %v166
    %487 = vmatpush1.bf16.msra.mxu0 %v165
    %488 = vmatprep.subr.bf16.mxu0 %v170
    %489 = vmatpush1.bf16.msra.mxu0 %v169
    %490 = vmatprep.subr.bf16.mxu0 0
    %491 = vmatpush1.bf16.msra.mxu0 0
    %492 = vmatprep.subr.bf16.mxu0 0
    %493 = vmatpush1.bf16.msra.mxu0 0
    %494 = vmatprep.subr.bf16.mxu0 0
    %495 = vmatpush1.bf16.msra.mxu0 0
    %496 = vmatprep.subr.bf16.mxu0 0
    %497 = vmatpush1.bf16.msra.mxu0 0
    %498 = vmatprep.subr.bf16.mxu0 0
    %499 = vmatpush1.bf16.msra.mxu0 0
    %500 = vmatprep.subr.bf16.mxu0 0
    %501 = vmatpush1.bf16.msra.mxu0 0
    %502 = vmatprep.subr.bf16.mxu0 0
    %503 = vmatpush1.bf16.msra.mxu0 0
    %504 = vmatprep.subr.bf16.mxu0 0
    %505 = vmatpush1.bf16.msra.mxu0 0
    %506 = vmatprep.subr.bf16.mxu0 0
    %507 = vmatpush1.bf16.msra.mxu0 0
    %508 = vmatprep.subr.bf16.mxu0 0
    %509 = vmatpush1.bf16.msra.mxu0 0
    %510 = vmatprep.subr.bf16.mxu0 0
    %511 = vmatpush1.bf16.msra.mxu0 0
    %512 = vmatprep.subr.bf16.mxu0 0
    %513 = vmatpush1.bf16.msra.mxu0 0
    %514 = vmatprep.subr.bf16.mxu0 0
    %515 = vmatpush1.bf16.msra.mxu0 0
    %516 = vmatprep.mubr.bf16.mxu0 0
    %517 = vmatmul.mubr.bf16.gmra.mrb[0].mxu0 %v439
    %v518 = vpop.f32.mrb[0].mxu0
    %v519 = vadd.f32 0.0, %v518
    %v520 = vpop.f32.mrb[0].mxu0
    %v521 = vadd.f32 0.0, %v520
    %v522 = vpop.f32.mrb[0].mxu0
    %v523 = vadd.f32 0.0, %v522
    %v524 = vpop.f32.mrb[0].mxu0
    %v525 = vadd.f32 0.0, %v524
    %526 = vdwg.mxu0
    %v527 = vadd.f32 %v425, %v476
    %v528 = vadd.f32 %v426, %v478
    %v529 = vadd.f32 %v427, %v519
    %v530 = vadd.f32 %v428, %v521
    %v531 = vadd.f32 %v429, %v480
    %v532 = vadd.f32 %v430, %v482
    %v533 = vadd.f32 %v431, %v523
    %v534 = vadd.f32 %v432, %v525
    %536 = vset.pattern.permute.xlu0 0
    %537 = vperm.xlu0 %536, %v32
    %v538 = vpop.permute.xlu0 %537
    %541 = vset.pattern.permute.xlu0 0
    %542 = vperm.xlu0 %541, %v33
    %v543 = vpop.permute.xlu0 %542
    %v545 = vadd.f32 %v527, %v538
    %v546 = vadd.f32 %v528, %v538
    %v547 = vadd.f32 %v529, %v538
    %v548 = vadd.f32 %v530, %v538
    %v549 = vadd.f32 %v531, %v543
    %v550 = vadd.f32 %v532, %v543
    %v551 = vadd.f32 %v533, %v543
    %v552 = vadd.f32 %v534, %v543
    %v553 = vsel %vm49, %v545, 0.0
    %v554 = vsel %vm50, %v546, 0.0
    %v555 = vsel %vm51, %v547, 0.0
    %v556 = vsel %vm52, %v548, 0.0
    %v557 = vsel %vm49, %v549, 0.0
    %v558 = vsel %vm50, %v550, 0.0
    %v559 = vsel %vm51, %v551, 0.0
    %v560 = vsel %vm52, %v552, 0.0
    %v561 = vpack.c.bf16 %v557, %v553
    %v562 = vpack.c.bf16 %v558, %v554
    %v563 = vpack.c.bf16 %v559, %v555
    %v564 = vpack.c.bf16 %v560, %v556
    %s565 = smul.u32 %s98, 16
    %v570 = vunpack.c.l.b16 %v561
    %v571 = vunpack.c.l.b16 %v562
    %v572 = vunpack.c.l.b16 %v563
    %v573 = vunpack.c.l.b16 %v564
    %v574 = vunpack.c.h.b16 %v561
    %v575 = vunpack.c.h.b16 %v562
    %v576 = vunpack.c.h.b16 %v563
    %v577 = vunpack.c.h.b16 %v564
    %v578 = vpack.c.b16 %v571, %v570
    %v579 = vpack.c.b16 %v573, %v572
    %v580 = vpack.c.b16 %v575, %v574
    %v581 = vpack.c.b16 %v577, %v576
    %s586 = sshra.s32 %s565, 3
    %s587 = sand.u32 %s565, 7
    %s588 = smul.u32 %s586, 4
    %s589 = smul.addr %s588, 4
    %s590 = scalar_lea.vmem %s4, %s589
    %591 = vst [vmem:[%s590] sm:$0xff] %v578
    %592 = vst [vmem:[%s590 + $0x8] sm:$0xff] %v579
    %593 = vst [vmem:[%s590 + $0x10] sm:$0xff] %v580
    %594 = vst [vmem:[%s590 + $0x18] sm:$0xff] %v581
  $region18: #{audio_vae_forward.13} parent=0 // loop_footer
    %s95 = sadd.s32 %s93, 1
  $region19: #{audio_vae_forward.13} parent=0 // loop_footer_branch
    %92 = sbr.rel target = $region15
  $region20: #{audio_vae_forward.13} parent=0 // loop_exit
    _
  // Predicated region
  $region21: #{audio_vae_forward.13} parent=0 // pred_check
    _
  $region22: #{audio_vae_forward.13} parent=0 // pred_check_branch
    %596 = sbr.rel (0) target = $region24
  $region23: #{audio_vae_forward.13} parent=0 // pred_region
    _
  $region24: #{audio_vae_forward.13} parent=0 // pred_fallthru
    _
  // Predicated region
  $region25: #{audio_vae_forward.13} parent=0 // pred_check
    _
  $region26: #{audio_vae_forward.13} parent=0 // pred_check_branch
    %598 = sbr.rel (0) target = $region28
  $region27: #{audio_vae_forward.13} parent=0 // pred_region
    _
  $region28: #{audio_vae_forward.13} parent=0 // pred_fallthru
    _

</llo_original>
